<compile_context>
chip_gen: v5e
topology: v5e:2x2
jax: 0.10.0
libtpu: 0.0.40
codegen_flags: <defaults>
</compile_context>

<pallas_src>
import math
import functools

import jax
import jax.numpy as jnp
from jax import lax
from jax.experimental import pallas as pl
from jax.experimental.pallas import tpu as pltpu

_PARALLEL_B = pltpu.CompilerParams(dimension_semantics=("parallel",))


def _rep_spec(shape):
    """Whole-array block, same block index for every grid step (weights / biases / LN params)."""
    nd = len(shape)
    return pl.BlockSpec(tuple(shape), lambda b, _nd=nd: (0,) * _nd)


def _batch_spec(shape):
    """Per-batch-element block: batch dim squeezed out, rest full-extent."""
    nd = len(shape)
    return pl.BlockSpec((None,) + tuple(shape[1:]),
                        lambda b, _nd=nd: (b,) + (0,) * (_nd - 1))


# ----------------------------- in-kernel helpers (traced inside Pallas) -----------------------------

def _mm(x, w, b=None, relu=False):
    """bf16 MXU matmul with f32 accumulation; bias add / relu in f32."""
    y = jnp.dot(x.astype(jnp.bfloat16), w.astype(jnp.bfloat16),
                preferred_element_type=jnp.float32)
    if b is not None:
        y = y + b
    if relu:
        y = jnp.maximum(y, 0.0)
    return y


def _layernorm(x, g, b, eps=1e-5):
    mu = jnp.mean(x, axis=-1, keepdims=True)
    xc = x - mu
    var = jnp.mean(xc * xc, axis=-1, keepdims=True)
    return xc * lax.rsqrt(var + eps) * g + b


def _mha(q_full, k_full, v_full, wo, bo, nhead, causal):
    """Multi-head attention + fused output projection; heads via static feature slices."""
    Sq, D = q_full.shape
    Sk = k_full.shape[0]
    Dh = D // nhead
    scale = 1.0 / math.sqrt(Dh)
    if causal:
        row = lax.broadcasted_iota(jnp.int32, (Sq, Sk), 0)
        col = lax.broadcasted_iota(jnp.int32, (Sq, Sk), 1)
        bias = jnp.where(col > row, -1e9, 0.0).astype(jnp.float32)
    acc = None
    for h in range(nhead):
        sl = slice(h * Dh, (h + 1) * Dh)
        qh = q_full[:, sl].astype(jnp.bfloat16)
        kh = k_full[:, sl].astype(jnp.bfloat16)
        vh = v_full[:, sl].astype(jnp.bfloat16)
        s = lax.dot_general(qh, kh, (((1,), (1,)), ((), ())),
                            preferred_element_type=jnp.float32) * scale
        if causal:
            s = s + bias
        m = jnp.max(s, axis=-1, keepdims=True)
        p = jnp.exp(s - m)
        p = p * pl.reciprocal(jnp.sum(p, axis=-1, keepdims=True), approx=True)
        oh = jnp.dot(p.astype(jnp.bfloat16), vh, preferred_element_type=jnp.float32)
        contrib = jnp.dot(oh.astype(jnp.bfloat16), wo[sl, :].astype(jnp.bfloat16),
                          preferred_element_type=jnp.float32)
        acc = contrib if acc is None else acc + contrib
    return acc + bo


def _encoder_block(x, wqkv, bqkv, wo, bo, ln1g, ln1b, w1, b1, w2, b2, ln2g, ln2b, *, nhead):
    D = x.shape[-1]
    qkv = _mm(x, wqkv, bqkv)                                    # fused QKV: (S, 3D)
    a = _mha(qkv[:, :D], qkv[:, D:2 * D], qkv[:, 2 * D:], wo, bo, nhead, causal=False)
    x = _layernorm(x + a, ln1g, ln1b)
    h = _mm(x, w1, b1, relu=True)                               # FFN intermediate stays in VMEM
    f = _mm(h, w2, b2)
    return _layernorm(x + f, ln2g, ln2b)


def _decoder_block(y, mem, sa_wqkv, sa_bqkv, sa_wo, sa_bo, ln1g, ln1b,
                   ca_wq, ca_bq, ca_wkv, ca_bkv, ca_wo, ca_bo, ln2g, ln2b,
                   w1, b1, w2, b2, ln3g, ln3b, *, nhead):
    D = y.shape[-1]
    # causal self-attention (mask generated in-kernel)
    qkv = _mm(y, sa_wqkv, sa_bqkv)
    a = _mha(qkv[:, :D], qkv[:, D:2 * D], qkv[:, 2 * D:], sa_wo, sa_bo, nhead, causal=True)
    y = _layernorm(y + a, ln1g, ln1b)
    # cross-attention over encoder memory (fused KV projection)
    q = _mm(y, ca_wq, ca_bq)
    kv = _mm(mem, ca_wkv, ca_bkv)
    c = _mha(q, kv[:, :D], kv[:, D:], ca_wo, ca_bo, nhead, causal=False)
    y = _layernorm(y + c, ln2g, ln2b)
    # feed-forward
    h = _mm(y, w1, b1, relu=True)
    f = _mm(h, w2, b2)
    return _layernorm(y + f, ln3g, ln3b)


# ----------------------------- the single fused kernel -----------------------------

_ENC_KEYS = ("wqkv", "bqkv", "wo", "bo", "ln1_g", "ln1_b",
             "w1", "b1", "w2", "b2", "ln2_g", "ln2_b")

_DEC_KEYS = ("sa_wqkv", "sa_bqkv", "sa_wo", "sa_bo", "ln1_g", "ln1_b",
             "ca_wq", "ca_bq", "ca_wkv", "ca_bkv", "ca_wo", "ca_bo",
             "ln2_g", "ln2_b", "w1", "b1", "w2", "b2", "ln3_g", "ln3_b")


def _transformer_kernel(src_ref, trg_ref,
                        enc_w_ref, enc_b_ref, pe_src_ref,
                        dec_w_ref, dec_b_ref, pe_trg_ref,
                        *rest, nhead, n_enc, n_dec, sqrt_d):
    ne, nd = len(_ENC_KEYS), len(_DEC_KEYS)
    enc_refs = rest[:ne]
    enc_ng_ref, enc_nb_ref = rest[ne], rest[ne + 1]
    dec_refs = rest[ne + 2: ne + 2 + nd]
    dec_ng_ref, dec_nb_ref, fc_w_ref, fc_b_ref, o_ref = rest[ne + 2 + nd:]

    # encoder: embedding * sqrt(d_model) + positional encoding (dropout = identity)
    x = _mm(src_ref[...], enc_w_ref[...], enc_b_ref[...]) * sqrt_d + pe_src_ref[...]
    for l in range(n_enc):
        x = _encoder_block(x, *[r[l] for r in enc_refs], nhead=nhead)
    mem = _layernorm(x, enc_ng_ref[...], enc_nb_ref[...])        # encoder memory stays in VMEM

    # decoder: embedding * sqrt(d_model) + positional encoding
    y = _mm(trg_ref[...], dec_w_ref[...], dec_b_ref[...]) * sqrt_d + pe_trg_ref[...]
    for l in range(n_dec):
        y = _decoder_block(y, mem, *[r[l] for r in dec_refs], nhead=nhead)

    # final decoder LayerNorm fused with fc_out
    y = _layernorm(y, dec_ng_ref[...], dec_nb_ref[...])
    o_ref[...] = _mm(y, fc_w_ref[...], fc_b_ref[...]).astype(o_ref.dtype)


# ----------------------------- model glue (plain JAX wrapper) -----------------------------

def make_positional_encoding(max_len, d_model):
    position = jnp.arange(max_len, dtype=jnp.float32)[:, None]
    div_term = jnp.exp(jnp.arange(0, d_model, 2, dtype=jnp.float32)
                       * (-math.log(10000.0) / d_model))
    pe = jnp.zeros((max_len, d_model), jnp.float32)
    pe = pe.at[:, 0::2].set(jnp.sin(position * div_term))
    pe = pe.at[:, 1::2].set(jnp.cos(position * div_term))
    return pe                            # (max_len, d_model)


def transformer_forward(src, trg, params, cfg):
    d_model, nhead, output_dim = cfg["d_model"], cfg["nhead"], cfg["output_dim"]
    n_enc, n_dec = cfg["num_encoder_layers"], cfg["num_decoder_layers"]
    B, S_src, _ = src.shape
    _, S_trg, _ = trg.shape
    sqrt_d = math.sqrt(d_model)

    pe_src = params["pe"][:S_src]
    pe_trg = params["pe"][:S_trg]

    operands = [src, trg,
                params["enc_emb_w"], params["enc_emb_b"], pe_src,
                params["dec_emb_w"], params["dec_emb_b"], pe_trg]
    operands += [params["enc_stack"][k] for k in _ENC_KEYS]
    operands += [params["enc_norm_g"], params["enc_norm_b"]]
    operands += [params["dec_stack"][k] for k in _DEC_KEYS]
    operands += [params["dec_norm_g"], params["dec_norm_b"],
                 params["fc_w"], params["fc_b"]]

    in_specs = [_batch_spec(src.shape), _batch_spec(trg.shape)]
    in_specs += [_rep_spec(a.shape) for a in operands[2:]]

    out = pl.pallas_call(
        functools.partial(_transformer_kernel, nhead=nhead,
                          n_enc=n_enc, n_dec=n_dec, sqrt_d=sqrt_d),
        out_shape=jax.ShapeDtypeStruct((B, S_trg, 2 * output_dim), jnp.float32),
        grid=(B,),
        in_specs=in_specs,
        out_specs=_batch_spec((B, S_trg, 2 * output_dim)),
        compiler_params=_PARALLEL_B,
    )(*operands)

    pred_mu = out[..., :output_dim]
    pred_log_sigma = out[..., output_dim:]
    return pred_mu, pred_log_sigma


def init_params(key, cfg):
    d, f = cfg["d_model"], cfg["dim_feedforward"]
    keys = iter(jax.random.split(key, 512))

    def W(*shape):
        return jax.random.normal(next(keys), shape, jnp.float32) * 0.05

    def zeros(*shape):
        return jnp.zeros(shape, jnp.float32)

    def ones(*shape):
        return jnp.ones(shape, jnp.float32)

    def enc_layer_p():
        return dict(wqkv=W(d, 3 * d), bqkv=zeros(1, 3 * d), wo=W(d, d), bo=zeros(1, d),
                    ln1_g=ones(1, d), ln1_b=zeros(1, d),
                    w1=W(d, f), b1=zeros(1, f), w2=W(f, d), b2=zeros(1, d),
                    ln2_g=ones(1, d), ln2_b=zeros(1, d))

    def dec_layer_p():
        return dict(sa_wqkv=W(d, 3 * d), sa_bqkv=zeros(1, 3 * d),
                    sa_wo=W(d, d), sa_bo=zeros(1, d),
                    ln1_g=ones(1, d), ln1_b=zeros(1, d),
                    ca_wq=W(d, d), ca_bq=zeros(1, d),
                    ca_wkv=W(d, 2 * d), ca_bkv=zeros(1, 2 * d),
                    ca_wo=W(d, d), ca_bo=zeros(1, d),
                    ln2_g=ones(1, d), ln2_b=zeros(1, d),
                    w1=W(d, f), b1=zeros(1, f), w2=W(f, d), b2=zeros(1, d),
                    ln3_g=ones(1, d), ln3_b=zeros(1, d))

    enc_layers = [enc_layer_p() for _ in range(cfg["num_encoder_layers"])]
    dec_layers = [dec_layer_p() for _ in range(cfg["num_decoder_layers"])]
    enc_stack = {k: jnp.stack([lp[k] for lp in enc_layers]) for k in _ENC_KEYS}
    dec_stack = {k: jnp.stack([lp[k] for lp in dec_layers]) for k in _DEC_KEYS}

    return dict(
        enc_emb_w=W(cfg["input_dim"], d), enc_emb_b=zeros(1, d),
        dec_emb_w=W(cfg["output_dim"], d), dec_emb_b=zeros(1, d),
        pe=make_positional_encoding(cfg["max_len"], d),
        enc_stack=enc_stack, dec_stack=dec_stack,
        enc_norm_g=ones(1, d), enc_norm_b=zeros(1, d),
        dec_norm_g=ones(1, d), dec_norm_b=zeros(1, d),
        fc_w=W(d, 2 * cfg["output_dim"]), fc_b=zeros(1, 2 * cfg["output_dim"]),
    )


if __name__ == "__main__":
    cfg = dict(input_dim=4, output_dim=2, d_model=32, nhead=4,
               num_encoder_layers=2, num_decoder_layers=2,
               dim_feedforward=64, max_len=64)

    key = jax.random.PRNGKey(0)
    k_par, k_src, k_trg = jax.random.split(key, 3)
    params = init_params(k_par, cfg)

    B, S_src, S_trg = 2, 8, 6
    src = jax.random.normal(k_src, (B, S_src, cfg["input_dim"]), jnp.float32)
    trg = jax.random.normal(k_trg, (B, S_trg, cfg["output_dim"]), jnp.float32)

    fwd = jax.jit(functools.partial(transformer_forward, cfg=cfg))
    pred_mu, pred_log_sigma = fwd(src, trg, params)
    jax.block_until_ready((pred_mu, pred_log_sigma))

    assert pred_mu.shape == (B, S_trg, cfg["output_dim"])
    assert pred_log_sigma.shape == (B, S_trg, cfg["output_dim"])
    assert bool(jnp.all(jnp.isfinite(pred_mu))) and bool(jnp.all(jnp.isfinite(pred_log_sigma)))
    print("KERNEL_OK")
</pallas_src>

<mosaic_0001>
module attributes {stable_mosaic.version = 11 : i64} {
  func.func @_transformer_kernel(%arg0: i32, %arg1: memref<1x8x4xf32, #tpu.memory_space<vmem>>, %arg2: memref<1x6x2xf32, #tpu.memory_space<vmem>>, %arg3: memref<4x32xf32, #tpu.memory_space<vmem>>, %arg4: memref<1x32xf32, #tpu.memory_space<vmem>>, %arg5: memref<8x32xf32, #tpu.memory_space<vmem>>, %arg6: memref<2x32xf32, #tpu.memory_space<vmem>>, %arg7: memref<1x32xf32, #tpu.memory_space<vmem>>, %arg8: memref<6x32xf32, #tpu.memory_space<vmem>>, %arg9: memref<2x32x96xf32, #tpu.memory_space<vmem>>, %arg10: memref<2x1x96xf32, #tpu.memory_space<vmem>>, %arg11: memref<2x32x32xf32, #tpu.memory_space<vmem>>, %arg12: memref<2x1x32xf32, #tpu.memory_space<vmem>>, %arg13: memref<2x1x32xf32, #tpu.memory_space<vmem>>, %arg14: memref<2x1x32xf32, #tpu.memory_space<vmem>>, %arg15: memref<2x32x64xf32, #tpu.memory_space<vmem>>, %arg16: memref<2x1x64xf32, #tpu.memory_space<vmem>>, %arg17: memref<2x64x32xf32, #tpu.memory_space<vmem>>, %arg18: memref<2x1x32xf32, #tpu.memory_space<vmem>>, %arg19: memref<2x1x32xf32, #tpu.memory_space<vmem>>, %arg20: memref<2x1x32xf32, #tpu.memory_space<vmem>>, %arg21: memref<1x32xf32, #tpu.memory_space<vmem>>, %arg22: memref<1x32xf32, #tpu.memory_space<vmem>>, %arg23: memref<2x32x96xf32, #tpu.memory_space<vmem>>, %arg24: memref<2x1x96xf32, #tpu.memory_space<vmem>>, %arg25: memref<2x32x32xf32, #tpu.memory_space<vmem>>, %arg26: memref<2x1x32xf32, #tpu.memory_space<vmem>>, %arg27: memref<2x1x32xf32, #tpu.memory_space<vmem>>, %arg28: memref<2x1x32xf32, #tpu.memory_space<vmem>>, %arg29: memref<2x32x32xf32, #tpu.memory_space<vmem>>, %arg30: memref<2x1x32xf32, #tpu.memory_space<vmem>>, %arg31: memref<2x32x64xf32, #tpu.memory_space<vmem>>, %arg32: memref<2x1x64xf32, #tpu.memory_space<vmem>>, %arg33: memref<2x32x32xf32, #tpu.memory_space<vmem>>, %arg34: memref<2x1x32xf32, #tpu.memory_space<vmem>>, %arg35: memref<2x1x32xf32, #tpu.memory_space<vmem>>, %arg36: memref<2x1x32xf32, #tpu.memory_space<vmem>>, %arg37: memref<2x32x64xf32, #tpu.memory_space<vmem>>, %arg38: memref<2x1x64xf32, #tpu.memory_space<vmem>>, %arg39: memref<2x64x32xf32, #tpu.memory_space<vmem>>, %arg40: memref<2x1x32xf32, #tpu.memory_space<vmem>>, %arg41: memref<2x1x32xf32, #tpu.memory_space<vmem>>, %arg42: memref<2x1x32xf32, #tpu.memory_space<vmem>>, %arg43: memref<1x32xf32, #tpu.memory_space<vmem>>, %arg44: memref<1x32xf32, #tpu.memory_space<vmem>>, %arg45: memref<32x4xf32, #tpu.memory_space<vmem>>, %arg46: memref<1x4xf32, #tpu.memory_space<vmem>>, %arg47: memref<1x6x4xf32, #tpu.memory_space<vmem>>) attributes {dimension_semantics = [#tpu.dimension_semantics<parallel>], iteration_bounds = array<i64: 2>, scalar_prefetch = 0 : i64, scratch_operands = 0 : i64, tpu.core_type = #tpu.core_type<tc>, window_params = [{transform_indices = @transform_0, window_bounds = array<i64: 1, 8, 4>}, {transform_indices = @transform_1, window_bounds = array<i64: 1, 6, 2>}, {pipeline_mode = #tpu.pipeline_mode<synchronous>, transform_indices = @transform_2, window_bounds = array<i64: 4, 32>}, {pipeline_mode = #tpu.pipeline_mode<synchronous>, transform_indices = @transform_3, window_bounds = array<i64: 1, 32>}, {pipeline_mode = #tpu.pipeline_mode<synchronous>, transform_indices = @transform_4, window_bounds = array<i64: 8, 32>}, {pipeline_mode = #tpu.pipeline_mode<synchronous>, transform_indices = @transform_5, window_bounds = array<i64: 2, 32>}, {pipeline_mode = #tpu.pipeline_mode<synchronous>, transform_indices = @transform_6, window_bounds = array<i64: 1, 32>}, {pipeline_mode = #tpu.pipeline_mode<synchronous>, transform_indices = @transform_7, window_bounds = array<i64: 6, 32>}, {pipeline_mode = #tpu.pipeline_mode<synchronous>, transform_indices = @transform_8, window_bounds = array<i64: 2, 32, 96>}, {pipeline_mode = #tpu.pipeline_mode<synchronous>, transform_indices = @transform_9, window_bounds = array<i64: 2, 1, 96>}, {pipeline_mode = #tpu.pipeline_mode<synchronous>, transform_indices = @transform_10, window_bounds = array<i64: 2, 32, 32>}, {pipeline_mode = #tpu.pipeline_mode<synchronous>, transform_indices = @transform_11, window_bounds = array<i64: 2, 1, 32>}, {pipeline_mode = #tpu.pipeline_mode<synchronous>, transform_indices = @transform_12, window_bounds = array<i64: 2, 1, 32>}, {pipeline_mode = #tpu.pipeline_mode<synchronous>, transform_indices = @transform_13, window_bounds = array<i64: 2, 1, 32>}, {pipeline_mode = #tpu.pipeline_mode<synchronous>, transform_indices = @transform_14, window_bounds = array<i64: 2, 32, 64>}, {pipeline_mode = #tpu.pipeline_mode<synchronous>, transform_indices = @transform_15, window_bounds = array<i64: 2, 1, 64>}, {pipeline_mode = #tpu.pipeline_mode<synchronous>, transform_indices = @transform_16, window_bounds = array<i64: 2, 64, 32>}, {pipeline_mode = #tpu.pipeline_mode<synchronous>, transform_indices = @transform_17, window_bounds = array<i64: 2, 1, 32>}, {pipeline_mode = #tpu.pipeline_mode<synchronous>, transform_indices = @transform_18, window_bounds = array<i64: 2, 1, 32>}, {pipeline_mode = #tpu.pipeline_mode<synchronous>, transform_indices = @transform_19, window_bounds = array<i64: 2, 1, 32>}, {pipeline_mode = #tpu.pipeline_mode<synchronous>, transform_indices = @transform_20, window_bounds = array<i64: 1, 32>}, {pipeline_mode = #tpu.pipeline_mode<synchronous>, transform_indices = @transform_21, window_bounds = array<i64: 1, 32>}, {pipeline_mode = #tpu.pipeline_mode<synchronous>, transform_indices = @transform_22, window_bounds = array<i64: 2, 32, 96>}, {pipeline_mode = #tpu.pipeline_mode<synchronous>, transform_indices = @transform_23, window_bounds = array<i64: 2, 1, 96>}, {pipeline_mode = #tpu.pipeline_mode<synchronous>, transform_indices = @transform_24, window_bounds = array<i64: 2, 32, 32>}, {pipeline_mode = #tpu.pipeline_mode<synchronous>, transform_indices = @transform_25, window_bounds = array<i64: 2, 1, 32>}, {pipeline_mode = #tpu.pipeline_mode<synchronous>, transform_indices = @transform_26, window_bounds = array<i64: 2, 1, 32>}, {pipeline_mode = #tpu.pipeline_mode<synchronous>, transform_indices = @transform_27, window_bounds = array<i64: 2, 1, 32>}, {pipeline_mode = #tpu.pipeline_mode<synchronous>, transform_indices = @transform_28, window_bounds = array<i64: 2, 32, 32>}, {pipeline_mode = #tpu.pipeline_mode<synchronous>, transform_indices = @transform_29, window_bounds = array<i64: 2, 1, 32>}, {pipeline_mode = #tpu.pipeline_mode<synchronous>, transform_indices = @transform_30, window_bounds = array<i64: 2, 32, 64>}, {pipeline_mode = #tpu.pipeline_mode<synchronous>, transform_indices = @transform_31, window_bounds = array<i64: 2, 1, 64>}, {pipeline_mode = #tpu.pipeline_mode<synchronous>, transform_indices = @transform_32, window_bounds = array<i64: 2, 32, 32>}, {pipeline_mode = #tpu.pipeline_mode<synchronous>, transform_indices = @transform_33, window_bounds = array<i64: 2, 1, 32>}, {pipeline_mode = #tpu.pipeline_mode<synchronous>, transform_indices = @transform_34, window_bounds = array<i64: 2, 1, 32>}, {pipeline_mode = #tpu.pipeline_mode<synchronous>, transform_indices = @transform_35, window_bounds = array<i64: 2, 1, 32>}, {pipeline_mode = #tpu.pipeline_mode<synchronous>, transform_indices = @transform_36, window_bounds = array<i64: 2, 32, 64>}, {pipeline_mode = #tpu.pipeline_mode<synchronous>, transform_indices = @transform_37, window_bounds = array<i64: 2, 1, 64>}, {pipeline_mode = #tpu.pipeline_mode<synchronous>, transform_indices = @transform_38, window_bounds = array<i64: 2, 64, 32>}, {pipeline_mode = #tpu.pipeline_mode<synchronous>, transform_indices = @transform_39, window_bounds = array<i64: 2, 1, 32>}, {pipeline_mode = #tpu.pipeline_mode<synchronous>, transform_indices = @transform_40, window_bounds = array<i64: 2, 1, 32>}, {pipeline_mode = #tpu.pipeline_mode<synchronous>, transform_indices = @transform_41, window_bounds = array<i64: 2, 1, 32>}, {pipeline_mode = #tpu.pipeline_mode<synchronous>, transform_indices = @transform_42, window_bounds = array<i64: 1, 32>}, {pipeline_mode = #tpu.pipeline_mode<synchronous>, transform_indices = @transform_43, window_bounds = array<i64: 1, 32>}, {pipeline_mode = #tpu.pipeline_mode<synchronous>, transform_indices = @transform_44, window_bounds = array<i64: 32, 4>}, {pipeline_mode = #tpu.pipeline_mode<synchronous>, transform_indices = @transform_45, window_bounds = array<i64: 1, 4>}, {transform_indices = @transform_46, window_bounds = array<i64: 1, 6, 4>}]} {
    %c0 = arith.constant 0 : index
    %c0_0 = arith.constant 0 : index
    %c0_1 = arith.constant 0 : index
    %0 = vector.load %arg1[%c0, %c0_0, %c0_1] : memref<1x8x4xf32, #tpu.memory_space<vmem>>, vector<1x8x4xf32>
    %1 = vector.shape_cast %0 : vector<1x8x4xf32> to vector<8x4xf32>
    %c0_2 = arith.constant 0 : index
    %c0_3 = arith.constant 0 : index
    %2 = vector.load %arg3[%c0_2, %c0_3] : memref<4x32xf32, #tpu.memory_space<vmem>>, vector<4x32xf32>
    %c0_4 = arith.constant 0 : index
    %c0_5 = arith.constant 0 : index
    %3 = vector.load %arg4[%c0_4, %c0_5] : memref<1x32xf32, #tpu.memory_space<vmem>>, vector<1x32xf32>
    %4 = arith.truncf %1 : vector<8x4xf32> to vector<8x4xbf16>
    %5 = arith.truncf %2 : vector<4x32xf32> to vector<4x32xbf16>
    %cst = arith.constant dense<0.000000e+00> : vector<8x32xf32>
    %6 = tpu.matmul %4, %5, %cst {dimension_numbers = #tpu.dot_dimension_numbers<[1], [0], [0], [1], [0, 0, 1, 1], [], []>} : vector<8x4xbf16>, vector<4x32xbf16>, vector<8x32xf32> -> vector<8x32xf32>
    %7 = vector.broadcast %3 : vector<1x32xf32> to vector<8x32xf32>
    %8 = arith.addf %6, %7 : vector<8x32xf32>
    %cst_6 = arith.constant 5.65685415 : f32
    %9 = vector.broadcast %cst_6 : f32 to vector<8x32xf32>
    %10 = arith.mulf %8, %9 : vector<8x32xf32>
    %c0_7 = arith.constant 0 : index
    %c0_8 = arith.constant 0 : index
    %11 = vector.load %arg5[%c0_7, %c0_8] : memref<8x32xf32, #tpu.memory_space<vmem>>, vector<8x32xf32>
    %12 = arith.addf %10, %11 : vector<8x32xf32>
    %c0_9 = arith.constant 0 : index
    %c0_10 = arith.constant 0 : index
    %c0_11 = arith.constant 0 : index
    %13 = vector.load %arg9[%c0_9, %c0_10, %c0_11] : memref<2x32x96xf32, #tpu.memory_space<vmem>>, vector<1x32x96xf32>
    %14 = vector.shape_cast %13 : vector<1x32x96xf32> to vector<32x96xf32>
    %c0_12 = arith.constant 0 : index
    %c0_13 = arith.constant 0 : index
    %c0_14 = arith.constant 0 : index
    %15 = vector.load %arg10[%c0_12, %c0_13, %c0_14] : memref<2x1x96xf32, #tpu.memory_space<vmem>>, vector<1x1x96xf32>
    %16 = vector.shape_cast %15 : vector<1x1x96xf32> to vector<1x96xf32>
    %c0_15 = arith.constant 0 : index
    %c0_16 = arith.constant 0 : index
    %c0_17 = arith.constant 0 : index
    %17 = vector.load %arg11[%c0_15, %c0_16, %c0_17] : memref<2x32x32xf32, #tpu.memory_space<vmem>>, vector<1x32x32xf32>
    %18 = vector.shape_cast %17 : vector<1x32x32xf32> to vector<32x32xf32>
    %c0_18 = arith.constant 0 : index
    %c0_19 = arith.constant 0 : index
    %c0_20 = arith.constant 0 : index
    %19 = vector.load %arg12[%c0_18, %c0_19, %c0_20] : memref<2x1x32xf32, #tpu.memory_space<vmem>>, vector<1x1x32xf32>
    %20 = vector.shape_cast %19 : vector<1x1x32xf32> to vector<1x32xf32>
    %c0_21 = arith.constant 0 : index
    %c0_22 = arith.constant 0 : index
    %c0_23 = arith.constant 0 : index
    %21 = vector.load %arg13[%c0_21, %c0_22, %c0_23] : memref<2x1x32xf32, #tpu.memory_space<vmem>>, vector<1x1x32xf32>
    %22 = vector.shape_cast %21 : vector<1x1x32xf32> to vector<1x32xf32>
    %c0_24 = arith.constant 0 : index
    %c0_25 = arith.constant 0 : index
    %c0_26 = arith.constant 0 : index
    %23 = vector.load %arg14[%c0_24, %c0_25, %c0_26] : memref<2x1x32xf32, #tpu.memory_space<vmem>>, vector<1x1x32xf32>
    %24 = vector.shape_cast %23 : vector<1x1x32xf32> to vector<1x32xf32>
    %c0_27 = arith.constant 0 : index
    %c0_28 = arith.constant 0 : index
    %c0_29 = arith.constant 0 : index
    %25 = vector.load %arg15[%c0_27, %c0_28, %c0_29] : memref<2x32x64xf32, #tpu.memory_space<vmem>>, vector<1x32x64xf32>
    %26 = vector.shape_cast %25 : vector<1x32x64xf32> to vector<32x64xf32>
    %c0_30 = arith.constant 0 : index
    %c0_31 = arith.constant 0 : index
    %c0_32 = arith.constant 0 : index
    %27 = vector.load %arg16[%c0_30, %c0_31, %c0_32] : memref<2x1x64xf32, #tpu.memory_space<vmem>>, vector<1x1x64xf32>
    %28 = vector.shape_cast %27 : vector<1x1x64xf32> to vector<1x64xf32>
    %c0_33 = arith.constant 0 : index
    %c0_34 = arith.constant 0 : index
    %c0_35 = arith.constant 0 : index
    %29 = vector.load %arg17[%c0_33, %c0_34, %c0_35] : memref<2x64x32xf32, #tpu.memory_space<vmem>>, vector<1x64x32xf32>
    %30 = vector.shape_cast %29 : vector<1x64x32xf32> to vector<64x32xf32>
    %c0_36 = arith.constant 0 : index
    %c0_37 = arith.constant 0 : index
    %c0_38 = arith.constant 0 : index
    %31 = vector.load %arg18[%c0_36, %c0_37, %c0_38] : memref<2x1x32xf32, #tpu.memory_space<vmem>>, vector<1x1x32xf32>
    %32 = vector.shape_cast %31 : vector<1x1x32xf32> to vector<1x32xf32>
    %c0_39 = arith.constant 0 : index
    %c0_40 = arith.constant 0 : index
    %c0_41 = arith.constant 0 : index
    %33 = vector.load %arg19[%c0_39, %c0_40, %c0_41] : memref<2x1x32xf32, #tpu.memory_space<vmem>>, vector<1x1x32xf32>
    %34 = vector.shape_cast %33 : vector<1x1x32xf32> to vector<1x32xf32>
    %c0_42 = arith.constant 0 : index
    %c0_43 = arith.constant 0 : index
    %c0_44 = arith.constant 0 : index
    %35 = vector.load %arg20[%c0_42, %c0_43, %c0_44] : memref<2x1x32xf32, #tpu.memory_space<vmem>>, vector<1x1x32xf32>
    %36 = vector.shape_cast %35 : vector<1x1x32xf32> to vector<1x32xf32>
    %37 = arith.truncf %12 : vector<8x32xf32> to vector<8x32xbf16>
    %38 = arith.truncf %14 : vector<32x96xf32> to vector<32x96xbf16>
    %cst_45 = arith.constant dense<0.000000e+00> : vector<8x96xf32>
    %39 = tpu.matmul %37, %38, %cst_45 {dimension_numbers = #tpu.dot_dimension_numbers<[1], [0], [0], [1], [0, 0, 1, 1], [], []>} : vector<8x32xbf16>, vector<32x96xbf16>, vector<8x96xf32> -> vector<8x96xf32>
    %40 = vector.broadcast %16 : vector<1x96xf32> to vector<8x96xf32>
    %41 = arith.addf %39, %40 : vector<8x96xf32>
    %42 = vector.extract_strided_slice %41 {offsets = [0, 0], sizes = [8, 32], strides = [1, 1]} : vector<8x96xf32> to vector<8x32xf32>
    %43 = vector.extract_strided_slice %41 {offsets = [0, 32], sizes = [8, 32], strides = [1, 1]} : vector<8x96xf32> to vector<8x32xf32>
    %44 = vector.extract_strided_slice %41 {offsets = [0, 64], sizes = [8, 32], strides = [1, 1]} : vector<8x96xf32> to vector<8x32xf32>
    %45 = vector.extract_strided_slice %42 {offsets = [0, 0], sizes = [8, 8], strides = [1, 1]} : vector<8x32xf32> to vector<8x8xf32>
    %46 = arith.truncf %45 : vector<8x8xf32> to vector<8x8xbf16>
    %47 = vector.extract_strided_slice %43 {offsets = [0, 0], sizes = [8, 8], strides = [1, 1]} : vector<8x32xf32> to vector<8x8xf32>
    %48 = arith.truncf %47 : vector<8x8xf32> to vector<8x8xbf16>
    %49 = vector.extract_strided_slice %44 {offsets = [0, 0], sizes = [8, 8], strides = [1, 1]} : vector<8x32xf32> to vector<8x8xf32>
    %50 = arith.truncf %49 : vector<8x8xf32> to vector<8x8xbf16>
    %cst_46 = arith.constant dense<0.000000e+00> : vector<8x8xf32>
    %51 = tpu.matmul %46, %48, %cst_46 {dimension_numbers = #tpu.dot_dimension_numbers<[1], [1], [0], [0], [0, 0, 1, 0], [], []>} : vector<8x8xbf16>, vector<8x8xbf16>, vector<8x8xf32> -> vector<8x8xf32>
    %cst_47 = arith.constant 0.353553385 : f32
    %52 = vector.broadcast %cst_47 : f32 to vector<8x8xf32>
    %53 = arith.mulf %51, %52 : vector<8x8xf32>
    %cst_48 = arith.constant dense<0xFF800000> : vector<8xf32>
    %54 = vector.multi_reduction <maximumf>, %53, %cst_48 [1] : vector<8x8xf32> to vector<8xf32>
    %55 = vector.shape_cast %54 : vector<8xf32> to vector<8x1xf32>
    %56 = vector.broadcast %55 : vector<8x1xf32> to vector<8x8xf32>
    %57 = arith.subf %53, %56 : vector<8x8xf32>
    %58 = math.exp %57 : vector<8x8xf32>
    %cst_49 = arith.constant dense<0.000000e+00> : vector<8xf32>
    %59 = vector.multi_reduction <add>, %58, %cst_49 [1] : vector<8x8xf32> to vector<8xf32>
    %60 = vector.shape_cast %59 : vector<8xf32> to vector<8x1xf32>
    %61 = tpu.reciprocal %60 {approx = true} : vector<8x1xf32> -> vector<8x1xf32>
    %62 = vector.broadcast %61 : vector<8x1xf32> to vector<8x8xf32>
    %63 = arith.mulf %58, %62 : vector<8x8xf32>
    %64 = arith.truncf %63 : vector<8x8xf32> to vector<8x8xbf16>
    %cst_50 = arith.constant dense<0.000000e+00> : vector<8x8xf32>
    %65 = tpu.matmul %64, %50, %cst_50 {dimension_numbers = #tpu.dot_dimension_numbers<[1], [0], [0], [1], [0, 0, 1, 1], [], []>} : vector<8x8xbf16>, vector<8x8xbf16>, vector<8x8xf32> -> vector<8x8xf32>
    %66 = arith.truncf %65 : vector<8x8xf32> to vector<8x8xbf16>
    %67 = vector.extract_strided_slice %18 {offsets = [0, 0], sizes = [8, 32], strides = [1, 1]} : vector<32x32xf32> to vector<8x32xf32>
    %68 = arith.truncf %67 : vector<8x32xf32> to vector<8x32xbf16>
    %cst_51 = arith.constant dense<0.000000e+00> : vector<8x32xf32>
    %69 = tpu.matmul %66, %68, %cst_51 {dimension_numbers = #tpu.dot_dimension_numbers<[1], [0], [0], [1], [0, 0, 1, 1], [], []>} : vector<8x8xbf16>, vector<8x32xbf16>, vector<8x32xf32> -> vector<8x32xf32>
    %70 = vector.extract_strided_slice %42 {offsets = [0, 8], sizes = [8, 8], strides = [1, 1]} : vector<8x32xf32> to vector<8x8xf32>
    %71 = arith.truncf %70 : vector<8x8xf32> to vector<8x8xbf16>
    %72 = vector.extract_strided_slice %43 {offsets = [0, 8], sizes = [8, 8], strides = [1, 1]} : vector<8x32xf32> to vector<8x8xf32>
    %73 = arith.truncf %72 : vector<8x8xf32> to vector<8x8xbf16>
    %74 = vector.extract_strided_slice %44 {offsets = [0, 8], sizes = [8, 8], strides = [1, 1]} : vector<8x32xf32> to vector<8x8xf32>
    %75 = arith.truncf %74 : vector<8x8xf32> to vector<8x8xbf16>
    %cst_52 = arith.constant dense<0.000000e+00> : vector<8x8xf32>
    %76 = tpu.matmul %71, %73, %cst_52 {dimension_numbers = #tpu.dot_dimension_numbers<[1], [1], [0], [0], [0, 0, 1, 0], [], []>} : vector<8x8xbf16>, vector<8x8xbf16>, vector<8x8xf32> -> vector<8x8xf32>
    %cst_53 = arith.constant 0.353553385 : f32
    %77 = vector.broadcast %cst_53 : f32 to vector<8x8xf32>
    %78 = arith.mulf %76, %77 : vector<8x8xf32>
    %cst_54 = arith.constant dense<0xFF800000> : vector<8xf32>
    %79 = vector.multi_reduction <maximumf>, %78, %cst_54 [1] : vector<8x8xf32> to vector<8xf32>
    %80 = vector.shape_cast %79 : vector<8xf32> to vector<8x1xf32>
    %81 = vector.broadcast %80 : vector<8x1xf32> to vector<8x8xf32>
    %82 = arith.subf %78, %81 : vector<8x8xf32>
    %83 = math.exp %82 : vector<8x8xf32>
    %cst_55 = arith.constant dense<0.000000e+00> : vector<8xf32>
    %84 = vector.multi_reduction <add>, %83, %cst_55 [1] : vector<8x8xf32> to vector<8xf32>
    %85 = vector.shape_cast %84 : vector<8xf32> to vector<8x1xf32>
    %86 = tpu.reciprocal %85 {approx = true} : vector<8x1xf32> -> vector<8x1xf32>
    %87 = vector.broadcast %86 : vector<8x1xf32> to vector<8x8xf32>
    %88 = arith.mulf %83, %87 : vector<8x8xf32>
    %89 = arith.truncf %88 : vector<8x8xf32> to vector<8x8xbf16>
    %cst_56 = arith.constant dense<0.000000e+00> : vector<8x8xf32>
    %90 = tpu.matmul %89, %75, %cst_56 {dimension_numbers = #tpu.dot_dimension_numbers<[1], [0], [0], [1], [0, 0, 1, 1], [], []>} : vector<8x8xbf16>, vector<8x8xbf16>, vector<8x8xf32> -> vector<8x8xf32>
    %91 = arith.truncf %90 : vector<8x8xf32> to vector<8x8xbf16>
    %92 = vector.extract_strided_slice %18 {offsets = [8, 0], sizes = [8, 32], strides = [1, 1]} : vector<32x32xf32> to vector<8x32xf32>
    %93 = arith.truncf %92 : vector<8x32xf32> to vector<8x32xbf16>
    %cst_57 = arith.constant dense<0.000000e+00> : vector<8x32xf32>
    %94 = tpu.matmul %91, %93, %cst_57 {dimension_numbers = #tpu.dot_dimension_numbers<[1], [0], [0], [1], [0, 0, 1, 1], [], []>} : vector<8x8xbf16>, vector<8x32xbf16>, vector<8x32xf32> -> vector<8x32xf32>
    %95 = arith.addf %69, %94 : vector<8x32xf32>
    %96 = vector.extract_strided_slice %42 {offsets = [0, 16], sizes = [8, 8], strides = [1, 1]} : vector<8x32xf32> to vector<8x8xf32>
    %97 = arith.truncf %96 : vector<8x8xf32> to vector<8x8xbf16>
    %98 = vector.extract_strided_slice %43 {offsets = [0, 16], sizes = [8, 8], strides = [1, 1]} : vector<8x32xf32> to vector<8x8xf32>
    %99 = arith.truncf %98 : vector<8x8xf32> to vector<8x8xbf16>
    %100 = vector.extract_strided_slice %44 {offsets = [0, 16], sizes = [8, 8], strides = [1, 1]} : vector<8x32xf32> to vector<8x8xf32>
    %101 = arith.truncf %100 : vector<8x8xf32> to vector<8x8xbf16>
    %cst_58 = arith.constant dense<0.000000e+00> : vector<8x8xf32>
    %102 = tpu.matmul %97, %99, %cst_58 {dimension_numbers = #tpu.dot_dimension_numbers<[1], [1], [0], [0], [0, 0, 1, 0], [], []>} : vector<8x8xbf16>, vector<8x8xbf16>, vector<8x8xf32> -> vector<8x8xf32>
    %cst_59 = arith.constant 0.353553385 : f32
    %103 = vector.broadcast %cst_59 : f32 to vector<8x8xf32>
    %104 = arith.mulf %102, %103 : vector<8x8xf32>
    %cst_60 = arith.constant dense<0xFF800000> : vector<8xf32>
    %105 = vector.multi_reduction <maximumf>, %104, %cst_60 [1] : vector<8x8xf32> to vector<8xf32>
    %106 = vector.shape_cast %105 : vector<8xf32> to vector<8x1xf32>
    %107 = vector.broadcast %106 : vector<8x1xf32> to vector<8x8xf32>
    %108 = arith.subf %104, %107 : vector<8x8xf32>
    %109 = math.exp %108 : vector<8x8xf32>
    %cst_61 = arith.constant dense<0.000000e+00> : vector<8xf32>
    %110 = vector.multi_reduction <add>, %109, %cst_61 [1] : vector<8x8xf32> to vector<8xf32>
    %111 = vector.shape_cast %110 : vector<8xf32> to vector<8x1xf32>
    %112 = tpu.reciprocal %111 {approx = true} : vector<8x1xf32> -> vector<8x1xf32>
    %113 = vector.broadcast %112 : vector<8x1xf32> to vector<8x8xf32>
    %114 = arith.mulf %109, %113 : vector<8x8xf32>
    %115 = arith.truncf %114 : vector<8x8xf32> to vector<8x8xbf16>
    %cst_62 = arith.constant dense<0.000000e+00> : vector<8x8xf32>
    %116 = tpu.matmul %115, %101, %cst_62 {dimension_numbers = #tpu.dot_dimension_numbers<[1], [0], [0], [1], [0, 0, 1, 1], [], []>} : vector<8x8xbf16>, vector<8x8xbf16>, vector<8x8xf32> -> vector<8x8xf32>
    %117 = arith.truncf %116 : vector<8x8xf32> to vector<8x8xbf16>
    %118 = vector.extract_strided_slice %18 {offsets = [16, 0], sizes = [8, 32], strides = [1, 1]} : vector<32x32xf32> to vector<8x32xf32>
    %119 = arith.truncf %118 : vector<8x32xf32> to vector<8x32xbf16>
    %cst_63 = arith.constant dense<0.000000e+00> : vector<8x32xf32>
    %120 = tpu.matmul %117, %119, %cst_63 {dimension_numbers = #tpu.dot_dimension_numbers<[1], [0], [0], [1], [0, 0, 1, 1], [], []>} : vector<8x8xbf16>, vector<8x32xbf16>, vector<8x32xf32> -> vector<8x32xf32>
    %121 = arith.addf %95, %120 : vector<8x32xf32>
    %122 = vector.extract_strided_slice %42 {offsets = [0, 24], sizes = [8, 8], strides = [1, 1]} : vector<8x32xf32> to vector<8x8xf32>
    %123 = arith.truncf %122 : vector<8x8xf32> to vector<8x8xbf16>
    %124 = vector.extract_strided_slice %43 {offsets = [0, 24], sizes = [8, 8], strides = [1, 1]} : vector<8x32xf32> to vector<8x8xf32>
    %125 = arith.truncf %124 : vector<8x8xf32> to vector<8x8xbf16>
    %126 = vector.extract_strided_slice %44 {offsets = [0, 24], sizes = [8, 8], strides = [1, 1]} : vector<8x32xf32> to vector<8x8xf32>
    %127 = arith.truncf %126 : vector<8x8xf32> to vector<8x8xbf16>
    %cst_64 = arith.constant dense<0.000000e+00> : vector<8x8xf32>
    %128 = tpu.matmul %123, %125, %cst_64 {dimension_numbers = #tpu.dot_dimension_numbers<[1], [1], [0], [0], [0, 0, 1, 0], [], []>} : vector<8x8xbf16>, vector<8x8xbf16>, vector<8x8xf32> -> vector<8x8xf32>
    %cst_65 = arith.constant 0.353553385 : f32
    %129 = vector.broadcast %cst_65 : f32 to vector<8x8xf32>
    %130 = arith.mulf %128, %129 : vector<8x8xf32>
    %cst_66 = arith.constant dense<0xFF800000> : vector<8xf32>
    %131 = vector.multi_reduction <maximumf>, %130, %cst_66 [1] : vector<8x8xf32> to vector<8xf32>
    %132 = vector.shape_cast %131 : vector<8xf32> to vector<8x1xf32>
    %133 = vector.broadcast %132 : vector<8x1xf32> to vector<8x8xf32>
    %134 = arith.subf %130, %133 : vector<8x8xf32>
    %135 = math.exp %134 : vector<8x8xf32>
    %cst_67 = arith.constant dense<0.000000e+00> : vector<8xf32>
    %136 = vector.multi_reduction <add>, %135, %cst_67 [1] : vector<8x8xf32> to vector<8xf32>
    %137 = vector.shape_cast %136 : vector<8xf32> to vector<8x1xf32>
    %138 = tpu.reciprocal %137 {approx = true} : vector<8x1xf32> -> vector<8x1xf32>
    %139 = vector.broadcast %138 : vector<8x1xf32> to vector<8x8xf32>
    %140 = arith.mulf %135, %139 : vector<8x8xf32>
    %141 = arith.truncf %140 : vector<8x8xf32> to vector<8x8xbf16>
    %cst_68 = arith.constant dense<0.000000e+00> : vector<8x8xf32>
    %142 = tpu.matmul %141, %127, %cst_68 {dimension_numbers = #tpu.dot_dimension_numbers<[1], [0], [0], [1], [0, 0, 1, 1], [], []>} : vector<8x8xbf16>, vector<8x8xbf16>, vector<8x8xf32> -> vector<8x8xf32>
    %143 = arith.truncf %142 : vector<8x8xf32> to vector<8x8xbf16>
    %144 = vector.extract_strided_slice %18 {offsets = [24, 0], sizes = [8, 32], strides = [1, 1]} : vector<32x32xf32> to vector<8x32xf32>
    %145 = arith.truncf %144 : vector<8x32xf32> to vector<8x32xbf16>
    %cst_69 = arith.constant dense<0.000000e+00> : vector<8x32xf32>
    %146 = tpu.matmul %143, %145, %cst_69 {dimension_numbers = #tpu.dot_dimension_numbers<[1], [0], [0], [1], [0, 0, 1, 1], [], []>} : vector<8x8xbf16>, vector<8x32xbf16>, vector<8x32xf32> -> vector<8x32xf32>
    %147 = arith.addf %121, %146 : vector<8x32xf32>
    %148 = vector.broadcast %20 : vector<1x32xf32> to vector<8x32xf32>
    %149 = arith.addf %147, %148 : vector<8x32xf32>
    %150 = arith.addf %12, %149 : vector<8x32xf32>
    %cst_70 = arith.constant dense<0.000000e+00> : vector<8xf32>
    %151 = vector.multi_reduction <add>, %150, %cst_70 [1] : vector<8x32xf32> to vector<8xf32>
    %152 = vector.shape_cast %151 : vector<8xf32> to vector<8x1xf32>
    %cst_71 = arith.constant 3.200000e+01 : f32
    %153 = vector.broadcast %cst_71 : f32 to vector<8x1xf32>
    %154 = arith.divf %152, %153 : vector<8x1xf32>
    %155 = vector.broadcast %154 : vector<8x1xf32> to vector<8x32xf32>
    %156 = arith.subf %150, %155 : vector<8x32xf32>
    %157 = arith.mulf %156, %156 : vector<8x32xf32>
    %cst_72 = arith.constant dense<0.000000e+00> : vector<8xf32>
    %158 = vector.multi_reduction <add>, %157, %cst_72 [1] : vector<8x32xf32> to vector<8xf32>
    %159 = vector.shape_cast %158 : vector<8xf32> to vector<8x1xf32>
    %cst_73 = arith.constant 3.200000e+01 : f32
    %160 = vector.broadcast %cst_73 : f32 to vector<8x1xf32>
    %161 = arith.divf %159, %160 : vector<8x1xf32>
    %cst_74 = arith.constant 9.99999974E-6 : f32
    %162 = vector.broadcast %cst_74 : f32 to vector<8x1xf32>
    %163 = arith.addf %161, %162 : vector<8x1xf32>
    %164 = math.rsqrt %163 : vector<8x1xf32>
    %165 = vector.broadcast %164 : vector<8x1xf32> to vector<8x32xf32>
    %166 = arith.mulf %156, %165 : vector<8x32xf32>
    %167 = vector.broadcast %22 : vector<1x32xf32> to vector<8x32xf32>
    %168 = arith.mulf %166, %167 : vector<8x32xf32>
    %169 = vector.broadcast %24 : vector<1x32xf32> to vector<8x32xf32>
    %170 = arith.addf %168, %169 : vector<8x32xf32>
    %171 = arith.truncf %170 : vector<8x32xf32> to vector<8x32xbf16>
    %172 = arith.truncf %26 : vector<32x64xf32> to vector<32x64xbf16>
    %cst_75 = arith.constant dense<0.000000e+00> : vector<8x64xf32>
    %173 = tpu.matmul %171, %172, %cst_75 {dimension_numbers = #tpu.dot_dimension_numbers<[1], [0], [0], [1], [0, 0, 1, 1], [], []>} : vector<8x32xbf16>, vector<32x64xbf16>, vector<8x64xf32> -> vector<8x64xf32>
    %174 = vector.broadcast %28 : vector<1x64xf32> to vector<8x64xf32>
    %175 = arith.addf %173, %174 : vector<8x64xf32>
    %cst_76 = arith.constant 0.000000e+00 : f32
    %176 = vector.broadcast %cst_76 : f32 to vector<8x64xf32>
    %177 = arith.maximumf %175, %176 : vector<8x64xf32>
    %178 = arith.truncf %177 : vector<8x64xf32> to vector<8x64xbf16>
    %179 = arith.truncf %30 : vector<64x32xf32> to vector<64x32xbf16>
    %cst_77 = arith.constant dense<0.000000e+00> : vector<8x32xf32>
    %180 = tpu.matmul %178, %179, %cst_77 {dimension_numbers = #tpu.dot_dimension_numbers<[1], [0], [0], [1], [0, 0, 1, 1], [], []>} : vector<8x64xbf16>, vector<64x32xbf16>, vector<8x32xf32> -> vector<8x32xf32>
    %181 = vector.broadcast %32 : vector<1x32xf32> to vector<8x32xf32>
    %182 = arith.addf %180, %181 : vector<8x32xf32>
    %183 = arith.addf %170, %182 : vector<8x32xf32>
    %cst_78 = arith.constant dense<0.000000e+00> : vector<8xf32>
    %184 = vector.multi_reduction <add>, %183, %cst_78 [1] : vector<8x32xf32> to vector<8xf32>
    %185 = vector.shape_cast %184 : vector<8xf32> to vector<8x1xf32>
    %cst_79 = arith.constant 3.200000e+01 : f32
    %186 = vector.broadcast %cst_79 : f32 to vector<8x1xf32>
    %187 = arith.divf %185, %186 : vector<8x1xf32>
    %188 = vector.broadcast %187 : vector<8x1xf32> to vector<8x32xf32>
    %189 = arith.subf %183, %188 : vector<8x32xf32>
    %190 = arith.mulf %189, %189 : vector<8x32xf32>
    %cst_80 = arith.constant dense<0.000000e+00> : vector<8xf32>
    %191 = vector.multi_reduction <add>, %190, %cst_80 [1] : vector<8x32xf32> to vector<8xf32>
    %192 = vector.shape_cast %191 : vector<8xf32> to vector<8x1xf32>
    %cst_81 = arith.constant 3.200000e+01 : f32
    %193 = vector.broadcast %cst_81 : f32 to vector<8x1xf32>
    %194 = arith.divf %192, %193 : vector<8x1xf32>
    %cst_82 = arith.constant 9.99999974E-6 : f32
    %195 = vector.broadcast %cst_82 : f32 to vector<8x1xf32>
    %196 = arith.addf %194, %195 : vector<8x1xf32>
    %197 = math.rsqrt %196 : vector<8x1xf32>
    %198 = vector.broadcast %197 : vector<8x1xf32> to vector<8x32xf32>
    %199 = arith.mulf %189, %198 : vector<8x32xf32>
    %200 = vector.broadcast %34 : vector<1x32xf32> to vector<8x32xf32>
    %201 = arith.mulf %199, %200 : vector<8x32xf32>
    %202 = vector.broadcast %36 : vector<1x32xf32> to vector<8x32xf32>
    %203 = arith.addf %201, %202 : vector<8x32xf32>
    %c1 = arith.constant 1 : index
    %c0_83 = arith.constant 0 : index
    %c0_84 = arith.constant 0 : index
    %204 = vector.load %arg9[%c1, %c0_83, %c0_84] : memref<2x32x96xf32, #tpu.memory_space<vmem>>, vector<1x32x96xf32>
    %205 = vector.shape_cast %204 : vector<1x32x96xf32> to vector<32x96xf32>
    %c1_85 = arith.constant 1 : index
    %c0_86 = arith.constant 0 : index
    %c0_87 = arith.constant 0 : index
    %206 = vector.load %arg10[%c1_85, %c0_86, %c0_87] : memref<2x1x96xf32, #tpu.memory_space<vmem>>, vector<1x1x96xf32>
    %207 = vector.shape_cast %206 : vector<1x1x96xf32> to vector<1x96xf32>
    %c1_88 = arith.constant 1 : index
    %c0_89 = arith.constant 0 : index
    %c0_90 = arith.constant 0 : index
    %208 = vector.load %arg11[%c1_88, %c0_89, %c0_90] : memref<2x32x32xf32, #tpu.memory_space<vmem>>, vector<1x32x32xf32>
    %209 = vector.shape_cast %208 : vector<1x32x32xf32> to vector<32x32xf32>
    %c1_91 = arith.constant 1 : index
    %c0_92 = arith.constant 0 : index
    %c0_93 = arith.constant 0 : index
    %210 = vector.load %arg12[%c1_91, %c0_92, %c0_93] : memref<2x1x32xf32, #tpu.memory_space<vmem>>, vector<1x1x32xf32>
    %211 = vector.shape_cast %210 : vector<1x1x32xf32> to vector<1x32xf32>
    %c1_94 = arith.constant 1 : index
    %c0_95 = arith.constant 0 : index
    %c0_96 = arith.constant 0 : index
    %212 = vector.load %arg13[%c1_94, %c0_95, %c0_96] : memref<2x1x32xf32, #tpu.memory_space<vmem>>, vector<1x1x32xf32>
    %213 = vector.shape_cast %212 : vector<1x1x32xf32> to vector<1x32xf32>
    %c1_97 = arith.constant 1 : index
    %c0_98 = arith.constant 0 : index
    %c0_99 = arith.constant 0 : index
    %214 = vector.load %arg14[%c1_97, %c0_98, %c0_99] : memref<2x1x32xf32, #tpu.memory_space<vmem>>, vector<1x1x32xf32>
    %215 = vector.shape_cast %214 : vector<1x1x32xf32> to vector<1x32xf32>
    %c1_100 = arith.constant 1 : index
    %c0_101 = arith.constant 0 : index
    %c0_102 = arith.constant 0 : index
    %216 = vector.load %arg15[%c1_100, %c0_101, %c0_102] : memref<2x32x64xf32, #tpu.memory_space<vmem>>, vector<1x32x64xf32>
    %217 = vector.shape_cast %216 : vector<1x32x64xf32> to vector<32x64xf32>
    %c1_103 = arith.constant 1 : index
    %c0_104 = arith.constant 0 : index
    %c0_105 = arith.constant 0 : index
    %218 = vector.load %arg16[%c1_103, %c0_104, %c0_105] : memref<2x1x64xf32, #tpu.memory_space<vmem>>, vector<1x1x64xf32>
    %219 = vector.shape_cast %218 : vector<1x1x64xf32> to vector<1x64xf32>
    %c1_106 = arith.constant 1 : index
    %c0_107 = arith.constant 0 : index
    %c0_108 = arith.constant 0 : index
    %220 = vector.load %arg17[%c1_106, %c0_107, %c0_108] : memref<2x64x32xf32, #tpu.memory_space<vmem>>, vector<1x64x32xf32>
    %221 = vector.shape_cast %220 : vector<1x64x32xf32> to vector<64x32xf32>
    %c1_109 = arith.constant 1 : index
    %c0_110 = arith.constant 0 : index
    %c0_111 = arith.constant 0 : index
    %222 = vector.load %arg18[%c1_109, %c0_110, %c0_111] : memref<2x1x32xf32, #tpu.memory_space<vmem>>, vector<1x1x32xf32>
    %223 = vector.shape_cast %222 : vector<1x1x32xf32> to vector<1x32xf32>
    %c1_112 = arith.constant 1 : index
    %c0_113 = arith.constant 0 : index
    %c0_114 = arith.constant 0 : index
    %224 = vector.load %arg19[%c1_112, %c0_113, %c0_114] : memref<2x1x32xf32, #tpu.memory_space<vmem>>, vector<1x1x32xf32>
    %225 = vector.shape_cast %224 : vector<1x1x32xf32> to vector<1x32xf32>
    %c1_115 = arith.constant 1 : index
    %c0_116 = arith.constant 0 : index
    %c0_117 = arith.constant 0 : index
    %226 = vector.load %arg20[%c1_115, %c0_116, %c0_117] : memref<2x1x32xf32, #tpu.memory_space<vmem>>, vector<1x1x32xf32>
    %227 = vector.shape_cast %226 : vector<1x1x32xf32> to vector<1x32xf32>
    %228 = arith.truncf %203 : vector<8x32xf32> to vector<8x32xbf16>
    %229 = arith.truncf %205 : vector<32x96xf32> to vector<32x96xbf16>
    %cst_118 = arith.constant dense<0.000000e+00> : vector<8x96xf32>
    %230 = tpu.matmul %228, %229, %cst_118 {dimension_numbers = #tpu.dot_dimension_numbers<[1], [0], [0], [1], [0, 0, 1, 1], [], []>} : vector<8x32xbf16>, vector<32x96xbf16>, vector<8x96xf32> -> vector<8x96xf32>
    %231 = vector.broadcast %207 : vector<1x96xf32> to vector<8x96xf32>
    %232 = arith.addf %230, %231 : vector<8x96xf32>
    %233 = vector.extract_strided_slice %232 {offsets = [0, 0], sizes = [8, 32], strides = [1, 1]} : vector<8x96xf32> to vector<8x32xf32>
    %234 = vector.extract_strided_slice %232 {offsets = [0, 32], sizes = [8, 32], strides = [1, 1]} : vector<8x96xf32> to vector<8x32xf32>
    %235 = vector.extract_strided_slice %232 {offsets = [0, 64], sizes = [8, 32], strides = [1, 1]} : vector<8x96xf32> to vector<8x32xf32>
    %236 = vector.extract_strided_slice %233 {offsets = [0, 0], sizes = [8, 8], strides = [1, 1]} : vector<8x32xf32> to vector<8x8xf32>
    %237 = arith.truncf %236 : vector<8x8xf32> to vector<8x8xbf16>
    %238 = vector.extract_strided_slice %234 {offsets = [0, 0], sizes = [8, 8], strides = [1, 1]} : vector<8x32xf32> to vector<8x8xf32>
    %239 = arith.truncf %238 : vector<8x8xf32> to vector<8x8xbf16>
    %240 = vector.extract_strided_slice %235 {offsets = [0, 0], sizes = [8, 8], strides = [1, 1]} : vector<8x32xf32> to vector<8x8xf32>
    %241 = arith.truncf %240 : vector<8x8xf32> to vector<8x8xbf16>
    %cst_119 = arith.constant dense<0.000000e+00> : vector<8x8xf32>
    %242 = tpu.matmul %237, %239, %cst_119 {dimension_numbers = #tpu.dot_dimension_numbers<[1], [1], [0], [0], [0, 0, 1, 0], [], []>} : vector<8x8xbf16>, vector<8x8xbf16>, vector<8x8xf32> -> vector<8x8xf32>
    %cst_120 = arith.constant 0.353553385 : f32
    %243 = vector.broadcast %cst_120 : f32 to vector<8x8xf32>
    %244 = arith.mulf %242, %243 : vector<8x8xf32>
    %cst_121 = arith.constant dense<0xFF800000> : vector<8xf32>
    %245 = vector.multi_reduction <maximumf>, %244, %cst_121 [1] : vector<8x8xf32> to vector<8xf32>
    %246 = vector.shape_cast %245 : vector<8xf32> to vector<8x1xf32>
    %247 = vector.broadcast %246 : vector<8x1xf32> to vector<8x8xf32>
    %248 = arith.subf %244, %247 : vector<8x8xf32>
    %249 = math.exp %248 : vector<8x8xf32>
    %cst_122 = arith.constant dense<0.000000e+00> : vector<8xf32>
    %250 = vector.multi_reduction <add>, %249, %cst_122 [1] : vector<8x8xf32> to vector<8xf32>
    %251 = vector.shape_cast %250 : vector<8xf32> to vector<8x1xf32>
    %252 = tpu.reciprocal %251 {approx = true} : vector<8x1xf32> -> vector<8x1xf32>
    %253 = vector.broadcast %252 : vector<8x1xf32> to vector<8x8xf32>
    %254 = arith.mulf %249, %253 : vector<8x8xf32>
    %255 = arith.truncf %254 : vector<8x8xf32> to vector<8x8xbf16>
    %cst_123 = arith.constant dense<0.000000e+00> : vector<8x8xf32>
    %256 = tpu.matmul %255, %241, %cst_123 {dimension_numbers = #tpu.dot_dimension_numbers<[1], [0], [0], [1], [0, 0, 1, 1], [], []>} : vector<8x8xbf16>, vector<8x8xbf16>, vector<8x8xf32> -> vector<8x8xf32>
    %257 = arith.truncf %256 : vector<8x8xf32> to vector<8x8xbf16>
    %258 = vector.extract_strided_slice %209 {offsets = [0, 0], sizes = [8, 32], strides = [1, 1]} : vector<32x32xf32> to vector<8x32xf32>
    %259 = arith.truncf %258 : vector<8x32xf32> to vector<8x32xbf16>
    %cst_124 = arith.constant dense<0.000000e+00> : vector<8x32xf32>
    %260 = tpu.matmul %257, %259, %cst_124 {dimension_numbers = #tpu.dot_dimension_numbers<[1], [0], [0], [1], [0, 0, 1, 1], [], []>} : vector<8x8xbf16>, vector<8x32xbf16>, vector<8x32xf32> -> vector<8x32xf32>
    %261 = vector.extract_strided_slice %233 {offsets = [0, 8], sizes = [8, 8], strides = [1, 1]} : vector<8x32xf32> to vector<8x8xf32>
    %262 = arith.truncf %261 : vector<8x8xf32> to vector<8x8xbf16>
    %263 = vector.extract_strided_slice %234 {offsets = [0, 8], sizes = [8, 8], strides = [1, 1]} : vector<8x32xf32> to vector<8x8xf32>
    %264 = arith.truncf %263 : vector<8x8xf32> to vector<8x8xbf16>
    %265 = vector.extract_strided_slice %235 {offsets = [0, 8], sizes = [8, 8], strides = [1, 1]} : vector<8x32xf32> to vector<8x8xf32>
    %266 = arith.truncf %265 : vector<8x8xf32> to vector<8x8xbf16>
    %cst_125 = arith.constant dense<0.000000e+00> : vector<8x8xf32>
    %267 = tpu.matmul %262, %264, %cst_125 {dimension_numbers = #tpu.dot_dimension_numbers<[1], [1], [0], [0], [0, 0, 1, 0], [], []>} : vector<8x8xbf16>, vector<8x8xbf16>, vector<8x8xf32> -> vector<8x8xf32>
    %cst_126 = arith.constant 0.353553385 : f32
    %268 = vector.broadcast %cst_126 : f32 to vector<8x8xf32>
    %269 = arith.mulf %267, %268 : vector<8x8xf32>
    %cst_127 = arith.constant dense<0xFF800000> : vector<8xf32>
    %270 = vector.multi_reduction <maximumf>, %269, %cst_127 [1] : vector<8x8xf32> to vector<8xf32>
    %271 = vector.shape_cast %270 : vector<8xf32> to vector<8x1xf32>
    %272 = vector.broadcast %271 : vector<8x1xf32> to vector<8x8xf32>
    %273 = arith.subf %269, %272 : vector<8x8xf32>
    %274 = math.exp %273 : vector<8x8xf32>
    %cst_128 = arith.constant dense<0.000000e+00> : vector<8xf32>
    %275 = vector.multi_reduction <add>, %274, %cst_128 [1] : vector<8x8xf32> to vector<8xf32>
    %276 = vector.shape_cast %275 : vector<8xf32> to vector<8x1xf32>
    %277 = tpu.reciprocal %276 {approx = true} : vector<8x1xf32> -> vector<8x1xf32>
    %278 = vector.broadcast %277 : vector<8x1xf32> to vector<8x8xf32>
    %279 = arith.mulf %274, %278 : vector<8x8xf32>
    %280 = arith.truncf %279 : vector<8x8xf32> to vector<8x8xbf16>
    %cst_129 = arith.constant dense<0.000000e+00> : vector<8x8xf32>
    %281 = tpu.matmul %280, %266, %cst_129 {dimension_numbers = #tpu.dot_dimension_numbers<[1], [0], [0], [1], [0, 0, 1, 1], [], []>} : vector<8x8xbf16>, vector<8x8xbf16>, vector<8x8xf32> -> vector<8x8xf32>
    %282 = arith.truncf %281 : vector<8x8xf32> to vector<8x8xbf16>
    %283 = vector.extract_strided_slice %209 {offsets = [8, 0], sizes = [8, 32], strides = [1, 1]} : vector<32x32xf32> to vector<8x32xf32>
    %284 = arith.truncf %283 : vector<8x32xf32> to vector<8x32xbf16>
    %cst_130 = arith.constant dense<0.000000e+00> : vector<8x32xf32>
    %285 = tpu.matmul %282, %284, %cst_130 {dimension_numbers = #tpu.dot_dimension_numbers<[1], [0], [0], [1], [0, 0, 1, 1], [], []>} : vector<8x8xbf16>, vector<8x32xbf16>, vector<8x32xf32> -> vector<8x32xf32>
    %286 = arith.addf %260, %285 : vector<8x32xf32>
    %287 = vector.extract_strided_slice %233 {offsets = [0, 16], sizes = [8, 8], strides = [1, 1]} : vector<8x32xf32> to vector<8x8xf32>
    %288 = arith.truncf %287 : vector<8x8xf32> to vector<8x8xbf16>
    %289 = vector.extract_strided_slice %234 {offsets = [0, 16], sizes = [8, 8], strides = [1, 1]} : vector<8x32xf32> to vector<8x8xf32>
    %290 = arith.truncf %289 : vector<8x8xf32> to vector<8x8xbf16>
    %291 = vector.extract_strided_slice %235 {offsets = [0, 16], sizes = [8, 8], strides = [1, 1]} : vector<8x32xf32> to vector<8x8xf32>
    %292 = arith.truncf %291 : vector<8x8xf32> to vector<8x8xbf16>
    %cst_131 = arith.constant dense<0.000000e+00> : vector<8x8xf32>
    %293 = tpu.matmul %288, %290, %cst_131 {dimension_numbers = #tpu.dot_dimension_numbers<[1], [1], [0], [0], [0, 0, 1, 0], [], []>} : vector<8x8xbf16>, vector<8x8xbf16>, vector<8x8xf32> -> vector<8x8xf32>
    %cst_132 = arith.constant 0.353553385 : f32
    %294 = vector.broadcast %cst_132 : f32 to vector<8x8xf32>
    %295 = arith.mulf %293, %294 : vector<8x8xf32>
    %cst_133 = arith.constant dense<0xFF800000> : vector<8xf32>
    %296 = vector.multi_reduction <maximumf>, %295, %cst_133 [1] : vector<8x8xf32> to vector<8xf32>
    %297 = vector.shape_cast %296 : vector<8xf32> to vector<8x1xf32>
    %298 = vector.broadcast %297 : vector<8x1xf32> to vector<8x8xf32>
    %299 = arith.subf %295, %298 : vector<8x8xf32>
    %300 = math.exp %299 : vector<8x8xf32>
    %cst_134 = arith.constant dense<0.000000e+00> : vector<8xf32>
    %301 = vector.multi_reduction <add>, %300, %cst_134 [1] : vector<8x8xf32> to vector<8xf32>
    %302 = vector.shape_cast %301 : vector<8xf32> to vector<8x1xf32>
    %303 = tpu.reciprocal %302 {approx = true} : vector<8x1xf32> -> vector<8x1xf32>
    %304 = vector.broadcast %303 : vector<8x1xf32> to vector<8x8xf32>
    %305 = arith.mulf %300, %304 : vector<8x8xf32>
    %306 = arith.truncf %305 : vector<8x8xf32> to vector<8x8xbf16>
    %cst_135 = arith.constant dense<0.000000e+00> : vector<8x8xf32>
    %307 = tpu.matmul %306, %292, %cst_135 {dimension_numbers = #tpu.dot_dimension_numbers<[1], [0], [0], [1], [0, 0, 1, 1], [], []>} : vector<8x8xbf16>, vector<8x8xbf16>, vector<8x8xf32> -> vector<8x8xf32>
    %308 = arith.truncf %307 : vector<8x8xf32> to vector<8x8xbf16>
    %309 = vector.extract_strided_slice %209 {offsets = [16, 0], sizes = [8, 32], strides = [1, 1]} : vector<32x32xf32> to vector<8x32xf32>
    %310 = arith.truncf %309 : vector<8x32xf32> to vector<8x32xbf16>
    %cst_136 = arith.constant dense<0.000000e+00> : vector<8x32xf32>
    %311 = tpu.matmul %308, %310, %cst_136 {dimension_numbers = #tpu.dot_dimension_numbers<[1], [0], [0], [1], [0, 0, 1, 1], [], []>} : vector<8x8xbf16>, vector<8x32xbf16>, vector<8x32xf32> -> vector<8x32xf32>
    %312 = arith.addf %286, %311 : vector<8x32xf32>
    %313 = vector.extract_strided_slice %233 {offsets = [0, 24], sizes = [8, 8], strides = [1, 1]} : vector<8x32xf32> to vector<8x8xf32>
    %314 = arith.truncf %313 : vector<8x8xf32> to vector<8x8xbf16>
    %315 = vector.extract_strided_slice %234 {offsets = [0, 24], sizes = [8, 8], strides = [1, 1]} : vector<8x32xf32> to vector<8x8xf32>
    %316 = arith.truncf %315 : vector<8x8xf32> to vector<8x8xbf16>
    %317 = vector.extract_strided_slice %235 {offsets = [0, 24], sizes = [8, 8], strides = [1, 1]} : vector<8x32xf32> to vector<8x8xf32>
    %318 = arith.truncf %317 : vector<8x8xf32> to vector<8x8xbf16>
    %cst_137 = arith.constant dense<0.000000e+00> : vector<8x8xf32>
    %319 = tpu.matmul %314, %316, %cst_137 {dimension_numbers = #tpu.dot_dimension_numbers<[1], [1], [0], [0], [0, 0, 1, 0], [], []>} : vector<8x8xbf16>, vector<8x8xbf16>, vector<8x8xf32> -> vector<8x8xf32>
    %cst_138 = arith.constant 0.353553385 : f32
    %320 = vector.broadcast %cst_138 : f32 to vector<8x8xf32>
    %321 = arith.mulf %319, %320 : vector<8x8xf32>
    %cst_139 = arith.constant dense<0xFF800000> : vector<8xf32>
    %322 = vector.multi_reduction <maximumf>, %321, %cst_139 [1] : vector<8x8xf32> to vector<8xf32>
    %323 = vector.shape_cast %322 : vector<8xf32> to vector<8x1xf32>
    %324 = vector.broadcast %323 : vector<8x1xf32> to vector<8x8xf32>
    %325 = arith.subf %321, %324 : vector<8x8xf32>
    %326 = math.exp %325 : vector<8x8xf32>
    %cst_140 = arith.constant dense<0.000000e+00> : vector<8xf32>
    %327 = vector.multi_reduction <add>, %326, %cst_140 [1] : vector<8x8xf32> to vector<8xf32>
    %328 = vector.shape_cast %327 : vector<8xf32> to vector<8x1xf32>
    %329 = tpu.reciprocal %328 {approx = true} : vector<8x1xf32> -> vector<8x1xf32>
    %330 = vector.broadcast %329 : vector<8x1xf32> to vector<8x8xf32>
    %331 = arith.mulf %326, %330 : vector<8x8xf32>
    %332 = arith.truncf %331 : vector<8x8xf32> to vector<8x8xbf16>
    %cst_141 = arith.constant dense<0.000000e+00> : vector<8x8xf32>
    %333 = tpu.matmul %332, %318, %cst_141 {dimension_numbers = #tpu.dot_dimension_numbers<[1], [0], [0], [1], [0, 0, 1, 1], [], []>} : vector<8x8xbf16>, vector<8x8xbf16>, vector<8x8xf32> -> vector<8x8xf32>
    %334 = arith.truncf %333 : vector<8x8xf32> to vector<8x8xbf16>
    %335 = vector.extract_strided_slice %209 {offsets = [24, 0], sizes = [8, 32], strides = [1, 1]} : vector<32x32xf32> to vector<8x32xf32>
    %336 = arith.truncf %335 : vector<8x32xf32> to vector<8x32xbf16>
    %cst_142 = arith.constant dense<0.000000e+00> : vector<8x32xf32>
    %337 = tpu.matmul %334, %336, %cst_142 {dimension_numbers = #tpu.dot_dimension_numbers<[1], [0], [0], [1], [0, 0, 1, 1], [], []>} : vector<8x8xbf16>, vector<8x32xbf16>, vector<8x32xf32> -> vector<8x32xf32>
    %338 = arith.addf %312, %337 : vector<8x32xf32>
    %339 = vector.broadcast %211 : vector<1x32xf32> to vector<8x32xf32>
    %340 = arith.addf %338, %339 : vector<8x32xf32>
    %341 = arith.addf %203, %340 : vector<8x32xf32>
    %cst_143 = arith.constant dense<0.000000e+00> : vector<8xf32>
    %342 = vector.multi_reduction <add>, %341, %cst_143 [1] : vector<8x32xf32> to vector<8xf32>
    %343 = vector.shape_cast %342 : vector<8xf32> to vector<8x1xf32>
    %cst_144 = arith.constant 3.200000e+01 : f32
    %344 = vector.broadcast %cst_144 : f32 to vector<8x1xf32>
    %345 = arith.divf %343, %344 : vector<8x1xf32>
    %346 = vector.broadcast %345 : vector<8x1xf32> to vector<8x32xf32>
    %347 = arith.subf %341, %346 : vector<8x32xf32>
    %348 = arith.mulf %347, %347 : vector<8x32xf32>
    %cst_145 = arith.constant dense<0.000000e+00> : vector<8xf32>
    %349 = vector.multi_reduction <add>, %348, %cst_145 [1] : vector<8x32xf32> to vector<8xf32>
    %350 = vector.shape_cast %349 : vector<8xf32> to vector<8x1xf32>
    %cst_146 = arith.constant 3.200000e+01 : f32
    %351 = vector.broadcast %cst_146 : f32 to vector<8x1xf32>
    %352 = arith.divf %350, %351 : vector<8x1xf32>
    %cst_147 = arith.constant 9.99999974E-6 : f32
    %353 = vector.broadcast %cst_147 : f32 to vector<8x1xf32>
    %354 = arith.addf %352, %353 : vector<8x1xf32>
    %355 = math.rsqrt %354 : vector<8x1xf32>
    %356 = vector.broadcast %355 : vector<8x1xf32> to vector<8x32xf32>
    %357 = arith.mulf %347, %356 : vector<8x32xf32>
    %358 = vector.broadcast %213 : vector<1x32xf32> to vector<8x32xf32>
    %359 = arith.mulf %357, %358 : vector<8x32xf32>
    %360 = vector.broadcast %215 : vector<1x32xf32> to vector<8x32xf32>
    %361 = arith.addf %359, %360 : vector<8x32xf32>
    %362 = arith.truncf %361 : vector<8x32xf32> to vector<8x32xbf16>
    %363 = arith.truncf %217 : vector<32x64xf32> to vector<32x64xbf16>
    %cst_148 = arith.constant dense<0.000000e+00> : vector<8x64xf32>
    %364 = tpu.matmul %362, %363, %cst_148 {dimension_numbers = #tpu.dot_dimension_numbers<[1], [0], [0], [1], [0, 0, 1, 1], [], []>} : vector<8x32xbf16>, vector<32x64xbf16>, vector<8x64xf32> -> vector<8x64xf32>
    %365 = vector.broadcast %219 : vector<1x64xf32> to vector<8x64xf32>
    %366 = arith.addf %364, %365 : vector<8x64xf32>
    %cst_149 = arith.constant 0.000000e+00 : f32
    %367 = vector.broadcast %cst_149 : f32 to vector<8x64xf32>
    %368 = arith.maximumf %366, %367 : vector<8x64xf32>
    %369 = arith.truncf %368 : vector<8x64xf32> to vector<8x64xbf16>
    %370 = arith.truncf %221 : vector<64x32xf32> to vector<64x32xbf16>
    %cst_150 = arith.constant dense<0.000000e+00> : vector<8x32xf32>
    %371 = tpu.matmul %369, %370, %cst_150 {dimension_numbers = #tpu.dot_dimension_numbers<[1], [0], [0], [1], [0, 0, 1, 1], [], []>} : vector<8x64xbf16>, vector<64x32xbf16>, vector<8x32xf32> -> vector<8x32xf32>
    %372 = vector.broadcast %223 : vector<1x32xf32> to vector<8x32xf32>
    %373 = arith.addf %371, %372 : vector<8x32xf32>
    %374 = arith.addf %361, %373 : vector<8x32xf32>
    %cst_151 = arith.constant dense<0.000000e+00> : vector<8xf32>
    %375 = vector.multi_reduction <add>, %374, %cst_151 [1] : vector<8x32xf32> to vector<8xf32>
    %376 = vector.shape_cast %375 : vector<8xf32> to vector<8x1xf32>
    %cst_152 = arith.constant 3.200000e+01 : f32
    %377 = vector.broadcast %cst_152 : f32 to vector<8x1xf32>
    %378 = arith.divf %376, %377 : vector<8x1xf32>
    %379 = vector.broadcast %378 : vector<8x1xf32> to vector<8x32xf32>
    %380 = arith.subf %374, %379 : vector<8x32xf32>
    %381 = arith.mulf %380, %380 : vector<8x32xf32>
    %cst_153 = arith.constant dense<0.000000e+00> : vector<8xf32>
    %382 = vector.multi_reduction <add>, %381, %cst_153 [1] : vector<8x32xf32> to vector<8xf32>
    %383 = vector.shape_cast %382 : vector<8xf32> to vector<8x1xf32>
    %cst_154 = arith.constant 3.200000e+01 : f32
    %384 = vector.broadcast %cst_154 : f32 to vector<8x1xf32>
    %385 = arith.divf %383, %384 : vector<8x1xf32>
    %cst_155 = arith.constant 9.99999974E-6 : f32
    %386 = vector.broadcast %cst_155 : f32 to vector<8x1xf32>
    %387 = arith.addf %385, %386 : vector<8x1xf32>
    %388 = math.rsqrt %387 : vector<8x1xf32>
    %389 = vector.broadcast %388 : vector<8x1xf32> to vector<8x32xf32>
    %390 = arith.mulf %380, %389 : vector<8x32xf32>
    %391 = vector.broadcast %225 : vector<1x32xf32> to vector<8x32xf32>
    %392 = arith.mulf %390, %391 : vector<8x32xf32>
    %393 = vector.broadcast %227 : vector<1x32xf32> to vector<8x32xf32>
    %394 = arith.addf %392, %393 : vector<8x32xf32>
    %c0_156 = arith.constant 0 : index
    %c0_157 = arith.constant 0 : index
    %395 = vector.load %arg21[%c0_156, %c0_157] : memref<1x32xf32, #tpu.memory_space<vmem>>, vector<1x32xf32>
    %c0_158 = arith.constant 0 : index
    %c0_159 = arith.constant 0 : index
    %396 = vector.load %arg22[%c0_158, %c0_159] : memref<1x32xf32, #tpu.memory_space<vmem>>, vector<1x32xf32>
    %cst_160 = arith.constant dense<0.000000e+00> : vector<8xf32>
    %397 = vector.multi_reduction <add>, %394, %cst_160 [1] : vector<8x32xf32> to vector<8xf32>
    %398 = vector.shape_cast %397 : vector<8xf32> to vector<8x1xf32>
    %cst_161 = arith.constant 3.200000e+01 : f32
    %399 = vector.broadcast %cst_161 : f32 to vector<8x1xf32>
    %400 = arith.divf %398, %399 : vector<8x1xf32>
    %401 = vector.broadcast %400 : vector<8x1xf32> to vector<8x32xf32>
    %402 = arith.subf %394, %401 : vector<8x32xf32>
    %403 = arith.mulf %402, %402 : vector<8x32xf32>
    %cst_162 = arith.constant dense<0.000000e+00> : vector<8xf32>
    %404 = vector.multi_reduction <add>, %403, %cst_162 [1] : vector<8x32xf32> to vector<8xf32>
    %405 = vector.shape_cast %404 : vector<8xf32> to vector<8x1xf32>
    %cst_163 = arith.constant 3.200000e+01 : f32
    %406 = vector.broadcast %cst_163 : f32 to vector<8x1xf32>
    %407 = arith.divf %405, %406 : vector<8x1xf32>
    %cst_164 = arith.constant 9.99999974E-6 : f32
    %408 = vector.broadcast %cst_164 : f32 to vector<8x1xf32>
    %409 = arith.addf %407, %408 : vector<8x1xf32>
    %410 = math.rsqrt %409 : vector<8x1xf32>
    %411 = vector.broadcast %410 : vector<8x1xf32> to vector<8x32xf32>
    %412 = arith.mulf %402, %411 : vector<8x32xf32>
    %413 = vector.broadcast %395 : vector<1x32xf32> to vector<8x32xf32>
    %414 = arith.mulf %412, %413 : vector<8x32xf32>
    %415 = vector.broadcast %396 : vector<1x32xf32> to vector<8x32xf32>
    %416 = arith.addf %414, %415 : vector<8x32xf32>
    %c0_165 = arith.constant 0 : index
    %c0_166 = arith.constant 0 : index
    %c0_167 = arith.constant 0 : index
    %417 = vector.load %arg2[%c0_165, %c0_166, %c0_167] : memref<1x6x2xf32, #tpu.memory_space<vmem>>, vector<1x6x2xf32>
    %418 = vector.shape_cast %417 : vector<1x6x2xf32> to vector<6x2xf32>
    %c0_168 = arith.constant 0 : index
    %c0_169 = arith.constant 0 : index
    %419 = vector.load %arg6[%c0_168, %c0_169] : memref<2x32xf32, #tpu.memory_space<vmem>>, vector<2x32xf32>
    %c0_170 = arith.constant 0 : index
    %c0_171 = arith.constant 0 : index
    %420 = vector.load %arg7[%c0_170, %c0_171] : memref<1x32xf32, #tpu.memory_space<vmem>>, vector<1x32xf32>
    %421 = arith.truncf %418 : vector<6x2xf32> to vector<6x2xbf16>
    %422 = arith.truncf %419 : vector<2x32xf32> to vector<2x32xbf16>
    %cst_172 = arith.constant dense<0.000000e+00> : vector<6x32xf32>
    %423 = tpu.matmul %421, %422, %cst_172 {dimension_numbers = #tpu.dot_dimension_numbers<[1], [0], [0], [1], [0, 0, 1, 1], [], []>} : vector<6x2xbf16>, vector<2x32xbf16>, vector<6x32xf32> -> vector<6x32xf32>
    %424 = vector.broadcast %420 : vector<1x32xf32> to vector<6x32xf32>
    %425 = arith.addf %423, %424 : vector<6x32xf32>
    %cst_173 = arith.constant 5.65685415 : f32
    %426 = vector.broadcast %cst_173 : f32 to vector<6x32xf32>
    %427 = arith.mulf %425, %426 : vector<6x32xf32>
    %c0_174 = arith.constant 0 : index
    %c0_175 = arith.constant 0 : index
    %428 = vector.load %arg8[%c0_174, %c0_175] : memref<6x32xf32, #tpu.memory_space<vmem>>, vector<6x32xf32>
    %429 = arith.addf %427, %428 : vector<6x32xf32>
    %c0_176 = arith.constant 0 : index
    %c0_177 = arith.constant 0 : index
    %c0_178 = arith.constant 0 : index
    %430 = vector.load %arg23[%c0_176, %c0_177, %c0_178] : memref<2x32x96xf32, #tpu.memory_space<vmem>>, vector<1x32x96xf32>
    %431 = vector.shape_cast %430 : vector<1x32x96xf32> to vector<32x96xf32>
    %c0_179 = arith.constant 0 : index
    %c0_180 = arith.constant 0 : index
    %c0_181 = arith.constant 0 : index
    %432 = vector.load %arg24[%c0_179, %c0_180, %c0_181] : memref<2x1x96xf32, #tpu.memory_space<vmem>>, vector<1x1x96xf32>
    %433 = vector.shape_cast %432 : vector<1x1x96xf32> to vector<1x96xf32>
    %c0_182 = arith.constant 0 : index
    %c0_183 = arith.constant 0 : index
    %c0_184 = arith.constant 0 : index
    %434 = vector.load %arg25[%c0_182, %c0_183, %c0_184] : memref<2x32x32xf32, #tpu.memory_space<vmem>>, vector<1x32x32xf32>
    %435 = vector.shape_cast %434 : vector<1x32x32xf32> to vector<32x32xf32>
    %c0_185 = arith.constant 0 : index
    %c0_186 = arith.constant 0 : index
    %c0_187 = arith.constant 0 : index
    %436 = vector.load %arg26[%c0_185, %c0_186, %c0_187] : memref<2x1x32xf32, #tpu.memory_space<vmem>>, vector<1x1x32xf32>
    %437 = vector.shape_cast %436 : vector<1x1x32xf32> to vector<1x32xf32>
    %c0_188 = arith.constant 0 : index
    %c0_189 = arith.constant 0 : index
    %c0_190 = arith.constant 0 : index
    %438 = vector.load %arg27[%c0_188, %c0_189, %c0_190] : memref<2x1x32xf32, #tpu.memory_space<vmem>>, vector<1x1x32xf32>
    %439 = vector.shape_cast %438 : vector<1x1x32xf32> to vector<1x32xf32>
    %c0_191 = arith.constant 0 : index
    %c0_192 = arith.constant 0 : index
    %c0_193 = arith.constant 0 : index
    %440 = vector.load %arg28[%c0_191, %c0_192, %c0_193] : memref<2x1x32xf32, #tpu.memory_space<vmem>>, vector<1x1x32xf32>
    %441 = vector.shape_cast %440 : vector<1x1x32xf32> to vector<1x32xf32>
    %c0_194 = arith.constant 0 : index
    %c0_195 = arith.constant 0 : index
    %c0_196 = arith.constant 0 : index
    %442 = vector.load %arg29[%c0_194, %c0_195, %c0_196] : memref<2x32x32xf32, #tpu.memory_space<vmem>>, vector<1x32x32xf32>
    %443 = vector.shape_cast %442 : vector<1x32x32xf32> to vector<32x32xf32>
    %c0_197 = arith.constant 0 : index
    %c0_198 = arith.constant 0 : index
    %c0_199 = arith.constant 0 : index
    %444 = vector.load %arg30[%c0_197, %c0_198, %c0_199] : memref<2x1x32xf32, #tpu.memory_space<vmem>>, vector<1x1x32xf32>
    %445 = vector.shape_cast %444 : vector<1x1x32xf32> to vector<1x32xf32>
    %c0_200 = arith.constant 0 : index
    %c0_201 = arith.constant 0 : index
    %c0_202 = arith.constant 0 : index
    %446 = vector.load %arg31[%c0_200, %c0_201, %c0_202] : memref<2x32x64xf32, #tpu.memory_space<vmem>>, vector<1x32x64xf32>
    %447 = vector.shape_cast %446 : vector<1x32x64xf32> to vector<32x64xf32>
    %c0_203 = arith.constant 0 : index
    %c0_204 = arith.constant 0 : index
    %c0_205 = arith.constant 0 : index
    %448 = vector.load %arg32[%c0_203, %c0_204, %c0_205] : memref<2x1x64xf32, #tpu.memory_space<vmem>>, vector<1x1x64xf32>
    %449 = vector.shape_cast %448 : vector<1x1x64xf32> to vector<1x64xf32>
    %c0_206 = arith.constant 0 : index
    %c0_207 = arith.constant 0 : index
    %c0_208 = arith.constant 0 : index
    %450 = vector.load %arg33[%c0_206, %c0_207, %c0_208] : memref<2x32x32xf32, #tpu.memory_space<vmem>>, vector<1x32x32xf32>
    %451 = vector.shape_cast %450 : vector<1x32x32xf32> to vector<32x32xf32>
    %c0_209 = arith.constant 0 : index
    %c0_210 = arith.constant 0 : index
    %c0_211 = arith.constant 0 : index
    %452 = vector.load %arg34[%c0_209, %c0_210, %c0_211] : memref<2x1x32xf32, #tpu.memory_space<vmem>>, vector<1x1x32xf32>
    %453 = vector.shape_cast %452 : vector<1x1x32xf32> to vector<1x32xf32>
    %c0_212 = arith.constant 0 : index
    %c0_213 = arith.constant 0 : index
    %c0_214 = arith.constant 0 : index
    %454 = vector.load %arg35[%c0_212, %c0_213, %c0_214] : memref<2x1x32xf32, #tpu.memory_space<vmem>>, vector<1x1x32xf32>
    %455 = vector.shape_cast %454 : vector<1x1x32xf32> to vector<1x32xf32>
    %c0_215 = arith.constant 0 : index
    %c0_216 = arith.constant 0 : index
    %c0_217 = arith.constant 0 : index
    %456 = vector.load %arg36[%c0_215, %c0_216, %c0_217] : memref<2x1x32xf32, #tpu.memory_space<vmem>>, vector<1x1x32xf32>
    %457 = vector.shape_cast %456 : vector<1x1x32xf32> to vector<1x32xf32>
    %c0_218 = arith.constant 0 : index
    %c0_219 = arith.constant 0 : index
    %c0_220 = arith.constant 0 : index
    %458 = vector.load %arg37[%c0_218, %c0_219, %c0_220] : memref<2x32x64xf32, #tpu.memory_space<vmem>>, vector<1x32x64xf32>
    %459 = vector.shape_cast %458 : vector<1x32x64xf32> to vector<32x64xf32>
    %c0_221 = arith.constant 0 : index
    %c0_222 = arith.constant 0 : index
    %c0_223 = arith.constant 0 : index
    %460 = vector.load %arg38[%c0_221, %c0_222, %c0_223] : memref<2x1x64xf32, #tpu.memory_space<vmem>>, vector<1x1x64xf32>
    %461 = vector.shape_cast %460 : vector<1x1x64xf32> to vector<1x64xf32>
    %c0_224 = arith.constant 0 : index
    %c0_225 = arith.constant 0 : index
    %c0_226 = arith.constant 0 : index
    %462 = vector.load %arg39[%c0_224, %c0_225, %c0_226] : memref<2x64x32xf32, #tpu.memory_space<vmem>>, vector<1x64x32xf32>
    %463 = vector.shape_cast %462 : vector<1x64x32xf32> to vector<64x32xf32>
    %c0_227 = arith.constant 0 : index
    %c0_228 = arith.constant 0 : index
    %c0_229 = arith.constant 0 : index
    %464 = vector.load %arg40[%c0_227, %c0_228, %c0_229] : memref<2x1x32xf32, #tpu.memory_space<vmem>>, vector<1x1x32xf32>
    %465 = vector.shape_cast %464 : vector<1x1x32xf32> to vector<1x32xf32>
    %c0_230 = arith.constant 0 : index
    %c0_231 = arith.constant 0 : index
    %c0_232 = arith.constant 0 : index
    %466 = vector.load %arg41[%c0_230, %c0_231, %c0_232] : memref<2x1x32xf32, #tpu.memory_space<vmem>>, vector<1x1x32xf32>
    %467 = vector.shape_cast %466 : vector<1x1x32xf32> to vector<1x32xf32>
    %c0_233 = arith.constant 0 : index
    %c0_234 = arith.constant 0 : index
    %c0_235 = arith.constant 0 : index
    %468 = vector.load %arg42[%c0_233, %c0_234, %c0_235] : memref<2x1x32xf32, #tpu.memory_space<vmem>>, vector<1x1x32xf32>
    %469 = vector.shape_cast %468 : vector<1x1x32xf32> to vector<1x32xf32>
    %470 = arith.truncf %429 : vector<6x32xf32> to vector<6x32xbf16>
    %471 = arith.truncf %431 : vector<32x96xf32> to vector<32x96xbf16>
    %cst_236 = arith.constant dense<0.000000e+00> : vector<6x96xf32>
    %472 = tpu.matmul %470, %471, %cst_236 {dimension_numbers = #tpu.dot_dimension_numbers<[1], [0], [0], [1], [0, 0, 1, 1], [], []>} : vector<6x32xbf16>, vector<32x96xbf16>, vector<6x96xf32> -> vector<6x96xf32>
    %473 = vector.broadcast %433 : vector<1x96xf32> to vector<6x96xf32>
    %474 = arith.addf %472, %473 : vector<6x96xf32>
    %475 = vector.extract_strided_slice %474 {offsets = [0, 0], sizes = [6, 32], strides = [1, 1]} : vector<6x96xf32> to vector<6x32xf32>
    %476 = vector.extract_strided_slice %474 {offsets = [0, 32], sizes = [6, 32], strides = [1, 1]} : vector<6x96xf32> to vector<6x32xf32>
    %477 = vector.extract_strided_slice %474 {offsets = [0, 64], sizes = [6, 32], strides = [1, 1]} : vector<6x96xf32> to vector<6x32xf32>
    %478 = tpu.iota {dimensions = array<i32: 0>} : vector<6x6xi32>
    %479 = tpu.iota {dimensions = array<i32: 1>} : vector<6x6xi32>
    %480 = arith.cmpi sgt, %479, %478 : vector<6x6xi32>
    %cst_237 = arith.constant -1.000000e+09 : f32
    %cst_238 = arith.constant 0.000000e+00 : f32
    %481 = vector.broadcast %cst_237 : f32 to vector<6x6xf32>
    %482 = vector.broadcast %cst_238 : f32 to vector<6x6xf32>
    %483 = arith.select %480, %481, %482 : vector<6x6xi1>, vector<6x6xf32>
    %484 = vector.extract_strided_slice %475 {offsets = [0, 0], sizes = [6, 8], strides = [1, 1]} : vector<6x32xf32> to vector<6x8xf32>
    %485 = arith.truncf %484 : vector<6x8xf32> to vector<6x8xbf16>
    %486 = vector.extract_strided_slice %476 {offsets = [0, 0], sizes = [6, 8], strides = [1, 1]} : vector<6x32xf32> to vector<6x8xf32>
    %487 = arith.truncf %486 : vector<6x8xf32> to vector<6x8xbf16>
    %488 = vector.extract_strided_slice %477 {offsets = [0, 0], sizes = [6, 8], strides = [1, 1]} : vector<6x32xf32> to vector<6x8xf32>
    %489 = arith.truncf %488 : vector<6x8xf32> to vector<6x8xbf16>
    %cst_239 = arith.constant dense<0.000000e+00> : vector<6x6xf32>
    %490 = tpu.matmul %485, %487, %cst_239 {dimension_numbers = #tpu.dot_dimension_numbers<[1], [1], [0], [0], [0, 0, 1, 0], [], []>} : vector<6x8xbf16>, vector<6x8xbf16>, vector<6x6xf32> -> vector<6x6xf32>
    %cst_240 = arith.constant 0.353553385 : f32
    %491 = vector.broadcast %cst_240 : f32 to vector<6x6xf32>
    %492 = arith.mulf %490, %491 : vector<6x6xf32>
    %493 = arith.addf %492, %483 : vector<6x6xf32>
    %cst_241 = arith.constant dense<0xFF800000> : vector<6xf32>
    %494 = vector.multi_reduction <maximumf>, %493, %cst_241 [1] : vector<6x6xf32> to vector<6xf32>
    %495 = vector.shape_cast %494 : vector<6xf32> to vector<6x1xf32>
    %496 = vector.broadcast %495 : vector<6x1xf32> to vector<6x6xf32>
    %497 = arith.subf %493, %496 : vector<6x6xf32>
    %498 = math.exp %497 : vector<6x6xf32>
    %cst_242 = arith.constant dense<0.000000e+00> : vector<6xf32>
    %499 = vector.multi_reduction <add>, %498, %cst_242 [1] : vector<6x6xf32> to vector<6xf32>
    %500 = vector.shape_cast %499 : vector<6xf32> to vector<6x1xf32>
    %501 = tpu.reciprocal %500 {approx = true} : vector<6x1xf32> -> vector<6x1xf32>
    %502 = vector.broadcast %501 : vector<6x1xf32> to vector<6x6xf32>
    %503 = arith.mulf %498, %502 : vector<6x6xf32>
    %504 = arith.truncf %503 : vector<6x6xf32> to vector<6x6xbf16>
    %cst_243 = arith.constant dense<0.000000e+00> : vector<6x8xf32>
    %505 = tpu.matmul %504, %489, %cst_243 {dimension_numbers = #tpu.dot_dimension_numbers<[1], [0], [0], [1], [0, 0, 1, 1], [], []>} : vector<6x6xbf16>, vector<6x8xbf16>, vector<6x8xf32> -> vector<6x8xf32>
    %506 = arith.truncf %505 : vector<6x8xf32> to vector<6x8xbf16>
    %507 = vector.extract_strided_slice %435 {offsets = [0, 0], sizes = [8, 32], strides = [1, 1]} : vector<32x32xf32> to vector<8x32xf32>
    %508 = arith.truncf %507 : vector<8x32xf32> to vector<8x32xbf16>
    %cst_244 = arith.constant dense<0.000000e+00> : vector<6x32xf32>
    %509 = tpu.matmul %506, %508, %cst_244 {dimension_numbers = #tpu.dot_dimension_numbers<[1], [0], [0], [1], [0, 0, 1, 1], [], []>} : vector<6x8xbf16>, vector<8x32xbf16>, vector<6x32xf32> -> vector<6x32xf32>
    %510 = vector.extract_strided_slice %475 {offsets = [0, 8], sizes = [6, 8], strides = [1, 1]} : vector<6x32xf32> to vector<6x8xf32>
    %511 = arith.truncf %510 : vector<6x8xf32> to vector<6x8xbf16>
    %512 = vector.extract_strided_slice %476 {offsets = [0, 8], sizes = [6, 8], strides = [1, 1]} : vector<6x32xf32> to vector<6x8xf32>
    %513 = arith.truncf %512 : vector<6x8xf32> to vector<6x8xbf16>
    %514 = vector.extract_strided_slice %477 {offsets = [0, 8], sizes = [6, 8], strides = [1, 1]} : vector<6x32xf32> to vector<6x8xf32>
    %515 = arith.truncf %514 : vector<6x8xf32> to vector<6x8xbf16>
    %cst_245 = arith.constant dense<0.000000e+00> : vector<6x6xf32>
    %516 = tpu.matmul %511, %513, %cst_245 {dimension_numbers = #tpu.dot_dimension_numbers<[1], [1], [0], [0], [0, 0, 1, 0], [], []>} : vector<6x8xbf16>, vector<6x8xbf16>, vector<6x6xf32> -> vector<6x6xf32>
    %cst_246 = arith.constant 0.353553385 : f32
    %517 = vector.broadcast %cst_246 : f32 to vector<6x6xf32>
    %518 = arith.mulf %516, %517 : vector<6x6xf32>
    %519 = arith.addf %518, %483 : vector<6x6xf32>
    %cst_247 = arith.constant dense<0xFF800000> : vector<6xf32>
    %520 = vector.multi_reduction <maximumf>, %519, %cst_247 [1] : vector<6x6xf32> to vector<6xf32>
    %521 = vector.shape_cast %520 : vector<6xf32> to vector<6x1xf32>
    %522 = vector.broadcast %521 : vector<6x1xf32> to vector<6x6xf32>
    %523 = arith.subf %519, %522 : vector<6x6xf32>
    %524 = math.exp %523 : vector<6x6xf32>
    %cst_248 = arith.constant dense<0.000000e+00> : vector<6xf32>
    %525 = vector.multi_reduction <add>, %524, %cst_248 [1] : vector<6x6xf32> to vector<6xf32>
    %526 = vector.shape_cast %525 : vector<6xf32> to vector<6x1xf32>
    %527 = tpu.reciprocal %526 {approx = true} : vector<6x1xf32> -> vector<6x1xf32>
    %528 = vector.broadcast %527 : vector<6x1xf32> to vector<6x6xf32>
    %529 = arith.mulf %524, %528 : vector<6x6xf32>
    %530 = arith.truncf %529 : vector<6x6xf32> to vector<6x6xbf16>
    %cst_249 = arith.constant dense<0.000000e+00> : vector<6x8xf32>
    %531 = tpu.matmul %530, %515, %cst_249 {dimension_numbers = #tpu.dot_dimension_numbers<[1], [0], [0], [1], [0, 0, 1, 1], [], []>} : vector<6x6xbf16>, vector<6x8xbf16>, vector<6x8xf32> -> vector<6x8xf32>
    %532 = arith.truncf %531 : vector<6x8xf32> to vector<6x8xbf16>
    %533 = vector.extract_strided_slice %435 {offsets = [8, 0], sizes = [8, 32], strides = [1, 1]} : vector<32x32xf32> to vector<8x32xf32>
    %534 = arith.truncf %533 : vector<8x32xf32> to vector<8x32xbf16>
    %cst_250 = arith.constant dense<0.000000e+00> : vector<6x32xf32>
    %535 = tpu.matmul %532, %534, %cst_250 {dimension_numbers = #tpu.dot_dimension_numbers<[1], [0], [0], [1], [0, 0, 1, 1], [], []>} : vector<6x8xbf16>, vector<8x32xbf16>, vector<6x32xf32> -> vector<6x32xf32>
    %536 = arith.addf %509, %535 : vector<6x32xf32>
    %537 = vector.extract_strided_slice %475 {offsets = [0, 16], sizes = [6, 8], strides = [1, 1]} : vector<6x32xf32> to vector<6x8xf32>
    %538 = arith.truncf %537 : vector<6x8xf32> to vector<6x8xbf16>
    %539 = vector.extract_strided_slice %476 {offsets = [0, 16], sizes = [6, 8], strides = [1, 1]} : vector<6x32xf32> to vector<6x8xf32>
    %540 = arith.truncf %539 : vector<6x8xf32> to vector<6x8xbf16>
    %541 = vector.extract_strided_slice %477 {offsets = [0, 16], sizes = [6, 8], strides = [1, 1]} : vector<6x32xf32> to vector<6x8xf32>
    %542 = arith.truncf %541 : vector<6x8xf32> to vector<6x8xbf16>
    %cst_251 = arith.constant dense<0.000000e+00> : vector<6x6xf32>
    %543 = tpu.matmul %538, %540, %cst_251 {dimension_numbers = #tpu.dot_dimension_numbers<[1], [1], [0], [0], [0, 0, 1, 0], [], []>} : vector<6x8xbf16>, vector<6x8xbf16>, vector<6x6xf32> -> vector<6x6xf32>
    %cst_252 = arith.constant 0.353553385 : f32
    %544 = vector.broadcast %cst_252 : f32 to vector<6x6xf32>
    %545 = arith.mulf %543, %544 : vector<6x6xf32>
    %546 = arith.addf %545, %483 : vector<6x6xf32>
    %cst_253 = arith.constant dense<0xFF800000> : vector<6xf32>
    %547 = vector.multi_reduction <maximumf>, %546, %cst_253 [1] : vector<6x6xf32> to vector<6xf32>
    %548 = vector.shape_cast %547 : vector<6xf32> to vector<6x1xf32>
    %549 = vector.broadcast %548 : vector<6x1xf32> to vector<6x6xf32>
    %550 = arith.subf %546, %549 : vector<6x6xf32>
    %551 = math.exp %550 : vector<6x6xf32>
    %cst_254 = arith.constant dense<0.000000e+00> : vector<6xf32>
    %552 = vector.multi_reduction <add>, %551, %cst_254 [1] : vector<6x6xf32> to vector<6xf32>
    %553 = vector.shape_cast %552 : vector<6xf32> to vector<6x1xf32>
    %554 = tpu.reciprocal %553 {approx = true} : vector<6x1xf32> -> vector<6x1xf32>
    %555 = vector.broadcast %554 : vector<6x1xf32> to vector<6x6xf32>
    %556 = arith.mulf %551, %555 : vector<6x6xf32>
    %557 = arith.truncf %556 : vector<6x6xf32> to vector<6x6xbf16>
    %cst_255 = arith.constant dense<0.000000e+00> : vector<6x8xf32>
    %558 = tpu.matmul %557, %542, %cst_255 {dimension_numbers = #tpu.dot_dimension_numbers<[1], [0], [0], [1], [0, 0, 1, 1], [], []>} : vector<6x6xbf16>, vector<6x8xbf16>, vector<6x8xf32> -> vector<6x8xf32>
    %559 = arith.truncf %558 : vector<6x8xf32> to vector<6x8xbf16>
    %560 = vector.extract_strided_slice %435 {offsets = [16, 0], sizes = [8, 32], strides = [1, 1]} : vector<32x32xf32> to vector<8x32xf32>
    %561 = arith.truncf %560 : vector<8x32xf32> to vector<8x32xbf16>
    %cst_256 = arith.constant dense<0.000000e+00> : vector<6x32xf32>
    %562 = tpu.matmul %559, %561, %cst_256 {dimension_numbers = #tpu.dot_dimension_numbers<[1], [0], [0], [1], [0, 0, 1, 1], [], []>} : vector<6x8xbf16>, vector<8x32xbf16>, vector<6x32xf32> -> vector<6x32xf32>
    %563 = arith.addf %536, %562 : vector<6x32xf32>
    %564 = vector.extract_strided_slice %475 {offsets = [0, 24], sizes = [6, 8], strides = [1, 1]} : vector<6x32xf32> to vector<6x8xf32>
    %565 = arith.truncf %564 : vector<6x8xf32> to vector<6x8xbf16>
    %566 = vector.extract_strided_slice %476 {offsets = [0, 24], sizes = [6, 8], strides = [1, 1]} : vector<6x32xf32> to vector<6x8xf32>
    %567 = arith.truncf %566 : vector<6x8xf32> to vector<6x8xbf16>
    %568 = vector.extract_strided_slice %477 {offsets = [0, 24], sizes = [6, 8], strides = [1, 1]} : vector<6x32xf32> to vector<6x8xf32>
    %569 = arith.truncf %568 : vector<6x8xf32> to vector<6x8xbf16>
    %cst_257 = arith.constant dense<0.000000e+00> : vector<6x6xf32>
    %570 = tpu.matmul %565, %567, %cst_257 {dimension_numbers = #tpu.dot_dimension_numbers<[1], [1], [0], [0], [0, 0, 1, 0], [], []>} : vector<6x8xbf16>, vector<6x8xbf16>, vector<6x6xf32> -> vector<6x6xf32>
    %cst_258 = arith.constant 0.353553385 : f32
    %571 = vector.broadcast %cst_258 : f32 to vector<6x6xf32>
    %572 = arith.mulf %570, %571 : vector<6x6xf32>
    %573 = arith.addf %572, %483 : vector<6x6xf32>
    %cst_259 = arith.constant dense<0xFF800000> : vector<6xf32>
    %574 = vector.multi_reduction <maximumf>, %573, %cst_259 [1] : vector<6x6xf32> to vector<6xf32>
    %575 = vector.shape_cast %574 : vector<6xf32> to vector<6x1xf32>
    %576 = vector.broadcast %575 : vector<6x1xf32> to vector<6x6xf32>
    %577 = arith.subf %573, %576 : vector<6x6xf32>
    %578 = math.exp %577 : vector<6x6xf32>
    %cst_260 = arith.constant dense<0.000000e+00> : vector<6xf32>
    %579 = vector.multi_reduction <add>, %578, %cst_260 [1] : vector<6x6xf32> to vector<6xf32>
    %580 = vector.shape_cast %579 : vector<6xf32> to vector<6x1xf32>
    %581 = tpu.reciprocal %580 {approx = true} : vector<6x1xf32> -> vector<6x1xf32>
    %582 = vector.broadcast %581 : vector<6x1xf32> to vector<6x6xf32>
    %583 = arith.mulf %578, %582 : vector<6x6xf32>
    %584 = arith.truncf %583 : vector<6x6xf32> to vector<6x6xbf16>
    %cst_261 = arith.constant dense<0.000000e+00> : vector<6x8xf32>
    %585 = tpu.matmul %584, %569, %cst_261 {dimension_numbers = #tpu.dot_dimension_numbers<[1], [0], [0], [1], [0, 0, 1, 1], [], []>} : vector<6x6xbf16>, vector<6x8xbf16>, vector<6x8xf32> -> vector<6x8xf32>
    %586 = arith.truncf %585 : vector<6x8xf32> to vector<6x8xbf16>
    %587 = vector.extract_strided_slice %435 {offsets = [24, 0], sizes = [8, 32], strides = [1, 1]} : vector<32x32xf32> to vector<8x32xf32>
    %588 = arith.truncf %587 : vector<8x32xf32> to vector<8x32xbf16>
    %cst_262 = arith.constant dense<0.000000e+00> : vector<6x32xf32>
    %589 = tpu.matmul %586, %588, %cst_262 {dimension_numbers = #tpu.dot_dimension_numbers<[1], [0], [0], [1], [0, 0, 1, 1], [], []>} : vector<6x8xbf16>, vector<8x32xbf16>, vector<6x32xf32> -> vector<6x32xf32>
    %590 = arith.addf %563, %589 : vector<6x32xf32>
    %591 = vector.broadcast %437 : vector<1x32xf32> to vector<6x32xf32>
    %592 = arith.addf %590, %591 : vector<6x32xf32>
    %593 = arith.addf %429, %592 : vector<6x32xf32>
    %cst_263 = arith.constant dense<0.000000e+00> : vector<6xf32>
    %594 = vector.multi_reduction <add>, %593, %cst_263 [1] : vector<6x32xf32> to vector<6xf32>
    %595 = vector.shape_cast %594 : vector<6xf32> to vector<6x1xf32>
    %cst_264 = arith.constant 3.200000e+01 : f32
    %596 = vector.broadcast %cst_264 : f32 to vector<6x1xf32>
    %597 = arith.divf %595, %596 : vector<6x1xf32>
    %598 = vector.broadcast %597 : vector<6x1xf32> to vector<6x32xf32>
    %599 = arith.subf %593, %598 : vector<6x32xf32>
    %600 = arith.mulf %599, %599 : vector<6x32xf32>
    %cst_265 = arith.constant dense<0.000000e+00> : vector<6xf32>
    %601 = vector.multi_reduction <add>, %600, %cst_265 [1] : vector<6x32xf32> to vector<6xf32>
    %602 = vector.shape_cast %601 : vector<6xf32> to vector<6x1xf32>
    %cst_266 = arith.constant 3.200000e+01 : f32
    %603 = vector.broadcast %cst_266 : f32 to vector<6x1xf32>
    %604 = arith.divf %602, %603 : vector<6x1xf32>
    %cst_267 = arith.constant 9.99999974E-6 : f32
    %605 = vector.broadcast %cst_267 : f32 to vector<6x1xf32>
    %606 = arith.addf %604, %605 : vector<6x1xf32>
    %607 = math.rsqrt %606 : vector<6x1xf32>
    %608 = vector.broadcast %607 : vector<6x1xf32> to vector<6x32xf32>
    %609 = arith.mulf %599, %608 : vector<6x32xf32>
    %610 = vector.broadcast %439 : vector<1x32xf32> to vector<6x32xf32>
    %611 = arith.mulf %609, %610 : vector<6x32xf32>
    %612 = vector.broadcast %441 : vector<1x32xf32> to vector<6x32xf32>
    %613 = arith.addf %611, %612 : vector<6x32xf32>
    %614 = arith.truncf %613 : vector<6x32xf32> to vector<6x32xbf16>
    %615 = arith.truncf %443 : vector<32x32xf32> to vector<32x32xbf16>
    %cst_268 = arith.constant dense<0.000000e+00> : vector<6x32xf32>
    %616 = tpu.matmul %614, %615, %cst_268 {dimension_numbers = #tpu.dot_dimension_numbers<[1], [0], [0], [1], [0, 0, 1, 1], [], []>} : vector<6x32xbf16>, vector<32x32xbf16>, vector<6x32xf32> -> vector<6x32xf32>
    %617 = vector.broadcast %445 : vector<1x32xf32> to vector<6x32xf32>
    %618 = arith.addf %616, %617 : vector<6x32xf32>
    %619 = arith.truncf %416 : vector<8x32xf32> to vector<8x32xbf16>
    %620 = arith.truncf %447 : vector<32x64xf32> to vector<32x64xbf16>
    %cst_269 = arith.constant dense<0.000000e+00> : vector<8x64xf32>
    %621 = tpu.matmul %619, %620, %cst_269 {dimension_numbers = #tpu.dot_dimension_numbers<[1], [0], [0], [1], [0, 0, 1, 1], [], []>} : vector<8x32xbf16>, vector<32x64xbf16>, vector<8x64xf32> -> vector<8x64xf32>
    %622 = vector.broadcast %449 : vector<1x64xf32> to vector<8x64xf32>
    %623 = arith.addf %621, %622 : vector<8x64xf32>
    %624 = vector.extract_strided_slice %623 {offsets = [0, 0], sizes = [8, 32], strides = [1, 1]} : vector<8x64xf32> to vector<8x32xf32>
    %625 = vector.extract_strided_slice %623 {offsets = [0, 32], sizes = [8, 32], strides = [1, 1]} : vector<8x64xf32> to vector<8x32xf32>
    %626 = vector.extract_strided_slice %618 {offsets = [0, 0], sizes = [6, 8], strides = [1, 1]} : vector<6x32xf32> to vector<6x8xf32>
    %627 = arith.truncf %626 : vector<6x8xf32> to vector<6x8xbf16>
    %628 = vector.extract_strided_slice %624 {offsets = [0, 0], sizes = [8, 8], strides = [1, 1]} : vector<8x32xf32> to vector<8x8xf32>
    %629 = arith.truncf %628 : vector<8x8xf32> to vector<8x8xbf16>
    %630 = vector.extract_strided_slice %625 {offsets = [0, 0], sizes = [8, 8], strides = [1, 1]} : vector<8x32xf32> to vector<8x8xf32>
    %631 = arith.truncf %630 : vector<8x8xf32> to vector<8x8xbf16>
    %cst_270 = arith.constant dense<0.000000e+00> : vector<6x8xf32>
    %632 = tpu.matmul %627, %629, %cst_270 {dimension_numbers = #tpu.dot_dimension_numbers<[1], [1], [0], [0], [0, 0, 1, 0], [], []>} : vector<6x8xbf16>, vector<8x8xbf16>, vector<6x8xf32> -> vector<6x8xf32>
    %cst_271 = arith.constant 0.353553385 : f32
    %633 = vector.broadcast %cst_271 : f32 to vector<6x8xf32>
    %634 = arith.mulf %632, %633 : vector<6x8xf32>
    %cst_272 = arith.constant dense<0xFF800000> : vector<6xf32>
    %635 = vector.multi_reduction <maximumf>, %634, %cst_272 [1] : vector<6x8xf32> to vector<6xf32>
    %636 = vector.shape_cast %635 : vector<6xf32> to vector<6x1xf32>
    %637 = vector.broadcast %636 : vector<6x1xf32> to vector<6x8xf32>
    %638 = arith.subf %634, %637 : vector<6x8xf32>
    %639 = math.exp %638 : vector<6x8xf32>
    %cst_273 = arith.constant dense<0.000000e+00> : vector<6xf32>
    %640 = vector.multi_reduction <add>, %639, %cst_273 [1] : vector<6x8xf32> to vector<6xf32>
    %641 = vector.shape_cast %640 : vector<6xf32> to vector<6x1xf32>
    %642 = tpu.reciprocal %641 {approx = true} : vector<6x1xf32> -> vector<6x1xf32>
    %643 = vector.broadcast %642 : vector<6x1xf32> to vector<6x8xf32>
    %644 = arith.mulf %639, %643 : vector<6x8xf32>
    %645 = arith.truncf %644 : vector<6x8xf32> to vector<6x8xbf16>
    %cst_274 = arith.constant dense<0.000000e+00> : vector<6x8xf32>
    %646 = tpu.matmul %645, %631, %cst_274 {dimension_numbers = #tpu.dot_dimension_numbers<[1], [0], [0], [1], [0, 0, 1, 1], [], []>} : vector<6x8xbf16>, vector<8x8xbf16>, vector<6x8xf32> -> vector<6x8xf32>
    %647 = arith.truncf %646 : vector<6x8xf32> to vector<6x8xbf16>
    %648 = vector.extract_strided_slice %451 {offsets = [0, 0], sizes = [8, 32], strides = [1, 1]} : vector<32x32xf32> to vector<8x32xf32>
    %649 = arith.truncf %648 : vector<8x32xf32> to vector<8x32xbf16>
    %cst_275 = arith.constant dense<0.000000e+00> : vector<6x32xf32>
    %650 = tpu.matmul %647, %649, %cst_275 {dimension_numbers = #tpu.dot_dimension_numbers<[1], [0], [0], [1], [0, 0, 1, 1], [], []>} : vector<6x8xbf16>, vector<8x32xbf16>, vector<6x32xf32> -> vector<6x32xf32>
    %651 = vector.extract_strided_slice %618 {offsets = [0, 8], sizes = [6, 8], strides = [1, 1]} : vector<6x32xf32> to vector<6x8xf32>
    %652 = arith.truncf %651 : vector<6x8xf32> to vector<6x8xbf16>
    %653 = vector.extract_strided_slice %624 {offsets = [0, 8], sizes = [8, 8], strides = [1, 1]} : vector<8x32xf32> to vector<8x8xf32>
    %654 = arith.truncf %653 : vector<8x8xf32> to vector<8x8xbf16>
    %655 = vector.extract_strided_slice %625 {offsets = [0, 8], sizes = [8, 8], strides = [1, 1]} : vector<8x32xf32> to vector<8x8xf32>
    %656 = arith.truncf %655 : vector<8x8xf32> to vector<8x8xbf16>
    %cst_276 = arith.constant dense<0.000000e+00> : vector<6x8xf32>
    %657 = tpu.matmul %652, %654, %cst_276 {dimension_numbers = #tpu.dot_dimension_numbers<[1], [1], [0], [0], [0, 0, 1, 0], [], []>} : vector<6x8xbf16>, vector<8x8xbf16>, vector<6x8xf32> -> vector<6x8xf32>
    %cst_277 = arith.constant 0.353553385 : f32
    %658 = vector.broadcast %cst_277 : f32 to vector<6x8xf32>
    %659 = arith.mulf %657, %658 : vector<6x8xf32>
    %cst_278 = arith.constant dense<0xFF800000> : vector<6xf32>
    %660 = vector.multi_reduction <maximumf>, %659, %cst_278 [1] : vector<6x8xf32> to vector<6xf32>
    %661 = vector.shape_cast %660 : vector<6xf32> to vector<6x1xf32>
    %662 = vector.broadcast %661 : vector<6x1xf32> to vector<6x8xf32>
    %663 = arith.subf %659, %662 : vector<6x8xf32>
    %664 = math.exp %663 : vector<6x8xf32>
    %cst_279 = arith.constant dense<0.000000e+00> : vector<6xf32>
    %665 = vector.multi_reduction <add>, %664, %cst_279 [1] : vector<6x8xf32> to vector<6xf32>
    %666 = vector.shape_cast %665 : vector<6xf32> to vector<6x1xf32>
    %667 = tpu.reciprocal %666 {approx = true} : vector<6x1xf32> -> vector<6x1xf32>
    %668 = vector.broadcast %667 : vector<6x1xf32> to vector<6x8xf32>
    %669 = arith.mulf %664, %668 : vector<6x8xf32>
    %670 = arith.truncf %669 : vector<6x8xf32> to vector<6x8xbf16>
    %cst_280 = arith.constant dense<0.000000e+00> : vector<6x8xf32>
    %671 = tpu.matmul %670, %656, %cst_280 {dimension_numbers = #tpu.dot_dimension_numbers<[1], [0], [0], [1], [0, 0, 1, 1], [], []>} : vector<6x8xbf16>, vector<8x8xbf16>, vector<6x8xf32> -> vector<6x8xf32>
    %672 = arith.truncf %671 : vector<6x8xf32> to vector<6x8xbf16>
    %673 = vector.extract_strided_slice %451 {offsets = [8, 0], sizes = [8, 32], strides = [1, 1]} : vector<32x32xf32> to vector<8x32xf32>
    %674 = arith.truncf %673 : vector<8x32xf32> to vector<8x32xbf16>
    %cst_281 = arith.constant dense<0.000000e+00> : vector<6x32xf32>
    %675 = tpu.matmul %672, %674, %cst_281 {dimension_numbers = #tpu.dot_dimension_numbers<[1], [0], [0], [1], [0, 0, 1, 1], [], []>} : vector<6x8xbf16>, vector<8x32xbf16>, vector<6x32xf32> -> vector<6x32xf32>
    %676 = arith.addf %650, %675 : vector<6x32xf32>
    %677 = vector.extract_strided_slice %618 {offsets = [0, 16], sizes = [6, 8], strides = [1, 1]} : vector<6x32xf32> to vector<6x8xf32>
    %678 = arith.truncf %677 : vector<6x8xf32> to vector<6x8xbf16>
    %679 = vector.extract_strided_slice %624 {offsets = [0, 16], sizes = [8, 8], strides = [1, 1]} : vector<8x32xf32> to vector<8x8xf32>
    %680 = arith.truncf %679 : vector<8x8xf32> to vector<8x8xbf16>
    %681 = vector.extract_strided_slice %625 {offsets = [0, 16], sizes = [8, 8], strides = [1, 1]} : vector<8x32xf32> to vector<8x8xf32>
    %682 = arith.truncf %681 : vector<8x8xf32> to vector<8x8xbf16>
    %cst_282 = arith.constant dense<0.000000e+00> : vector<6x8xf32>
    %683 = tpu.matmul %678, %680, %cst_282 {dimension_numbers = #tpu.dot_dimension_numbers<[1], [1], [0], [0], [0, 0, 1, 0], [], []>} : vector<6x8xbf16>, vector<8x8xbf16>, vector<6x8xf32> -> vector<6x8xf32>
    %cst_283 = arith.constant 0.353553385 : f32
    %684 = vector.broadcast %cst_283 : f32 to vector<6x8xf32>
    %685 = arith.mulf %683, %684 : vector<6x8xf32>
    %cst_284 = arith.constant dense<0xFF800000> : vector<6xf32>
    %686 = vector.multi_reduction <maximumf>, %685, %cst_284 [1] : vector<6x8xf32> to vector<6xf32>
    %687 = vector.shape_cast %686 : vector<6xf32> to vector<6x1xf32>
    %688 = vector.broadcast %687 : vector<6x1xf32> to vector<6x8xf32>
    %689 = arith.subf %685, %688 : vector<6x8xf32>
    %690 = math.exp %689 : vector<6x8xf32>
    %cst_285 = arith.constant dense<0.000000e+00> : vector<6xf32>
    %691 = vector.multi_reduction <add>, %690, %cst_285 [1] : vector<6x8xf32> to vector<6xf32>
    %692 = vector.shape_cast %691 : vector<6xf32> to vector<6x1xf32>
    %693 = tpu.reciprocal %692 {approx = true} : vector<6x1xf32> -> vector<6x1xf32>
    %694 = vector.broadcast %693 : vector<6x1xf32> to vector<6x8xf32>
    %695 = arith.mulf %690, %694 : vector<6x8xf32>
    %696 = arith.truncf %695 : vector<6x8xf32> to vector<6x8xbf16>
    %cst_286 = arith.constant dense<0.000000e+00> : vector<6x8xf32>
    %697 = tpu.matmul %696, %682, %cst_286 {dimension_numbers = #tpu.dot_dimension_numbers<[1], [0], [0], [1], [0, 0, 1, 1], [], []>} : vector<6x8xbf16>, vector<8x8xbf16>, vector<6x8xf32> -> vector<6x8xf32>
    %698 = arith.truncf %697 : vector<6x8xf32> to vector<6x8xbf16>
    %699 = vector.extract_strided_slice %451 {offsets = [16, 0], sizes = [8, 32], strides = [1, 1]} : vector<32x32xf32> to vector<8x32xf32>
    %700 = arith.truncf %699 : vector<8x32xf32> to vector<8x32xbf16>
    %cst_287 = arith.constant dense<0.000000e+00> : vector<6x32xf32>
    %701 = tpu.matmul %698, %700, %cst_287 {dimension_numbers = #tpu.dot_dimension_numbers<[1], [0], [0], [1], [0, 0, 1, 1], [], []>} : vector<6x8xbf16>, vector<8x32xbf16>, vector<6x32xf32> -> vector<6x32xf32>
    %702 = arith.addf %676, %701 : vector<6x32xf32>
    %703 = vector.extract_strided_slice %618 {offsets = [0, 24], sizes = [6, 8], strides = [1, 1]} : vector<6x32xf32> to vector<6x8xf32>
    %704 = arith.truncf %703 : vector<6x8xf32> to vector<6x8xbf16>
    %705 = vector.extract_strided_slice %624 {offsets = [0, 24], sizes = [8, 8], strides = [1, 1]} : vector<8x32xf32> to vector<8x8xf32>
    %706 = arith.truncf %705 : vector<8x8xf32> to vector<8x8xbf16>
    %707 = vector.extract_strided_slice %625 {offsets = [0, 24], sizes = [8, 8], strides = [1, 1]} : vector<8x32xf32> to vector<8x8xf32>
    %708 = arith.truncf %707 : vector<8x8xf32> to vector<8x8xbf16>
    %cst_288 = arith.constant dense<0.000000e+00> : vector<6x8xf32>
    %709 = tpu.matmul %704, %706, %cst_288 {dimension_numbers = #tpu.dot_dimension_numbers<[1], [1], [0], [0], [0, 0, 1, 0], [], []>} : vector<6x8xbf16>, vector<8x8xbf16>, vector<6x8xf32> -> vector<6x8xf32>
    %cst_289 = arith.constant 0.353553385 : f32
    %710 = vector.broadcast %cst_289 : f32 to vector<6x8xf32>
    %711 = arith.mulf %709, %710 : vector<6x8xf32>
    %cst_290 = arith.constant dense<0xFF800000> : vector<6xf32>
    %712 = vector.multi_reduction <maximumf>, %711, %cst_290 [1] : vector<6x8xf32> to vector<6xf32>
    %713 = vector.shape_cast %712 : vector<6xf32> to vector<6x1xf32>
    %714 = vector.broadcast %713 : vector<6x1xf32> to vector<6x8xf32>
    %715 = arith.subf %711, %714 : vector<6x8xf32>
    %716 = math.exp %715 : vector<6x8xf32>
    %cst_291 = arith.constant dense<0.000000e+00> : vector<6xf32>
    %717 = vector.multi_reduction <add>, %716, %cst_291 [1] : vector<6x8xf32> to vector<6xf32>
    %718 = vector.shape_cast %717 : vector<6xf32> to vector<6x1xf32>
    %719 = tpu.reciprocal %718 {approx = true} : vector<6x1xf32> -> vector<6x1xf32>
    %720 = vector.broadcast %719 : vector<6x1xf32> to vector<6x8xf32>
    %721 = arith.mulf %716, %720 : vector<6x8xf32>
    %722 = arith.truncf %721 : vector<6x8xf32> to vector<6x8xbf16>
    %cst_292 = arith.constant dense<0.000000e+00> : vector<6x8xf32>
    %723 = tpu.matmul %722, %708, %cst_292 {dimension_numbers = #tpu.dot_dimension_numbers<[1], [0], [0], [1], [0, 0, 1, 1], [], []>} : vector<6x8xbf16>, vector<8x8xbf16>, vector<6x8xf32> -> vector<6x8xf32>
    %724 = arith.truncf %723 : vector<6x8xf32> to vector<6x8xbf16>
    %725 = vector.extract_strided_slice %451 {offsets = [24, 0], sizes = [8, 32], strides = [1, 1]} : vector<32x32xf32> to vector<8x32xf32>
    %726 = arith.truncf %725 : vector<8x32xf32> to vector<8x32xbf16>
    %cst_293 = arith.constant dense<0.000000e+00> : vector<6x32xf32>
    %727 = tpu.matmul %724, %726, %cst_293 {dimension_numbers = #tpu.dot_dimension_numbers<[1], [0], [0], [1], [0, 0, 1, 1], [], []>} : vector<6x8xbf16>, vector<8x32xbf16>, vector<6x32xf32> -> vector<6x32xf32>
    %728 = arith.addf %702, %727 : vector<6x32xf32>
    %729 = vector.broadcast %453 : vector<1x32xf32> to vector<6x32xf32>
    %730 = arith.addf %728, %729 : vector<6x32xf32>
    %731 = arith.addf %613, %730 : vector<6x32xf32>
    %cst_294 = arith.constant dense<0.000000e+00> : vector<6xf32>
    %732 = vector.multi_reduction <add>, %731, %cst_294 [1] : vector<6x32xf32> to vector<6xf32>
    %733 = vector.shape_cast %732 : vector<6xf32> to vector<6x1xf32>
    %cst_295 = arith.constant 3.200000e+01 : f32
    %734 = vector.broadcast %cst_295 : f32 to vector<6x1xf32>
    %735 = arith.divf %733, %734 : vector<6x1xf32>
    %736 = vector.broadcast %735 : vector<6x1xf32> to vector<6x32xf32>
    %737 = arith.subf %731, %736 : vector<6x32xf32>
    %738 = arith.mulf %737, %737 : vector<6x32xf32>
    %cst_296 = arith.constant dense<0.000000e+00> : vector<6xf32>
    %739 = vector.multi_reduction <add>, %738, %cst_296 [1] : vector<6x32xf32> to vector<6xf32>
    %740 = vector.shape_cast %739 : vector<6xf32> to vector<6x1xf32>
    %cst_297 = arith.constant 3.200000e+01 : f32
    %741 = vector.broadcast %cst_297 : f32 to vector<6x1xf32>
    %742 = arith.divf %740, %741 : vector<6x1xf32>
    %cst_298 = arith.constant 9.99999974E-6 : f32
    %743 = vector.broadcast %cst_298 : f32 to vector<6x1xf32>
    %744 = arith.addf %742, %743 : vector<6x1xf32>
    %745 = math.rsqrt %744 : vector<6x1xf32>
    %746 = vector.broadcast %745 : vector<6x1xf32> to vector<6x32xf32>
    %747 = arith.mulf %737, %746 : vector<6x32xf32>
    %748 = vector.broadcast %455 : vector<1x32xf32> to vector<6x32xf32>
    %749 = arith.mulf %747, %748 : vector<6x32xf32>
    %750 = vector.broadcast %457 : vector<1x32xf32> to vector<6x32xf32>
    %751 = arith.addf %749, %750 : vector<6x32xf32>
    %752 = arith.truncf %751 : vector<6x32xf32> to vector<6x32xbf16>
    %753 = arith.truncf %459 : vector<32x64xf32> to vector<32x64xbf16>
    %cst_299 = arith.constant dense<0.000000e+00> : vector<6x64xf32>
    %754 = tpu.matmul %752, %753, %cst_299 {dimension_numbers = #tpu.dot_dimension_numbers<[1], [0], [0], [1], [0, 0, 1, 1], [], []>} : vector<6x32xbf16>, vector<32x64xbf16>, vector<6x64xf32> -> vector<6x64xf32>
    %755 = vector.broadcast %461 : vector<1x64xf32> to vector<6x64xf32>
    %756 = arith.addf %754, %755 : vector<6x64xf32>
    %cst_300 = arith.constant 0.000000e+00 : f32
    %757 = vector.broadcast %cst_300 : f32 to vector<6x64xf32>
    %758 = arith.maximumf %756, %757 : vector<6x64xf32>
    %759 = arith.truncf %758 : vector<6x64xf32> to vector<6x64xbf16>
    %760 = arith.truncf %463 : vector<64x32xf32> to vector<64x32xbf16>
    %cst_301 = arith.constant dense<0.000000e+00> : vector<6x32xf32>
    %761 = tpu.matmul %759, %760, %cst_301 {dimension_numbers = #tpu.dot_dimension_numbers<[1], [0], [0], [1], [0, 0, 1, 1], [], []>} : vector<6x64xbf16>, vector<64x32xbf16>, vector<6x32xf32> -> vector<6x32xf32>
    %762 = vector.broadcast %465 : vector<1x32xf32> to vector<6x32xf32>
    %763 = arith.addf %761, %762 : vector<6x32xf32>
    %764 = arith.addf %751, %763 : vector<6x32xf32>
    %cst_302 = arith.constant dense<0.000000e+00> : vector<6xf32>
    %765 = vector.multi_reduction <add>, %764, %cst_302 [1] : vector<6x32xf32> to vector<6xf32>
    %766 = vector.shape_cast %765 : vector<6xf32> to vector<6x1xf32>
    %cst_303 = arith.constant 3.200000e+01 : f32
    %767 = vector.broadcast %cst_303 : f32 to vector<6x1xf32>
    %768 = arith.divf %766, %767 : vector<6x1xf32>
    %769 = vector.broadcast %768 : vector<6x1xf32> to vector<6x32xf32>
    %770 = arith.subf %764, %769 : vector<6x32xf32>
    %771 = arith.mulf %770, %770 : vector<6x32xf32>
    %cst_304 = arith.constant dense<0.000000e+00> : vector<6xf32>
    %772 = vector.multi_reduction <add>, %771, %cst_304 [1] : vector<6x32xf32> to vector<6xf32>
    %773 = vector.shape_cast %772 : vector<6xf32> to vector<6x1xf32>
    %cst_305 = arith.constant 3.200000e+01 : f32
    %774 = vector.broadcast %cst_305 : f32 to vector<6x1xf32>
    %775 = arith.divf %773, %774 : vector<6x1xf32>
    %cst_306 = arith.constant 9.99999974E-6 : f32
    %776 = vector.broadcast %cst_306 : f32 to vector<6x1xf32>
    %777 = arith.addf %775, %776 : vector<6x1xf32>
    %778 = math.rsqrt %777 : vector<6x1xf32>
    %779 = vector.broadcast %778 : vector<6x1xf32> to vector<6x32xf32>
    %780 = arith.mulf %770, %779 : vector<6x32xf32>
    %781 = vector.broadcast %467 : vector<1x32xf32> to vector<6x32xf32>
    %782 = arith.mulf %780, %781 : vector<6x32xf32>
    %783 = vector.broadcast %469 : vector<1x32xf32> to vector<6x32xf32>
    %784 = arith.addf %782, %783 : vector<6x32xf32>
    %c1_307 = arith.constant 1 : index
    %c0_308 = arith.constant 0 : index
    %c0_309 = arith.constant 0 : index
    %785 = vector.load %arg23[%c1_307, %c0_308, %c0_309] : memref<2x32x96xf32, #tpu.memory_space<vmem>>, vector<1x32x96xf32>
    %786 = vector.shape_cast %785 : vector<1x32x96xf32> to vector<32x96xf32>
    %c1_310 = arith.constant 1 : index
    %c0_311 = arith.constant 0 : index
    %c0_312 = arith.constant 0 : index
    %787 = vector.load %arg24[%c1_310, %c0_311, %c0_312] : memref<2x1x96xf32, #tpu.memory_space<vmem>>, vector<1x1x96xf32>
    %788 = vector.shape_cast %787 : vector<1x1x96xf32> to vector<1x96xf32>
    %c1_313 = arith.constant 1 : index
    %c0_314 = arith.constant 0 : index
    %c0_315 = arith.constant 0 : index
    %789 = vector.load %arg25[%c1_313, %c0_314, %c0_315] : memref<2x32x32xf32, #tpu.memory_space<vmem>>, vector<1x32x32xf32>
    %790 = vector.shape_cast %789 : vector<1x32x32xf32> to vector<32x32xf32>
    %c1_316 = arith.constant 1 : index
    %c0_317 = arith.constant 0 : index
    %c0_318 = arith.constant 0 : index
    %791 = vector.load %arg26[%c1_316, %c0_317, %c0_318] : memref<2x1x32xf32, #tpu.memory_space<vmem>>, vector<1x1x32xf32>
    %792 = vector.shape_cast %791 : vector<1x1x32xf32> to vector<1x32xf32>
    %c1_319 = arith.constant 1 : index
    %c0_320 = arith.constant 0 : index
    %c0_321 = arith.constant 0 : index
    %793 = vector.load %arg27[%c1_319, %c0_320, %c0_321] : memref<2x1x32xf32, #tpu.memory_space<vmem>>, vector<1x1x32xf32>
    %794 = vector.shape_cast %793 : vector<1x1x32xf32> to vector<1x32xf32>
    %c1_322 = arith.constant 1 : index
    %c0_323 = arith.constant 0 : index
    %c0_324 = arith.constant 0 : index
    %795 = vector.load %arg28[%c1_322, %c0_323, %c0_324] : memref<2x1x32xf32, #tpu.memory_space<vmem>>, vector<1x1x32xf32>
    %796 = vector.shape_cast %795 : vector<1x1x32xf32> to vector<1x32xf32>
    %c1_325 = arith.constant 1 : index
    %c0_326 = arith.constant 0 : index
    %c0_327 = arith.constant 0 : index
    %797 = vector.load %arg29[%c1_325, %c0_326, %c0_327] : memref<2x32x32xf32, #tpu.memory_space<vmem>>, vector<1x32x32xf32>
    %798 = vector.shape_cast %797 : vector<1x32x32xf32> to vector<32x32xf32>
    %c1_328 = arith.constant 1 : index
    %c0_329 = arith.constant 0 : index
    %c0_330 = arith.constant 0 : index
    %799 = vector.load %arg30[%c1_328, %c0_329, %c0_330] : memref<2x1x32xf32, #tpu.memory_space<vmem>>, vector<1x1x32xf32>
    %800 = vector.shape_cast %799 : vector<1x1x32xf32> to vector<1x32xf32>
    %c1_331 = arith.constant 1 : index
    %c0_332 = arith.constant 0 : index
    %c0_333 = arith.constant 0 : index
    %801 = vector.load %arg31[%c1_331, %c0_332, %c0_333] : memref<2x32x64xf32, #tpu.memory_space<vmem>>, vector<1x32x64xf32>
    %802 = vector.shape_cast %801 : vector<1x32x64xf32> to vector<32x64xf32>
    %c1_334 = arith.constant 1 : index
    %c0_335 = arith.constant 0 : index
    %c0_336 = arith.constant 0 : index
    %803 = vector.load %arg32[%c1_334, %c0_335, %c0_336] : memref<2x1x64xf32, #tpu.memory_space<vmem>>, vector<1x1x64xf32>
    %804 = vector.shape_cast %803 : vector<1x1x64xf32> to vector<1x64xf32>
    %c1_337 = arith.constant 1 : index
    %c0_338 = arith.constant 0 : index
    %c0_339 = arith.constant 0 : index
    %805 = vector.load %arg33[%c1_337, %c0_338, %c0_339] : memref<2x32x32xf32, #tpu.memory_space<vmem>>, vector<1x32x32xf32>
    %806 = vector.shape_cast %805 : vector<1x32x32xf32> to vector<32x32xf32>
    %c1_340 = arith.constant 1 : index
    %c0_341 = arith.constant 0 : index
    %c0_342 = arith.constant 0 : index
    %807 = vector.load %arg34[%c1_340, %c0_341, %c0_342] : memref<2x1x32xf32, #tpu.memory_space<vmem>>, vector<1x1x32xf32>
    %808 = vector.shape_cast %807 : vector<1x1x32xf32> to vector<1x32xf32>
    %c1_343 = arith.constant 1 : index
    %c0_344 = arith.constant 0 : index
    %c0_345 = arith.constant 0 : index
    %809 = vector.load %arg35[%c1_343, %c0_344, %c0_345] : memref<2x1x32xf32, #tpu.memory_space<vmem>>, vector<1x1x32xf32>
    %810 = vector.shape_cast %809 : vector<1x1x32xf32> to vector<1x32xf32>
    %c1_346 = arith.constant 1 : index
    %c0_347 = arith.constant 0 : index
    %c0_348 = arith.constant 0 : index
    %811 = vector.load %arg36[%c1_346, %c0_347, %c0_348] : memref<2x1x32xf32, #tpu.memory_space<vmem>>, vector<1x1x32xf32>
    %812 = vector.shape_cast %811 : vector<1x1x32xf32> to vector<1x32xf32>
    %c1_349 = arith.constant 1 : index
    %c0_350 = arith.constant 0 : index
    %c0_351 = arith.constant 0 : index
    %813 = vector.load %arg37[%c1_349, %c0_350, %c0_351] : memref<2x32x64xf32, #tpu.memory_space<vmem>>, vector<1x32x64xf32>
    %814 = vector.shape_cast %813 : vector<1x32x64xf32> to vector<32x64xf32>
    %c1_352 = arith.constant 1 : index
    %c0_353 = arith.constant 0 : index
    %c0_354 = arith.constant 0 : index
    %815 = vector.load %arg38[%c1_352, %c0_353, %c0_354] : memref<2x1x64xf32, #tpu.memory_space<vmem>>, vector<1x1x64xf32>
    %816 = vector.shape_cast %815 : vector<1x1x64xf32> to vector<1x64xf32>
    %c1_355 = arith.constant 1 : index
    %c0_356 = arith.constant 0 : index
    %c0_357 = arith.constant 0 : index
    %817 = vector.load %arg39[%c1_355, %c0_356, %c0_357] : memref<2x64x32xf32, #tpu.memory_space<vmem>>, vector<1x64x32xf32>
    %818 = vector.shape_cast %817 : vector<1x64x32xf32> to vector<64x32xf32>
    %c1_358 = arith.constant 1 : index
    %c0_359 = arith.constant 0 : index
    %c0_360 = arith.constant 0 : index
    %819 = vector.load %arg40[%c1_358, %c0_359, %c0_360] : memref<2x1x32xf32, #tpu.memory_space<vmem>>, vector<1x1x32xf32>
    %820 = vector.shape_cast %819 : vector<1x1x32xf32> to vector<1x32xf32>
    %c1_361 = arith.constant 1 : index
    %c0_362 = arith.constant 0 : index
    %c0_363 = arith.constant 0 : index
    %821 = vector.load %arg41[%c1_361, %c0_362, %c0_363] : memref<2x1x32xf32, #tpu.memory_space<vmem>>, vector<1x1x32xf32>
    %822 = vector.shape_cast %821 : vector<1x1x32xf32> to vector<1x32xf32>
    %c1_364 = arith.constant 1 : index
    %c0_365 = arith.constant 0 : index
    %c0_366 = arith.constant 0 : index
    %823 = vector.load %arg42[%c1_364, %c0_365, %c0_366] : memref<2x1x32xf32, #tpu.memory_space<vmem>>, vector<1x1x32xf32>
    %824 = vector.shape_cast %823 : vector<1x1x32xf32> to vector<1x32xf32>
    %825 = arith.truncf %784 : vector<6x32xf32> to vector<6x32xbf16>
    %826 = arith.truncf %786 : vector<32x96xf32> to vector<32x96xbf16>
    %cst_367 = arith.constant dense<0.000000e+00> : vector<6x96xf32>
    %827 = tpu.matmul %825, %826, %cst_367 {dimension_numbers = #tpu.dot_dimension_numbers<[1], [0], [0], [1], [0, 0, 1, 1], [], []>} : vector<6x32xbf16>, vector<32x96xbf16>, vector<6x96xf32> -> vector<6x96xf32>
    %828 = vector.broadcast %788 : vector<1x96xf32> to vector<6x96xf32>
    %829 = arith.addf %827, %828 : vector<6x96xf32>
    %830 = vector.extract_strided_slice %829 {offsets = [0, 0], sizes = [6, 32], strides = [1, 1]} : vector<6x96xf32> to vector<6x32xf32>
    %831 = vector.extract_strided_slice %829 {offsets = [0, 32], sizes = [6, 32], strides = [1, 1]} : vector<6x96xf32> to vector<6x32xf32>
    %832 = vector.extract_strided_slice %829 {offsets = [0, 64], sizes = [6, 32], strides = [1, 1]} : vector<6x96xf32> to vector<6x32xf32>
    %833 = tpu.iota {dimensions = array<i32: 0>} : vector<6x6xi32>
    %834 = tpu.iota {dimensions = array<i32: 1>} : vector<6x6xi32>
    %835 = arith.cmpi sgt, %834, %833 : vector<6x6xi32>
    %cst_368 = arith.constant -1.000000e+09 : f32
    %cst_369 = arith.constant 0.000000e+00 : f32
    %836 = vector.broadcast %cst_368 : f32 to vector<6x6xf32>
    %837 = vector.broadcast %cst_369 : f32 to vector<6x6xf32>
    %838 = arith.select %835, %836, %837 : vector<6x6xi1>, vector<6x6xf32>
    %839 = vector.extract_strided_slice %830 {offsets = [0, 0], sizes = [6, 8], strides = [1, 1]} : vector<6x32xf32> to vector<6x8xf32>
    %840 = arith.truncf %839 : vector<6x8xf32> to vector<6x8xbf16>
    %841 = vector.extract_strided_slice %831 {offsets = [0, 0], sizes = [6, 8], strides = [1, 1]} : vector<6x32xf32> to vector<6x8xf32>
    %842 = arith.truncf %841 : vector<6x8xf32> to vector<6x8xbf16>
    %843 = vector.extract_strided_slice %832 {offsets = [0, 0], sizes = [6, 8], strides = [1, 1]} : vector<6x32xf32> to vector<6x8xf32>
    %844 = arith.truncf %843 : vector<6x8xf32> to vector<6x8xbf16>
    %cst_370 = arith.constant dense<0.000000e+00> : vector<6x6xf32>
    %845 = tpu.matmul %840, %842, %cst_370 {dimension_numbers = #tpu.dot_dimension_numbers<[1], [1], [0], [0], [0, 0, 1, 0], [], []>} : vector<6x8xbf16>, vector<6x8xbf16>, vector<6x6xf32> -> vector<6x6xf32>
    %cst_371 = arith.constant 0.353553385 : f32
    %846 = vector.broadcast %cst_371 : f32 to vector<6x6xf32>
    %847 = arith.mulf %845, %846 : vector<6x6xf32>
    %848 = arith.addf %847, %838 : vector<6x6xf32>
    %cst_372 = arith.constant dense<0xFF800000> : vector<6xf32>
    %849 = vector.multi_reduction <maximumf>, %848, %cst_372 [1] : vector<6x6xf32> to vector<6xf32>
    %850 = vector.shape_cast %849 : vector<6xf32> to vector<6x1xf32>
    %851 = vector.broadcast %850 : vector<6x1xf32> to vector<6x6xf32>
    %852 = arith.subf %848, %851 : vector<6x6xf32>
    %853 = math.exp %852 : vector<6x6xf32>
    %cst_373 = arith.constant dense<0.000000e+00> : vector<6xf32>
    %854 = vector.multi_reduction <add>, %853, %cst_373 [1] : vector<6x6xf32> to vector<6xf32>
    %855 = vector.shape_cast %854 : vector<6xf32> to vector<6x1xf32>
    %856 = tpu.reciprocal %855 {approx = true} : vector<6x1xf32> -> vector<6x1xf32>
    %857 = vector.broadcast %856 : vector<6x1xf32> to vector<6x6xf32>
    %858 = arith.mulf %853, %857 : vector<6x6xf32>
    %859 = arith.truncf %858 : vector<6x6xf32> to vector<6x6xbf16>
    %cst_374 = arith.constant dense<0.000000e+00> : vector<6x8xf32>
    %860 = tpu.matmul %859, %844, %cst_374 {dimension_numbers = #tpu.dot_dimension_numbers<[1], [0], [0], [1], [0, 0, 1, 1], [], []>} : vector<6x6xbf16>, vector<6x8xbf16>, vector<6x8xf32> -> vector<6x8xf32>
    %861 = arith.truncf %860 : vector<6x8xf32> to vector<6x8xbf16>
    %862 = vector.extract_strided_slice %790 {offsets = [0, 0], sizes = [8, 32], strides = [1, 1]} : vector<32x32xf32> to vector<8x32xf32>
    %863 = arith.truncf %862 : vector<8x32xf32> to vector<8x32xbf16>
    %cst_375 = arith.constant dense<0.000000e+00> : vector<6x32xf32>
    %864 = tpu.matmul %861, %863, %cst_375 {dimension_numbers = #tpu.dot_dimension_numbers<[1], [0], [0], [1], [0, 0, 1, 1], [], []>} : vector<6x8xbf16>, vector<8x32xbf16>, vector<6x32xf32> -> vector<6x32xf32>
    %865 = vector.extract_strided_slice %830 {offsets = [0, 8], sizes = [6, 8], strides = [1, 1]} : vector<6x32xf32> to vector<6x8xf32>
    %866 = arith.truncf %865 : vector<6x8xf32> to vector<6x8xbf16>
    %867 = vector.extract_strided_slice %831 {offsets = [0, 8], sizes = [6, 8], strides = [1, 1]} : vector<6x32xf32> to vector<6x8xf32>
    %868 = arith.truncf %867 : vector<6x8xf32> to vector<6x8xbf16>
    %869 = vector.extract_strided_slice %832 {offsets = [0, 8], sizes = [6, 8], strides = [1, 1]} : vector<6x32xf32> to vector<6x8xf32>
    %870 = arith.truncf %869 : vector<6x8xf32> to vector<6x8xbf16>
    %cst_376 = arith.constant dense<0.000000e+00> : vector<6x6xf32>
    %871 = tpu.matmul %866, %868, %cst_376 {dimension_numbers = #tpu.dot_dimension_numbers<[1], [1], [0], [0], [0, 0, 1, 0], [], []>} : vector<6x8xbf16>, vector<6x8xbf16>, vector<6x6xf32> -> vector<6x6xf32>
    %cst_377 = arith.constant 0.353553385 : f32
    %872 = vector.broadcast %cst_377 : f32 to vector<6x6xf32>
    %873 = arith.mulf %871, %872 : vector<6x6xf32>
    %874 = arith.addf %873, %838 : vector<6x6xf32>
    %cst_378 = arith.constant dense<0xFF800000> : vector<6xf32>
    %875 = vector.multi_reduction <maximumf>, %874, %cst_378 [1] : vector<6x6xf32> to vector<6xf32>
    %876 = vector.shape_cast %875 : vector<6xf32> to vector<6x1xf32>
    %877 = vector.broadcast %876 : vector<6x1xf32> to vector<6x6xf32>
    %878 = arith.subf %874, %877 : vector<6x6xf32>
    %879 = math.exp %878 : vector<6x6xf32>
    %cst_379 = arith.constant dense<0.000000e+00> : vector<6xf32>
    %880 = vector.multi_reduction <add>, %879, %cst_379 [1] : vector<6x6xf32> to vector<6xf32>
    %881 = vector.shape_cast %880 : vector<6xf32> to vector<6x1xf32>
    %882 = tpu.reciprocal %881 {approx = true} : vector<6x1xf32> -> vector<6x1xf32>
    %883 = vector.broadcast %882 : vector<6x1xf32> to vector<6x6xf32>
    %884 = arith.mulf %879, %883 : vector<6x6xf32>
    %885 = arith.truncf %884 : vector<6x6xf32> to vector<6x6xbf16>
    %cst_380 = arith.constant dense<0.000000e+00> : vector<6x8xf32>
    %886 = tpu.matmul %885, %870, %cst_380 {dimension_numbers = #tpu.dot_dimension_numbers<[1], [0], [0], [1], [0, 0, 1, 1], [], []>} : vector<6x6xbf16>, vector<6x8xbf16>, vector<6x8xf32> -> vector<6x8xf32>
    %887 = arith.truncf %886 : vector<6x8xf32> to vector<6x8xbf16>
    %888 = vector.extract_strided_slice %790 {offsets = [8, 0], sizes = [8, 32], strides = [1, 1]} : vector<32x32xf32> to vector<8x32xf32>
    %889 = arith.truncf %888 : vector<8x32xf32> to vector<8x32xbf16>
    %cst_381 = arith.constant dense<0.000000e+00> : vector<6x32xf32>
    %890 = tpu.matmul %887, %889, %cst_381 {dimension_numbers = #tpu.dot_dimension_numbers<[1], [0], [0], [1], [0, 0, 1, 1], [], []>} : vector<6x8xbf16>, vector<8x32xbf16>, vector<6x32xf32> -> vector<6x32xf32>
    %891 = arith.addf %864, %890 : vector<6x32xf32>
    %892 = vector.extract_strided_slice %830 {offsets = [0, 16], sizes = [6, 8], strides = [1, 1]} : vector<6x32xf32> to vector<6x8xf32>
    %893 = arith.truncf %892 : vector<6x8xf32> to vector<6x8xbf16>
    %894 = vector.extract_strided_slice %831 {offsets = [0, 16], sizes = [6, 8], strides = [1, 1]} : vector<6x32xf32> to vector<6x8xf32>
    %895 = arith.truncf %894 : vector<6x8xf32> to vector<6x8xbf16>
    %896 = vector.extract_strided_slice %832 {offsets = [0, 16], sizes = [6, 8], strides = [1, 1]} : vector<6x32xf32> to vector<6x8xf32>
    %897 = arith.truncf %896 : vector<6x8xf32> to vector<6x8xbf16>
    %cst_382 = arith.constant dense<0.000000e+00> : vector<6x6xf32>
    %898 = tpu.matmul %893, %895, %cst_382 {dimension_numbers = #tpu.dot_dimension_numbers<[1], [1], [0], [0], [0, 0, 1, 0], [], []>} : vector<6x8xbf16>, vector<6x8xbf16>, vector<6x6xf32> -> vector<6x6xf32>
    %cst_383 = arith.constant 0.353553385 : f32
    %899 = vector.broadcast %cst_383 : f32 to vector<6x6xf32>
    %900 = arith.mulf %898, %899 : vector<6x6xf32>
    %901 = arith.addf %900, %838 : vector<6x6xf32>
    %cst_384 = arith.constant dense<0xFF800000> : vector<6xf32>
    %902 = vector.multi_reduction <maximumf>, %901, %cst_384 [1] : vector<6x6xf32> to vector<6xf32>
    %903 = vector.shape_cast %902 : vector<6xf32> to vector<6x1xf32>
    %904 = vector.broadcast %903 : vector<6x1xf32> to vector<6x6xf32>
    %905 = arith.subf %901, %904 : vector<6x6xf32>
    %906 = math.exp %905 : vector<6x6xf32>
    %cst_385 = arith.constant dense<0.000000e+00> : vector<6xf32>
    %907 = vector.multi_reduction <add>, %906, %cst_385 [1] : vector<6x6xf32> to vector<6xf32>
    %908 = vector.shape_cast %907 : vector<6xf32> to vector<6x1xf32>
    %909 = tpu.reciprocal %908 {approx = true} : vector<6x1xf32> -> vector<6x1xf32>
    %910 = vector.broadcast %909 : vector<6x1xf32> to vector<6x6xf32>
    %911 = arith.mulf %906, %910 : vector<6x6xf32>
    %912 = arith.truncf %911 : vector<6x6xf32> to vector<6x6xbf16>
    %cst_386 = arith.constant dense<0.000000e+00> : vector<6x8xf32>
    %913 = tpu.matmul %912, %897, %cst_386 {dimension_numbers = #tpu.dot_dimension_numbers<[1], [0], [0], [1], [0, 0, 1, 1], [], []>} : vector<6x6xbf16>, vector<6x8xbf16>, vector<6x8xf32> -> vector<6x8xf32>
    %914 = arith.truncf %913 : vector<6x8xf32> to vector<6x8xbf16>
    %915 = vector.extract_strided_slice %790 {offsets = [16, 0], sizes = [8, 32], strides = [1, 1]} : vector<32x32xf32> to vector<8x32xf32>
    %916 = arith.truncf %915 : vector<8x32xf32> to vector<8x32xbf16>
    %cst_387 = arith.constant dense<0.000000e+00> : vector<6x32xf32>
    %917 = tpu.matmul %914, %916, %cst_387 {dimension_numbers = #tpu.dot_dimension_numbers<[1], [0], [0], [1], [0, 0, 1, 1], [], []>} : vector<6x8xbf16>, vector<8x32xbf16>, vector<6x32xf32> -> vector<6x32xf32>
    %918 = arith.addf %891, %917 : vector<6x32xf32>
    %919 = vector.extract_strided_slice %830 {offsets = [0, 24], sizes = [6, 8], strides = [1, 1]} : vector<6x32xf32> to vector<6x8xf32>
    %920 = arith.truncf %919 : vector<6x8xf32> to vector<6x8xbf16>
    %921 = vector.extract_strided_slice %831 {offsets = [0, 24], sizes = [6, 8], strides = [1, 1]} : vector<6x32xf32> to vector<6x8xf32>
    %922 = arith.truncf %921 : vector<6x8xf32> to vector<6x8xbf16>
    %923 = vector.extract_strided_slice %832 {offsets = [0, 24], sizes = [6, 8], strides = [1, 1]} : vector<6x32xf32> to vector<6x8xf32>
    %924 = arith.truncf %923 : vector<6x8xf32> to vector<6x8xbf16>
    %cst_388 = arith.constant dense<0.000000e+00> : vector<6x6xf32>
    %925 = tpu.matmul %920, %922, %cst_388 {dimension_numbers = #tpu.dot_dimension_numbers<[1], [1], [0], [0], [0, 0, 1, 0], [], []>} : vector<6x8xbf16>, vector<6x8xbf16>, vector<6x6xf32> -> vector<6x6xf32>
    %cst_389 = arith.constant 0.353553385 : f32
    %926 = vector.broadcast %cst_389 : f32 to vector<6x6xf32>
    %927 = arith.mulf %925, %926 : vector<6x6xf32>
    %928 = arith.addf %927, %838 : vector<6x6xf32>
    %cst_390 = arith.constant dense<0xFF800000> : vector<6xf32>
    %929 = vector.multi_reduction <maximumf>, %928, %cst_390 [1] : vector<6x6xf32> to vector<6xf32>
    %930 = vector.shape_cast %929 : vector<6xf32> to vector<6x1xf32>
    %931 = vector.broadcast %930 : vector<6x1xf32> to vector<6x6xf32>
    %932 = arith.subf %928, %931 : vector<6x6xf32>
    %933 = math.exp %932 : vector<6x6xf32>
    %cst_391 = arith.constant dense<0.000000e+00> : vector<6xf32>
    %934 = vector.multi_reduction <add>, %933, %cst_391 [1] : vector<6x6xf32> to vector<6xf32>
    %935 = vector.shape_cast %934 : vector<6xf32> to vector<6x1xf32>
    %936 = tpu.reciprocal %935 {approx = true} : vector<6x1xf32> -> vector<6x1xf32>
    %937 = vector.broadcast %936 : vector<6x1xf32> to vector<6x6xf32>
    %938 = arith.mulf %933, %937 : vector<6x6xf32>
    %939 = arith.truncf %938 : vector<6x6xf32> to vector<6x6xbf16>
    %cst_392 = arith.constant dense<0.000000e+00> : vector<6x8xf32>
    %940 = tpu.matmul %939, %924, %cst_392 {dimension_numbers = #tpu.dot_dimension_numbers<[1], [0], [0], [1], [0, 0, 1, 1], [], []>} : vector<6x6xbf16>, vector<6x8xbf16>, vector<6x8xf32> -> vector<6x8xf32>
    %941 = arith.truncf %940 : vector<6x8xf32> to vector<6x8xbf16>
    %942 = vector.extract_strided_slice %790 {offsets = [24, 0], sizes = [8, 32], strides = [1, 1]} : vector<32x32xf32> to vector<8x32xf32>
    %943 = arith.truncf %942 : vector<8x32xf32> to vector<8x32xbf16>
    %cst_393 = arith.constant dense<0.000000e+00> : vector<6x32xf32>
    %944 = tpu.matmul %941, %943, %cst_393 {dimension_numbers = #tpu.dot_dimension_numbers<[1], [0], [0], [1], [0, 0, 1, 1], [], []>} : vector<6x8xbf16>, vector<8x32xbf16>, vector<6x32xf32> -> vector<6x32xf32>
    %945 = arith.addf %918, %944 : vector<6x32xf32>
    %946 = vector.broadcast %792 : vector<1x32xf32> to vector<6x32xf32>
    %947 = arith.addf %945, %946 : vector<6x32xf32>
    %948 = arith.addf %784, %947 : vector<6x32xf32>
    %cst_394 = arith.constant dense<0.000000e+00> : vector<6xf32>
    %949 = vector.multi_reduction <add>, %948, %cst_394 [1] : vector<6x32xf32> to vector<6xf32>
    %950 = vector.shape_cast %949 : vector<6xf32> to vector<6x1xf32>
    %cst_395 = arith.constant 3.200000e+01 : f32
    %951 = vector.broadcast %cst_395 : f32 to vector<6x1xf32>
    %952 = arith.divf %950, %951 : vector<6x1xf32>
    %953 = vector.broadcast %952 : vector<6x1xf32> to vector<6x32xf32>
    %954 = arith.subf %948, %953 : vector<6x32xf32>
    %955 = arith.mulf %954, %954 : vector<6x32xf32>
    %cst_396 = arith.constant dense<0.000000e+00> : vector<6xf32>
    %956 = vector.multi_reduction <add>, %955, %cst_396 [1] : vector<6x32xf32> to vector<6xf32>
    %957 = vector.shape_cast %956 : vector<6xf32> to vector<6x1xf32>
    %cst_397 = arith.constant 3.200000e+01 : f32
    %958 = vector.broadcast %cst_397 : f32 to vector<6x1xf32>
    %959 = arith.divf %957, %958 : vector<6x1xf32>
    %cst_398 = arith.constant 9.99999974E-6 : f32
    %960 = vector.broadcast %cst_398 : f32 to vector<6x1xf32>
    %961 = arith.addf %959, %960 : vector<6x1xf32>
    %962 = math.rsqrt %961 : vector<6x1xf32>
    %963 = vector.broadcast %962 : vector<6x1xf32> to vector<6x32xf32>
    %964 = arith.mulf %954, %963 : vector<6x32xf32>
    %965 = vector.broadcast %794 : vector<1x32xf32> to vector<6x32xf32>
    %966 = arith.mulf %964, %965 : vector<6x32xf32>
    %967 = vector.broadcast %796 : vector<1x32xf32> to vector<6x32xf32>
    %968 = arith.addf %966, %967 : vector<6x32xf32>
    %969 = arith.truncf %968 : vector<6x32xf32> to vector<6x32xbf16>
    %970 = arith.truncf %798 : vector<32x32xf32> to vector<32x32xbf16>
    %cst_399 = arith.constant dense<0.000000e+00> : vector<6x32xf32>
    %971 = tpu.matmul %969, %970, %cst_399 {dimension_numbers = #tpu.dot_dimension_numbers<[1], [0], [0], [1], [0, 0, 1, 1], [], []>} : vector<6x32xbf16>, vector<32x32xbf16>, vector<6x32xf32> -> vector<6x32xf32>
    %972 = vector.broadcast %800 : vector<1x32xf32> to vector<6x32xf32>
    %973 = arith.addf %971, %972 : vector<6x32xf32>
    %974 = arith.truncf %416 : vector<8x32xf32> to vector<8x32xbf16>
    %975 = arith.truncf %802 : vector<32x64xf32> to vector<32x64xbf16>
    %cst_400 = arith.constant dense<0.000000e+00> : vector<8x64xf32>
    %976 = tpu.matmul %974, %975, %cst_400 {dimension_numbers = #tpu.dot_dimension_numbers<[1], [0], [0], [1], [0, 0, 1, 1], [], []>} : vector<8x32xbf16>, vector<32x64xbf16>, vector<8x64xf32> -> vector<8x64xf32>
    %977 = vector.broadcast %804 : vector<1x64xf32> to vector<8x64xf32>
    %978 = arith.addf %976, %977 : vector<8x64xf32>
    %979 = vector.extract_strided_slice %978 {offsets = [0, 0], sizes = [8, 32], strides = [1, 1]} : vector<8x64xf32> to vector<8x32xf32>
    %980 = vector.extract_strided_slice %978 {offsets = [0, 32], sizes = [8, 32], strides = [1, 1]} : vector<8x64xf32> to vector<8x32xf32>
    %981 = vector.extract_strided_slice %973 {offsets = [0, 0], sizes = [6, 8], strides = [1, 1]} : vector<6x32xf32> to vector<6x8xf32>
    %982 = arith.truncf %981 : vector<6x8xf32> to vector<6x8xbf16>
    %983 = vector.extract_strided_slice %979 {offsets = [0, 0], sizes = [8, 8], strides = [1, 1]} : vector<8x32xf32> to vector<8x8xf32>
    %984 = arith.truncf %983 : vector<8x8xf32> to vector<8x8xbf16>
    %985 = vector.extract_strided_slice %980 {offsets = [0, 0], sizes = [8, 8], strides = [1, 1]} : vector<8x32xf32> to vector<8x8xf32>
    %986 = arith.truncf %985 : vector<8x8xf32> to vector<8x8xbf16>
    %cst_401 = arith.constant dense<0.000000e+00> : vector<6x8xf32>
    %987 = tpu.matmul %982, %984, %cst_401 {dimension_numbers = #tpu.dot_dimension_numbers<[1], [1], [0], [0], [0, 0, 1, 0], [], []>} : vector<6x8xbf16>, vector<8x8xbf16>, vector<6x8xf32> -> vector<6x8xf32>
    %cst_402 = arith.constant 0.353553385 : f32
    %988 = vector.broadcast %cst_402 : f32 to vector<6x8xf32>
    %989 = arith.mulf %987, %988 : vector<6x8xf32>
    %cst_403 = arith.constant dense<0xFF800000> : vector<6xf32>
    %990 = vector.multi_reduction <maximumf>, %989, %cst_403 [1] : vector<6x8xf32> to vector<6xf32>
    %991 = vector.shape_cast %990 : vector<6xf32> to vector<6x1xf32>
    %992 = vector.broadcast %991 : vector<6x1xf32> to vector<6x8xf32>
    %993 = arith.subf %989, %992 : vector<6x8xf32>
    %994 = math.exp %993 : vector<6x8xf32>
    %cst_404 = arith.constant dense<0.000000e+00> : vector<6xf32>
    %995 = vector.multi_reduction <add>, %994, %cst_404 [1] : vector<6x8xf32> to vector<6xf32>
    %996 = vector.shape_cast %995 : vector<6xf32> to vector<6x1xf32>
    %997 = tpu.reciprocal %996 {approx = true} : vector<6x1xf32> -> vector<6x1xf32>
    %998 = vector.broadcast %997 : vector<6x1xf32> to vector<6x8xf32>
    %999 = arith.mulf %994, %998 : vector<6x8xf32>
    %1000 = arith.truncf %999 : vector<6x8xf32> to vector<6x8xbf16>
    %cst_405 = arith.constant dense<0.000000e+00> : vector<6x8xf32>
    %1001 = tpu.matmul %1000, %986, %cst_405 {dimension_numbers = #tpu.dot_dimension_numbers<[1], [0], [0], [1], [0, 0, 1, 1], [], []>} : vector<6x8xbf16>, vector<8x8xbf16>, vector<6x8xf32> -> vector<6x8xf32>
    %1002 = arith.truncf %1001 : vector<6x8xf32> to vector<6x8xbf16>
    %1003 = vector.extract_strided_slice %806 {offsets = [0, 0], sizes = [8, 32], strides = [1, 1]} : vector<32x32xf32> to vector<8x32xf32>
    %1004 = arith.truncf %1003 : vector<8x32xf32> to vector<8x32xbf16>
    %cst_406 = arith.constant dense<0.000000e+00> : vector<6x32xf32>
    %1005 = tpu.matmul %1002, %1004, %cst_406 {dimension_numbers = #tpu.dot_dimension_numbers<[1], [0], [0], [1], [0, 0, 1, 1], [], []>} : vector<6x8xbf16>, vector<8x32xbf16>, vector<6x32xf32> -> vector<6x32xf32>
    %1006 = vector.extract_strided_slice %973 {offsets = [0, 8], sizes = [6, 8], strides = [1, 1]} : vector<6x32xf32> to vector<6x8xf32>
    %1007 = arith.truncf %1006 : vector<6x8xf32> to vector<6x8xbf16>
    %1008 = vector.extract_strided_slice %979 {offsets = [0, 8], sizes = [8, 8], strides = [1, 1]} : vector<8x32xf32> to vector<8x8xf32>
    %1009 = arith.truncf %1008 : vector<8x8xf32> to vector<8x8xbf16>
    %1010 = vector.extract_strided_slice %980 {offsets = [0, 8], sizes = [8, 8], strides = [1, 1]} : vector<8x32xf32> to vector<8x8xf32>
    %1011 = arith.truncf %1010 : vector<8x8xf32> to vector<8x8xbf16>
    %cst_407 = arith.constant dense<0.000000e+00> : vector<6x8xf32>
    %1012 = tpu.matmul %1007, %1009, %cst_407 {dimension_numbers = #tpu.dot_dimension_numbers<[1], [1], [0], [0], [0, 0, 1, 0], [], []>} : vector<6x8xbf16>, vector<8x8xbf16>, vector<6x8xf32> -> vector<6x8xf32>
    %cst_408 = arith.constant 0.353553385 : f32
    %1013 = vector.broadcast %cst_408 : f32 to vector<6x8xf32>
    %1014 = arith.mulf %1012, %1013 : vector<6x8xf32>
    %cst_409 = arith.constant dense<0xFF800000> : vector<6xf32>
    %1015 = vector.multi_reduction <maximumf>, %1014, %cst_409 [1] : vector<6x8xf32> to vector<6xf32>
    %1016 = vector.shape_cast %1015 : vector<6xf32> to vector<6x1xf32>
    %1017 = vector.broadcast %1016 : vector<6x1xf32> to vector<6x8xf32>
    %1018 = arith.subf %1014, %1017 : vector<6x8xf32>
    %1019 = math.exp %1018 : vector<6x8xf32>
    %cst_410 = arith.constant dense<0.000000e+00> : vector<6xf32>
    %1020 = vector.multi_reduction <add>, %1019, %cst_410 [1] : vector<6x8xf32> to vector<6xf32>
    %1021 = vector.shape_cast %1020 : vector<6xf32> to vector<6x1xf32>
    %1022 = tpu.reciprocal %1021 {approx = true} : vector<6x1xf32> -> vector<6x1xf32>
    %1023 = vector.broadcast %1022 : vector<6x1xf32> to vector<6x8xf32>
    %1024 = arith.mulf %1019, %1023 : vector<6x8xf32>
    %1025 = arith.truncf %1024 : vector<6x8xf32> to vector<6x8xbf16>
    %cst_411 = arith.constant dense<0.000000e+00> : vector<6x8xf32>
    %1026 = tpu.matmul %1025, %1011, %cst_411 {dimension_numbers = #tpu.dot_dimension_numbers<[1], [0], [0], [1], [0, 0, 1, 1], [], []>} : vector<6x8xbf16>, vector<8x8xbf16>, vector<6x8xf32> -> vector<6x8xf32>
    %1027 = arith.truncf %1026 : vector<6x8xf32> to vector<6x8xbf16>
    %1028 = vector.extract_strided_slice %806 {offsets = [8, 0], sizes = [8, 32], strides = [1, 1]} : vector<32x32xf32> to vector<8x32xf32>
    %1029 = arith.truncf %1028 : vector<8x32xf32> to vector<8x32xbf16>
    %cst_412 = arith.constant dense<0.000000e+00> : vector<6x32xf32>
    %1030 = tpu.matmul %1027, %1029, %cst_412 {dimension_numbers = #tpu.dot_dimension_numbers<[1], [0], [0], [1], [0, 0, 1, 1], [], []>} : vector<6x8xbf16>, vector<8x32xbf16>, vector<6x32xf32> -> vector<6x32xf32>
    %1031 = arith.addf %1005, %1030 : vector<6x32xf32>
    %1032 = vector.extract_strided_slice %973 {offsets = [0, 16], sizes = [6, 8], strides = [1, 1]} : vector<6x32xf32> to vector<6x8xf32>
    %1033 = arith.truncf %1032 : vector<6x8xf32> to vector<6x8xbf16>
    %1034 = vector.extract_strided_slice %979 {offsets = [0, 16], sizes = [8, 8], strides = [1, 1]} : vector<8x32xf32> to vector<8x8xf32>
    %1035 = arith.truncf %1034 : vector<8x8xf32> to vector<8x8xbf16>
    %1036 = vector.extract_strided_slice %980 {offsets = [0, 16], sizes = [8, 8], strides = [1, 1]} : vector<8x32xf32> to vector<8x8xf32>
    %1037 = arith.truncf %1036 : vector<8x8xf32> to vector<8x8xbf16>
    %cst_413 = arith.constant dense<0.000000e+00> : vector<6x8xf32>
    %1038 = tpu.matmul %1033, %1035, %cst_413 {dimension_numbers = #tpu.dot_dimension_numbers<[1], [1], [0], [0], [0, 0, 1, 0], [], []>} : vector<6x8xbf16>, vector<8x8xbf16>, vector<6x8xf32> -> vector<6x8xf32>
    %cst_414 = arith.constant 0.353553385 : f32
    %1039 = vector.broadcast %cst_414 : f32 to vector<6x8xf32>
    %1040 = arith.mulf %1038, %1039 : vector<6x8xf32>
    %cst_415 = arith.constant dense<0xFF800000> : vector<6xf32>
    %1041 = vector.multi_reduction <maximumf>, %1040, %cst_415 [1] : vector<6x8xf32> to vector<6xf32>
    %1042 = vector.shape_cast %1041 : vector<6xf32> to vector<6x1xf32>
    %1043 = vector.broadcast %1042 : vector<6x1xf32> to vector<6x8xf32>
    %1044 = arith.subf %1040, %1043 : vector<6x8xf32>
    %1045 = math.exp %1044 : vector<6x8xf32>
    %cst_416 = arith.constant dense<0.000000e+00> : vector<6xf32>
    %1046 = vector.multi_reduction <add>, %1045, %cst_416 [1] : vector<6x8xf32> to vector<6xf32>
    %1047 = vector.shape_cast %1046 : vector<6xf32> to vector<6x1xf32>
    %1048 = tpu.reciprocal %1047 {approx = true} : vector<6x1xf32> -> vector<6x1xf32>
    %1049 = vector.broadcast %1048 : vector<6x1xf32> to vector<6x8xf32>
    %1050 = arith.mulf %1045, %1049 : vector<6x8xf32>
    %1051 = arith.truncf %1050 : vector<6x8xf32> to vector<6x8xbf16>
    %cst_417 = arith.constant dense<0.000000e+00> : vector<6x8xf32>
    %1052 = tpu.matmul %1051, %1037, %cst_417 {dimension_numbers = #tpu.dot_dimension_numbers<[1], [0], [0], [1], [0, 0, 1, 1], [], []>} : vector<6x8xbf16>, vector<8x8xbf16>, vector<6x8xf32> -> vector<6x8xf32>
    %1053 = arith.truncf %1052 : vector<6x8xf32> to vector<6x8xbf16>
    %1054 = vector.extract_strided_slice %806 {offsets = [16, 0], sizes = [8, 32], strides = [1, 1]} : vector<32x32xf32> to vector<8x32xf32>
    %1055 = arith.truncf %1054 : vector<8x32xf32> to vector<8x32xbf16>
    %cst_418 = arith.constant dense<0.000000e+00> : vector<6x32xf32>
    %1056 = tpu.matmul %1053, %1055, %cst_418 {dimension_numbers = #tpu.dot_dimension_numbers<[1], [0], [0], [1], [0, 0, 1, 1], [], []>} : vector<6x8xbf16>, vector<8x32xbf16>, vector<6x32xf32> -> vector<6x32xf32>
    %1057 = arith.addf %1031, %1056 : vector<6x32xf32>
    %1058 = vector.extract_strided_slice %973 {offsets = [0, 24], sizes = [6, 8], strides = [1, 1]} : vector<6x32xf32> to vector<6x8xf32>
    %1059 = arith.truncf %1058 : vector<6x8xf32> to vector<6x8xbf16>
    %1060 = vector.extract_strided_slice %979 {offsets = [0, 24], sizes = [8, 8], strides = [1, 1]} : vector<8x32xf32> to vector<8x8xf32>
    %1061 = arith.truncf %1060 : vector<8x8xf32> to vector<8x8xbf16>
    %1062 = vector.extract_strided_slice %980 {offsets = [0, 24], sizes = [8, 8], strides = [1, 1]} : vector<8x32xf32> to vector<8x8xf32>
    %1063 = arith.truncf %1062 : vector<8x8xf32> to vector<8x8xbf16>
    %cst_419 = arith.constant dense<0.000000e+00> : vector<6x8xf32>
    %1064 = tpu.matmul %1059, %1061, %cst_419 {dimension_numbers = #tpu.dot_dimension_numbers<[1], [1], [0], [0], [0, 0, 1, 0], [], []>} : vector<6x8xbf16>, vector<8x8xbf16>, vector<6x8xf32> -> vector<6x8xf32>
    %cst_420 = arith.constant 0.353553385 : f32
    %1065 = vector.broadcast %cst_420 : f32 to vector<6x8xf32>
    %1066 = arith.mulf %1064, %1065 : vector<6x8xf32>
    %cst_421 = arith.constant dense<0xFF800000> : vector<6xf32>
    %1067 = vector.multi_reduction <maximumf>, %1066, %cst_421 [1] : vector<6x8xf32> to vector<6xf32>
    %1068 = vector.shape_cast %1067 : vector<6xf32> to vector<6x1xf32>
    %1069 = vector.broadcast %1068 : vector<6x1xf32> to vector<6x8xf32>
    %1070 = arith.subf %1066, %1069 : vector<6x8xf32>
    %1071 = math.exp %1070 : vector<6x8xf32>
    %cst_422 = arith.constant dense<0.000000e+00> : vector<6xf32>
    %1072 = vector.multi_reduction <add>, %1071, %cst_422 [1] : vector<6x8xf32> to vector<6xf32>
    %1073 = vector.shape_cast %1072 : vector<6xf32> to vector<6x1xf32>
    %1074 = tpu.reciprocal %1073 {approx = true} : vector<6x1xf32> -> vector<6x1xf32>
    %1075 = vector.broadcast %1074 : vector<6x1xf32> to vector<6x8xf32>
    %1076 = arith.mulf %1071, %1075 : vector<6x8xf32>
    %1077 = arith.truncf %1076 : vector<6x8xf32> to vector<6x8xbf16>
    %cst_423 = arith.constant dense<0.000000e+00> : vector<6x8xf32>
    %1078 = tpu.matmul %1077, %1063, %cst_423 {dimension_numbers = #tpu.dot_dimension_numbers<[1], [0], [0], [1], [0, 0, 1, 1], [], []>} : vector<6x8xbf16>, vector<8x8xbf16>, vector<6x8xf32> -> vector<6x8xf32>
    %1079 = arith.truncf %1078 : vector<6x8xf32> to vector<6x8xbf16>
    %1080 = vector.extract_strided_slice %806 {offsets = [24, 0], sizes = [8, 32], strides = [1, 1]} : vector<32x32xf32> to vector<8x32xf32>
    %1081 = arith.truncf %1080 : vector<8x32xf32> to vector<8x32xbf16>
    %cst_424 = arith.constant dense<0.000000e+00> : vector<6x32xf32>
    %1082 = tpu.matmul %1079, %1081, %cst_424 {dimension_numbers = #tpu.dot_dimension_numbers<[1], [0], [0], [1], [0, 0, 1, 1], [], []>} : vector<6x8xbf16>, vector<8x32xbf16>, vector<6x32xf32> -> vector<6x32xf32>
    %1083 = arith.addf %1057, %1082 : vector<6x32xf32>
    %1084 = vector.broadcast %808 : vector<1x32xf32> to vector<6x32xf32>
    %1085 = arith.addf %1083, %1084 : vector<6x32xf32>
    %1086 = arith.addf %968, %1085 : vector<6x32xf32>
    %cst_425 = arith.constant dense<0.000000e+00> : vector<6xf32>
    %1087 = vector.multi_reduction <add>, %1086, %cst_425 [1] : vector<6x32xf32> to vector<6xf32>
    %1088 = vector.shape_cast %1087 : vector<6xf32> to vector<6x1xf32>
    %cst_426 = arith.constant 3.200000e+01 : f32
    %1089 = vector.broadcast %cst_426 : f32 to vector<6x1xf32>
    %1090 = arith.divf %1088, %1089 : vector<6x1xf32>
    %1091 = vector.broadcast %1090 : vector<6x1xf32> to vector<6x32xf32>
    %1092 = arith.subf %1086, %1091 : vector<6x32xf32>
    %1093 = arith.mulf %1092, %1092 : vector<6x32xf32>
    %cst_427 = arith.constant dense<0.000000e+00> : vector<6xf32>
    %1094 = vector.multi_reduction <add>, %1093, %cst_427 [1] : vector<6x32xf32> to vector<6xf32>
    %1095 = vector.shape_cast %1094 : vector<6xf32> to vector<6x1xf32>
    %cst_428 = arith.constant 3.200000e+01 : f32
    %1096 = vector.broadcast %cst_428 : f32 to vector<6x1xf32>
    %1097 = arith.divf %1095, %1096 : vector<6x1xf32>
    %cst_429 = arith.constant 9.99999974E-6 : f32
    %1098 = vector.broadcast %cst_429 : f32 to vector<6x1xf32>
    %1099 = arith.addf %1097, %1098 : vector<6x1xf32>
    %1100 = math.rsqrt %1099 : vector<6x1xf32>
    %1101 = vector.broadcast %1100 : vector<6x1xf32> to vector<6x32xf32>
    %1102 = arith.mulf %1092, %1101 : vector<6x32xf32>
    %1103 = vector.broadcast %810 : vector<1x32xf32> to vector<6x32xf32>
    %1104 = arith.mulf %1102, %1103 : vector<6x32xf32>
    %1105 = vector.broadcast %812 : vector<1x32xf32> to vector<6x32xf32>
    %1106 = arith.addf %1104, %1105 : vector<6x32xf32>
    %1107 = arith.truncf %1106 : vector<6x32xf32> to vector<6x32xbf16>
    %1108 = arith.truncf %814 : vector<32x64xf32> to vector<32x64xbf16>
    %cst_430 = arith.constant dense<0.000000e+00> : vector<6x64xf32>
    %1109 = tpu.matmul %1107, %1108, %cst_430 {dimension_numbers = #tpu.dot_dimension_numbers<[1], [0], [0], [1], [0, 0, 1, 1], [], []>} : vector<6x32xbf16>, vector<32x64xbf16>, vector<6x64xf32> -> vector<6x64xf32>
    %1110 = vector.broadcast %816 : vector<1x64xf32> to vector<6x64xf32>
    %1111 = arith.addf %1109, %1110 : vector<6x64xf32>
    %cst_431 = arith.constant 0.000000e+00 : f32
    %1112 = vector.broadcast %cst_431 : f32 to vector<6x64xf32>
    %1113 = arith.maximumf %1111, %1112 : vector<6x64xf32>
    %1114 = arith.truncf %1113 : vector<6x64xf32> to vector<6x64xbf16>
    %1115 = arith.truncf %818 : vector<64x32xf32> to vector<64x32xbf16>
    %cst_432 = arith.constant dense<0.000000e+00> : vector<6x32xf32>
    %1116 = tpu.matmul %1114, %1115, %cst_432 {dimension_numbers = #tpu.dot_dimension_numbers<[1], [0], [0], [1], [0, 0, 1, 1], [], []>} : vector<6x64xbf16>, vector<64x32xbf16>, vector<6x32xf32> -> vector<6x32xf32>
    %1117 = vector.broadcast %820 : vector<1x32xf32> to vector<6x32xf32>
    %1118 = arith.addf %1116, %1117 : vector<6x32xf32>
    %1119 = arith.addf %1106, %1118 : vector<6x32xf32>
    %cst_433 = arith.constant dense<0.000000e+00> : vector<6xf32>
    %1120 = vector.multi_reduction <add>, %1119, %cst_433 [1] : vector<6x32xf32> to vector<6xf32>
    %1121 = vector.shape_cast %1120 : vector<6xf32> to vector<6x1xf32>
    %cst_434 = arith.constant 3.200000e+01 : f32
    %1122 = vector.broadcast %cst_434 : f32 to vector<6x1xf32>
    %1123 = arith.divf %1121, %1122 : vector<6x1xf32>
    %1124 = vector.broadcast %1123 : vector<6x1xf32> to vector<6x32xf32>
    %1125 = arith.subf %1119, %1124 : vector<6x32xf32>
    %1126 = arith.mulf %1125, %1125 : vector<6x32xf32>
    %cst_435 = arith.constant dense<0.000000e+00> : vector<6xf32>
    %1127 = vector.multi_reduction <add>, %1126, %cst_435 [1] : vector<6x32xf32> to vector<6xf32>
    %1128 = vector.shape_cast %1127 : vector<6xf32> to vector<6x1xf32>
    %cst_436 = arith.constant 3.200000e+01 : f32
    %1129 = vector.broadcast %cst_436 : f32 to vector<6x1xf32>
    %1130 = arith.divf %1128, %1129 : vector<6x1xf32>
    %cst_437 = arith.constant 9.99999974E-6 : f32
    %1131 = vector.broadcast %cst_437 : f32 to vector<6x1xf32>
    %1132 = arith.addf %1130, %1131 : vector<6x1xf32>
    %1133 = math.rsqrt %1132 : vector<6x1xf32>
    %1134 = vector.broadcast %1133 : vector<6x1xf32> to vector<6x32xf32>
    %1135 = arith.mulf %1125, %1134 : vector<6x32xf32>
    %1136 = vector.broadcast %822 : vector<1x32xf32> to vector<6x32xf32>
    %1137 = arith.mulf %1135, %1136 : vector<6x32xf32>
    %1138 = vector.broadcast %824 : vector<1x32xf32> to vector<6x32xf32>
    %1139 = arith.addf %1137, %1138 : vector<6x32xf32>
    %c0_438 = arith.constant 0 : index
    %c0_439 = arith.constant 0 : index
    %1140 = vector.load %arg43[%c0_438, %c0_439] : memref<1x32xf32, #tpu.memory_space<vmem>>, vector<1x32xf32>
    %c0_440 = arith.constant 0 : index
    %c0_441 = arith.constant 0 : index
    %1141 = vector.load %arg44[%c0_440, %c0_441] : memref<1x32xf32, #tpu.memory_space<vmem>>, vector<1x32xf32>
    %cst_442 = arith.constant dense<0.000000e+00> : vector<6xf32>
    %1142 = vector.multi_reduction <add>, %1139, %cst_442 [1] : vector<6x32xf32> to vector<6xf32>
    %1143 = vector.shape_cast %1142 : vector<6xf32> to vector<6x1xf32>
    %cst_443 = arith.constant 3.200000e+01 : f32
    %1144 = vector.broadcast %cst_443 : f32 to vector<6x1xf32>
    %1145 = arith.divf %1143, %1144 : vector<6x1xf32>
    %1146 = vector.broadcast %1145 : vector<6x1xf32> to vector<6x32xf32>
    %1147 = arith.subf %1139, %1146 : vector<6x32xf32>
    %1148 = arith.mulf %1147, %1147 : vector<6x32xf32>
    %cst_444 = arith.constant dense<0.000000e+00> : vector<6xf32>
    %1149 = vector.multi_reduction <add>, %1148, %cst_444 [1] : vector<6x32xf32> to vector<6xf32>
    %1150 = vector.shape_cast %1149 : vector<6xf32> to vector<6x1xf32>
    %cst_445 = arith.constant 3.200000e+01 : f32
    %1151 = vector.broadcast %cst_445 : f32 to vector<6x1xf32>
    %1152 = arith.divf %1150, %1151 : vector<6x1xf32>
    %cst_446 = arith.constant 9.99999974E-6 : f32
    %1153 = vector.broadcast %cst_446 : f32 to vector<6x1xf32>
    %1154 = arith.addf %1152, %1153 : vector<6x1xf32>
    %1155 = math.rsqrt %1154 : vector<6x1xf32>
    %1156 = vector.broadcast %1155 : vector<6x1xf32> to vector<6x32xf32>
    %1157 = arith.mulf %1147, %1156 : vector<6x32xf32>
    %1158 = vector.broadcast %1140 : vector<1x32xf32> to vector<6x32xf32>
    %1159 = arith.mulf %1157, %1158 : vector<6x32xf32>
    %1160 = vector.broadcast %1141 : vector<1x32xf32> to vector<6x32xf32>
    %1161 = arith.addf %1159, %1160 : vector<6x32xf32>
    %c0_447 = arith.constant 0 : index
    %c0_448 = arith.constant 0 : index
    %1162 = vector.load %arg45[%c0_447, %c0_448] : memref<32x4xf32, #tpu.memory_space<vmem>>, vector<32x4xf32>
    %c0_449 = arith.constant 0 : index
    %c0_450 = arith.constant 0 : index
    %1163 = vector.load %arg46[%c0_449, %c0_450] : memref<1x4xf32, #tpu.memory_space<vmem>>, vector<1x4xf32>
    %1164 = arith.truncf %1161 : vector<6x32xf32> to vector<6x32xbf16>
    %1165 = arith.truncf %1162 : vector<32x4xf32> to vector<32x4xbf16>
    %cst_451 = arith.constant dense<0.000000e+00> : vector<6x4xf32>
    %1166 = tpu.matmul %1164, %1165, %cst_451 {dimension_numbers = #tpu.dot_dimension_numbers<[1], [0], [0], [1], [0, 0, 1, 1], [], []>} : vector<6x32xbf16>, vector<32x4xbf16>, vector<6x4xf32> -> vector<6x4xf32>
    %1167 = vector.broadcast %1163 : vector<1x4xf32> to vector<6x4xf32>
    %1168 = arith.addf %1166, %1167 : vector<6x4xf32>
    %c0_452 = arith.constant 0 : index
    %c0_453 = arith.constant 0 : index
    %c0_454 = arith.constant 0 : index
    %1169 = vector.load %arg47[%c0_452, %c0_453, %c0_454] : memref<1x6x4xf32, #tpu.memory_space<vmem>>, vector<1x6x4xf32>
    %1170 = vector.shape_cast %1169 : vector<1x6x4xf32> to vector<6x4xf32>
    %1171 = vector.shape_cast %1168 : vector<6x4xf32> to vector<1x6x4xf32>
    tpu.vector_store %arg47[%c0_452, %c0_453, %c0_454], %1171 {strides = array<i32>} : memref<1x6x4xf32, #tpu.memory_space<vmem>>, vector<1x6x4xf32>,
    return
  }
  func.func @transform_0(%arg0: i32) -> (i32, i32, i32) {
    %c0_i32 = arith.constant 0 : i32
    %c0_i32_0 = arith.constant 0 : i32
    %c0_i32_1 = arith.constant 0 : i32
    return %arg0, %c0_i32, %c0_i32_0 : i32, i32, i32
  }
  func.func @transform_1(%arg0: i32) -> (i32, i32, i32) {
    %c0_i32 = arith.constant 0 : i32
    %c0_i32_0 = arith.constant 0 : i32
    %c0_i32_1 = arith.constant 0 : i32
    return %arg0, %c0_i32, %c0_i32_0 : i32, i32, i32
  }
  func.func @transform_2(%arg0: i32) -> (i32, i32) {
    %c0_i32 = arith.constant 0 : i32
    %c0_i32_0 = arith.constant 0 : i32
    %c0_i32_1 = arith.constant 0 : i32
    return %c0_i32, %c0_i32_0 : i32, i32
  }
  func.func @transform_3(%arg0: i32) -> (i32, i32) {
    %c0_i32 = arith.constant 0 : i32
    %c0_i32_0 = arith.constant 0 : i32
    %c0_i32_1 = arith.constant 0 : i32
    return %c0_i32, %c0_i32_0 : i32, i32
  }
  func.func @transform_4(%arg0: i32) -> (i32, i32) {
    %c0_i32 = arith.constant 0 : i32
    %c0_i32_0 = arith.constant 0 : i32
    %c0_i32_1 = arith.constant 0 : i32
    return %c0_i32, %c0_i32_0 : i32, i32
  }
  func.func @transform_5(%arg0: i32) -> (i32, i32) {
    %c0_i32 = arith.constant 0 : i32
    %c0_i32_0 = arith.constant 0 : i32
    %c0_i32_1 = arith.constant 0 : i32
    return %c0_i32, %c0_i32_0 : i32, i32
  }
  func.func @transform_6(%arg0: i32) -> (i32, i32) {
    %c0_i32 = arith.constant 0 : i32
    %c0_i32_0 = arith.constant 0 : i32
    %c0_i32_1 = arith.constant 0 : i32
    return %c0_i32, %c0_i32_0 : i32, i32
  }
  func.func @transform_7(%arg0: i32) -> (i32, i32) {
    %c0_i32 = arith.constant 0 : i32
    %c0_i32_0 = arith.constant 0 : i32
    %c0_i32_1 = arith.constant 0 : i32
    return %c0_i32, %c0_i32_0 : i32, i32
  }
  func.func @transform_8(%arg0: i32) -> (i32, i32, i32) {
    %c0_i32 = arith.constant 0 : i32
    %c0_i32_0 = arith.constant 0 : i32
    %c0_i32_1 = arith.constant 0 : i32
    %c0_i32_2 = arith.constant 0 : i32
    return %c0_i32, %c0_i32_0, %c0_i32_1 : i32, i32, i32
  }
  func.func @transform_9(%arg0: i32) -> (i32, i32, i32) {
    %c0_i32 = arith.constant 0 : i32
    %c0_i32_0 = arith.constant 0 : i32
    %c0_i32_1 = arith.constant 0 : i32
    %c0_i32_2 = arith.constant 0 : i32
    return %c0_i32, %c0_i32_0, %c0_i32_1 : i32, i32, i32
  }
  func.func @transform_10(%arg0: i32) -> (i32, i32, i32) {
    %c0_i32 = arith.constant 0 : i32
    %c0_i32_0 = arith.constant 0 : i32
    %c0_i32_1 = arith.constant 0 : i32
    %c0_i32_2 = arith.constant 0 : i32
    return %c0_i32, %c0_i32_0, %c0_i32_1 : i32, i32, i32
  }
  func.func @transform_11(%arg0: i32) -> (i32, i32, i32) {
    %c0_i32 = arith.constant 0 : i32
    %c0_i32_0 = arith.constant 0 : i32
    %c0_i32_1 = arith.constant 0 : i32
    %c0_i32_2 = arith.constant 0 : i32
    return %c0_i32, %c0_i32_0, %c0_i32_1 : i32, i32, i32
  }
  func.func @transform_12(%arg0: i32) -> (i32, i32, i32) {
    %c0_i32 = arith.constant 0 : i32
    %c0_i32_0 = arith.constant 0 : i32
    %c0_i32_1 = arith.constant 0 : i32
    %c0_i32_2 = arith.constant 0 : i32
    return %c0_i32, %c0_i32_0, %c0_i32_1 : i32, i32, i32
  }
  func.func @transform_13(%arg0: i32) -> (i32, i32, i32) {
    %c0_i32 = arith.constant 0 : i32
    %c0_i32_0 = arith.constant 0 : i32
    %c0_i32_1 = arith.constant 0 : i32
    %c0_i32_2 = arith.constant 0 : i32
    return %c0_i32, %c0_i32_0, %c0_i32_1 : i32, i32, i32
  }
  func.func @transform_14(%arg0: i32) -> (i32, i32, i32) {
    %c0_i32 = arith.constant 0 : i32
    %c0_i32_0 = arith.constant 0 : i32
    %c0_i32_1 = arith.constant 0 : i32
    %c0_i32_2 = arith.constant 0 : i32
    return %c0_i32, %c0_i32_0, %c0_i32_1 : i32, i32, i32
  }
  func.func @transform_15(%arg0: i32) -> (i32, i32, i32) {
    %c0_i32 = arith.constant 0 : i32
    %c0_i32_0 = arith.constant 0 : i32
    %c0_i32_1 = arith.constant 0 : i32
    %c0_i32_2 = arith.constant 0 : i32
    return %c0_i32, %c0_i32_0, %c0_i32_1 : i32, i32, i32
  }
  func.func @transform_16(%arg0: i32) -> (i32, i32, i32) {
    %c0_i32 = arith.constant 0 : i32
    %c0_i32_0 = arith.constant 0 : i32
    %c0_i32_1 = arith.constant 0 : i32
    %c0_i32_2 = arith.constant 0 : i32
    return %c0_i32, %c0_i32_0, %c0_i32_1 : i32, i32, i32
  }
  func.func @transform_17(%arg0: i32) -> (i32, i32, i32) {
    %c0_i32 = arith.constant 0 : i32
    %c0_i32_0 = arith.constant 0 : i32
    %c0_i32_1 = arith.constant 0 : i32
    %c0_i32_2 = arith.constant 0 : i32
    return %c0_i32, %c0_i32_0, %c0_i32_1 : i32, i32, i32
  }
  func.func @transform_18(%arg0: i32) -> (i32, i32, i32) {
    %c0_i32 = arith.constant 0 : i32
    %c0_i32_0 = arith.constant 0 : i32
    %c0_i32_1 = arith.constant 0 : i32
    %c0_i32_2 = arith.constant 0 : i32
    return %c0_i32, %c0_i32_0, %c0_i32_1 : i32, i32, i32
  }
  func.func @transform_19(%arg0: i32) -> (i32, i32, i32) {
    %c0_i32 = arith.constant 0 : i32
    %c0_i32_0 = arith.constant 0 : i32
    %c0_i32_1 = arith.constant 0 : i32
    %c0_i32_2 = arith.constant 0 : i32
    return %c0_i32, %c0_i32_0, %c0_i32_1 : i32, i32, i32
  }
  func.func @transform_20(%arg0: i32) -> (i32, i32) {
    %c0_i32 = arith.constant 0 : i32
    %c0_i32_0 = arith.constant 0 : i32
    %c0_i32_1 = arith.constant 0 : i32
    return %c0_i32, %c0_i32_0 : i32, i32
  }
  func.func @transform_21(%arg0: i32) -> (i32, i32) {
    %c0_i32 = arith.constant 0 : i32
    %c0_i32_0 = arith.constant 0 : i32
    %c0_i32_1 = arith.constant 0 : i32
    return %c0_i32, %c0_i32_0 : i32, i32
  }
  func.func @transform_22(%arg0: i32) -> (i32, i32, i32) {
    %c0_i32 = arith.constant 0 : i32
    %c0_i32_0 = arith.constant 0 : i32
    %c0_i32_1 = arith.constant 0 : i32
    %c0_i32_2 = arith.constant 0 : i32
    return %c0_i32, %c0_i32_0, %c0_i32_1 : i32, i32, i32
  }
  func.func @transform_23(%arg0: i32) -> (i32, i32, i32) {
    %c0_i32 = arith.constant 0 : i32
    %c0_i32_0 = arith.constant 0 : i32
    %c0_i32_1 = arith.constant 0 : i32
    %c0_i32_2 = arith.constant 0 : i32
    return %c0_i32, %c0_i32_0, %c0_i32_1 : i32, i32, i32
  }
  func.func @transform_24(%arg0: i32) -> (i32, i32, i32) {
    %c0_i32 = arith.constant 0 : i32
    %c0_i32_0 = arith.constant 0 : i32
    %c0_i32_1 = arith.constant 0 : i32
    %c0_i32_2 = arith.constant 0 : i32
    return %c0_i32, %c0_i32_0, %c0_i32_1 : i32, i32, i32
  }
  func.func @transform_25(%arg0: i32) -> (i32, i32, i32) {
    %c0_i32 = arith.constant 0 : i32
    %c0_i32_0 = arith.constant 0 : i32
    %c0_i32_1 = arith.constant 0 : i32
    %c0_i32_2 = arith.constant 0 : i32
    return %c0_i32, %c0_i32_0, %c0_i32_1 : i32, i32, i32
  }
  func.func @transform_26(%arg0: i32) -> (i32, i32, i32) {
    %c0_i32 = arith.constant 0 : i32
    %c0_i32_0 = arith.constant 0 : i32
    %c0_i32_1 = arith.constant 0 : i32
    %c0_i32_2 = arith.constant 0 : i32
    return %c0_i32, %c0_i32_0, %c0_i32_1 : i32, i32, i32
  }
  func.func @transform_27(%arg0: i32) -> (i32, i32, i32) {
    %c0_i32 = arith.constant 0 : i32
    %c0_i32_0 = arith.constant 0 : i32
    %c0_i32_1 = arith.constant 0 : i32
    %c0_i32_2 = arith.constant 0 : i32
    return %c0_i32, %c0_i32_0, %c0_i32_1 : i32, i32, i32
  }
  func.func @transform_28(%arg0: i32) -> (i32, i32, i32) {
    %c0_i32 = arith.constant 0 : i32
    %c0_i32_0 = arith.constant 0 : i32
    %c0_i32_1 = arith.constant 0 : i32
    %c0_i32_2 = arith.constant 0 : i32
    return %c0_i32, %c0_i32_0, %c0_i32_1 : i32, i32, i32
  }
  func.func @transform_29(%arg0: i32) -> (i32, i32, i32) {
    %c0_i32 = arith.constant 0 : i32
    %c0_i32_0 = arith.constant 0 : i32
    %c0_i32_1 = arith.constant 0 : i32
    %c0_i32_2 = arith.constant 0 : i32
    return %c0_i32, %c0_i32_0, %c0_i32_1 : i32, i32, i32
  }
  func.func @transform_30(%arg0: i32) -> (i32, i32, i32) {
    %c0_i32 = arith.constant 0 : i32
    %c0_i32_0 = arith.constant 0 : i32
    %c0_i32_1 = arith.constant 0 : i32
    %c0_i32_2 = arith.constant 0 : i32
    return %c0_i32, %c0_i32_0, %c0_i32_1 : i32, i32, i32
  }
  func.func @transform_31(%arg0: i32) -> (i32, i32, i32) {
    %c0_i32 = arith.constant 0 : i32
    %c0_i32_0 = arith.constant 0 : i32
    %c0_i32_1 = arith.constant 0 : i32
    %c0_i32_2 = arith.constant 0 : i32
    return %c0_i32, %c0_i32_0, %c0_i32_1 : i32, i32, i32
  }
  func.func @transform_32(%arg0: i32) -> (i32, i32, i32) {
    %c0_i32 = arith.constant 0 : i32
    %c0_i32_0 = arith.constant 0 : i32
    %c0_i32_1 = arith.constant 0 : i32
    %c0_i32_2 = arith.constant 0 : i32
    return %c0_i32, %c0_i32_0, %c0_i32_1 : i32, i32, i32
  }
  func.func @transform_33(%arg0: i32) -> (i32, i32, i32) {
    %c0_i32 = arith.constant 0 : i32
    %c0_i32_0 = arith.constant 0 : i32
    %c0_i32_1 = arith.constant 0 : i32
    %c0_i32_2 = arith.constant 0 : i32
    return %c0_i32, %c0_i32_0, %c0_i32_1 : i32, i32, i32
  }
  func.func @transform_34(%arg0: i32) -> (i32, i32, i32) {
    %c0_i32 = arith.constant 0 : i32
    %c0_i32_0 = arith.constant 0 : i32
    %c0_i32_1 = arith.constant 0 : i32
    %c0_i32_2 = arith.constant 0 : i32
    return %c0_i32, %c0_i32_0, %c0_i32_1 : i32, i32, i32
  }
  func.func @transform_35(%arg0: i32) -> (i32, i32, i32) {
    %c0_i32 = arith.constant 0 : i32
    %c0_i32_0 = arith.constant 0 : i32
    %c0_i32_1 = arith.constant 0 : i32
    %c0_i32_2 = arith.constant 0 : i32
    return %c0_i32, %c0_i32_0, %c0_i32_1 : i32, i32, i32
  }
  func.func @transform_36(%arg0: i32) -> (i32, i32, i32) {
    %c0_i32 = arith.constant 0 : i32
    %c0_i32_0 = arith.constant 0 : i32
    %c0_i32_1 = arith.constant 0 : i32
    %c0_i32_2 = arith.constant 0 : i32
    return %c0_i32, %c0_i32_0, %c0_i32_1 : i32, i32, i32
  }
  func.func @transform_37(%arg0: i32) -> (i32, i32, i32) {
    %c0_i32 = arith.constant 0 : i32
    %c0_i32_0 = arith.constant 0 : i32
    %c0_i32_1 = arith.constant 0 : i32
    %c0_i32_2 = arith.constant 0 : i32
    return %c0_i32, %c0_i32_0, %c0_i32_1 : i32, i32, i32
  }
  func.func @transform_38(%arg0: i32) -> (i32, i32, i32) {
    %c0_i32 = arith.constant 0 : i32
    %c0_i32_0 = arith.constant 0 : i32
    %c0_i32_1 = arith.constant 0 : i32
    %c0_i32_2 = arith.constant 0 : i32
    return %c0_i32, %c0_i32_0, %c0_i32_1 : i32, i32, i32
  }
  func.func @transform_39(%arg0: i32) -> (i32, i32, i32) {
    %c0_i32 = arith.constant 0 : i32
    %c0_i32_0 = arith.constant 0 : i32
    %c0_i32_1 = arith.constant 0 : i32
    %c0_i32_2 = arith.constant 0 : i32
    return %c0_i32, %c0_i32_0, %c0_i32_1 : i32, i32, i32
  }
  func.func @transform_40(%arg0: i32) -> (i32, i32, i32) {
    %c0_i32 = arith.constant 0 : i32
    %c0_i32_0 = arith.constant 0 : i32
    %c0_i32_1 = arith.constant 0 : i32
    %c0_i32_2 = arith.constant 0 : i32
    return %c0_i32, %c0_i32_0, %c0_i32_1 : i32, i32, i32
  }
  func.func @transform_41(%arg0: i32) -> (i32, i32, i32) {
    %c0_i32 = arith.constant 0 : i32
    %c0_i32_0 = arith.constant 0 : i32
    %c0_i32_1 = arith.constant 0 : i32
    %c0_i32_2 = arith.constant 0 : i32
    return %c0_i32, %c0_i32_0, %c0_i32_1 : i32, i32, i32
  }
  func.func @transform_42(%arg0: i32) -> (i32, i32) {
    %c0_i32 = arith.constant 0 : i32
    %c0_i32_0 = arith.constant 0 : i32
    %c0_i32_1 = arith.constant 0 : i32
    return %c0_i32, %c0_i32_0 : i32, i32
  }
  func.func @transform_43(%arg0: i32) -> (i32, i32) {
    %c0_i32 = arith.constant 0 : i32
    %c0_i32_0 = arith.constant 0 : i32
    %c0_i32_1 = arith.constant 0 : i32
    return %c0_i32, %c0_i32_0 : i32, i32
  }
  func.func @transform_44(%arg0: i32) -> (i32, i32) {
    %c0_i32 = arith.constant 0 : i32
    %c0_i32_0 = arith.constant 0 : i32
    %c0_i32_1 = arith.constant 0 : i32
    return %c0_i32, %c0_i32_0 : i32, i32
  }
  func.func @transform_45(%arg0: i32) -> (i32, i32) {
    %c0_i32 = arith.constant 0 : i32
    %c0_i32_0 = arith.constant 0 : i32
    %c0_i32_1 = arith.constant 0 : i32
    return %c0_i32, %c0_i32_0 : i32, i32
  }
  func.func @transform_46(%arg0: i32) -> (i32, i32, i32) {
    %c0_i32 = arith.constant 0 : i32
    %c0_i32_0 = arith.constant 0 : i32
    %c0_i32_1 = arith.constant 0 : i32
    return %arg0, %c0_i32, %c0_i32_0 : i32, i32, i32
  }
}

</mosaic_0001>

<llo_original>
// kernel: transformer_forward.1
$region0: #{transformer_forward.1}
  #allocation0 [shape = 'u32[]', space=smem, size = 0x4, offset = 0x4, fixed_abs, tag = 'smem constant byte address 0x4 - core index']
  #allocation1 [shape = 'u32[72,128]{1,0:T(1,128)}', space=vmem, size = 0x9000, scoped, tag = 'internal scratch']
  %s0 = inlined_call_operand.smem [shape: u32[47], index: -1, kind: input, shape index: {}]
  %s1 = sld [smem:[%s0]]
  %s2 = scalar_lea.smem %s0, 1
  %s3 = sld [smem:[%s2]]
  %s4 = scalar_lea.smem %s0, 2
  %s5 = sld [smem:[%s4]]
  %s6 = scalar_lea.smem %s0, 3
  %s7 = sld [smem:[%s6]]
  %s8 = scalar_lea.smem %s0, 4
  %s9 = sld [smem:[%s8]]
  %s10 = scalar_lea.smem %s0, 5
  %s11 = sld [smem:[%s10]]
  %s12 = scalar_lea.smem %s0, 6
  %s13 = sld [smem:[%s12]]
  %s14 = scalar_lea.smem %s0, 7
  %s15 = sld [smem:[%s14]]
  %s16 = scalar_lea.smem %s0, 8
  %s17 = sld [smem:[%s16]]
  %s18 = scalar_lea.smem %s0, 9
  %s19 = sld [smem:[%s18]]
  %s20 = scalar_lea.smem %s0, 10
  %s21 = sld [smem:[%s20]]
  %s22 = scalar_lea.smem %s0, 11
  %s23 = sld [smem:[%s22]]
  %s24 = scalar_lea.smem %s0, 12
  %s25 = sld [smem:[%s24]]
  %s26 = scalar_lea.smem %s0, 13
  %s27 = sld [smem:[%s26]]
  %s28 = scalar_lea.smem %s0, 14
  %s29 = sld [smem:[%s28]]
  %s30 = scalar_lea.smem %s0, 15
  %s31 = sld [smem:[%s30]]
  %s32 = scalar_lea.smem %s0, 16
  %s33 = sld [smem:[%s32]]
  %s34 = scalar_lea.smem %s0, 17
  %s35 = sld [smem:[%s34]]
  %s36 = scalar_lea.smem %s0, 18
  %s37 = sld [smem:[%s36]]
  %s38 = scalar_lea.smem %s0, 19
  %s39 = sld [smem:[%s38]]
  %s40 = scalar_lea.smem %s0, 20
  %s41 = sld [smem:[%s40]]
  %s42 = scalar_lea.smem %s0, 21
  %s43 = sld [smem:[%s42]]
  %s44 = scalar_lea.smem %s0, 22
  %s45 = sld [smem:[%s44]]
  %s46 = scalar_lea.smem %s0, 23
  %s47 = sld [smem:[%s46]]
  %s48 = scalar_lea.smem %s0, 24
  %s49 = sld [smem:[%s48]]
  %s50 = scalar_lea.smem %s0, 25
  %s51 = sld [smem:[%s50]]
  %s52 = scalar_lea.smem %s0, 26
  %s53 = sld [smem:[%s52]]
  %s54 = scalar_lea.smem %s0, 27
  %s55 = sld [smem:[%s54]]
  %s56 = scalar_lea.smem %s0, 28
  %s57 = sld [smem:[%s56]]
  %s58 = scalar_lea.smem %s0, 29
  %s59 = sld [smem:[%s58]]
  %s60 = scalar_lea.smem %s0, 30
  %s61 = sld [smem:[%s60]]
  %s62 = scalar_lea.smem %s0, 31
  %s63 = sld [smem:[%s62]]
  %s64 = scalar_lea.smem %s0, 32
  %s65 = sld [smem:[%s64]]
  %s66 = scalar_lea.smem %s0, 33
  %s67 = sld [smem:[%s66]]
  %s68 = scalar_lea.smem %s0, 34
  %s69 = sld [smem:[%s68]]
  %s70 = scalar_lea.smem %s0, 35
  %s71 = sld [smem:[%s70]]
  %s72 = scalar_lea.smem %s0, 36
  %s73 = sld [smem:[%s72]]
  %s74 = scalar_lea.smem %s0, 37
  %s75 = sld [smem:[%s74]]
  %s76 = scalar_lea.smem %s0, 38
  %s77 = sld [smem:[%s76]]
  %s78 = scalar_lea.smem %s0, 39
  %s79 = sld [smem:[%s78]]
  %s80 = scalar_lea.smem %s0, 40
  %s81 = sld [smem:[%s80]]
  %s82 = scalar_lea.smem %s0, 41
  %s83 = sld [smem:[%s82]]
  %s84 = scalar_lea.smem %s0, 42
  %s85 = sld [smem:[%s84]]
  %s86 = scalar_lea.smem %s0, 43
  %s87 = sld [smem:[%s86]]
  %s88 = scalar_lea.smem %s0, 44
  %s89 = sld [smem:[%s88]]
  %s90 = scalar_lea.smem %s0, 45
  %s91 = sld [smem:[%s90]]
  %s92 = scalar_lea.smem %s0, 46
  %s93 = sld [smem:[%s92]]
  %s94 = sld [smem:[#allocation0]]
  $region245: #{transformer_forward.1} parent=0
    _
  %s96 = ssub.s32 1, %s94
  %s97 = scalar_select 0, %s96, %s94
  $region1: #{transformer_forward.1} parent=0
    #allocation2 [shape = 'u8[512]{0}', space=vmem, size = 0x400, scoped, tag = 'input window, operand 6, single buffered']
    #allocation3 [shape = 's32[2]{0}', space=sflag, size = 0x8, scoped, tag = 'scoped memory for transformer_forward.1']
    #allocation4 [shape = 'u8[32768]{0}', space=vmem, size = 0x8000, scoped, tag = 'input window, operand 30, single buffered']
    #allocation5 [shape = 's32[1]{0}', space=sflag, size = 0x4, scoped, tag = 'scoped memory for transformer_forward.1']
    #allocation6 [shape = 'u8[32768]{0}', space=vmem, size = 0x8000, scoped, tag = 'input window, operand 32, single buffered']
    #allocation7 [shape = 'u8[32768]{0}', space=vmem, size = 0x8000, scoped, tag = 'input window, operand 36, single buffered']
    #allocation8 [shape = 's32[1]{0}', space=sflag, size = 0x4, scoped, tag = 'scoped memory for transformer_forward.1']
    #allocation9 [shape = 'u8[1024]{0}', space=vmem, size = 0x400, scoped, tag = 'input window, operand 37, single buffered']
    #allocation10 [shape = 'u8[512]{0}', space=vmem, size = 0x400, scoped, tag = 'input window, operand 42, single buffered']
    #allocation11 [shape = 's32[1]{0}', space=sflag, size = 0x4, scoped, tag = 'scoped memory for transformer_forward.1']
    #allocation12 [shape = 'u8[512]{0}', space=vmem, size = 0x400, scoped, tag = 'input window, operand 43, single buffered']
    %98 = vsyncpa [#allocation3], 0
    %99 = vsyncpa [#allocation5], 0
    %100 = vsyncpa [#allocation8], 0
    %101 = vsyncpa [#allocation11], 0
    loop: start=0, step=1, limit=4
    $region2: #{transformer_forward.1} parent=1 // loop_pre_header
      _
    $region3: #{transformer_forward.1} parent=1 // loop_header
      %s103 = sphi 0, %s107
      %p104 = scmp.ge.s32.totalorder %s103, 4
      %s113 = sphi 0, %s115
      %s116 = sphi 0, %s113
      %s117 = sphi 0, %s116
      %s133 = sphi 0, %s117
      %s139 = sphi 0, %s141
      %s142 = sphi 0, %s139
      %s143 = sphi 0, %s142
      %s159 = sphi 0, %s143
      %s163 = sphi 0, %s163
      %s165 = sphi 0, %s163
      %s166 = sphi 0, %s165
      %s180 = sphi 0, %s166
      %s184 = sphi 0, %s184
      %s186 = sphi 0, %s184
      %s187 = sphi 0, %s186
      %s201 = sphi 0, %s187
      %s205 = sphi 0, %s205
      %s207 = sphi 0, %s205
      %s208 = sphi 0, %s207
      %s222 = sphi 0, %s208
      %s226 = sphi 0, %s226
      %s228 = sphi 0, %s226
      %s229 = sphi 0, %s228
      %s243 = sphi 0, %s229
      %s247 = sphi 0, %s247
      %s249 = sphi 0, %s247
      %s250 = sphi 0, %s249
      %s264 = sphi 0, %s250
      %s268 = sphi 0, %s268
      %s270 = sphi 0, %s268
      %s271 = sphi 0, %s270
      %s285 = sphi 0, %s271
      %s289 = sphi 0, %s289
      %s291 = sphi 0, %s289
      %s292 = sphi 0, %s291
      %s306 = sphi 0, %s292
      %s310 = sphi 0, %s310
      %s312 = sphi 0, %s310
      %s313 = sphi 0, %s312
      %s327 = sphi 0, %s313
      %s331 = sphi 0, %s331
      %s333 = sphi 0, %s331
      %s334 = sphi 0, %s333
      %s348 = sphi 0, %s334
      %s352 = sphi 0, %s352
      %s354 = sphi 0, %s352
      %s355 = sphi 0, %s354
      %s369 = sphi 0, %s355
      %s373 = sphi 0, %s373
      %s375 = sphi 0, %s373
      %s376 = sphi 0, %s375
      %s390 = sphi 0, %s376
      %s394 = sphi 0, %s394
      %s396 = sphi 0, %s394
      %s397 = sphi 0, %s396
      %s411 = sphi 0, %s397
      %s415 = sphi 0, %s415
      %s417 = sphi 0, %s415
      %s418 = sphi 0, %s417
      %s432 = sphi 0, %s418
      %s436 = sphi 0, %s436
      %s438 = sphi 0, %s436
      %s439 = sphi 0, %s438
      %s453 = sphi 0, %s439
      %s457 = sphi 0, %s457
      %s459 = sphi 0, %s457
      %s460 = sphi 0, %s459
      %s474 = sphi 0, %s460
      %s478 = sphi 0, %s478
      %s480 = sphi 0, %s478
      %s481 = sphi 0, %s480
      %s495 = sphi 0, %s481
      %s499 = sphi 0, %s499
      %s501 = sphi 0, %s499
      %s502 = sphi 0, %s501
      %s516 = sphi 0, %s502
      %s520 = sphi 0, %s520
      %s522 = sphi 0, %s520
      %s523 = sphi 0, %s522
      %s537 = sphi 0, %s523
      %s541 = sphi 0, %s541
      %s543 = sphi 0, %s541
      %s544 = sphi 0, %s543
      %s558 = sphi 0, %s544
      %s562 = sphi 0, %s562
      %s564 = sphi 0, %s562
      %s565 = sphi 0, %s564
      %s579 = sphi 0, %s565
      %s583 = sphi 0, %s583
      %s585 = sphi 0, %s583
      %s586 = sphi 0, %s585
      %s600 = sphi 0, %s586
      %s604 = sphi 0, %s604
      %s606 = sphi 0, %s604
      %s607 = sphi 0, %s606
      %s621 = sphi 0, %s607
      %s625 = sphi 0, %s625
      %s627 = sphi 0, %s625
      %s628 = sphi 0, %s627
      %s642 = sphi 0, %s628
      %s646 = sphi 0, %s646
      %s648 = sphi 0, %s646
      %s649 = sphi 0, %s648
      %s663 = sphi 0, %s649
      %s667 = sphi 0, %s667
      %s669 = sphi 0, %s667
      %s670 = sphi 0, %s669
      %s684 = sphi 0, %s670
      %s688 = sphi 0, %s688
      %s690 = sphi 0, %s688
      %s691 = sphi 0, %s690
      %s705 = sphi 0, %s691
      %s709 = sphi 0, %s709
      %s711 = sphi 0, %s709
      %s712 = sphi 0, %s711
      %s726 = sphi 0, %s712
      %s730 = sphi 0, %s730
      %s732 = sphi 0, %s730
      %s733 = sphi 0, %s732
      %s747 = sphi 0, %s733
      %s751 = sphi 0, %s751
      %s753 = sphi 0, %s751
      %s754 = sphi 0, %s753
      %s768 = sphi 0, %s754
      %s772 = sphi 0, %s772
      %s774 = sphi 0, %s772
      %s775 = sphi 0, %s774
      %s789 = sphi 0, %s775
      %s793 = sphi 0, %s793
      %s795 = sphi 0, %s793
      %s796 = sphi 0, %s795
      %s810 = sphi 0, %s796
      %s814 = sphi 0, %s814
      %s816 = sphi 0, %s814
      %s817 = sphi 0, %s816
      %s831 = sphi 0, %s817
      %s835 = sphi 0, %s835
      %s837 = sphi 0, %s835
      %s838 = sphi 0, %s837
      %s852 = sphi 0, %s838
      %s856 = sphi 0, %s856
      %s858 = sphi 0, %s856
      %s859 = sphi 0, %s858
      %s873 = sphi 0, %s859
      %s877 = sphi 0, %s877
      %s879 = sphi 0, %s877
      %s880 = sphi 0, %s879
      %s894 = sphi 0, %s880
      %s898 = sphi 0, %s898
      %s900 = sphi 0, %s898
      %s901 = sphi 0, %s900
      %s915 = sphi 0, %s901
      %s919 = sphi 0, %s919
      %s921 = sphi 0, %s919
      %s922 = sphi 0, %s921
      %s936 = sphi 0, %s922
      %s940 = sphi 0, %s940
      %s942 = sphi 0, %s940
      %s943 = sphi 0, %s942
      %s957 = sphi 0, %s943
      %s961 = sphi 0, %s961
      %s963 = sphi 0, %s961
      %s964 = sphi 0, %s963
      %s978 = sphi 0, %s964
      %s982 = sphi 0, %s982
      %s984 = sphi 0, %s982
      %s985 = sphi 0, %s984
      %s999 = sphi 0, %s985
      %s1003 = sphi 0, %s1003
      %s1005 = sphi 0, %s1003
      %s1006 = sphi 0, %s1005
      %s1020 = sphi 0, %s1006
      %s1024 = sphi 0, %s1024
      %s1026 = sphi 0, %s1024
      %s1027 = sphi 0, %s1026
      %s1041 = sphi 0, %s1027
      %s1045 = sphi 0, %s1045
      %s1047 = sphi 0, %s1045
      %s1048 = sphi 0, %s1047
      %s1062 = sphi 0, %s1048
      %s1066 = sphi 0, %s1066
      %s1068 = sphi 0, %s1066
      %s1069 = sphi 0, %s1068
      %s1083 = sphi 0, %s1069
      %s1089 = sphi 0, %s1091
      %s1092 = sphi 0, %s1089
      %s1093 = sphi 0, %s1092
      %s1109 = sphi 0, %s1093
    $region4: #{transformer_forward.1} parent=1 // loop_header_branch
      %106 = sbr.rel (%p104) target = $region8
    $region5: #{transformer_forward.1} parent=1 // loop_body
      %s108 = ssub.s32 %s103, 1
      %s109 = ssub.s32 %s103, 2
      %s110 = sadd.s32 %s103, 1
      %s111 = ssub.s32 %s103, %s110
      %p112 = scmp.eq.s32.totalorder %s111, 0
      %s114 = sadd.s32 %s113, 1
      %s115 = scalar_select %p112, %s113, %s114
      %p118 = pneg %p112
      %p119 = scmp.eq.s32.totalorder %s103, 1
      %p120 = por %p118, %p119
      %p121 = scmp.ne.s32.totalorder %s113, %s116
      %p122 = scmp.eq.s32.totalorder %s103, 0
      %p123 = por %p121, %p122
      %p124 = scmp.ne.s32.totalorder %s113, %s116
      %p125 = scmp.eq.s32.totalorder %s108, 1
      %p126 = por %p124, %p125
      %p127 = scmp.ne.s32.totalorder %s116, %s117
      %p128 = scmp.eq.s32.totalorder %s108, 0
      %p129 = por %p127, %p128
      %p130 = scmp.ne.s32.totalorder %s116, %s117
      %p131 = scmp.eq.s32.totalorder %s109, 1
      %p132 = por %p130, %p131
      %p134 = scmp.ne.s32.totalorder %s117, %s133
      %p135 = scmp.eq.s32.totalorder %s109, 0
      %p136 = por %p134, %p135
      %s137 = ssub.s32 %s103, %s110
      %p138 = scmp.eq.s32.totalorder %s137, 0
      %s140 = sadd.s32 %s139, 1
      %s141 = scalar_select %p138, %s139, %s140
      %p144 = pneg %p138
      %p145 = scmp.eq.s32.totalorder %s103, 1
      %p146 = por %p144, %p145
      %p147 = scmp.ne.s32.totalorder %s139, %s142
      %p148 = scmp.eq.s32.totalorder %s103, 0
      %p149 = por %p147, %p148
      %p150 = scmp.ne.s32.totalorder %s139, %s142
      %p151 = scmp.eq.s32.totalorder %s108, 1
      %p152 = por %p150, %p151
      %p153 = scmp.ne.s32.totalorder %s142, %s143
      %p154 = scmp.eq.s32.totalorder %s108, 0
      %p155 = por %p153, %p154
      %p156 = scmp.ne.s32.totalorder %s142, %s143
      %p157 = scmp.eq.s32.totalorder %s109, 1
      %p158 = por %p156, %p157
      %p160 = scmp.ne.s32.totalorder %s143, %s159
      %p161 = scmp.eq.s32.totalorder %s109, 0
      %p162 = por %p160, %p161
      %s164 = sadd.s32 %s163, 1
      %p167 = scmp.eq.s32.totalorder %s103, 1
      %p168 = scmp.ne.s32.totalorder %s163, %s165
      %p169 = scmp.eq.s32.totalorder %s103, 0
      %p170 = por %p168, %p169
      %p171 = scmp.ne.s32.totalorder %s163, %s165
      %p172 = scmp.eq.s32.totalorder %s108, 1
      %p173 = por %p171, %p172
      %p174 = scmp.ne.s32.totalorder %s165, %s166
      %p175 = scmp.eq.s32.totalorder %s108, 0
      %p176 = por %p174, %p175
      %p177 = scmp.ne.s32.totalorder %s165, %s166
      %p178 = scmp.eq.s32.totalorder %s109, 1
      %p179 = por %p177, %p178
      %p181 = scmp.ne.s32.totalorder %s166, %s180
      %p182 = scmp.eq.s32.totalorder %s109, 0
      %p183 = por %p181, %p182
      %s185 = sadd.s32 %s184, 1
      %p188 = scmp.eq.s32.totalorder %s103, 1
      %p189 = scmp.ne.s32.totalorder %s184, %s186
      %p190 = scmp.eq.s32.totalorder %s103, 0
      %p191 = por %p189, %p190
      %p192 = scmp.ne.s32.totalorder %s184, %s186
      %p193 = scmp.eq.s32.totalorder %s108, 1
      %p194 = por %p192, %p193
      %p195 = scmp.ne.s32.totalorder %s186, %s187
      %p196 = scmp.eq.s32.totalorder %s108, 0
      %p197 = por %p195, %p196
      %p198 = scmp.ne.s32.totalorder %s186, %s187
      %p199 = scmp.eq.s32.totalorder %s109, 1
      %p200 = por %p198, %p199
      %p202 = scmp.ne.s32.totalorder %s187, %s201
      %p203 = scmp.eq.s32.totalorder %s109, 0
      %p204 = por %p202, %p203
      %s206 = sadd.s32 %s205, 1
      %p209 = scmp.eq.s32.totalorder %s103, 1
      %p210 = scmp.ne.s32.totalorder %s205, %s207
      %p211 = scmp.eq.s32.totalorder %s103, 0
      %p212 = por %p210, %p211
      %p213 = scmp.ne.s32.totalorder %s205, %s207
      %p214 = scmp.eq.s32.totalorder %s108, 1
      %p215 = por %p213, %p214
      %p216 = scmp.ne.s32.totalorder %s207, %s208
      %p217 = scmp.eq.s32.totalorder %s108, 0
      %p218 = por %p216, %p217
      %p219 = scmp.ne.s32.totalorder %s207, %s208
      %p220 = scmp.eq.s32.totalorder %s109, 1
      %p221 = por %p219, %p220
      %p223 = scmp.ne.s32.totalorder %s208, %s222
      %p224 = scmp.eq.s32.totalorder %s109, 0
      %p225 = por %p223, %p224
      %s227 = sadd.s32 %s226, 1
      %p230 = scmp.eq.s32.totalorder %s103, 1
      %p231 = scmp.ne.s32.totalorder %s226, %s228
      %p232 = scmp.eq.s32.totalorder %s103, 0
      %p233 = por %p231, %p232
      %p234 = scmp.ne.s32.totalorder %s226, %s228
      %p235 = scmp.eq.s32.totalorder %s108, 1
      %p236 = por %p234, %p235
      %p237 = scmp.ne.s32.totalorder %s228, %s229
      %p238 = scmp.eq.s32.totalorder %s108, 0
      %p239 = por %p237, %p238
      %p240 = scmp.ne.s32.totalorder %s228, %s229
      %p241 = scmp.eq.s32.totalorder %s109, 1
      %p242 = por %p240, %p241
      %p244 = scmp.ne.s32.totalorder %s229, %s243
      %p245 = scmp.eq.s32.totalorder %s109, 0
      %p246 = por %p244, %p245
      %s248 = sadd.s32 %s247, 1
      %p251 = scmp.eq.s32.totalorder %s103, 1
      %p252 = scmp.ne.s32.totalorder %s247, %s249
      %p253 = scmp.eq.s32.totalorder %s103, 0
      %p254 = por %p252, %p253
      %p255 = scmp.ne.s32.totalorder %s247, %s249
      %p256 = scmp.eq.s32.totalorder %s108, 1
      %p257 = por %p255, %p256
      %p258 = scmp.ne.s32.totalorder %s249, %s250
      %p259 = scmp.eq.s32.totalorder %s108, 0
      %p260 = por %p258, %p259
      %p261 = scmp.ne.s32.totalorder %s249, %s250
      %p262 = scmp.eq.s32.totalorder %s109, 1
      %p263 = por %p261, %p262
      %p265 = scmp.ne.s32.totalorder %s250, %s264
      %p266 = scmp.eq.s32.totalorder %s109, 0
      %p267 = por %p265, %p266
      %s269 = sadd.s32 %s268, 1
      %p272 = scmp.eq.s32.totalorder %s103, 1
      %p273 = scmp.ne.s32.totalorder %s268, %s270
      %p274 = scmp.eq.s32.totalorder %s103, 0
      %p275 = por %p273, %p274
      %p276 = scmp.ne.s32.totalorder %s268, %s270
      %p277 = scmp.eq.s32.totalorder %s108, 1
      %p278 = por %p276, %p277
      %p279 = scmp.ne.s32.totalorder %s270, %s271
      %p280 = scmp.eq.s32.totalorder %s108, 0
      %p281 = por %p279, %p280
      %p282 = scmp.ne.s32.totalorder %s270, %s271
      %p283 = scmp.eq.s32.totalorder %s109, 1
      %p284 = por %p282, %p283
      %p286 = scmp.ne.s32.totalorder %s271, %s285
      %p287 = scmp.eq.s32.totalorder %s109, 0
      %p288 = por %p286, %p287
      %s290 = sadd.s32 %s289, 1
      %p293 = scmp.eq.s32.totalorder %s103, 1
      %p294 = scmp.ne.s32.totalorder %s289, %s291
      %p295 = scmp.eq.s32.totalorder %s103, 0
      %p296 = por %p294, %p295
      %p297 = scmp.ne.s32.totalorder %s289, %s291
      %p298 = scmp.eq.s32.totalorder %s108, 1
      %p299 = por %p297, %p298
      %p300 = scmp.ne.s32.totalorder %s291, %s292
      %p301 = scmp.eq.s32.totalorder %s108, 0
      %p302 = por %p300, %p301
      %p303 = scmp.ne.s32.totalorder %s291, %s292
      %p304 = scmp.eq.s32.totalorder %s109, 1
      %p305 = por %p303, %p304
      %p307 = scmp.ne.s32.totalorder %s292, %s306
      %p308 = scmp.eq.s32.totalorder %s109, 0
      %p309 = por %p307, %p308
      %s311 = sadd.s32 %s310, 1
      %p314 = scmp.eq.s32.totalorder %s103, 1
      %p315 = scmp.ne.s32.totalorder %s310, %s312
      %p316 = scmp.eq.s32.totalorder %s103, 0
      %p317 = por %p315, %p316
      %p318 = scmp.ne.s32.totalorder %s310, %s312
      %p319 = scmp.eq.s32.totalorder %s108, 1
      %p320 = por %p318, %p319
      %p321 = scmp.ne.s32.totalorder %s312, %s313
      %p322 = scmp.eq.s32.totalorder %s108, 0
      %p323 = por %p321, %p322
      %p324 = scmp.ne.s32.totalorder %s312, %s313
      %p325 = scmp.eq.s32.totalorder %s109, 1
      %p326 = por %p324, %p325
      %p328 = scmp.ne.s32.totalorder %s313, %s327
      %p329 = scmp.eq.s32.totalorder %s109, 0
      %p330 = por %p328, %p329
      %s332 = sadd.s32 %s331, 1
      %p335 = scmp.eq.s32.totalorder %s103, 1
      %p336 = scmp.ne.s32.totalorder %s331, %s333
      %p337 = scmp.eq.s32.totalorder %s103, 0
      %p338 = por %p336, %p337
      %p339 = scmp.ne.s32.totalorder %s331, %s333
      %p340 = scmp.eq.s32.totalorder %s108, 1
      %p341 = por %p339, %p340
      %p342 = scmp.ne.s32.totalorder %s333, %s334
      %p343 = scmp.eq.s32.totalorder %s108, 0
      %p344 = por %p342, %p343
      %p345 = scmp.ne.s32.totalorder %s333, %s334
      %p346 = scmp.eq.s32.totalorder %s109, 1
      %p347 = por %p345, %p346
      %p349 = scmp.ne.s32.totalorder %s334, %s348
      %p350 = scmp.eq.s32.totalorder %s109, 0
      %p351 = por %p349, %p350
      %s353 = sadd.s32 %s352, 1
      %p356 = scmp.eq.s32.totalorder %s103, 1
      %p357 = scmp.ne.s32.totalorder %s352, %s354
      %p358 = scmp.eq.s32.totalorder %s103, 0
      %p359 = por %p357, %p358
      %p360 = scmp.ne.s32.totalorder %s352, %s354
      %p361 = scmp.eq.s32.totalorder %s108, 1
      %p362 = por %p360, %p361
      %p363 = scmp.ne.s32.totalorder %s354, %s355
      %p364 = scmp.eq.s32.totalorder %s108, 0
      %p365 = por %p363, %p364
      %p366 = scmp.ne.s32.totalorder %s354, %s355
      %p367 = scmp.eq.s32.totalorder %s109, 1
      %p368 = por %p366, %p367
      %p370 = scmp.ne.s32.totalorder %s355, %s369
      %p371 = scmp.eq.s32.totalorder %s109, 0
      %p372 = por %p370, %p371
      %s374 = sadd.s32 %s373, 1
      %p377 = scmp.eq.s32.totalorder %s103, 1
      %p378 = scmp.ne.s32.totalorder %s373, %s375
      %p379 = scmp.eq.s32.totalorder %s103, 0
      %p380 = por %p378, %p379
      %p381 = scmp.ne.s32.totalorder %s373, %s375
      %p382 = scmp.eq.s32.totalorder %s108, 1
      %p383 = por %p381, %p382
      %p384 = scmp.ne.s32.totalorder %s375, %s376
      %p385 = scmp.eq.s32.totalorder %s108, 0
      %p386 = por %p384, %p385
      %p387 = scmp.ne.s32.totalorder %s375, %s376
      %p388 = scmp.eq.s32.totalorder %s109, 1
      %p389 = por %p387, %p388
      %p391 = scmp.ne.s32.totalorder %s376, %s390
      %p392 = scmp.eq.s32.totalorder %s109, 0
      %p393 = por %p391, %p392
      %s395 = sadd.s32 %s394, 1
      %p398 = scmp.eq.s32.totalorder %s103, 1
      %p399 = scmp.ne.s32.totalorder %s394, %s396
      %p400 = scmp.eq.s32.totalorder %s103, 0
      %p401 = por %p399, %p400
      %p402 = scmp.ne.s32.totalorder %s394, %s396
      %p403 = scmp.eq.s32.totalorder %s108, 1
      %p404 = por %p402, %p403
      %p405 = scmp.ne.s32.totalorder %s396, %s397
      %p406 = scmp.eq.s32.totalorder %s108, 0
      %p407 = por %p405, %p406
      %p408 = scmp.ne.s32.totalorder %s396, %s397
      %p409 = scmp.eq.s32.totalorder %s109, 1
      %p410 = por %p408, %p409
      %p412 = scmp.ne.s32.totalorder %s397, %s411
      %p413 = scmp.eq.s32.totalorder %s109, 0
      %p414 = por %p412, %p413
      %s416 = sadd.s32 %s415, 1
      %p419 = scmp.eq.s32.totalorder %s103, 1
      %p420 = scmp.ne.s32.totalorder %s415, %s417
      %p421 = scmp.eq.s32.totalorder %s103, 0
      %p422 = por %p420, %p421
      %p423 = scmp.ne.s32.totalorder %s415, %s417
      %p424 = scmp.eq.s32.totalorder %s108, 1
      %p425 = por %p423, %p424
      %p426 = scmp.ne.s32.totalorder %s417, %s418
      %p427 = scmp.eq.s32.totalorder %s108, 0
      %p428 = por %p426, %p427
      %p429 = scmp.ne.s32.totalorder %s417, %s418
      %p430 = scmp.eq.s32.totalorder %s109, 1
      %p431 = por %p429, %p430
      %p433 = scmp.ne.s32.totalorder %s418, %s432
      %p434 = scmp.eq.s32.totalorder %s109, 0
      %p435 = por %p433, %p434
      %s437 = sadd.s32 %s436, 1
      %p440 = scmp.eq.s32.totalorder %s103, 1
      %p441 = scmp.ne.s32.totalorder %s436, %s438
      %p442 = scmp.eq.s32.totalorder %s103, 0
      %p443 = por %p441, %p442
      %p444 = scmp.ne.s32.totalorder %s436, %s438
      %p445 = scmp.eq.s32.totalorder %s108, 1
      %p446 = por %p444, %p445
      %p447 = scmp.ne.s32.totalorder %s438, %s439
      %p448 = scmp.eq.s32.totalorder %s108, 0
      %p449 = por %p447, %p448
      %p450 = scmp.ne.s32.totalorder %s438, %s439
      %p451 = scmp.eq.s32.totalorder %s109, 1
      %p452 = por %p450, %p451
      %p454 = scmp.ne.s32.totalorder %s439, %s453
      %p455 = scmp.eq.s32.totalorder %s109, 0
      %p456 = por %p454, %p455
      %s458 = sadd.s32 %s457, 1
      %p461 = scmp.eq.s32.totalorder %s103, 1
      %p462 = scmp.ne.s32.totalorder %s457, %s459
      %p463 = scmp.eq.s32.totalorder %s103, 0
      %p464 = por %p462, %p463
      %p465 = scmp.ne.s32.totalorder %s457, %s459
      %p466 = scmp.eq.s32.totalorder %s108, 1
      %p467 = por %p465, %p466
      %p468 = scmp.ne.s32.totalorder %s459, %s460
      %p469 = scmp.eq.s32.totalorder %s108, 0
      %p470 = por %p468, %p469
      %p471 = scmp.ne.s32.totalorder %s459, %s460
      %p472 = scmp.eq.s32.totalorder %s109, 1
      %p473 = por %p471, %p472
      %p475 = scmp.ne.s32.totalorder %s460, %s474
      %p476 = scmp.eq.s32.totalorder %s109, 0
      %p477 = por %p475, %p476
      %s479 = sadd.s32 %s478, 1
      %p482 = scmp.eq.s32.totalorder %s103, 1
      %p483 = scmp.ne.s32.totalorder %s478, %s480
      %p484 = scmp.eq.s32.totalorder %s103, 0
      %p485 = por %p483, %p484
      %p486 = scmp.ne.s32.totalorder %s478, %s480
      %p487 = scmp.eq.s32.totalorder %s108, 1
      %p488 = por %p486, %p487
      %p489 = scmp.ne.s32.totalorder %s480, %s481
      %p490 = scmp.eq.s32.totalorder %s108, 0
      %p491 = por %p489, %p490
      %p492 = scmp.ne.s32.totalorder %s480, %s481
      %p493 = scmp.eq.s32.totalorder %s109, 1
      %p494 = por %p492, %p493
      %p496 = scmp.ne.s32.totalorder %s481, %s495
      %p497 = scmp.eq.s32.totalorder %s109, 0
      %p498 = por %p496, %p497
      %s500 = sadd.s32 %s499, 1
      %p503 = scmp.eq.s32.totalorder %s103, 1
      %p504 = scmp.ne.s32.totalorder %s499, %s501
      %p505 = scmp.eq.s32.totalorder %s103, 0
      %p506 = por %p504, %p505
      %p507 = scmp.ne.s32.totalorder %s499, %s501
      %p508 = scmp.eq.s32.totalorder %s108, 1
      %p509 = por %p507, %p508
      %p510 = scmp.ne.s32.totalorder %s501, %s502
      %p511 = scmp.eq.s32.totalorder %s108, 0
      %p512 = por %p510, %p511
      %p513 = scmp.ne.s32.totalorder %s501, %s502
      %p514 = scmp.eq.s32.totalorder %s109, 1
      %p515 = por %p513, %p514
      %p517 = scmp.ne.s32.totalorder %s502, %s516
      %p518 = scmp.eq.s32.totalorder %s109, 0
      %p519 = por %p517, %p518
      %s521 = sadd.s32 %s520, 1
      %p524 = scmp.eq.s32.totalorder %s103, 1
      %p525 = scmp.ne.s32.totalorder %s520, %s522
      %p526 = scmp.eq.s32.totalorder %s103, 0
      %p527 = por %p525, %p526
      %p528 = scmp.ne.s32.totalorder %s520, %s522
      %p529 = scmp.eq.s32.totalorder %s108, 1
      %p530 = por %p528, %p529
      %p531 = scmp.ne.s32.totalorder %s522, %s523
      %p532 = scmp.eq.s32.totalorder %s108, 0
      %p533 = por %p531, %p532
      %p534 = scmp.ne.s32.totalorder %s522, %s523
      %p535 = scmp.eq.s32.totalorder %s109, 1
      %p536 = por %p534, %p535
      %p538 = scmp.ne.s32.totalorder %s523, %s537
      %p539 = scmp.eq.s32.totalorder %s109, 0
      %p540 = por %p538, %p539
      %s542 = sadd.s32 %s541, 1
      %p545 = scmp.eq.s32.totalorder %s103, 1
      %p546 = scmp.ne.s32.totalorder %s541, %s543
      %p547 = scmp.eq.s32.totalorder %s103, 0
      %p548 = por %p546, %p547
      %p549 = scmp.ne.s32.totalorder %s541, %s543
      %p550 = scmp.eq.s32.totalorder %s108, 1
      %p551 = por %p549, %p550
      %p552 = scmp.ne.s32.totalorder %s543, %s544
      %p553 = scmp.eq.s32.totalorder %s108, 0
      %p554 = por %p552, %p553
      %p555 = scmp.ne.s32.totalorder %s543, %s544
      %p556 = scmp.eq.s32.totalorder %s109, 1
      %p557 = por %p555, %p556
      %p559 = scmp.ne.s32.totalorder %s544, %s558
      %p560 = scmp.eq.s32.totalorder %s109, 0
      %p561 = por %p559, %p560
      %s563 = sadd.s32 %s562, 1
      %p566 = scmp.eq.s32.totalorder %s103, 1
      %p567 = scmp.ne.s32.totalorder %s562, %s564
      %p568 = scmp.eq.s32.totalorder %s103, 0
      %p569 = por %p567, %p568
      %p570 = scmp.ne.s32.totalorder %s562, %s564
      %p571 = scmp.eq.s32.totalorder %s108, 1
      %p572 = por %p570, %p571
      %p573 = scmp.ne.s32.totalorder %s564, %s565
      %p574 = scmp.eq.s32.totalorder %s108, 0
      %p575 = por %p573, %p574
      %p576 = scmp.ne.s32.totalorder %s564, %s565
      %p577 = scmp.eq.s32.totalorder %s109, 1
      %p578 = por %p576, %p577
      %p580 = scmp.ne.s32.totalorder %s565, %s579
      %p581 = scmp.eq.s32.totalorder %s109, 0
      %p582 = por %p580, %p581
      %s584 = sadd.s32 %s583, 1
      %p587 = scmp.eq.s32.totalorder %s103, 1
      %p588 = scmp.ne.s32.totalorder %s583, %s585
      %p589 = scmp.eq.s32.totalorder %s103, 0
      %p590 = por %p588, %p589
      %p591 = scmp.ne.s32.totalorder %s583, %s585
      %p592 = scmp.eq.s32.totalorder %s108, 1
      %p593 = por %p591, %p592
      %p594 = scmp.ne.s32.totalorder %s585, %s586
      %p595 = scmp.eq.s32.totalorder %s108, 0
      %p596 = por %p594, %p595
      %p597 = scmp.ne.s32.totalorder %s585, %s586
      %p598 = scmp.eq.s32.totalorder %s109, 1
      %p599 = por %p597, %p598
      %p601 = scmp.ne.s32.totalorder %s586, %s600
      %p602 = scmp.eq.s32.totalorder %s109, 0
      %p603 = por %p601, %p602
      %s605 = sadd.s32 %s604, 1
      %p608 = scmp.eq.s32.totalorder %s103, 1
      %p609 = scmp.ne.s32.totalorder %s604, %s606
      %p610 = scmp.eq.s32.totalorder %s103, 0
      %p611 = por %p609, %p610
      %p612 = scmp.ne.s32.totalorder %s604, %s606
      %p613 = scmp.eq.s32.totalorder %s108, 1
      %p614 = por %p612, %p613
      %p615 = scmp.ne.s32.totalorder %s606, %s607
      %p616 = scmp.eq.s32.totalorder %s108, 0
      %p617 = por %p615, %p616
      %p618 = scmp.ne.s32.totalorder %s606, %s607
      %p619 = scmp.eq.s32.totalorder %s109, 1
      %p620 = por %p618, %p619
      %p622 = scmp.ne.s32.totalorder %s607, %s621
      %p623 = scmp.eq.s32.totalorder %s109, 0
      %p624 = por %p622, %p623
      %s626 = sadd.s32 %s625, 1
      %p629 = scmp.eq.s32.totalorder %s103, 1
      %p630 = scmp.ne.s32.totalorder %s625, %s627
      %p631 = scmp.eq.s32.totalorder %s103, 0
      %p632 = por %p630, %p631
      %p633 = scmp.ne.s32.totalorder %s625, %s627
      %p634 = scmp.eq.s32.totalorder %s108, 1
      %p635 = por %p633, %p634
      %p636 = scmp.ne.s32.totalorder %s627, %s628
      %p637 = scmp.eq.s32.totalorder %s108, 0
      %p638 = por %p636, %p637
      %p639 = scmp.ne.s32.totalorder %s627, %s628
      %p640 = scmp.eq.s32.totalorder %s109, 1
      %p641 = por %p639, %p640
      %p643 = scmp.ne.s32.totalorder %s628, %s642
      %p644 = scmp.eq.s32.totalorder %s109, 0
      %p645 = por %p643, %p644
      %s647 = sadd.s32 %s646, 1
      %p650 = scmp.eq.s32.totalorder %s103, 1
      %p651 = scmp.ne.s32.totalorder %s646, %s648
      %p652 = scmp.eq.s32.totalorder %s103, 0
      %p653 = por %p651, %p652
      %p654 = scmp.ne.s32.totalorder %s646, %s648
      %p655 = scmp.eq.s32.totalorder %s108, 1
      %p656 = por %p654, %p655
      %p657 = scmp.ne.s32.totalorder %s648, %s649
      %p658 = scmp.eq.s32.totalorder %s108, 0
      %p659 = por %p657, %p658
      %p660 = scmp.ne.s32.totalorder %s648, %s649
      %p661 = scmp.eq.s32.totalorder %s109, 1
      %p662 = por %p660, %p661
      %p664 = scmp.ne.s32.totalorder %s649, %s663
      %p665 = scmp.eq.s32.totalorder %s109, 0
      %p666 = por %p664, %p665
      %s668 = sadd.s32 %s667, 1
      %p671 = scmp.eq.s32.totalorder %s103, 1
      %p672 = scmp.ne.s32.totalorder %s667, %s669
      %p673 = scmp.eq.s32.totalorder %s103, 0
      %p674 = por %p672, %p673
      %p675 = scmp.ne.s32.totalorder %s667, %s669
      %p676 = scmp.eq.s32.totalorder %s108, 1
      %p677 = por %p675, %p676
      %p678 = scmp.ne.s32.totalorder %s669, %s670
      %p679 = scmp.eq.s32.totalorder %s108, 0
      %p680 = por %p678, %p679
      %p681 = scmp.ne.s32.totalorder %s669, %s670
      %p682 = scmp.eq.s32.totalorder %s109, 1
      %p683 = por %p681, %p682
      %p685 = scmp.ne.s32.totalorder %s670, %s684
      %p686 = scmp.eq.s32.totalorder %s109, 0
      %p687 = por %p685, %p686
      %s689 = sadd.s32 %s688, 1
      %p692 = scmp.eq.s32.totalorder %s103, 1
      %p693 = scmp.ne.s32.totalorder %s688, %s690
      %p694 = scmp.eq.s32.totalorder %s103, 0
      %p695 = por %p693, %p694
      %p696 = scmp.ne.s32.totalorder %s688, %s690
      %p697 = scmp.eq.s32.totalorder %s108, 1
      %p698 = por %p696, %p697
      %p699 = scmp.ne.s32.totalorder %s690, %s691
      %p700 = scmp.eq.s32.totalorder %s108, 0
      %p701 = por %p699, %p700
      %p702 = scmp.ne.s32.totalorder %s690, %s691
      %p703 = scmp.eq.s32.totalorder %s109, 1
      %p704 = por %p702, %p703
      %p706 = scmp.ne.s32.totalorder %s691, %s705
      %p707 = scmp.eq.s32.totalorder %s109, 0
      %p708 = por %p706, %p707
      %s710 = sadd.s32 %s709, 1
      %p713 = scmp.eq.s32.totalorder %s103, 1
      %p714 = scmp.ne.s32.totalorder %s709, %s711
      %p715 = scmp.eq.s32.totalorder %s103, 0
      %p716 = por %p714, %p715
      %p717 = scmp.ne.s32.totalorder %s709, %s711
      %p718 = scmp.eq.s32.totalorder %s108, 1
      %p719 = por %p717, %p718
      %p720 = scmp.ne.s32.totalorder %s711, %s712
      %p721 = scmp.eq.s32.totalorder %s108, 0
      %p722 = por %p720, %p721
      %p723 = scmp.ne.s32.totalorder %s711, %s712
      %p724 = scmp.eq.s32.totalorder %s109, 1
      %p725 = por %p723, %p724
      %p727 = scmp.ne.s32.totalorder %s712, %s726
      %p728 = scmp.eq.s32.totalorder %s109, 0
      %p729 = por %p727, %p728
      %s731 = sadd.s32 %s730, 1
      %p734 = scmp.eq.s32.totalorder %s103, 1
      %p735 = scmp.ne.s32.totalorder %s730, %s732
      %p736 = scmp.eq.s32.totalorder %s103, 0
      %p737 = por %p735, %p736
      %p738 = scmp.ne.s32.totalorder %s730, %s732
      %p739 = scmp.eq.s32.totalorder %s108, 1
      %p740 = por %p738, %p739
      %p741 = scmp.ne.s32.totalorder %s732, %s733
      %p742 = scmp.eq.s32.totalorder %s108, 0
      %p743 = por %p741, %p742
      %p744 = scmp.ne.s32.totalorder %s732, %s733
      %p745 = scmp.eq.s32.totalorder %s109, 1
      %p746 = por %p744, %p745
      %p748 = scmp.ne.s32.totalorder %s733, %s747
      %p749 = scmp.eq.s32.totalorder %s109, 0
      %p750 = por %p748, %p749
      %s752 = sadd.s32 %s751, 1
      %p755 = scmp.eq.s32.totalorder %s103, 1
      %p756 = scmp.ne.s32.totalorder %s751, %s753
      %p757 = scmp.eq.s32.totalorder %s103, 0
      %p758 = por %p756, %p757
      %p759 = scmp.ne.s32.totalorder %s751, %s753
      %p760 = scmp.eq.s32.totalorder %s108, 1
      %p761 = por %p759, %p760
      %p762 = scmp.ne.s32.totalorder %s753, %s754
      %p763 = scmp.eq.s32.totalorder %s108, 0
      %p764 = por %p762, %p763
      %p765 = scmp.ne.s32.totalorder %s753, %s754
      %p766 = scmp.eq.s32.totalorder %s109, 1
      %p767 = por %p765, %p766
      %p769 = scmp.ne.s32.totalorder %s754, %s768
      %p770 = scmp.eq.s32.totalorder %s109, 0
      %p771 = por %p769, %p770
      %s773 = sadd.s32 %s772, 1
      %p776 = scmp.eq.s32.totalorder %s103, 1
      %p777 = scmp.ne.s32.totalorder %s772, %s774
      %p778 = scmp.eq.s32.totalorder %s103, 0
      %p779 = por %p777, %p778
      %p780 = scmp.ne.s32.totalorder %s772, %s774
      %p781 = scmp.eq.s32.totalorder %s108, 1
      %p782 = por %p780, %p781
      %p783 = scmp.ne.s32.totalorder %s774, %s775
      %p784 = scmp.eq.s32.totalorder %s108, 0
      %p785 = por %p783, %p784
      %p786 = scmp.ne.s32.totalorder %s774, %s775
      %p787 = scmp.eq.s32.totalorder %s109, 1
      %p788 = por %p786, %p787
      %p790 = scmp.ne.s32.totalorder %s775, %s789
      %p791 = scmp.eq.s32.totalorder %s109, 0
      %p792 = por %p790, %p791
      %s794 = sadd.s32 %s793, 1
      %p797 = scmp.eq.s32.totalorder %s103, 1
      %p798 = scmp.ne.s32.totalorder %s793, %s795
      %p799 = scmp.eq.s32.totalorder %s103, 0
      %p800 = por %p798, %p799
      %p801 = scmp.ne.s32.totalorder %s793, %s795
      %p802 = scmp.eq.s32.totalorder %s108, 1
      %p803 = por %p801, %p802
      %p804 = scmp.ne.s32.totalorder %s795, %s796
      %p805 = scmp.eq.s32.totalorder %s108, 0
      %p806 = por %p804, %p805
      %p807 = scmp.ne.s32.totalorder %s795, %s796
      %p808 = scmp.eq.s32.totalorder %s109, 1
      %p809 = por %p807, %p808
      %p811 = scmp.ne.s32.totalorder %s796, %s810
      %p812 = scmp.eq.s32.totalorder %s109, 0
      %p813 = por %p811, %p812
      %s815 = sadd.s32 %s814, 1
      %p818 = scmp.eq.s32.totalorder %s103, 1
      %p819 = scmp.ne.s32.totalorder %s814, %s816
      %p820 = scmp.eq.s32.totalorder %s103, 0
      %p821 = por %p819, %p820
      %p822 = scmp.ne.s32.totalorder %s814, %s816
      %p823 = scmp.eq.s32.totalorder %s108, 1
      %p824 = por %p822, %p823
      %p825 = scmp.ne.s32.totalorder %s816, %s817
      %p826 = scmp.eq.s32.totalorder %s108, 0
      %p827 = por %p825, %p826
      %p828 = scmp.ne.s32.totalorder %s816, %s817
      %p829 = scmp.eq.s32.totalorder %s109, 1
      %p830 = por %p828, %p829
      %p832 = scmp.ne.s32.totalorder %s817, %s831
      %p833 = scmp.eq.s32.totalorder %s109, 0
      %p834 = por %p832, %p833
      %s836 = sadd.s32 %s835, 1
      %p839 = scmp.eq.s32.totalorder %s103, 1
      %p840 = scmp.ne.s32.totalorder %s835, %s837
      %p841 = scmp.eq.s32.totalorder %s103, 0
      %p842 = por %p840, %p841
      %p843 = scmp.ne.s32.totalorder %s835, %s837
      %p844 = scmp.eq.s32.totalorder %s108, 1
      %p845 = por %p843, %p844
      %p846 = scmp.ne.s32.totalorder %s837, %s838
      %p847 = scmp.eq.s32.totalorder %s108, 0
      %p848 = por %p846, %p847
      %p849 = scmp.ne.s32.totalorder %s837, %s838
      %p850 = scmp.eq.s32.totalorder %s109, 1
      %p851 = por %p849, %p850
      %p853 = scmp.ne.s32.totalorder %s838, %s852
      %p854 = scmp.eq.s32.totalorder %s109, 0
      %p855 = por %p853, %p854
      %s857 = sadd.s32 %s856, 1
      %p860 = scmp.eq.s32.totalorder %s103, 1
      %p861 = scmp.ne.s32.totalorder %s856, %s858
      %p862 = scmp.eq.s32.totalorder %s103, 0
      %p863 = por %p861, %p862
      %p864 = scmp.ne.s32.totalorder %s856, %s858
      %p865 = scmp.eq.s32.totalorder %s108, 1
      %p866 = por %p864, %p865
      %p867 = scmp.ne.s32.totalorder %s858, %s859
      %p868 = scmp.eq.s32.totalorder %s108, 0
      %p869 = por %p867, %p868
      %p870 = scmp.ne.s32.totalorder %s858, %s859
      %p871 = scmp.eq.s32.totalorder %s109, 1
      %p872 = por %p870, %p871
      %p874 = scmp.ne.s32.totalorder %s859, %s873
      %p875 = scmp.eq.s32.totalorder %s109, 0
      %p876 = por %p874, %p875
      %s878 = sadd.s32 %s877, 1
      %p881 = scmp.eq.s32.totalorder %s103, 1
      %p882 = scmp.ne.s32.totalorder %s877, %s879
      %p883 = scmp.eq.s32.totalorder %s103, 0
      %p884 = por %p882, %p883
      %p885 = scmp.ne.s32.totalorder %s877, %s879
      %p886 = scmp.eq.s32.totalorder %s108, 1
      %p887 = por %p885, %p886
      %p888 = scmp.ne.s32.totalorder %s879, %s880
      %p889 = scmp.eq.s32.totalorder %s108, 0
      %p890 = por %p888, %p889
      %p891 = scmp.ne.s32.totalorder %s879, %s880
      %p892 = scmp.eq.s32.totalorder %s109, 1
      %p893 = por %p891, %p892
      %p895 = scmp.ne.s32.totalorder %s880, %s894
      %p896 = scmp.eq.s32.totalorder %s109, 0
      %p897 = por %p895, %p896
      %s899 = sadd.s32 %s898, 1
      %p902 = scmp.eq.s32.totalorder %s103, 1
      %p903 = scmp.ne.s32.totalorder %s898, %s900
      %p904 = scmp.eq.s32.totalorder %s103, 0
      %p905 = por %p903, %p904
      %p906 = scmp.ne.s32.totalorder %s898, %s900
      %p907 = scmp.eq.s32.totalorder %s108, 1
      %p908 = por %p906, %p907
      %p909 = scmp.ne.s32.totalorder %s900, %s901
      %p910 = scmp.eq.s32.totalorder %s108, 0
      %p911 = por %p909, %p910
      %p912 = scmp.ne.s32.totalorder %s900, %s901
      %p913 = scmp.eq.s32.totalorder %s109, 1
      %p914 = por %p912, %p913
      %p916 = scmp.ne.s32.totalorder %s901, %s915
      %p917 = scmp.eq.s32.totalorder %s109, 0
      %p918 = por %p916, %p917
      %s920 = sadd.s32 %s919, 1
      %p923 = scmp.eq.s32.totalorder %s103, 1
      %p924 = scmp.ne.s32.totalorder %s919, %s921
      %p925 = scmp.eq.s32.totalorder %s103, 0
      %p926 = por %p924, %p925
      %p927 = scmp.ne.s32.totalorder %s919, %s921
      %p928 = scmp.eq.s32.totalorder %s108, 1
      %p929 = por %p927, %p928
      %p930 = scmp.ne.s32.totalorder %s921, %s922
      %p931 = scmp.eq.s32.totalorder %s108, 0
      %p932 = por %p930, %p931
      %p933 = scmp.ne.s32.totalorder %s921, %s922
      %p934 = scmp.eq.s32.totalorder %s109, 1
      %p935 = por %p933, %p934
      %p937 = scmp.ne.s32.totalorder %s922, %s936
      %p938 = scmp.eq.s32.totalorder %s109, 0
      %p939 = por %p937, %p938
      %s941 = sadd.s32 %s940, 1
      %p944 = scmp.eq.s32.totalorder %s103, 1
      %p945 = scmp.ne.s32.totalorder %s940, %s942
      %p946 = scmp.eq.s32.totalorder %s103, 0
      %p947 = por %p945, %p946
      %p948 = scmp.ne.s32.totalorder %s940, %s942
      %p949 = scmp.eq.s32.totalorder %s108, 1
      %p950 = por %p948, %p949
      %p951 = scmp.ne.s32.totalorder %s942, %s943
      %p952 = scmp.eq.s32.totalorder %s108, 0
      %p953 = por %p951, %p952
      %p954 = scmp.ne.s32.totalorder %s942, %s943
      %p955 = scmp.eq.s32.totalorder %s109, 1
      %p956 = por %p954, %p955
      %p958 = scmp.ne.s32.totalorder %s943, %s957
      %p959 = scmp.eq.s32.totalorder %s109, 0
      %p960 = por %p958, %p959
      %s962 = sadd.s32 %s961, 1
      %p965 = scmp.eq.s32.totalorder %s103, 1
      %p966 = scmp.ne.s32.totalorder %s961, %s963
      %p967 = scmp.eq.s32.totalorder %s103, 0
      %p968 = por %p966, %p967
      %p969 = scmp.ne.s32.totalorder %s961, %s963
      %p970 = scmp.eq.s32.totalorder %s108, 1
      %p971 = por %p969, %p970
      %p972 = scmp.ne.s32.totalorder %s963, %s964
      %p973 = scmp.eq.s32.totalorder %s108, 0
      %p974 = por %p972, %p973
      %p975 = scmp.ne.s32.totalorder %s963, %s964
      %p976 = scmp.eq.s32.totalorder %s109, 1
      %p977 = por %p975, %p976
      %p979 = scmp.ne.s32.totalorder %s964, %s978
      %p980 = scmp.eq.s32.totalorder %s109, 0
      %p981 = por %p979, %p980
      %s983 = sadd.s32 %s982, 1
      %p986 = scmp.eq.s32.totalorder %s103, 1
      %p987 = scmp.ne.s32.totalorder %s982, %s984
      %p988 = scmp.eq.s32.totalorder %s103, 0
      %p989 = por %p987, %p988
      %p990 = scmp.ne.s32.totalorder %s982, %s984
      %p991 = scmp.eq.s32.totalorder %s108, 1
      %p992 = por %p990, %p991
      %p993 = scmp.ne.s32.totalorder %s984, %s985
      %p994 = scmp.eq.s32.totalorder %s108, 0
      %p995 = por %p993, %p994
      %p996 = scmp.ne.s32.totalorder %s984, %s985
      %p997 = scmp.eq.s32.totalorder %s109, 1
      %p998 = por %p996, %p997
      %p1000 = scmp.ne.s32.totalorder %s985, %s999
      %p1001 = scmp.eq.s32.totalorder %s109, 0
      %p1002 = por %p1000, %p1001
      %s1004 = sadd.s32 %s1003, 1
      %p1007 = scmp.eq.s32.totalorder %s103, 1
      %p1008 = scmp.ne.s32.totalorder %s1003, %s1005
      %p1009 = scmp.eq.s32.totalorder %s103, 0
      %p1010 = por %p1008, %p1009
      %p1011 = scmp.ne.s32.totalorder %s1003, %s1005
      %p1012 = scmp.eq.s32.totalorder %s108, 1
      %p1013 = por %p1011, %p1012
      %p1014 = scmp.ne.s32.totalorder %s1005, %s1006
      %p1015 = scmp.eq.s32.totalorder %s108, 0
      %p1016 = por %p1014, %p1015
      %p1017 = scmp.ne.s32.totalorder %s1005, %s1006
      %p1018 = scmp.eq.s32.totalorder %s109, 1
      %p1019 = por %p1017, %p1018
      %p1021 = scmp.ne.s32.totalorder %s1006, %s1020
      %p1022 = scmp.eq.s32.totalorder %s109, 0
      %p1023 = por %p1021, %p1022
      %s1025 = sadd.s32 %s1024, 1
      %p1028 = scmp.eq.s32.totalorder %s103, 1
      %p1029 = scmp.ne.s32.totalorder %s1024, %s1026
      %p1030 = scmp.eq.s32.totalorder %s103, 0
      %p1031 = por %p1029, %p1030
      %p1032 = scmp.ne.s32.totalorder %s1024, %s1026
      %p1033 = scmp.eq.s32.totalorder %s108, 1
      %p1034 = por %p1032, %p1033
      %p1035 = scmp.ne.s32.totalorder %s1026, %s1027
      %p1036 = scmp.eq.s32.totalorder %s108, 0
      %p1037 = por %p1035, %p1036
      %p1038 = scmp.ne.s32.totalorder %s1026, %s1027
      %p1039 = scmp.eq.s32.totalorder %s109, 1
      %p1040 = por %p1038, %p1039
      %p1042 = scmp.ne.s32.totalorder %s1027, %s1041
      %p1043 = scmp.eq.s32.totalorder %s109, 0
      %p1044 = por %p1042, %p1043
      %s1046 = sadd.s32 %s1045, 1
      %p1049 = scmp.eq.s32.totalorder %s103, 1
      %p1050 = scmp.ne.s32.totalorder %s1045, %s1047
      %p1051 = scmp.eq.s32.totalorder %s103, 0
      %p1052 = por %p1050, %p1051
      %p1053 = scmp.ne.s32.totalorder %s1045, %s1047
      %p1054 = scmp.eq.s32.totalorder %s108, 1
      %p1055 = por %p1053, %p1054
      %p1056 = scmp.ne.s32.totalorder %s1047, %s1048
      %p1057 = scmp.eq.s32.totalorder %s108, 0
      %p1058 = por %p1056, %p1057
      %p1059 = scmp.ne.s32.totalorder %s1047, %s1048
      %p1060 = scmp.eq.s32.totalorder %s109, 1
      %p1061 = por %p1059, %p1060
      %p1063 = scmp.ne.s32.totalorder %s1048, %s1062
      %p1064 = scmp.eq.s32.totalorder %s109, 0
      %p1065 = por %p1063, %p1064
      %s1067 = sadd.s32 %s1066, 1
      %p1070 = scmp.eq.s32.totalorder %s103, 1
      %p1071 = scmp.ne.s32.totalorder %s1066, %s1068
      %p1072 = scmp.eq.s32.totalorder %s103, 0
      %p1073 = por %p1071, %p1072
      %p1074 = scmp.ne.s32.totalorder %s1066, %s1068
      %p1075 = scmp.eq.s32.totalorder %s108, 1
      %p1076 = por %p1074, %p1075
      %p1077 = scmp.ne.s32.totalorder %s1068, %s1069
      %p1078 = scmp.eq.s32.totalorder %s108, 0
      %p1079 = por %p1077, %p1078
      %p1080 = scmp.ne.s32.totalorder %s1068, %s1069
      %p1081 = scmp.eq.s32.totalorder %s109, 1
      %p1082 = por %p1080, %p1081
      %p1084 = scmp.ne.s32.totalorder %s1069, %s1083
      %p1085 = scmp.eq.s32.totalorder %s109, 0
      %p1086 = por %p1084, %p1085
      %s1087 = ssub.s32 %s103, %s110
      %p1088 = scmp.eq.s32.totalorder %s1087, 0
      %s1090 = sadd.s32 %s1089, 1
      %s1091 = scalar_select %p1088, %s1089, %s1090
      %p1094 = pneg %p1088
      %p1095 = scmp.eq.s32.totalorder %s103, 1
      %p1096 = por %p1094, %p1095
      %p1097 = scmp.ne.s32.totalorder %s1089, %s1092
      %p1098 = scmp.eq.s32.totalorder %s103, 0
      %p1099 = por %p1097, %p1098
      %p1100 = scmp.ne.s32.totalorder %s1089, %s1092
      %p1101 = scmp.eq.s32.totalorder %s108, 1
      %p1102 = por %p1100, %p1101
      %p1103 = scmp.ne.s32.totalorder %s1092, %s1093
      %p1104 = scmp.eq.s32.totalorder %s108, 0
      %p1105 = por %p1103, %p1104
      %p1106 = scmp.ne.s32.totalorder %s1092, %s1093
      %p1107 = scmp.eq.s32.totalorder %s109, 1
      %p1108 = por %p1106, %p1107
      %p1110 = scmp.ne.s32.totalorder %s1093, %s1109
      %p1111 = scmp.eq.s32.totalorder %s109, 0
      %p1112 = por %p1110, %p1111
      %p1113 = scmp.le.s32.totalorder 1, %s103
      %p1114 = scmp.lt.s32.totalorder %s103, 3
      %p1115 = pnand %p1113, %p1114
      %p1116 = pneg %p1115
      // Predicated region
      $region9: #{transformer_forward.1} parent=5 // pred_check
        _
      $region10: #{transformer_forward.1} parent=5 // pred_check_branch
        %1118 = sbr.rel (%p1115) target = $region12
      $region11: #{transformer_forward.1} parent=5 // pred_region
        %s1119 = ssub.s32 %s103, 1
        // Predicated region
        $region13: #{transformer_forward.1} parent=11 // pred_check
          %p1120 = pneg %p176
        $region14: #{transformer_forward.1} parent=11 // pred_check_branch
          %1122 = sbr.rel (%p1120) target = $region16
        $region15: #{transformer_forward.1} parent=11 // pred_region
          _
        $region16: #{transformer_forward.1} parent=11 // pred_fallthru
          _
        // Predicated region
        $region17: #{transformer_forward.1} parent=11 // pred_check
          %p1123 = pneg %p197
        $region18: #{transformer_forward.1} parent=11 // pred_check_branch
          %1125 = sbr.rel (%p1123) target = $region20
        $region19: #{transformer_forward.1} parent=11 // pred_region
          _
        $region20: #{transformer_forward.1} parent=11 // pred_fallthru
          _
        // Predicated region
        $region21: #{transformer_forward.1} parent=11 // pred_check
          %p1126 = pneg %p218
        $region22: #{transformer_forward.1} parent=11 // pred_check_branch
          %1128 = sbr.rel (%p1126) target = $region24
        $region23: #{transformer_forward.1} parent=11 // pred_region
          _
        $region24: #{transformer_forward.1} parent=11 // pred_fallthru
          _
        // Predicated region
        $region25: #{transformer_forward.1} parent=11 // pred_check
          %p1129 = pneg %p239
        $region26: #{transformer_forward.1} parent=11 // pred_check_branch
          %1131 = sbr.rel (%p1129) target = $region28
        $region27: #{transformer_forward.1} parent=11 // pred_region
          _
        $region28: #{transformer_forward.1} parent=11 // pred_fallthru
          _
        // Predicated region
        $region29: #{transformer_forward.1} parent=11 // pred_check
          %p1132 = pneg %p260
        $region30: #{transformer_forward.1} parent=11 // pred_check_branch
          %1134 = sbr.rel (%p1132) target = $region32
        $region31: #{transformer_forward.1} parent=11 // pred_region
          %1136 = vsyncadd [#allocation3], 0
          %s1138 = sshll.u32 %s13, 4
          %s1139 = int_to_ptr.hbm [resolvable:$true] %s1138
          %s1140 = sshll.u32 [#allocation2], 4
          %s1141 = int_to_ptr.vmem [resolvable:$true] %s1140
          %1143 = dma.hbm_to_vmem [thread:$0]  %s1139, 16, %s1141, [#allocation3]
        $region32: #{transformer_forward.1} parent=11 // pred_fallthru
          _
        // Predicated region
        $region33: #{transformer_forward.1} parent=11 // pred_check
          %p1144 = pneg %p281
        $region34: #{transformer_forward.1} parent=11 // pred_check_branch
          %1146 = sbr.rel (%p1144) target = $region36
        $region35: #{transformer_forward.1} parent=11 // pred_region
          _
        $region36: #{transformer_forward.1} parent=11 // pred_fallthru
          _
        // Predicated region
        $region37: #{transformer_forward.1} parent=11 // pred_check
          %p1147 = pneg %p302
        $region38: #{transformer_forward.1} parent=11 // pred_check_branch
          %1149 = sbr.rel (%p1147) target = $region40
        $region39: #{transformer_forward.1} parent=11 // pred_region
          _
        $region40: #{transformer_forward.1} parent=11 // pred_fallthru
          _
        // Predicated region
        $region41: #{transformer_forward.1} parent=11 // pred_check
          %p1150 = pneg %p323
        $region42: #{transformer_forward.1} parent=11 // pred_check_branch
          %1152 = sbr.rel (%p1150) target = $region44
        $region43: #{transformer_forward.1} parent=11 // pred_region
          _
        $region44: #{transformer_forward.1} parent=11 // pred_fallthru
          _
        // Predicated region
        $region45: #{transformer_forward.1} parent=11 // pred_check
          %p1153 = pneg %p344
        $region46: #{transformer_forward.1} parent=11 // pred_check_branch
          %1155 = sbr.rel (%p1153) target = $region48
        $region47: #{transformer_forward.1} parent=11 // pred_region
          _
        $region48: #{transformer_forward.1} parent=11 // pred_fallthru
          _
        // Predicated region
        $region49: #{transformer_forward.1} parent=11 // pred_check
          %p1156 = pneg %p365
        $region50: #{transformer_forward.1} parent=11 // pred_check_branch
          %1158 = sbr.rel (%p1156) target = $region52
        $region51: #{transformer_forward.1} parent=11 // pred_region
          _
        $region52: #{transformer_forward.1} parent=11 // pred_fallthru
          _
        // Predicated region
        $region53: #{transformer_forward.1} parent=11 // pred_check
          %p1159 = pneg %p386
        $region54: #{transformer_forward.1} parent=11 // pred_check_branch
          %1161 = sbr.rel (%p1159) target = $region56
        $region55: #{transformer_forward.1} parent=11 // pred_region
          _
        $region56: #{transformer_forward.1} parent=11 // pred_fallthru
          _
        // Predicated region
        $region57: #{transformer_forward.1} parent=11 // pred_check
          %p1162 = pneg %p407
        $region58: #{transformer_forward.1} parent=11 // pred_check_branch
          %1164 = sbr.rel (%p1162) target = $region60
        $region59: #{transformer_forward.1} parent=11 // pred_region
          _
        $region60: #{transformer_forward.1} parent=11 // pred_fallthru
          _
        // Predicated region
        $region61: #{transformer_forward.1} parent=11 // pred_check
          %p1165 = pneg %p428
        $region62: #{transformer_forward.1} parent=11 // pred_check_branch
          %1167 = sbr.rel (%p1165) target = $region64
        $region63: #{transformer_forward.1} parent=11 // pred_region
          _
        $region64: #{transformer_forward.1} parent=11 // pred_fallthru
          _
        // Predicated region
        $region65: #{transformer_forward.1} parent=11 // pred_check
          %p1168 = pneg %p449
        $region66: #{transformer_forward.1} parent=11 // pred_check_branch
          %1170 = sbr.rel (%p1168) target = $region68
        $region67: #{transformer_forward.1} parent=11 // pred_region
          _
        $region68: #{transformer_forward.1} parent=11 // pred_fallthru
          _
        // Predicated region
        $region69: #{transformer_forward.1} parent=11 // pred_check
          %p1171 = pneg %p470
        $region70: #{transformer_forward.1} parent=11 // pred_check_branch
          %1173 = sbr.rel (%p1171) target = $region72
        $region71: #{transformer_forward.1} parent=11 // pred_region
          _
        $region72: #{transformer_forward.1} parent=11 // pred_fallthru
          _
        // Predicated region
        $region73: #{transformer_forward.1} parent=11 // pred_check
          %p1174 = pneg %p491
        $region74: #{transformer_forward.1} parent=11 // pred_check_branch
          %1176 = sbr.rel (%p1174) target = $region76
        $region75: #{transformer_forward.1} parent=11 // pred_region
          _
        $region76: #{transformer_forward.1} parent=11 // pred_fallthru
          _
        // Predicated region
        $region77: #{transformer_forward.1} parent=11 // pred_check
          %p1177 = pneg %p512
        $region78: #{transformer_forward.1} parent=11 // pred_check_branch
          %1179 = sbr.rel (%p1177) target = $region80
        $region79: #{transformer_forward.1} parent=11 // pred_region
          _
        $region80: #{transformer_forward.1} parent=11 // pred_fallthru
          _
        // Predicated region
        $region81: #{transformer_forward.1} parent=11 // pred_check
          %p1180 = pneg %p533
        $region82: #{transformer_forward.1} parent=11 // pred_check_branch
          %1182 = sbr.rel (%p1180) target = $region84
        $region83: #{transformer_forward.1} parent=11 // pred_region
          _
        $region84: #{transformer_forward.1} parent=11 // pred_fallthru
          _
        // Predicated region
        $region85: #{transformer_forward.1} parent=11 // pred_check
          %p1183 = pneg %p554
        $region86: #{transformer_forward.1} parent=11 // pred_check_branch
          %1185 = sbr.rel (%p1183) target = $region88
        $region87: #{transformer_forward.1} parent=11 // pred_region
          _
        $region88: #{transformer_forward.1} parent=11 // pred_fallthru
          _
        // Predicated region
        $region89: #{transformer_forward.1} parent=11 // pred_check
          %p1186 = pneg %p575
        $region90: #{transformer_forward.1} parent=11 // pred_check_branch
          %1188 = sbr.rel (%p1186) target = $region92
        $region91: #{transformer_forward.1} parent=11 // pred_region
          _
        $region92: #{transformer_forward.1} parent=11 // pred_fallthru
          _
        // Predicated region
        $region93: #{transformer_forward.1} parent=11 // pred_check
          %p1189 = pneg %p596
        $region94: #{transformer_forward.1} parent=11 // pred_check_branch
          %1191 = sbr.rel (%p1189) target = $region96
        $region95: #{transformer_forward.1} parent=11 // pred_region
          _
        $region96: #{transformer_forward.1} parent=11 // pred_fallthru
          _
        // Predicated region
        $region97: #{transformer_forward.1} parent=11 // pred_check
          %p1192 = pneg %p617
        $region98: #{transformer_forward.1} parent=11 // pred_check_branch
          %1194 = sbr.rel (%p1192) target = $region100
        $region99: #{transformer_forward.1} parent=11 // pred_region
          _
        $region100: #{transformer_forward.1} parent=11 // pred_fallthru
          _
        // Predicated region
        $region101: #{transformer_forward.1} parent=11 // pred_check
          %p1195 = pneg %p638
        $region102: #{transformer_forward.1} parent=11 // pred_check_branch
          %1197 = sbr.rel (%p1195) target = $region104
        $region103: #{transformer_forward.1} parent=11 // pred_region
          _
        $region104: #{transformer_forward.1} parent=11 // pred_fallthru
          _
        // Predicated region
        $region105: #{transformer_forward.1} parent=11 // pred_check
          %p1198 = pneg %p659
        $region106: #{transformer_forward.1} parent=11 // pred_check_branch
          %1200 = sbr.rel (%p1198) target = $region108
        $region107: #{transformer_forward.1} parent=11 // pred_region
          _
        $region108: #{transformer_forward.1} parent=11 // pred_fallthru
          _
        // Predicated region
        $region109: #{transformer_forward.1} parent=11 // pred_check
          %p1201 = pneg %p680
        $region110: #{transformer_forward.1} parent=11 // pred_check_branch
          %1203 = sbr.rel (%p1201) target = $region112
        $region111: #{transformer_forward.1} parent=11 // pred_region
          _
        $region112: #{transformer_forward.1} parent=11 // pred_fallthru
          _
        // Predicated region
        $region113: #{transformer_forward.1} parent=11 // pred_check
          %p1204 = pneg %p701
        $region114: #{transformer_forward.1} parent=11 // pred_check_branch
          %1206 = sbr.rel (%p1204) target = $region116
        $region115: #{transformer_forward.1} parent=11 // pred_region
          _
        $region116: #{transformer_forward.1} parent=11 // pred_fallthru
          _
        // Predicated region
        $region117: #{transformer_forward.1} parent=11 // pred_check
          %p1207 = pneg %p722
        $region118: #{transformer_forward.1} parent=11 // pred_check_branch
          %1209 = sbr.rel (%p1207) target = $region120
        $region119: #{transformer_forward.1} parent=11 // pred_region
          _
        $region120: #{transformer_forward.1} parent=11 // pred_fallthru
          _
        // Predicated region
        $region121: #{transformer_forward.1} parent=11 // pred_check
          %p1210 = pneg %p743
        $region122: #{transformer_forward.1} parent=11 // pred_check_branch
          %1212 = sbr.rel (%p1210) target = $region124
        $region123: #{transformer_forward.1} parent=11 // pred_region
          _
        $region124: #{transformer_forward.1} parent=11 // pred_fallthru
          _
        // Predicated region
        $region125: #{transformer_forward.1} parent=11 // pred_check
          %p1213 = pneg %p764
        $region126: #{transformer_forward.1} parent=11 // pred_check_branch
          %1215 = sbr.rel (%p1213) target = $region128
        $region127: #{transformer_forward.1} parent=11 // pred_region
          %1217 = vsyncadd [#allocation5], 0
          %s1218 = sshll.u32 %s61, 4
          %s1219 = int_to_ptr.hbm [resolvable:$true] %s1218
          %s1220 = sshll.u32 [#allocation4], 4
          %s1221 = int_to_ptr.vmem [resolvable:$true] %s1220
          %1226 = dma.hbm_to_vmem [thread:$0]  %s1219, 1024, %s1221, [#allocation5], 128, 128, 8
        $region128: #{transformer_forward.1} parent=11 // pred_fallthru
          _
        // Predicated region
        $region129: #{transformer_forward.1} parent=11 // pred_check
          %p1227 = pneg %p785
        $region130: #{transformer_forward.1} parent=11 // pred_check_branch
          %1229 = sbr.rel (%p1227) target = $region132
        $region131: #{transformer_forward.1} parent=11 // pred_region
          _
        $region132: #{transformer_forward.1} parent=11 // pred_fallthru
          _
        // Predicated region
        $region133: #{transformer_forward.1} parent=11 // pred_check
          %p1230 = pneg %p806
        $region134: #{transformer_forward.1} parent=11 // pred_check_branch
          %1232 = sbr.rel (%p1230) target = $region136
        $region135: #{transformer_forward.1} parent=11 // pred_region
          %1234 = vsyncadd [#allocation5], 0
          %s1235 = sshll.u32 %s65, 4
          %s1236 = int_to_ptr.hbm [resolvable:$true] %s1235
          %s1237 = sshll.u32 [#allocation6], 4
          %s1238 = int_to_ptr.vmem [resolvable:$true] %s1237
          %1243 = dma.hbm_to_vmem [thread:$0]  %s1236, 1024, %s1238, [#allocation5], 128, 128, 8
        $region136: #{transformer_forward.1} parent=11 // pred_fallthru
          _
        // Predicated region
        $region137: #{transformer_forward.1} parent=11 // pred_check
          %p1244 = pneg %p827
        $region138: #{transformer_forward.1} parent=11 // pred_check_branch
          %1246 = sbr.rel (%p1244) target = $region140
        $region139: #{transformer_forward.1} parent=11 // pred_region
          _
        $region140: #{transformer_forward.1} parent=11 // pred_fallthru
          _
        // Predicated region
        $region141: #{transformer_forward.1} parent=11 // pred_check
          %p1247 = pneg %p848
        $region142: #{transformer_forward.1} parent=11 // pred_check_branch
          %1249 = sbr.rel (%p1247) target = $region144
        $region143: #{transformer_forward.1} parent=11 // pred_region
          _
        $region144: #{transformer_forward.1} parent=11 // pred_fallthru
          _
        // Predicated region
        $region145: #{transformer_forward.1} parent=11 // pred_check
          %p1250 = pneg %p869
        $region146: #{transformer_forward.1} parent=11 // pred_check_branch
          %1252 = sbr.rel (%p1250) target = $region148
        $region147: #{transformer_forward.1} parent=11 // pred_region
          _
        $region148: #{transformer_forward.1} parent=11 // pred_fallthru
          _
        // Predicated region
        $region149: #{transformer_forward.1} parent=11 // pred_check
          %p1253 = pneg %p890
        $region150: #{transformer_forward.1} parent=11 // pred_check_branch
          %1255 = sbr.rel (%p1253) target = $region152
        $region151: #{transformer_forward.1} parent=11 // pred_region
          %1257 = vsyncadd [#allocation8], 0
          %s1258 = sshll.u32 %s73, 4
          %s1259 = int_to_ptr.hbm [resolvable:$true] %s1258
          %s1260 = sshll.u32 [#allocation7], 4
          %s1261 = int_to_ptr.vmem [resolvable:$true] %s1260
          %1266 = dma.hbm_to_vmem [thread:$0]  %s1259, 1024, %s1261, [#allocation8], 128, 128, 8
        $region152: #{transformer_forward.1} parent=11 // pred_fallthru
          _
        // Predicated region
        $region153: #{transformer_forward.1} parent=11 // pred_check
          %p1267 = pneg %p911
        $region154: #{transformer_forward.1} parent=11 // pred_check_branch
          %1269 = sbr.rel (%p1267) target = $region156
        $region155: #{transformer_forward.1} parent=11 // pred_region
          %1271 = vsyncadd [#allocation8], 0
          %s1272 = sshll.u32 %s75, 4
          %s1273 = int_to_ptr.hbm [resolvable:$true] %s1272
          %s1274 = sshll.u32 [#allocation9], 4
          %s1275 = int_to_ptr.vmem [resolvable:$true] %s1274
          %1280 = dma.hbm_to_vmem [thread:$0]  %s1273, 32, %s1275, [#allocation8], 16, 16, 1
        $region156: #{transformer_forward.1} parent=11 // pred_fallthru
          _
        // Predicated region
        $region157: #{transformer_forward.1} parent=11 // pred_check
          %p1281 = pneg %p932
        $region158: #{transformer_forward.1} parent=11 // pred_check_branch
          %1283 = sbr.rel (%p1281) target = $region160
        $region159: #{transformer_forward.1} parent=11 // pred_region
          _
        $region160: #{transformer_forward.1} parent=11 // pred_fallthru
          _
        // Predicated region
        $region161: #{transformer_forward.1} parent=11 // pred_check
          %p1284 = pneg %p953
        $region162: #{transformer_forward.1} parent=11 // pred_check_branch
          %1286 = sbr.rel (%p1284) target = $region164
        $region163: #{transformer_forward.1} parent=11 // pred_region
          _
        $region164: #{transformer_forward.1} parent=11 // pred_fallthru
          _
        // Predicated region
        $region165: #{transformer_forward.1} parent=11 // pred_check
          %p1287 = pneg %p974
        $region166: #{transformer_forward.1} parent=11 // pred_check_branch
          %1289 = sbr.rel (%p1287) target = $region168
        $region167: #{transformer_forward.1} parent=11 // pred_region
          _
        $region168: #{transformer_forward.1} parent=11 // pred_fallthru
          _
        // Predicated region
        $region169: #{transformer_forward.1} parent=11 // pred_check
          %p1290 = pneg %p995
        $region170: #{transformer_forward.1} parent=11 // pred_check_branch
          %1292 = sbr.rel (%p1290) target = $region172
        $region171: #{transformer_forward.1} parent=11 // pred_region
          _
        $region172: #{transformer_forward.1} parent=11 // pred_fallthru
          _
        // Predicated region
        $region173: #{transformer_forward.1} parent=11 // pred_check
          %p1293 = pneg %p1016
        $region174: #{transformer_forward.1} parent=11 // pred_check_branch
          %1295 = sbr.rel (%p1293) target = $region176
        $region175: #{transformer_forward.1} parent=11 // pred_region
          %1297 = vsyncadd [#allocation11], 0
          %s1299 = sshll.u32 %s85, 4
          %s1300 = int_to_ptr.hbm [resolvable:$true] %s1299
          %s1301 = sshll.u32 [#allocation10], 4
          %s1302 = int_to_ptr.vmem [resolvable:$true] %s1301
          %1304 = dma.hbm_to_vmem [thread:$0]  %s1300, 16, %s1302, [#allocation11]
        $region176: #{transformer_forward.1} parent=11 // pred_fallthru
          _
        // Predicated region
        $region177: #{transformer_forward.1} parent=11 // pred_check
          %p1305 = pneg %p1037
        $region178: #{transformer_forward.1} parent=11 // pred_check_branch
          %1307 = sbr.rel (%p1305) target = $region180
        $region179: #{transformer_forward.1} parent=11 // pred_region
          %1309 = vsyncadd [#allocation11], 0
          %s1311 = sshll.u32 %s87, 4
          %s1312 = int_to_ptr.hbm [resolvable:$true] %s1311
          %s1313 = sshll.u32 [#allocation12], 4
          %s1314 = int_to_ptr.vmem [resolvable:$true] %s1313
          %1316 = dma.hbm_to_vmem [thread:$0]  %s1312, 16, %s1314, [#allocation11]
        $region180: #{transformer_forward.1} parent=11 // pred_fallthru
          _
        // Predicated region
        $region181: #{transformer_forward.1} parent=11 // pred_check
          %p1317 = pneg %p1058
        $region182: #{transformer_forward.1} parent=11 // pred_check_branch
          %1319 = sbr.rel (%p1317) target = $region184
        $region183: #{transformer_forward.1} parent=11 // pred_region
          _
        $region184: #{transformer_forward.1} parent=11 // pred_fallthru
          _
        // Predicated region
        $region185: #{transformer_forward.1} parent=11 // pred_check
          %p1320 = pneg %p1079
        $region186: #{transformer_forward.1} parent=11 // pred_check_branch
          %1322 = sbr.rel (%p1320) target = $region188
        $region187: #{transformer_forward.1} parent=11 // pred_region
          _
        $region188: #{transformer_forward.1} parent=11 // pred_fallthru
          _
      $region12: #{transformer_forward.1} parent=5 // pred_fallthru
        _
      %p1323 = scmp.lt.s32.totalorder %s103, 2
      // Predicated region
      $region189: #{transformer_forward.1} parent=5 // pred_check
        %p1324 = pneg %p1323
      $region190: #{transformer_forward.1} parent=5 // pred_check_branch
        %1326 = sbr.rel (%p1324) target = $region192
      $region191: #{transformer_forward.1} parent=5 // pred_region
        // Predicated region
        $region193: #{transformer_forward.1} parent=191 // pred_check
          %p1327 = pneg %p123
        $region194: #{transformer_forward.1} parent=191 // pred_check_branch
          %1329 = sbr.rel (%p1327) target = $region196
        $region195: #{transformer_forward.1} parent=191 // pred_region
          %p1330 = scmp.lt.s32.totalorder %s103, 1
          %s1331 = scalar_select %p1330, %s103, 1
          %s1332 = smul.addr %s1331, 8
          %s1333 = scalar_lea.vmem %s1, %s1332
        $region196: #{transformer_forward.1} parent=191 // pred_fallthru
          _
        // Predicated region
        $region197: #{transformer_forward.1} parent=191 // pred_check
          %p1334 = pneg %p149
        $region198: #{transformer_forward.1} parent=191 // pred_check_branch
          %1336 = sbr.rel (%p1334) target = $region200
        $region199: #{transformer_forward.1} parent=191 // pred_region
          %p1337 = scmp.lt.s32.totalorder %s103, 1
          %s1338 = scalar_select %p1337, %s103, 1
          %s1339 = smul.addr %s1338, 8
          %s1340 = scalar_lea.vmem %s3, %s1339
        $region200: #{transformer_forward.1} parent=191 // pred_fallthru
          _
      $region192: #{transformer_forward.1} parent=5 // pred_fallthru
        _
      %p1341 = scmp.le.s32.totalorder 1, %s103
      %p1342 = scmp.lt.s32.totalorder %s103, 3
      %p1343 = pnand %p1341, %p1342
      %p1344 = pneg %p1343
      // Predicated region
      $region201: #{transformer_forward.1} parent=5 // pred_check
        _
      $region202: #{transformer_forward.1} parent=5 // pred_check_branch
        %1346 = sbr.rel (%p1343) target = $region204
      $region203: #{transformer_forward.1} parent=5 // pred_region
        %s1347 = ssub.s32 %s103, 1
        // Predicated region
        $region205: #{transformer_forward.1} parent=203 // pred_check
          %p1348 = pneg %p260
        $region206: #{transformer_forward.1} parent=203 // pred_check_branch
          %1350 = sbr.rel (%p1348) target = $region208
        $region207: #{transformer_forward.1} parent=203 // pred_region
          %1352 = dma.done [#allocation3], 16
        $region208: #{transformer_forward.1} parent=203 // pred_fallthru
          _
        // Predicated region
        $region209: #{transformer_forward.1} parent=203 // pred_check
          %p1353 = pneg %p764
        $region210: #{transformer_forward.1} parent=203 // pred_check_branch
          %1355 = sbr.rel (%p1353) target = $region212
        $region211: #{transformer_forward.1} parent=203 // pred_region
          %1357 = dma.done [#allocation5], 1024
        $region212: #{transformer_forward.1} parent=203 // pred_fallthru
          _
        // Predicated region
        $region213: #{transformer_forward.1} parent=203 // pred_check
          %p1358 = pneg %p806
        $region214: #{transformer_forward.1} parent=203 // pred_check_branch
          %1360 = sbr.rel (%p1358) target = $region216
        $region215: #{transformer_forward.1} parent=203 // pred_region
          %1362 = dma.done [#allocation5], 1024
        $region216: #{transformer_forward.1} parent=203 // pred_fallthru
          _
        // Predicated region
        $region217: #{transformer_forward.1} parent=203 // pred_check
          %p1363 = pneg %p890
        $region218: #{transformer_forward.1} parent=203 // pred_check_branch
          %1365 = sbr.rel (%p1363) target = $region220
        $region219: #{transformer_forward.1} parent=203 // pred_region
          %1367 = dma.done [#allocation8], 1024
        $region220: #{transformer_forward.1} parent=203 // pred_fallthru
          _
        // Predicated region
        $region221: #{transformer_forward.1} parent=203 // pred_check
          %p1368 = pneg %p911
        $region222: #{transformer_forward.1} parent=203 // pred_check_branch
          %1370 = sbr.rel (%p1368) target = $region224
        $region223: #{transformer_forward.1} parent=203 // pred_region
          %1372 = dma.done [#allocation8], 32
        $region224: #{transformer_forward.1} parent=203 // pred_fallthru
          _
        // Predicated region
        $region225: #{transformer_forward.1} parent=203 // pred_check
          %p1373 = pneg %p1016
        $region226: #{transformer_forward.1} parent=203 // pred_check_branch
          %1375 = sbr.rel (%p1373) target = $region228
        $region227: #{transformer_forward.1} parent=203 // pred_region
          %1377 = dma.done [#allocation11], 16
        $region228: #{transformer_forward.1} parent=203 // pred_fallthru
          _
        // Predicated region
        $region229: #{transformer_forward.1} parent=203 // pred_check
          %p1378 = pneg %p1037
        $region230: #{transformer_forward.1} parent=203 // pred_check_branch
          %1380 = sbr.rel (%p1378) target = $region232
        $region231: #{transformer_forward.1} parent=203 // pred_region
          %1382 = dma.done [#allocation11], 16
        $region232: #{transformer_forward.1} parent=203 // pred_fallthru
          _
        %p1383 = scmp.lt.s32.totalorder %s108, 1
        %s1384 = scalar_select %p1383, %s108, 1
        %s1385 = smul.addr %s1384, 8
        %s1386 = scalar_lea.vmem %s1, %s1385
        %p1387 = pneg %p129
        %p1388 = pneg %p126
        %p1389 = scmp.lt.s32.totalorder %s108, 1
        %s1390 = scalar_select %p1389, %s108, 1
        %s1391 = smul.addr %s1390, 8
        %s1392 = scalar_lea.vmem %s3, %s1391
        %p1393 = pneg %p155
        %p1394 = pneg %p152
        %p1395 = pneg %p176
        %p1396 = pneg %p173
        %p1397 = pneg %p197
        %p1398 = pneg %p194
        %p1399 = pneg %p218
        %p1400 = pneg %p215
        %p1401 = pneg %p239
        %p1402 = pneg %p236
        %p1403 = pneg %p260
        %p1404 = pneg %p257
        %p1405 = pneg %p281
        %p1406 = pneg %p278
        %p1407 = pneg %p302
        %p1408 = pneg %p299
        %p1409 = pneg %p323
        %p1410 = pneg %p320
        %p1411 = pneg %p344
        %p1412 = pneg %p341
        %p1413 = pneg %p365
        %p1414 = pneg %p362
        %p1415 = pneg %p386
        %p1416 = pneg %p383
        %p1417 = pneg %p407
        %p1418 = pneg %p404
        %p1419 = pneg %p428
        %p1420 = pneg %p425
        %p1421 = pneg %p449
        %p1422 = pneg %p446
        %p1423 = pneg %p470
        %p1424 = pneg %p467
        %p1425 = pneg %p491
        %p1426 = pneg %p488
        %p1427 = pneg %p512
        %p1428 = pneg %p509
        %p1429 = pneg %p533
        %p1430 = pneg %p530
        %p1431 = pneg %p554
        %p1432 = pneg %p551
        %p1433 = pneg %p575
        %p1434 = pneg %p572
        %p1435 = pneg %p596
        %p1436 = pneg %p593
        %p1437 = pneg %p617
        %p1438 = pneg %p614
        %p1439 = pneg %p638
        %p1440 = pneg %p635
        %p1441 = pneg %p659
        %p1442 = pneg %p656
        %p1443 = pneg %p680
        %p1444 = pneg %p677
        %p1445 = pneg %p701
        %p1446 = pneg %p698
        %p1447 = pneg %p722
        %p1448 = pneg %p719
        %p1449 = pneg %p743
        %p1450 = pneg %p740
        %p1451 = pneg %p764
        %p1452 = pneg %p761
        %p1453 = pneg %p785
        %p1454 = pneg %p782
        %p1455 = pneg %p806
        %p1456 = pneg %p803
        %p1457 = pneg %p827
        %p1458 = pneg %p824
        %p1459 = pneg %p848
        %p1460 = pneg %p845
        %p1461 = pneg %p869
        %p1462 = pneg %p866
        %p1463 = pneg %p890
        %p1464 = pneg %p887
        %p1465 = pneg %p911
        %p1466 = pneg %p908
        %p1467 = pneg %p932
        %p1468 = pneg %p929
        %p1469 = pneg %p953
        %p1470 = pneg %p950
        %p1471 = pneg %p974
        %p1472 = pneg %p971
        %p1473 = pneg %p995
        %p1474 = pneg %p992
        %p1475 = pneg %p1016
        %p1476 = pneg %p1013
        %p1477 = pneg %p1037
        %p1478 = pneg %p1034
        %p1479 = pneg %p1058
        %p1480 = pneg %p1055
        %p1481 = pneg %p1079
        %p1482 = pneg %p1076
        %p1483 = pneg %p1105
        %p1484 = pneg %p1102
        %p1485 = scmp.lt.s32.totalorder %s108, 1
        %s1486 = scalar_select %p1485, %s108, 1
        %s1487 = smul.addr %s1486, 8
        %s1488 = scalar_lea.vmem %s93, %s1487
        %p1489 = scmp.lt.s32.totalorder %s108, 1
        %s1490 = scalar_select %p1489, %s108, 1
        %s1491 = smul.addr %s1490, 8
        %s1492 = scalar_lea.vmem %s1, %s1491
        %p1493 = scmp.lt.s32.totalorder %s108, 1
        %s1494 = scalar_select %p1493, %s108, 1
        %s1495 = smul.addr %s1494, 8
        %s1496 = scalar_lea.vmem %s3, %s1495
        %p1497 = scmp.lt.s32.totalorder %s108, 1
        %s1498 = scalar_select %p1497, %s108, 1
        %s1499 = smul.addr %s1498, 8
        %s1500 = scalar_lea.vmem %s93, %s1499
        %v1502 = vld [vmem:[%s1492] sm:$0xff]
        %v1503 = vld [vmem:[%s5] sm:$0xf]
        %v1504 = vld [vmem:[%s7] sm:$0x1]
        %v1505 = vpack.c.bf16 %v1502, %v1502
        %v1506 = vpack.c.bf16 %v1503, %v1503
        %v1508 = vperm.slane %v1504, 0
        %vm1510 = vcmask 31744
        %v1512 = vsel %vm1510, %v1505, 0
        %vm1514 = vcmask 1041408
        %v1516 = vsel %vm1514, %v1506, 0
        %1518 = vmatpush.bf16.msra.mxu0 0
        %1519 = vmatpush.bf16.msra.mxu0 0
        %1520 = vmatpush.bf16.msra.mxu0 0
        %1521 = vmatpush.bf16.msra.mxu0 0
        %1522 = vmatpush.bf16.msra.mxu0 0
        %1523 = vmatpush.bf16.msra.mxu0 0
        %1524 = vmatpush.bf16.msra.mxu0 0
        %1525 = vmatpush.bf16.msra.mxu0 %v1516
        %1526 = vmatmul.bf16.gmra.mxu0 %v1512
        %v1527 = vpop.f32.mrf.mxu0
        %v1528 = vadd.f32 %v1508, %v1527
        %v1529 = vpop.f32.mrf.mxu0
        %1530 = vdwg.mxu0
        %v1531 = vmul.f32 %v1528, 5.656854
        %v1532 = vld [vmem:[%s9] sm:$0xff]
        %v1533 = vadd.f32 %v1531, %v1532
        %v1534 = vld [vmem:[%s17] sm:$0xff]
        %v1535 = vld [vmem:[%s17 + $0x8] sm:$0xff]
        %v1536 = vld [vmem:[%s17 + $0x10] sm:$0xff]
        %v1537 = vld [vmem:[%s17 + $0x18] sm:$0xff]
        %v1538 = vld [vmem:[%s19] sm:$0x1]
        %v1539 = vld [vmem:[%s21] sm:$0xff]
        %v1540 = vld [vmem:[%s21 + $0x8] sm:$0xff]
        %v1541 = vld [vmem:[%s21 + $0x10] sm:$0xff]
        %v1542 = vld [vmem:[%s21 + $0x18] sm:$0xff]
        %v1543 = vld [vmem:[%s23] sm:$0x1]
        %v1544 = vld [vmem:[%s25] sm:$0x1]
        %v1545 = vld [vmem:[%s27] sm:$0x1]
        %v1546 = vld [vmem:[%s29] sm:$0xff]
        %v1547 = vld [vmem:[%s29 + $0x8] sm:$0xff]
        %v1548 = vld [vmem:[%s29 + $0x10] sm:$0xff]
        %v1549 = vld [vmem:[%s29 + $0x18] sm:$0xff]
        %v1550 = vld [vmem:[%s31] sm:$0x1]
        %v1551 = vld [vmem:[%s33] sm:$0xff]
        %v1552 = vld [vmem:[%s33 + $0x8] sm:$0xff]
        %v1553 = vld [vmem:[%s33 + $0x10] sm:$0xff]
        %v1554 = vld [vmem:[%s33 + $0x18] sm:$0xff]
        %v1555 = vld [vmem:[%s33 + $0x20] sm:$0xff]
        %v1556 = vld [vmem:[%s33 + $0x28] sm:$0xff]
        %v1557 = vld [vmem:[%s33 + $0x30] sm:$0xff]
        %v1558 = vld [vmem:[%s33 + $0x38] sm:$0xff]
        %v1559 = vld [vmem:[%s35] sm:$0x1]
        %v1560 = vld [vmem:[%s37] sm:$0x1]
        %v1561 = vld [vmem:[%s39] sm:$0x1]
        %v1562 = vpack.c.bf16 %v1533, %v1533
        %v1563 = vpack.c.bf16 %v1535, %v1534
        %v1564 = vpack.c.bf16 %v1537, %v1536
        %v1566 = vperm.slane %v1538, 0
        %vm1568 = vcmask 261120
        %v1570 = vsel %vm1568, %v1562, 0
        %1572 = vmatpush.bf16.msra.mxu0 0
        %1573 = vmatpush.bf16.msra.mxu0 0
        %1574 = vmatpush.bf16.msra.mxu0 0
        %1575 = vmatpush.bf16.msra.mxu0 0
        %1576 = vmatpush.bf16.msra.mxu0 0
        %1577 = vmatpush.bf16.msra.mxu0 0
        %1578 = vmatpush.bf16.msra.mxu0 %v1564
        %1579 = vmatpush.bf16.msra.mxu0 %v1563
        %1580 = vmatmul.bf16.gmra.mxu0 %v1570
        %v1581 = vpop.f32.mrf.mxu0
        %v1582 = vadd.f32 %v1566, %v1581
        %v1583 = vpop.f32.mrf.mxu0
        %1584 = vdwg.mxu0
        %v1585 = vpack.c.bf16 %v1582, %v1582
        %1587 = vrot.lane.b32.xlu0 %v1585, 96
        %v1588 = vpop.permute.xlu0 %1587
        %vm1589 = vcmask 64512
        %v1591 = vsel %vm1589, %v1585, 0
        %v1594 = vsel %vm1589, %v1588, 0
        %1596 = vmatpush.bf16.xpose.msra.mxu0 0
        %1597 = vmatpush.bf16.xpose.msra.mxu0 0
        %1598 = vmatpush.bf16.xpose.msra.mxu0 0
        %1599 = vmatpush.bf16.xpose.msra.mxu0 0
        %1600 = vmatpush.bf16.xpose.msra.mxu0 0
        %1601 = vmatpush.bf16.xpose.msra.mxu0 0
        %1602 = vmatpush.bf16.xpose.msra.mxu0 0
        %1603 = vmatpush.bf16.xpose.msra.mxu0 %v1594
        %1604 = vmatmul.bf16.gmra.mxu0 %v1591
        %v1605 = vpop.f32.mrf.mxu0
        %v1606 = vadd.f32 0.0, %v1605
        %v1607 = vpop.f32.mrf.mxu0
        %1608 = vdwg.mxu0
        %v1609 = vmul.f32 %v1606, 0.35355338
        %v1610 = vsel %vm1589, %v1609, -inf
        %1611 = vmax.xlane.f32.xlu0 %v1610
        %v1612 = vpop.xlane.xlu0 %1611
        %v1613 = vsub.f32 %v1609, %v1612
        %v1614 = vmul.f32 %v1613, 1.442695
        %v1615 = vpow.pop %v1614
        %v1616 = vsel %vm1589, %v1615, 0.0
        %1617 = vadd.xlane.f32.xlu0 %v1616
        %v1618 = vpop.xlane.xlu0 %1617
        %v1619 = vrcp.pop %v1618
        %v1620 = vmul.f32 %v1615, %v1619
        %v1621 = vpack.c.bf16 %v1620, %v1620
        %1622 = vrot.lane.b32.xlu0 %v1585, 64
        %v1623 = vpop.permute.xlu0 %1622
        %v1625 = vsel %vm1589, %v1621, 0
        %vm1627 = vcmask 1043456
        %v1629 = vsel %vm1627, %v1623, 0
        %1631 = vmatpush.bf16.msra.mxu0 0
        %1632 = vmatpush.bf16.msra.mxu0 0
        %1633 = vmatpush.bf16.msra.mxu0 0
        %1634 = vmatpush.bf16.msra.mxu0 0
        %1635 = vmatpush.bf16.msra.mxu0 0
        %1636 = vmatpush.bf16.msra.mxu0 0
        %1637 = vmatpush.bf16.msra.mxu0 0
        %1638 = vmatpush.bf16.msra.mxu0 %v1629
        %1639 = vmatmul.bf16.gmra.mxu0 %v1625
        %v1640 = vpop.f32.mrf.mxu0
        %v1641 = vadd.f32 0.0, %v1640
        %v1642 = vpop.f32.mrf.mxu0
        %1643 = vdwg.mxu0
        %v1644 = vpack.c.bf16 %v1641, %v1641
        %v1645 = vpack.c.bf16 %v1539, %v1539
        %1646 = vrot.lane.b32.xlu0 %v1585, 120
        %v1647 = vpop.permute.xlu0 %1646
        %1648 = vrot.lane.b32.xlu0 %v1585, 88
        %v1649 = vpop.permute.xlu0 %1648
        %v1651 = vsel %vm1589, %v1647, 0
        %v1654 = vsel %vm1589, %v1649, 0
        %1656 = vmatpush.bf16.xpose.msra.mxu0 0
        %1657 = vmatpush.bf16.xpose.msra.mxu0 0
        %1658 = vmatpush.bf16.xpose.msra.mxu0 0
        %1659 = vmatpush.bf16.xpose.msra.mxu0 0
        %1660 = vmatpush.bf16.xpose.msra.mxu0 0
        %1661 = vmatpush.bf16.xpose.msra.mxu0 0
        %1662 = vmatpush.bf16.xpose.msra.mxu0 0
        %1663 = vmatpush.bf16.xpose.msra.mxu0 %v1654
        %1664 = vmatmul.bf16.gmra.mxu0 %v1651
        %v1665 = vpop.f32.mrf.mxu0
        %v1666 = vadd.f32 0.0, %v1665
        %v1667 = vpop.f32.mrf.mxu0
        %1668 = vdwg.mxu0
        %v1669 = vmul.f32 %v1666, 0.35355338
        %v1670 = vsel %vm1589, %v1669, -inf
        %1671 = vmax.xlane.f32.xlu0 %v1670
        %v1672 = vpop.xlane.xlu0 %1671
        %v1673 = vsub.f32 %v1669, %v1672
        %v1674 = vmul.f32 %v1673, 1.442695
        %v1675 = vpow.pop %v1674
        %v1676 = vsel %vm1589, %v1675, 0.0
        %1677 = vadd.xlane.f32.xlu0 %v1676
        %v1678 = vpop.xlane.xlu0 %1677
        %v1679 = vrcp.pop %v1678
        %v1680 = vmul.f32 %v1675, %v1679
        %v1681 = vpack.c.bf16 %v1680, %v1680
        %1682 = vrot.lane.b32.xlu0 %v1585, 56
        %v1683 = vpop.permute.xlu0 %1682
        %v1685 = vsel %vm1589, %v1681, 0
        %v1688 = vsel %vm1627, %v1683, 0
        %1690 = vmatpush.bf16.msra.mxu0 0
        %1691 = vmatpush.bf16.msra.mxu0 0
        %1692 = vmatpush.bf16.msra.mxu0 0
        %1693 = vmatpush.bf16.msra.mxu0 0
        %1694 = vmatpush.bf16.msra.mxu0 0
        %1695 = vmatpush.bf16.msra.mxu0 0
        %1696 = vmatpush.bf16.msra.mxu0 0
        %1697 = vmatpush.bf16.msra.mxu0 %v1688
        %1698 = vmatmul.bf16.gmra.mxu0 %v1685
        %v1699 = vpop.f32.mrf.mxu0
        %v1700 = vadd.f32 0.0, %v1699
        %v1701 = vpop.f32.mrf.mxu0
        %1702 = vdwg.mxu0
        %v1703 = vpack.c.bf16 %v1700, %v1700
        %v1704 = vpack.c.bf16 %v1540, %v1540
        %v1706 = vsel %vm1589, %v1703, 0
        %v1709 = vsel %vm1627, %v1704, 0
        %1711 = vmatpush.bf16.msra.mxu0 0
        %1712 = vmatpush.bf16.msra.mxu0 0
        %1713 = vmatpush.bf16.msra.mxu0 0
        %1714 = vmatpush.bf16.msra.mxu0 0
        %1715 = vmatpush.bf16.msra.mxu0 0
        %1716 = vmatpush.bf16.msra.mxu0 0
        %1717 = vmatpush.bf16.msra.mxu0 0
        %1718 = vmatpush.bf16.msra.mxu0 %v1709
        %1719 = vmatmul.bf16.gmra.mxu0 %v1706
        %v1720 = vpop.f32.mrf.mxu0
        %v1721 = vadd.f32 0.0, %v1720
        %v1722 = vpop.f32.mrf.mxu0
        %1723 = vdwg.mxu0
        %v1725 = vsel %vm1589, %v1644, 0
        %v1728 = vsel %vm1627, %v1645, 0
        %1730 = vmatpush.bf16.msra.mxu0 0
        %1731 = vmatpush.bf16.msra.mxu0 0
        %1732 = vmatpush.bf16.msra.mxu0 0
        %1733 = vmatpush.bf16.msra.mxu0 0
        %1734 = vmatpush.bf16.msra.mxu0 0
        %1735 = vmatpush.bf16.msra.mxu0 0
        %1736 = vmatpush.bf16.msra.mxu0 0
        %1737 = vmatpush.bf16.msra.mxu0 %v1728
        %1738 = vmatmul.bf16.gmra.mxu0 %v1725
        %v1739 = vpop.f32.mrf.mxu0
        %v1740 = vadd.f32 %v1721, %v1739
        %v1741 = vpop.f32.mrf.mxu0
        %1742 = vdwg.mxu0
        %1743 = vrot.lane.b32.xlu0 %v1585, 112
        %v1744 = vpop.permute.xlu0 %1743
        %1745 = vrot.lane.b32.xlu0 %v1585, 80
        %v1746 = vpop.permute.xlu0 %1745
        %v1748 = vsel %vm1589, %v1744, 0
        %v1751 = vsel %vm1589, %v1746, 0
        %1753 = vmatpush.bf16.xpose.msra.mxu0 0
        %1754 = vmatpush.bf16.xpose.msra.mxu0 0
        %1755 = vmatpush.bf16.xpose.msra.mxu0 0
        %1756 = vmatpush.bf16.xpose.msra.mxu0 0
        %1757 = vmatpush.bf16.xpose.msra.mxu0 0
        %1758 = vmatpush.bf16.xpose.msra.mxu0 0
        %1759 = vmatpush.bf16.xpose.msra.mxu0 0
        %1760 = vmatpush.bf16.xpose.msra.mxu0 %v1751
        %1761 = vmatmul.bf16.gmra.mxu0 %v1748
        %v1762 = vpop.f32.mrf.mxu0
        %v1763 = vadd.f32 0.0, %v1762
        %v1764 = vpop.f32.mrf.mxu0
        %1765 = vdwg.mxu0
        %v1766 = vmul.f32 %v1763, 0.35355338
        %v1767 = vsel %vm1589, %v1766, -inf
        %1768 = vmax.xlane.f32.xlu0 %v1767
        %v1769 = vpop.xlane.xlu0 %1768
        %v1770 = vsub.f32 %v1766, %v1769
        %v1771 = vmul.f32 %v1770, 1.442695
        %v1772 = vpow.pop %v1771
        %v1773 = vsel %vm1589, %v1772, 0.0
        %1774 = vadd.xlane.f32.xlu0 %v1773
        %v1775 = vpop.xlane.xlu0 %1774
        %v1776 = vrcp.pop %v1775
        %v1777 = vmul.f32 %v1772, %v1776
        %v1778 = vpack.c.bf16 %v1777, %v1777
        %1779 = vrot.lane.b32.xlu0 %v1585, 48
        %v1780 = vpop.permute.xlu0 %1779
        %v1782 = vsel %vm1589, %v1778, 0
        %v1785 = vsel %vm1627, %v1780, 0
        %1787 = vmatpush.bf16.msra.mxu0 0
        %1788 = vmatpush.bf16.msra.mxu0 0
        %1789 = vmatpush.bf16.msra.mxu0 0
        %1790 = vmatpush.bf16.msra.mxu0 0
        %1791 = vmatpush.bf16.msra.mxu0 0
        %1792 = vmatpush.bf16.msra.mxu0 0
        %1793 = vmatpush.bf16.msra.mxu0 0
        %1794 = vmatpush.bf16.msra.mxu0 %v1785
        %1795 = vmatmul.bf16.gmra.mxu0 %v1782
        %v1796 = vpop.f32.mrf.mxu0
        %v1797 = vadd.f32 0.0, %v1796
        %v1798 = vpop.f32.mrf.mxu0
        %1799 = vdwg.mxu0
        %v1800 = vpack.c.bf16 %v1797, %v1797
        %v1801 = vpack.c.bf16 %v1541, %v1541
        %v1803 = vsel %vm1589, %v1800, 0
        %v1806 = vsel %vm1627, %v1801, 0
        %1808 = vmatpush.bf16.msra.mxu0 0
        %1809 = vmatpush.bf16.msra.mxu0 0
        %1810 = vmatpush.bf16.msra.mxu0 0
        %1811 = vmatpush.bf16.msra.mxu0 0
        %1812 = vmatpush.bf16.msra.mxu0 0
        %1813 = vmatpush.bf16.msra.mxu0 0
        %1814 = vmatpush.bf16.msra.mxu0 0
        %1815 = vmatpush.bf16.msra.mxu0 %v1806
        %1816 = vmatmul.bf16.gmra.mxu0 %v1803
        %v1817 = vpop.f32.mrf.mxu0
        %v1818 = vadd.f32 0.0, %v1817
        %v1819 = vpop.f32.mrf.mxu0
        %1820 = vdwg.mxu0
        %v1821 = vadd.f32 %v1740, %v1818
        %1822 = vrot.lane.b32.xlu0 %v1585, 104
        %v1823 = vpop.permute.xlu0 %1822
        %1824 = vrot.lane.b32.xlu0 %v1585, 72
        %v1825 = vpop.permute.xlu0 %1824
        %v1827 = vsel %vm1589, %v1823, 0
        %v1830 = vsel %vm1589, %v1825, 0
        %1832 = vmatpush.bf16.xpose.msra.mxu0 0
        %1833 = vmatpush.bf16.xpose.msra.mxu0 0
        %1834 = vmatpush.bf16.xpose.msra.mxu0 0
        %1835 = vmatpush.bf16.xpose.msra.mxu0 0
        %1836 = vmatpush.bf16.xpose.msra.mxu0 0
        %1837 = vmatpush.bf16.xpose.msra.mxu0 0
        %1838 = vmatpush.bf16.xpose.msra.mxu0 0
        %1839 = vmatpush.bf16.xpose.msra.mxu0 %v1830
        %1840 = vmatmul.bf16.gmra.mxu0 %v1827
        %v1841 = vpop.f32.mrf.mxu0
        %v1842 = vadd.f32 0.0, %v1841
        %v1843 = vpop.f32.mrf.mxu0
        %1844 = vdwg.mxu0
        %v1845 = vmul.f32 %v1842, 0.35355338
        %v1846 = vsel %vm1589, %v1845, -inf
        %1847 = vmax.xlane.f32.xlu0 %v1846
        %v1848 = vpop.xlane.xlu0 %1847
        %v1849 = vsub.f32 %v1845, %v1848
        %v1850 = vmul.f32 %v1849, 1.442695
        %v1851 = vpow.pop %v1850
        %v1852 = vsel %vm1589, %v1851, 0.0
        %1853 = vadd.xlane.f32.xlu0 %v1852
        %v1854 = vpop.xlane.xlu0 %1853
        %v1855 = vrcp.pop %v1854
        %v1856 = vmul.f32 %v1851, %v1855
        %v1857 = vpack.c.bf16 %v1856, %v1856
        %1858 = vrot.lane.b32.xlu0 %v1585, 40
        %v1859 = vpop.permute.xlu0 %1858
        %v1861 = vsel %vm1589, %v1857, 0
        %v1864 = vsel %vm1627, %v1859, 0
        %1866 = vmatpush.bf16.msra.mxu0 0
        %1867 = vmatpush.bf16.msra.mxu0 0
        %1868 = vmatpush.bf16.msra.mxu0 0
        %1869 = vmatpush.bf16.msra.mxu0 0
        %1870 = vmatpush.bf16.msra.mxu0 0
        %1871 = vmatpush.bf16.msra.mxu0 0
        %1872 = vmatpush.bf16.msra.mxu0 0
        %1873 = vmatpush.bf16.msra.mxu0 %v1864
        %1874 = vmatmul.bf16.gmra.mxu0 %v1861
        %v1875 = vpop.f32.mrf.mxu0
        %v1876 = vadd.f32 0.0, %v1875
        %v1877 = vpop.f32.mrf.mxu0
        %1878 = vdwg.mxu0
        %v1879 = vpack.c.bf16 %v1876, %v1876
        %v1880 = vpack.c.bf16 %v1542, %v1542
        %v1882 = vsel %vm1589, %v1879, 0
        %v1885 = vsel %vm1627, %v1880, 0
        %1887 = vmatpush.bf16.msra.mxu0 0
        %1888 = vmatpush.bf16.msra.mxu0 0
        %1889 = vmatpush.bf16.msra.mxu0 0
        %1890 = vmatpush.bf16.msra.mxu0 0
        %1891 = vmatpush.bf16.msra.mxu0 0
        %1892 = vmatpush.bf16.msra.mxu0 0
        %1893 = vmatpush.bf16.msra.mxu0 0
        %1894 = vmatpush.bf16.msra.mxu0 %v1885
        %1895 = vmatmul.bf16.gmra.mxu0 %v1882
        %v1896 = vpop.f32.mrf.mxu0
        %v1897 = vadd.f32 0.0, %v1896
        %v1898 = vpop.f32.mrf.mxu0
        %1899 = vdwg.mxu0
        %v1900 = vadd.f32 %v1821, %v1897
        %v1902 = vperm.slane %v1543, 0
        %v1904 = vadd.f32 %v1900, %v1902
        %v1905 = vadd.f32 %v1533, %v1904
        %v1906 = vsel %vm1568, %v1905, 0.0
        %1907 = vadd.xlane.f32.xlu0 %v1906
        %v1908 = vpop.xlane.xlu0 %1907
        %v1909 = vrcp.pop 32.0
        %v1910 = vmul.f32 32.0, %v1909
        %v1911 = vsub.f32 1.0, %v1910
        %v1912 = vmul.f32 %v1909, %v1911
        %v1913 = vadd.f32 %v1909, %v1912
        %vm1914 = vweird.f32 %v1909
        %v1915 = vsel %vm1914, %v1909, %v1913
        %v1916 = vmul.f32 %v1908, %v1915
        %v1917 = vsub.f32 %v1905, %v1916
        %v1918 = vmul.f32 %v1917, %v1917
        %v1919 = vsel %vm1568, %v1918, 0.0
        %1920 = vadd.xlane.f32.xlu0 %v1919
        %v1921 = vpop.xlane.xlu0 %1920
        %v1922 = vmul.f32 %v1921, %v1915
        %v1923 = vadd.f32 %v1922, 1e-05
        %v1924 = vrsqrt.pop %v1923
        %v1925 = vmul.f32 %v1924, %v1923
        %v1926 = vmul.f32 %v1925, %v1924
        %v1927 = vmul.f32 0.5, %v1926
        %v1928 = vsub.f32 1.5, %v1927
        %v1929 = vmul.f32 %v1924, %v1928
        %vm1930 = vweird.f32 %v1923
        %vm1931 = vweird.f32 %v1924
        %vm1932 = vmor %vm1930, %vm1931
        %v1933 = vsel %vm1932, %v1924, %v1929
        %v1934 = vmul.f32 %v1917, %v1933
        %v1936 = vperm.slane %v1544, 0
        %v1938 = vmul.f32 %v1934, %v1936
        %v1940 = vperm.slane %v1545, 0
        %v1942 = vadd.f32 %v1938, %v1940
        %v1943 = vpack.c.bf16 %v1942, %v1942
        %v1944 = vpack.c.bf16 %v1547, %v1546
        %v1945 = vpack.c.bf16 %v1549, %v1548
        %v1947 = vperm.slane %v1550, 0
        %v1950 = vsel %vm1568, %v1943, 0
        %1952 = vmatpush.bf16.msra.mxu0 0
        %1953 = vmatpush.bf16.msra.mxu0 0
        %1954 = vmatpush.bf16.msra.mxu0 0
        %1955 = vmatpush.bf16.msra.mxu0 0
        %1956 = vmatpush.bf16.msra.mxu0 0
        %1957 = vmatpush.bf16.msra.mxu0 0
        %1958 = vmatpush.bf16.msra.mxu0 %v1945
        %1959 = vmatpush.bf16.msra.mxu0 %v1944
        %1960 = vmatmul.bf16.gmra.mxu0 %v1950
        %v1961 = vpop.f32.mrf.mxu0
        %v1962 = vadd.f32 %v1947, %v1961
        %v1963 = vpop.f32.mrf.mxu0
        %1964 = vdwg.mxu0
        %v1965 = vmax.f32 %v1962, 0.0
        %v1966 = vpack.c.bf16 %v1965, %v1965
        %v1967 = vpack.c.bf16 %v1552, %v1551
        %v1968 = vpack.c.bf16 %v1554, %v1553
        %v1969 = vpack.c.bf16 %v1556, %v1555
        %v1970 = vpack.c.bf16 %v1558, %v1557
        %v1972 = vperm.slane %v1559, 0
        %vm1974 = vcmask 523264
        %v1976 = vsel %vm1974, %v1966, 0
        %1978 = vmatpush.bf16.msra.mxu0 0
        %1979 = vmatpush.bf16.msra.mxu0 0
        %1980 = vmatpush.bf16.msra.mxu0 0
        %1981 = vmatpush.bf16.msra.mxu0 0
        %1982 = vmatpush.bf16.msra.mxu0 %v1970
        %1983 = vmatpush.bf16.msra.mxu0 %v1969
        %1984 = vmatpush.bf16.msra.mxu0 %v1968
        %1985 = vmatpush.bf16.msra.mxu0 %v1967
        %1986 = vmatmul.bf16.gmra.mxu0 %v1976
        %v1987 = vpop.f32.mrf.mxu0
        %v1988 = vadd.f32 %v1972, %v1987
        %v1989 = vpop.f32.mrf.mxu0
        %1990 = vdwg.mxu0
        %v1991 = vadd.f32 %v1942, %v1988
        %v1992 = vsel %vm1568, %v1991, 0.0
        %1993 = vadd.xlane.f32.xlu0 %v1992
        %v1994 = vpop.xlane.xlu0 %1993
        %v1995 = vmul.f32 %v1994, %v1915
        %v1996 = vsub.f32 %v1991, %v1995
        %v1997 = vmul.f32 %v1996, %v1996
        %v1998 = vsel %vm1568, %v1997, 0.0
        %1999 = vadd.xlane.f32.xlu0 %v1998
        %v2000 = vpop.xlane.xlu0 %1999
        %v2001 = vmul.f32 %v2000, %v1915
        %v2002 = vadd.f32 %v2001, 1e-05
        %v2003 = vrsqrt.pop %v2002
        %v2004 = vmul.f32 %v2003, %v2002
        %v2005 = vmul.f32 %v2004, %v2003
        %v2006 = vmul.f32 0.5, %v2005
        %v2007 = vsub.f32 1.5, %v2006
        %v2008 = vmul.f32 %v2003, %v2007
        %vm2009 = vweird.f32 %v2002
        %vm2010 = vweird.f32 %v2003
        %vm2011 = vmor %vm2009, %vm2010
        %v2012 = vsel %vm2011, %v2003, %v2008
        %v2013 = vmul.f32 %v1996, %v2012
        %v2015 = vperm.slane %v1560, 0
        %v2017 = vmul.f32 %v2013, %v2015
        %v2019 = vperm.slane %v1561, 0
        %v2021 = vadd.f32 %v2017, %v2019
        %s2022 = scalar_lea.vmem %s17, 32
        %v2023 = vld [vmem:[%s2022] sm:$0xff]
        %v2024 = vld [vmem:[%s2022 + $0x8] sm:$0xff]
        %v2025 = vld [vmem:[%s2022 + $0x10] sm:$0xff]
        %v2026 = vld [vmem:[%s2022 + $0x18] sm:$0xff]
        %s2027 = scalar_lea.vmem %s19, 1
        %v2028 = vld [vmem:[%s2027] sm:$0x1]
        %s2029 = scalar_lea.vmem %s21, 32
        %v2030 = vld [vmem:[%s2029] sm:$0xff]
        %v2031 = vld [vmem:[%s2029 + $0x8] sm:$0xff]
        %v2032 = vld [vmem:[%s2029 + $0x10] sm:$0xff]
        %v2033 = vld [vmem:[%s2029 + $0x18] sm:$0xff]
        %s2034 = scalar_lea.vmem %s23, 1
        %v2035 = vld [vmem:[%s2034] sm:$0x1]
        %s2036 = scalar_lea.vmem %s25, 1
        %v2037 = vld [vmem:[%s2036] sm:$0x1]
        %s2038 = scalar_lea.vmem %s27, 1
        %v2039 = vld [vmem:[%s2038] sm:$0x1]
        %s2040 = scalar_lea.vmem %s29, 32
        %v2041 = vld [vmem:[%s2040] sm:$0xff]
        %v2042 = vld [vmem:[%s2040 + $0x8] sm:$0xff]
        %v2043 = vld [vmem:[%s2040 + $0x10] sm:$0xff]
        %v2044 = vld [vmem:[%s2040 + $0x18] sm:$0xff]
        %s2045 = scalar_lea.vmem %s31, 1
        %v2046 = vld [vmem:[%s2045] sm:$0x1]
        %s2047 = scalar_lea.vmem %s33, 64
        %v2048 = vld [vmem:[%s2047] sm:$0xff]
        %v2049 = vld [vmem:[%s2047 + $0x8] sm:$0xff]
        %v2050 = vld [vmem:[%s2047 + $0x10] sm:$0xff]
        %v2051 = vld [vmem:[%s2047 + $0x18] sm:$0xff]
        %v2052 = vld [vmem:[%s2047 + $0x20] sm:$0xff]
        %v2053 = vld [vmem:[%s2047 + $0x28] sm:$0xff]
        %v2054 = vld [vmem:[%s2047 + $0x30] sm:$0xff]
        %v2055 = vld [vmem:[%s2047 + $0x38] sm:$0xff]
        %s2056 = scalar_lea.vmem %s35, 1
        %v2057 = vld [vmem:[%s2056] sm:$0x1]
        %s2058 = scalar_lea.vmem %s37, 1
        %v2059 = vld [vmem:[%s2058] sm:$0x1]
        %s2060 = scalar_lea.vmem %s39, 1
        %v2061 = vld [vmem:[%s2060] sm:$0x1]
        %v2062 = vpack.c.bf16 %v2021, %v2021
        %v2063 = vpack.c.bf16 %v2024, %v2023
        %v2064 = vpack.c.bf16 %v2026, %v2025
        %v2066 = vperm.slane %v2028, 0
        %v2069 = vsel %vm1568, %v2062, 0
        %2071 = vmatpush.bf16.msra.mxu0 0
        %2072 = vmatpush.bf16.msra.mxu0 0
        %2073 = vmatpush.bf16.msra.mxu0 0
        %2074 = vmatpush.bf16.msra.mxu0 0
        %2075 = vmatpush.bf16.msra.mxu0 0
        %2076 = vmatpush.bf16.msra.mxu0 0
        %2077 = vmatpush.bf16.msra.mxu0 %v2064
        %2078 = vmatpush.bf16.msra.mxu0 %v2063
        %2079 = vmatmul.bf16.gmra.mxu0 %v2069
        %v2080 = vpop.f32.mrf.mxu0
        %v2081 = vadd.f32 %v2066, %v2080
        %v2082 = vpop.f32.mrf.mxu0
        %2083 = vdwg.mxu0
        %v2084 = vpack.c.bf16 %v2081, %v2081
        %2086 = vrot.lane.b32.xlu0 %v2084, 96
        %v2087 = vpop.permute.xlu0 %2086
        %v2089 = vsel %vm1589, %v2084, 0
        %v2092 = vsel %vm1589, %v2087, 0
        %2094 = vmatpush.bf16.xpose.msra.mxu0 0
        %2095 = vmatpush.bf16.xpose.msra.mxu0 0
        %2096 = vmatpush.bf16.xpose.msra.mxu0 0
        %2097 = vmatpush.bf16.xpose.msra.mxu0 0
        %2098 = vmatpush.bf16.xpose.msra.mxu0 0
        %2099 = vmatpush.bf16.xpose.msra.mxu0 0
        %2100 = vmatpush.bf16.xpose.msra.mxu0 0
        %2101 = vmatpush.bf16.xpose.msra.mxu0 %v2092
        %2102 = vmatmul.bf16.gmra.mxu0 %v2089
        %v2103 = vpop.f32.mrf.mxu0
        %v2104 = vadd.f32 0.0, %v2103
        %v2105 = vpop.f32.mrf.mxu0
        %2106 = vdwg.mxu0
        %v2107 = vmul.f32 %v2104, 0.35355338
        %v2108 = vsel %vm1589, %v2107, -inf
        %2109 = vmax.xlane.f32.xlu0 %v2108
        %v2110 = vpop.xlane.xlu0 %2109
        %v2111 = vsub.f32 %v2107, %v2110
        %v2112 = vmul.f32 %v2111, 1.442695
        %v2113 = vpow.pop %v2112
        %v2114 = vsel %vm1589, %v2113, 0.0
        %2115 = vadd.xlane.f32.xlu0 %v2114
        %v2116 = vpop.xlane.xlu0 %2115
        %v2117 = vrcp.pop %v2116
        %v2118 = vmul.f32 %v2113, %v2117
        %v2119 = vpack.c.bf16 %v2118, %v2118
        %2120 = vrot.lane.b32.xlu0 %v2084, 64
        %v2121 = vpop.permute.xlu0 %2120
        %v2123 = vsel %vm1589, %v2119, 0
        %v2126 = vsel %vm1627, %v2121, 0
        %2128 = vmatpush.bf16.msra.mxu0 0
        %2129 = vmatpush.bf16.msra.mxu0 0
        %2130 = vmatpush.bf16.msra.mxu0 0
        %2131 = vmatpush.bf16.msra.mxu0 0
        %2132 = vmatpush.bf16.msra.mxu0 0
        %2133 = vmatpush.bf16.msra.mxu0 0
        %2134 = vmatpush.bf16.msra.mxu0 0
        %2135 = vmatpush.bf16.msra.mxu0 %v2126
        %2136 = vmatmul.bf16.gmra.mxu0 %v2123
        %v2137 = vpop.f32.mrf.mxu0
        %v2138 = vadd.f32 0.0, %v2137
        %v2139 = vpop.f32.mrf.mxu0
        %2140 = vdwg.mxu0
        %v2141 = vpack.c.bf16 %v2138, %v2138
        %v2142 = vpack.c.bf16 %v2030, %v2030
        %2143 = vrot.lane.b32.xlu0 %v2084, 120
        %v2144 = vpop.permute.xlu0 %2143
        %2145 = vrot.lane.b32.xlu0 %v2084, 88
        %v2146 = vpop.permute.xlu0 %2145
        %v2148 = vsel %vm1589, %v2144, 0
        %v2151 = vsel %vm1589, %v2146, 0
        %2153 = vmatpush.bf16.xpose.msra.mxu0 0
        %2154 = vmatpush.bf16.xpose.msra.mxu0 0
        %2155 = vmatpush.bf16.xpose.msra.mxu0 0
        %2156 = vmatpush.bf16.xpose.msra.mxu0 0
        %2157 = vmatpush.bf16.xpose.msra.mxu0 0
        %2158 = vmatpush.bf16.xpose.msra.mxu0 0
        %2159 = vmatpush.bf16.xpose.msra.mxu0 0
        %2160 = vmatpush.bf16.xpose.msra.mxu0 %v2151
        %2161 = vmatmul.bf16.gmra.mxu0 %v2148
        %v2162 = vpop.f32.mrf.mxu0
        %v2163 = vadd.f32 0.0, %v2162
        %v2164 = vpop.f32.mrf.mxu0
        %2165 = vdwg.mxu0
        %v2166 = vmul.f32 %v2163, 0.35355338
        %v2167 = vsel %vm1589, %v2166, -inf
        %2168 = vmax.xlane.f32.xlu0 %v2167
        %v2169 = vpop.xlane.xlu0 %2168
        %v2170 = vsub.f32 %v2166, %v2169
        %v2171 = vmul.f32 %v2170, 1.442695
        %v2172 = vpow.pop %v2171
        %v2173 = vsel %vm1589, %v2172, 0.0
        %2174 = vadd.xlane.f32.xlu0 %v2173
        %v2175 = vpop.xlane.xlu0 %2174
        %v2176 = vrcp.pop %v2175
        %v2177 = vmul.f32 %v2172, %v2176
        %v2178 = vpack.c.bf16 %v2177, %v2177
        %2179 = vrot.lane.b32.xlu0 %v2084, 56
        %v2180 = vpop.permute.xlu0 %2179
        %v2182 = vsel %vm1589, %v2178, 0
        %v2185 = vsel %vm1627, %v2180, 0
        %2187 = vmatpush.bf16.msra.mxu0 0
        %2188 = vmatpush.bf16.msra.mxu0 0
        %2189 = vmatpush.bf16.msra.mxu0 0
        %2190 = vmatpush.bf16.msra.mxu0 0
        %2191 = vmatpush.bf16.msra.mxu0 0
        %2192 = vmatpush.bf16.msra.mxu0 0
        %2193 = vmatpush.bf16.msra.mxu0 0
        %2194 = vmatpush.bf16.msra.mxu0 %v2185
        %2195 = vmatmul.bf16.gmra.mxu0 %v2182
        %v2196 = vpop.f32.mrf.mxu0
        %v2197 = vadd.f32 0.0, %v2196
        %v2198 = vpop.f32.mrf.mxu0
        %2199 = vdwg.mxu0
        %v2200 = vpack.c.bf16 %v2197, %v2197
        %v2201 = vpack.c.bf16 %v2031, %v2031
        %v2203 = vsel %vm1589, %v2200, 0
        %v2206 = vsel %vm1627, %v2201, 0
        %2208 = vmatpush.bf16.msra.mxu0 0
        %2209 = vmatpush.bf16.msra.mxu0 0
        %2210 = vmatpush.bf16.msra.mxu0 0
        %2211 = vmatpush.bf16.msra.mxu0 0
        %2212 = vmatpush.bf16.msra.mxu0 0
        %2213 = vmatpush.bf16.msra.mxu0 0
        %2214 = vmatpush.bf16.msra.mxu0 0
        %2215 = vmatpush.bf16.msra.mxu0 %v2206
        %2216 = vmatmul.bf16.gmra.mxu0 %v2203
        %v2217 = vpop.f32.mrf.mxu0
        %v2218 = vadd.f32 0.0, %v2217
        %v2219 = vpop.f32.mrf.mxu0
        %2220 = vdwg.mxu0
        %v2222 = vsel %vm1589, %v2141, 0
        %v2225 = vsel %vm1627, %v2142, 0
        %2227 = vmatpush.bf16.msra.mxu0 0
        %2228 = vmatpush.bf16.msra.mxu0 0
        %2229 = vmatpush.bf16.msra.mxu0 0
        %2230 = vmatpush.bf16.msra.mxu0 0
        %2231 = vmatpush.bf16.msra.mxu0 0
        %2232 = vmatpush.bf16.msra.mxu0 0
        %2233 = vmatpush.bf16.msra.mxu0 0
        %2234 = vmatpush.bf16.msra.mxu0 %v2225
        %2235 = vmatmul.bf16.gmra.mxu0 %v2222
        %v2236 = vpop.f32.mrf.mxu0
        %v2237 = vadd.f32 %v2218, %v2236
        %v2238 = vpop.f32.mrf.mxu0
        %2239 = vdwg.mxu0
        %2240 = vrot.lane.b32.xlu0 %v2084, 112
        %v2241 = vpop.permute.xlu0 %2240
        %2242 = vrot.lane.b32.xlu0 %v2084, 80
        %v2243 = vpop.permute.xlu0 %2242
        %v2245 = vsel %vm1589, %v2241, 0
        %v2248 = vsel %vm1589, %v2243, 0
        %2250 = vmatpush.bf16.xpose.msra.mxu0 0
        %2251 = vmatpush.bf16.xpose.msra.mxu0 0
        %2252 = vmatpush.bf16.xpose.msra.mxu0 0
        %2253 = vmatpush.bf16.xpose.msra.mxu0 0
        %2254 = vmatpush.bf16.xpose.msra.mxu0 0
        %2255 = vmatpush.bf16.xpose.msra.mxu0 0
        %2256 = vmatpush.bf16.xpose.msra.mxu0 0
        %2257 = vmatpush.bf16.xpose.msra.mxu0 %v2248
        %2258 = vmatmul.bf16.gmra.mxu0 %v2245
        %v2259 = vpop.f32.mrf.mxu0
        %v2260 = vadd.f32 0.0, %v2259
        %v2261 = vpop.f32.mrf.mxu0
        %2262 = vdwg.mxu0
        %v2263 = vmul.f32 %v2260, 0.35355338
        %v2264 = vsel %vm1589, %v2263, -inf
        %2265 = vmax.xlane.f32.xlu0 %v2264
        %v2266 = vpop.xlane.xlu0 %2265
        %v2267 = vsub.f32 %v2263, %v2266
        %v2268 = vmul.f32 %v2267, 1.442695
        %v2269 = vpow.pop %v2268
        %v2270 = vsel %vm1589, %v2269, 0.0
        %2271 = vadd.xlane.f32.xlu0 %v2270
        %v2272 = vpop.xlane.xlu0 %2271
        %v2273 = vrcp.pop %v2272
        %v2274 = vmul.f32 %v2269, %v2273
        %v2275 = vpack.c.bf16 %v2274, %v2274
        %2276 = vrot.lane.b32.xlu0 %v2084, 48
        %v2277 = vpop.permute.xlu0 %2276
        %v2279 = vsel %vm1589, %v2275, 0
        %v2282 = vsel %vm1627, %v2277, 0
        %2284 = vmatpush.bf16.msra.mxu0 0
        %2285 = vmatpush.bf16.msra.mxu0 0
        %2286 = vmatpush.bf16.msra.mxu0 0
        %2287 = vmatpush.bf16.msra.mxu0 0
        %2288 = vmatpush.bf16.msra.mxu0 0
        %2289 = vmatpush.bf16.msra.mxu0 0
        %2290 = vmatpush.bf16.msra.mxu0 0
        %2291 = vmatpush.bf16.msra.mxu0 %v2282
        %2292 = vmatmul.bf16.gmra.mxu0 %v2279
        %v2293 = vpop.f32.mrf.mxu0
        %v2294 = vadd.f32 0.0, %v2293
        %v2295 = vpop.f32.mrf.mxu0
        %2296 = vdwg.mxu0
        %v2297 = vpack.c.bf16 %v2294, %v2294
        %v2298 = vpack.c.bf16 %v2032, %v2032
        %v2300 = vsel %vm1589, %v2297, 0
        %v2303 = vsel %vm1627, %v2298, 0
        %2305 = vmatpush.bf16.msra.mxu0 0
        %2306 = vmatpush.bf16.msra.mxu0 0
        %2307 = vmatpush.bf16.msra.mxu0 0
        %2308 = vmatpush.bf16.msra.mxu0 0
        %2309 = vmatpush.bf16.msra.mxu0 0
        %2310 = vmatpush.bf16.msra.mxu0 0
        %2311 = vmatpush.bf16.msra.mxu0 0
        %2312 = vmatpush.bf16.msra.mxu0 %v2303
        %2313 = vmatmul.bf16.gmra.mxu0 %v2300
        %v2314 = vpop.f32.mrf.mxu0
        %v2315 = vadd.f32 0.0, %v2314
        %v2316 = vpop.f32.mrf.mxu0
        %2317 = vdwg.mxu0
        %v2318 = vadd.f32 %v2237, %v2315
        %2319 = vrot.lane.b32.xlu0 %v2084, 104
        %v2320 = vpop.permute.xlu0 %2319
        %2321 = vrot.lane.b32.xlu0 %v2084, 72
        %v2322 = vpop.permute.xlu0 %2321
        %v2324 = vsel %vm1589, %v2320, 0
        %v2327 = vsel %vm1589, %v2322, 0
        %2329 = vmatpush.bf16.xpose.msra.mxu0 0
        %2330 = vmatpush.bf16.xpose.msra.mxu0 0
        %2331 = vmatpush.bf16.xpose.msra.mxu0 0
        %2332 = vmatpush.bf16.xpose.msra.mxu0 0
        %2333 = vmatpush.bf16.xpose.msra.mxu0 0
        %2334 = vmatpush.bf16.xpose.msra.mxu0 0
        %2335 = vmatpush.bf16.xpose.msra.mxu0 0
        %2336 = vmatpush.bf16.xpose.msra.mxu0 %v2327
        %2337 = vmatmul.bf16.gmra.mxu0 %v2324
        %v2338 = vpop.f32.mrf.mxu0
        %v2339 = vadd.f32 0.0, %v2338
        %v2340 = vpop.f32.mrf.mxu0
        %2341 = vdwg.mxu0
        %v2342 = vmul.f32 %v2339, 0.35355338
        %v2343 = vsel %vm1589, %v2342, -inf
        %2344 = vmax.xlane.f32.xlu0 %v2343
        %v2345 = vpop.xlane.xlu0 %2344
        %v2346 = vsub.f32 %v2342, %v2345
        %v2347 = vmul.f32 %v2346, 1.442695
        %v2348 = vpow.pop %v2347
        %v2349 = vsel %vm1589, %v2348, 0.0
        %2350 = vadd.xlane.f32.xlu0 %v2349
        %v2351 = vpop.xlane.xlu0 %2350
        %v2352 = vrcp.pop %v2351
        %v2353 = vmul.f32 %v2348, %v2352
        %v2354 = vpack.c.bf16 %v2353, %v2353
        %2355 = vrot.lane.b32.xlu0 %v2084, 40
        %v2356 = vpop.permute.xlu0 %2355
        %v2358 = vsel %vm1589, %v2354, 0
        %v2361 = vsel %vm1627, %v2356, 0
        %2363 = vmatpush.bf16.msra.mxu0 0
        %2364 = vmatpush.bf16.msra.mxu0 0
        %2365 = vmatpush.bf16.msra.mxu0 0
        %2366 = vmatpush.bf16.msra.mxu0 0
        %2367 = vmatpush.bf16.msra.mxu0 0
        %2368 = vmatpush.bf16.msra.mxu0 0
        %2369 = vmatpush.bf16.msra.mxu0 0
        %2370 = vmatpush.bf16.msra.mxu0 %v2361
        %2371 = vmatmul.bf16.gmra.mxu0 %v2358
        %v2372 = vpop.f32.mrf.mxu0
        %v2373 = vadd.f32 0.0, %v2372
        %v2374 = vpop.f32.mrf.mxu0
        %2375 = vdwg.mxu0
        %v2376 = vpack.c.bf16 %v2373, %v2373
        %v2377 = vpack.c.bf16 %v2033, %v2033
        %v2379 = vsel %vm1589, %v2376, 0
        %v2382 = vsel %vm1627, %v2377, 0
        %2384 = vmatpush.bf16.msra.mxu0 0
        %2385 = vmatpush.bf16.msra.mxu0 0
        %2386 = vmatpush.bf16.msra.mxu0 0
        %2387 = vmatpush.bf16.msra.mxu0 0
        %2388 = vmatpush.bf16.msra.mxu0 0
        %2389 = vmatpush.bf16.msra.mxu0 0
        %2390 = vmatpush.bf16.msra.mxu0 0
        %2391 = vmatpush.bf16.msra.mxu0 %v2382
        %2392 = vmatmul.bf16.gmra.mxu0 %v2379
        %v2393 = vpop.f32.mrf.mxu0
        %v2394 = vadd.f32 0.0, %v2393
        %v2395 = vpop.f32.mrf.mxu0
        %2396 = vdwg.mxu0
        %v2397 = vadd.f32 %v2318, %v2394
        %v2399 = vperm.slane %v2035, 0
        %v2401 = vadd.f32 %v2397, %v2399
        %v2402 = vadd.f32 %v2021, %v2401
        %v2403 = vsel %vm1568, %v2402, 0.0
        %2404 = vadd.xlane.f32.xlu0 %v2403
        %v2405 = vpop.xlane.xlu0 %2404
        %v2406 = vmul.f32 %v2405, %v1915
        %v2407 = vsub.f32 %v2402, %v2406
        %v2408 = vmul.f32 %v2407, %v2407
        %v2409 = vsel %vm1568, %v2408, 0.0
        %2410 = vadd.xlane.f32.xlu0 %v2409
        %v2411 = vpop.xlane.xlu0 %2410
        %v2412 = vmul.f32 %v2411, %v1915
        %v2413 = vadd.f32 %v2412, 1e-05
        %v2414 = vrsqrt.pop %v2413
        %v2415 = vmul.f32 %v2414, %v2413
        %v2416 = vmul.f32 %v2415, %v2414
        %v2417 = vmul.f32 0.5, %v2416
        %v2418 = vsub.f32 1.5, %v2417
        %v2419 = vmul.f32 %v2414, %v2418
        %vm2420 = vweird.f32 %v2413
        %vm2421 = vweird.f32 %v2414
        %vm2422 = vmor %vm2420, %vm2421
        %v2423 = vsel %vm2422, %v2414, %v2419
        %v2424 = vmul.f32 %v2407, %v2423
        %v2426 = vperm.slane %v2037, 0
        %v2428 = vmul.f32 %v2424, %v2426
        %v2430 = vperm.slane %v2039, 0
        %v2432 = vadd.f32 %v2428, %v2430
        %v2433 = vpack.c.bf16 %v2432, %v2432
        %v2434 = vpack.c.bf16 %v2042, %v2041
        %v2435 = vpack.c.bf16 %v2044, %v2043
        %v2437 = vperm.slane %v2046, 0
        %v2440 = vsel %vm1568, %v2433, 0
        %2442 = vmatpush.bf16.msra.mxu0 0
        %2443 = vmatpush.bf16.msra.mxu0 0
        %2444 = vmatpush.bf16.msra.mxu0 0
        %2445 = vmatpush.bf16.msra.mxu0 0
        %2446 = vmatpush.bf16.msra.mxu0 0
        %2447 = vmatpush.bf16.msra.mxu0 0
        %2448 = vmatpush.bf16.msra.mxu0 %v2435
        %2449 = vmatpush.bf16.msra.mxu0 %v2434
        %2450 = vmatmul.bf16.gmra.mxu0 %v2440
        %v2451 = vpop.f32.mrf.mxu0
        %v2452 = vadd.f32 %v2437, %v2451
        %v2453 = vpop.f32.mrf.mxu0
        %2454 = vdwg.mxu0
        %v2455 = vmax.f32 %v2452, 0.0
        %v2456 = vpack.c.bf16 %v2455, %v2455
        %v2457 = vpack.c.bf16 %v2049, %v2048
        %v2458 = vpack.c.bf16 %v2051, %v2050
        %v2459 = vpack.c.bf16 %v2053, %v2052
        %v2460 = vpack.c.bf16 %v2055, %v2054
        %v2462 = vperm.slane %v2057, 0
        %v2465 = vsel %vm1974, %v2456, 0
        %2467 = vmatpush.bf16.msra.mxu0 0
        %2468 = vmatpush.bf16.msra.mxu0 0
        %2469 = vmatpush.bf16.msra.mxu0 0
        %2470 = vmatpush.bf16.msra.mxu0 0
        %2471 = vmatpush.bf16.msra.mxu0 %v2460
        %2472 = vmatpush.bf16.msra.mxu0 %v2459
        %2473 = vmatpush.bf16.msra.mxu0 %v2458
        %2474 = vmatpush.bf16.msra.mxu0 %v2457
        %2475 = vmatmul.bf16.gmra.mxu0 %v2465
        %v2476 = vpop.f32.mrf.mxu0
        %v2477 = vadd.f32 %v2462, %v2476
        %v2478 = vpop.f32.mrf.mxu0
        %2479 = vdwg.mxu0
        %v2480 = vadd.f32 %v2432, %v2477
        %v2481 = vsel %vm1568, %v2480, 0.0
        %2482 = vadd.xlane.f32.xlu0 %v2481
        %v2483 = vpop.xlane.xlu0 %2482
        %v2484 = vmul.f32 %v2483, %v1915
        %v2485 = vsub.f32 %v2480, %v2484
        %v2486 = vmul.f32 %v2485, %v2485
        %v2487 = vsel %vm1568, %v2486, 0.0
        %2488 = vadd.xlane.f32.xlu0 %v2487
        %v2489 = vpop.xlane.xlu0 %2488
        %v2490 = vmul.f32 %v2489, %v1915
        %v2491 = vadd.f32 %v2490, 1e-05
        %v2492 = vrsqrt.pop %v2491
        %v2493 = vmul.f32 %v2492, %v2491
        %v2494 = vmul.f32 %v2493, %v2492
        %v2495 = vmul.f32 0.5, %v2494
        %v2496 = vsub.f32 1.5, %v2495
        %v2497 = vmul.f32 %v2492, %v2496
        %vm2498 = vweird.f32 %v2491
        %vm2499 = vweird.f32 %v2492
        %vm2500 = vmor %vm2498, %vm2499
        %v2501 = vsel %vm2500, %v2492, %v2497
        %v2502 = vmul.f32 %v2485, %v2501
        %v2504 = vperm.slane %v2059, 0
        %v2506 = vmul.f32 %v2502, %v2504
        %v2508 = vperm.slane %v2061, 0
        %v2510 = vadd.f32 %v2506, %v2508
        %v2511 = vld [vmem:[%s41] sm:$0x1]
        %v2512 = vld [vmem:[%s43] sm:$0x1]
        %v2513 = vsel %vm1568, %v2510, 0.0
        %2514 = vadd.xlane.f32.xlu0 %v2513
        %v2515 = vpop.xlane.xlu0 %2514
        %v2516 = vmul.f32 %v2515, %v1915
        %v2517 = vsub.f32 %v2510, %v2516
        %v2518 = vmul.f32 %v2517, %v2517
        %v2519 = vsel %vm1568, %v2518, 0.0
        %2520 = vadd.xlane.f32.xlu0 %v2519
        %v2521 = vpop.xlane.xlu0 %2520
        %v2522 = vmul.f32 %v2521, %v1915
        %v2523 = vadd.f32 %v2522, 1e-05
        %v2524 = vrsqrt.pop %v2523
        %v2525 = vmul.f32 %v2524, %v2523
        %v2526 = vmul.f32 %v2525, %v2524
        %v2527 = vmul.f32 0.5, %v2526
        %v2528 = vsub.f32 1.5, %v2527
        %v2529 = vmul.f32 %v2524, %v2528
        %vm2530 = vweird.f32 %v2523
        %vm2531 = vweird.f32 %v2524
        %vm2532 = vmor %vm2530, %vm2531
        %v2533 = vsel %vm2532, %v2524, %v2529
        %v2534 = vmul.f32 %v2517, %v2533
        %v2536 = vperm.slane %v2511, 0
        %v2538 = vmul.f32 %v2534, %v2536
        %v2540 = vperm.slane %v2512, 0
        %v2542 = vadd.f32 %v2538, %v2540
        %v2543 = vld [vmem:[%s1496] sm:$0x3f]
        %v2544 = vld [vmem:[%s11] sm:$0x3]
        %v2545 = vld [vmem:[#allocation2] sm:$0x1]
        %v2546 = vpack.c.bf16 %v2543, %v2543
        %v2547 = vpack.c.bf16 %v2544, %v2544
        %v2549 = vperm.slane %v2545, 0
        %vm2551 = vcmask 15360
        %v2553 = vsel %vm2551, %v2546, 0
        %vm2555 = vcmask 1040384
        %v2557 = vsel %vm2555, %v2547, 0
        %2559 = vmatpush.bf16.msra.mxu0 0
        %2560 = vmatpush.bf16.msra.mxu0 0
        %2561 = vmatpush.bf16.msra.mxu0 0
        %2562 = vmatpush.bf16.msra.mxu0 0
        %2563 = vmatpush.bf16.msra.mxu0 0
        %2564 = vmatpush.bf16.msra.mxu0 0
        %2565 = vmatpush.bf16.msra.mxu0 0
        %2566 = vmatpush.bf16.msra.mxu0 %v2557
        %2567 = vmatmul.bf16.gmra.mxu0 %v2553
        %v2568 = vpop.f32.mrf.mxu0
        %v2569 = vadd.f32 %v2549, %v2568
        %v2570 = vpop.f32.mrf.mxu0
        %2571 = vdwg.mxu0
        %v2572 = vmul.f32 %v2569, 5.656854
        %v2573 = vld [vmem:[%s15] sm:$0x3f]
        %v2574 = vadd.f32 %v2572, %v2573
        %v2575 = vld [vmem:[%s45] sm:$0xff]
        %v2576 = vld [vmem:[%s45 + $0x8] sm:$0xff]
        %v2577 = vld [vmem:[%s45 + $0x10] sm:$0xff]
        %v2578 = vld [vmem:[%s45 + $0x18] sm:$0xff]
        %v2579 = vld [vmem:[%s47] sm:$0x1]
        %v2580 = vld [vmem:[%s49] sm:$0xff]
        %v2581 = vld [vmem:[%s49 + $0x8] sm:$0xff]
        %v2582 = vld [vmem:[%s49 + $0x10] sm:$0xff]
        %v2583 = vld [vmem:[%s49 + $0x18] sm:$0xff]
        %v2584 = vld [vmem:[%s51] sm:$0x1]
        %v2585 = vld [vmem:[%s53] sm:$0x1]
        %v2586 = vld [vmem:[%s55] sm:$0x1]
        %v2587 = vld [vmem:[%s57] sm:$0xff]
        %v2588 = vld [vmem:[%s57 + $0x8] sm:$0xff]
        %v2589 = vld [vmem:[%s57 + $0x10] sm:$0xff]
        %v2590 = vld [vmem:[%s57 + $0x18] sm:$0xff]
        %v2591 = vld [vmem:[%s59] sm:$0x1]
        %v2592 = vld [vmem:[#allocation4] sm:$0xff]
        %v2593 = vld [vmem:[#allocation4 + $0x8] sm:$0xff]
        %v2594 = vld [vmem:[#allocation4 + $0x10] sm:$0xff]
        %v2595 = vld [vmem:[#allocation4 + $0x18] sm:$0xff]
        %v2596 = vld [vmem:[%s63] sm:$0x1]
        %v2597 = vld [vmem:[#allocation6] sm:$0xff]
        %v2598 = vld [vmem:[#allocation6 + $0x8] sm:$0xff]
        %v2599 = vld [vmem:[#allocation6 + $0x10] sm:$0xff]
        %v2600 = vld [vmem:[#allocation6 + $0x18] sm:$0xff]
        %v2601 = vld [vmem:[%s67] sm:$0x1]
        %v2602 = vld [vmem:[%s69] sm:$0x1]
        %v2603 = vld [vmem:[%s71] sm:$0x1]
        %v2604 = vld [vmem:[#allocation7] sm:$0xff]
        %v2605 = vld [vmem:[#allocation7 + $0x8] sm:$0xff]
        %v2606 = vld [vmem:[#allocation7 + $0x10] sm:$0xff]
        %v2607 = vld [vmem:[#allocation7 + $0x18] sm:$0xff]
        %v2608 = vld [vmem:[#allocation9] sm:$0x1]
        %v2609 = vld [vmem:[%s77] sm:$0xff]
        %v2610 = vld [vmem:[%s77 + $0x8] sm:$0xff]
        %v2611 = vld [vmem:[%s77 + $0x10] sm:$0xff]
        %v2612 = vld [vmem:[%s77 + $0x18] sm:$0xff]
        %v2613 = vld [vmem:[%s77 + $0x20] sm:$0xff]
        %v2614 = vld [vmem:[%s77 + $0x28] sm:$0xff]
        %v2615 = vld [vmem:[%s77 + $0x30] sm:$0xff]
        %v2616 = vld [vmem:[%s77 + $0x38] sm:$0xff]
        %v2617 = vld [vmem:[%s79] sm:$0x1]
        %v2618 = vld [vmem:[%s81] sm:$0x1]
        %v2619 = vld [vmem:[%s83] sm:$0x1]
        %v2620 = vpack.c.bf16 %v2574, %v2574
        %v2621 = vpack.c.bf16 %v2576, %v2575
        %v2622 = vpack.c.bf16 %v2578, %v2577
        %v2624 = vperm.slane %v2579, 0
        %v2627 = vsel %vm1568, %v2620, 0
        %2629 = vmatpush.bf16.msra.mxu0 0
        %2630 = vmatpush.bf16.msra.mxu0 0
        %2631 = vmatpush.bf16.msra.mxu0 0
        %2632 = vmatpush.bf16.msra.mxu0 0
        %2633 = vmatpush.bf16.msra.mxu0 0
        %2634 = vmatpush.bf16.msra.mxu0 0
        %2635 = vmatpush.bf16.msra.mxu0 %v2622
        %2636 = vmatpush.bf16.msra.mxu0 %v2621
        %2637 = vmatmul.bf16.gmra.mxu0 %v2627
        %v2638 = vpop.f32.mrf.mxu0
        %v2639 = vadd.f32 %v2624, %v2638
        %v2640 = vpop.f32.mrf.mxu0
        %2641 = vdwg.mxu0
        %v2642 = vlaneseq
        %v2643 = vshrl.u32 %v2642, 7
        %v2644 = vlaneseq
        %v2645 = vand.u32 %v2644, 127
        %vm2646 = vcmp.gt.s32.totalorder %v2645, %v2643
        %v2647 = vsel %vm2646, -1e+09, 0.0
        %v2648 = vpack.c.bf16 %v2639, %v2639
        %2650 = vrot.lane.b32.xlu0 %v2648, 96
        %v2651 = vpop.permute.xlu0 %2650
        %v2653 = vsel %vm1589, %v2648, 0
        %v2656 = vsel %vm1589, %v2651, 0
        %2658 = vmatpush.bf16.xpose.msra.mxu0 0
        %2659 = vmatpush.bf16.xpose.msra.mxu0 0
        %2660 = vmatpush.bf16.xpose.msra.mxu0 0
        %2661 = vmatpush.bf16.xpose.msra.mxu0 0
        %2662 = vmatpush.bf16.xpose.msra.mxu0 0
        %2663 = vmatpush.bf16.xpose.msra.mxu0 0
        %2664 = vmatpush.bf16.xpose.msra.mxu0 0
        %2665 = vmatpush.bf16.xpose.msra.mxu0 %v2656
        %2666 = vmatmul.bf16.gmra.mxu0 %v2653
        %v2667 = vpop.f32.mrf.mxu0
        %v2668 = vadd.f32 0.0, %v2667
        %v2669 = vpop.f32.mrf.mxu0
        %2670 = vdwg.mxu0
        %v2671 = vmul.f32 %v2668, 0.35355338
        %v2672 = vadd.f32 %v2671, %v2647
        %vm2673 = vcmask 46080
        %v2674 = vsel %vm2673, %v2672, -inf
        %2675 = vmax.xlane.f32.xlu0 %v2674
        %v2676 = vpop.xlane.xlu0 %2675
        %v2677 = vsub.f32 %v2672, %v2676
        %v2678 = vmul.f32 %v2677, 1.442695
        %v2679 = vpow.pop %v2678
        %v2680 = vsel %vm2673, %v2679, 0.0
        %2681 = vadd.xlane.f32.xlu0 %v2680
        %v2682 = vpop.xlane.xlu0 %2681
        %v2683 = vrcp.pop %v2682
        %v2684 = vmul.f32 %v2679, %v2683
        %v2685 = vpack.c.bf16 %v2684, %v2684
        %2686 = vrot.lane.b32.xlu0 %v2648, 64
        %v2687 = vpop.permute.xlu0 %2686
        %vm2688 = vcmask 48128
        %v2690 = vsel %vm2688, %v2685, 0
        %vm2692 = vcmask 1042432
        %v2694 = vsel %vm2692, %v2687, 0
        %2696 = vmatpush.bf16.msra.mxu0 0
        %2697 = vmatpush.bf16.msra.mxu0 0
        %2698 = vmatpush.bf16.msra.mxu0 0
        %2699 = vmatpush.bf16.msra.mxu0 0
        %2700 = vmatpush.bf16.msra.mxu0 0
        %2701 = vmatpush.bf16.msra.mxu0 0
        %2702 = vmatpush.bf16.msra.mxu0 0
        %2703 = vmatpush.bf16.msra.mxu0 %v2694
        %2704 = vmatmul.bf16.gmra.mxu0 %v2690
        %v2705 = vpop.f32.mrf.mxu0
        %v2706 = vadd.f32 0.0, %v2705
        %v2707 = vpop.f32.mrf.mxu0
        %2708 = vdwg.mxu0
        %v2709 = vpack.c.bf16 %v2706, %v2706
        %v2710 = vpack.c.bf16 %v2580, %v2580
        %2711 = vrot.lane.b32.xlu0 %v2648, 120
        %v2712 = vpop.permute.xlu0 %2711
        %2713 = vrot.lane.b32.xlu0 %v2648, 88
        %v2714 = vpop.permute.xlu0 %2713
        %v2716 = vsel %vm1589, %v2712, 0
        %v2719 = vsel %vm1589, %v2714, 0
        %2721 = vmatpush.bf16.xpose.msra.mxu0 0
        %2722 = vmatpush.bf16.xpose.msra.mxu0 0
        %2723 = vmatpush.bf16.xpose.msra.mxu0 0
        %2724 = vmatpush.bf16.xpose.msra.mxu0 0
        %2725 = vmatpush.bf16.xpose.msra.mxu0 0
        %2726 = vmatpush.bf16.xpose.msra.mxu0 0
        %2727 = vmatpush.bf16.xpose.msra.mxu0 0
        %2728 = vmatpush.bf16.xpose.msra.mxu0 %v2719
        %2729 = vmatmul.bf16.gmra.mxu0 %v2716
        %v2730 = vpop.f32.mrf.mxu0
        %v2731 = vadd.f32 0.0, %v2730
        %v2732 = vpop.f32.mrf.mxu0
        %2733 = vdwg.mxu0
        %v2734 = vmul.f32 %v2731, 0.35355338
        %v2735 = vadd.f32 %v2734, %v2647
        %v2736 = vsel %vm2673, %v2735, -inf
        %2737 = vmax.xlane.f32.xlu0 %v2736
        %v2738 = vpop.xlane.xlu0 %2737
        %v2739 = vsub.f32 %v2735, %v2738
        %v2740 = vmul.f32 %v2739, 1.442695
        %v2741 = vpow.pop %v2740
        %v2742 = vsel %vm2673, %v2741, 0.0
        %2743 = vadd.xlane.f32.xlu0 %v2742
        %v2744 = vpop.xlane.xlu0 %2743
        %v2745 = vrcp.pop %v2744
        %v2746 = vmul.f32 %v2741, %v2745
        %v2747 = vpack.c.bf16 %v2746, %v2746
        %2748 = vrot.lane.b32.xlu0 %v2648, 56
        %v2749 = vpop.permute.xlu0 %2748
        %v2751 = vsel %vm2688, %v2747, 0
        %v2754 = vsel %vm2692, %v2749, 0
        %2756 = vmatpush.bf16.msra.mxu0 0
        %2757 = vmatpush.bf16.msra.mxu0 0
        %2758 = vmatpush.bf16.msra.mxu0 0
        %2759 = vmatpush.bf16.msra.mxu0 0
        %2760 = vmatpush.bf16.msra.mxu0 0
        %2761 = vmatpush.bf16.msra.mxu0 0
        %2762 = vmatpush.bf16.msra.mxu0 0
        %2763 = vmatpush.bf16.msra.mxu0 %v2754
        %2764 = vmatmul.bf16.gmra.mxu0 %v2751
        %v2765 = vpop.f32.mrf.mxu0
        %v2766 = vadd.f32 0.0, %v2765
        %v2767 = vpop.f32.mrf.mxu0
        %2768 = vdwg.mxu0
        %v2769 = vpack.c.bf16 %v2766, %v2766
        %v2770 = vpack.c.bf16 %v2581, %v2581
        %v2772 = vsel %vm1589, %v2769, 0
        %v2775 = vsel %vm1627, %v2770, 0
        %2777 = vmatpush.bf16.msra.mxu0 0
        %2778 = vmatpush.bf16.msra.mxu0 0
        %2779 = vmatpush.bf16.msra.mxu0 0
        %2780 = vmatpush.bf16.msra.mxu0 0
        %2781 = vmatpush.bf16.msra.mxu0 0
        %2782 = vmatpush.bf16.msra.mxu0 0
        %2783 = vmatpush.bf16.msra.mxu0 0
        %2784 = vmatpush.bf16.msra.mxu0 %v2775
        %2785 = vmatmul.bf16.gmra.mxu0 %v2772
        %v2786 = vpop.f32.mrf.mxu0
        %v2787 = vadd.f32 0.0, %v2786
        %v2788 = vpop.f32.mrf.mxu0
        %2789 = vdwg.mxu0
        %v2791 = vsel %vm1589, %v2709, 0
        %v2794 = vsel %vm1627, %v2710, 0
        %2796 = vmatpush.bf16.msra.mxu0 0
        %2797 = vmatpush.bf16.msra.mxu0 0
        %2798 = vmatpush.bf16.msra.mxu0 0
        %2799 = vmatpush.bf16.msra.mxu0 0
        %2800 = vmatpush.bf16.msra.mxu0 0
        %2801 = vmatpush.bf16.msra.mxu0 0
        %2802 = vmatpush.bf16.msra.mxu0 0
        %2803 = vmatpush.bf16.msra.mxu0 %v2794
        %2804 = vmatmul.bf16.gmra.mxu0 %v2791
        %v2805 = vpop.f32.mrf.mxu0
        %v2806 = vadd.f32 %v2787, %v2805
        %v2807 = vpop.f32.mrf.mxu0
        %2808 = vdwg.mxu0
        %2809 = vrot.lane.b32.xlu0 %v2648, 112
        %v2810 = vpop.permute.xlu0 %2809
        %2811 = vrot.lane.b32.xlu0 %v2648, 80
        %v2812 = vpop.permute.xlu0 %2811
        %v2814 = vsel %vm1589, %v2810, 0
        %v2817 = vsel %vm1589, %v2812, 0
        %2819 = vmatpush.bf16.xpose.msra.mxu0 0
        %2820 = vmatpush.bf16.xpose.msra.mxu0 0
        %2821 = vmatpush.bf16.xpose.msra.mxu0 0
        %2822 = vmatpush.bf16.xpose.msra.mxu0 0
        %2823 = vmatpush.bf16.xpose.msra.mxu0 0
        %2824 = vmatpush.bf16.xpose.msra.mxu0 0
        %2825 = vmatpush.bf16.xpose.msra.mxu0 0
        %2826 = vmatpush.bf16.xpose.msra.mxu0 %v2817
        %2827 = vmatmul.bf16.gmra.mxu0 %v2814
        %v2828 = vpop.f32.mrf.mxu0
        %v2829 = vadd.f32 0.0, %v2828
        %v2830 = vpop.f32.mrf.mxu0
        %2831 = vdwg.mxu0
        %v2832 = vmul.f32 %v2829, 0.35355338
        %v2833 = vadd.f32 %v2832, %v2647
        %v2834 = vsel %vm2673, %v2833, -inf
        %2835 = vmax.xlane.f32.xlu0 %v2834
        %v2836 = vpop.xlane.xlu0 %2835
        %v2837 = vsub.f32 %v2833, %v2836
        %v2838 = vmul.f32 %v2837, 1.442695
        %v2839 = vpow.pop %v2838
        %v2840 = vsel %vm2673, %v2839, 0.0
        %2841 = vadd.xlane.f32.xlu0 %v2840
        %v2842 = vpop.xlane.xlu0 %2841
        %v2843 = vrcp.pop %v2842
        %v2844 = vmul.f32 %v2839, %v2843
        %v2845 = vpack.c.bf16 %v2844, %v2844
        %2846 = vrot.lane.b32.xlu0 %v2648, 48
        %v2847 = vpop.permute.xlu0 %2846
        %v2849 = vsel %vm2688, %v2845, 0
        %v2852 = vsel %vm2692, %v2847, 0
        %2854 = vmatpush.bf16.msra.mxu0 0
        %2855 = vmatpush.bf16.msra.mxu0 0
        %2856 = vmatpush.bf16.msra.mxu0 0
        %2857 = vmatpush.bf16.msra.mxu0 0
        %2858 = vmatpush.bf16.msra.mxu0 0
        %2859 = vmatpush.bf16.msra.mxu0 0
        %2860 = vmatpush.bf16.msra.mxu0 0
        %2861 = vmatpush.bf16.msra.mxu0 %v2852
        %2862 = vmatmul.bf16.gmra.mxu0 %v2849
        %v2863 = vpop.f32.mrf.mxu0
        %v2864 = vadd.f32 0.0, %v2863
        %v2865 = vpop.f32.mrf.mxu0
        %2866 = vdwg.mxu0
        %v2867 = vpack.c.bf16 %v2864, %v2864
        %v2868 = vpack.c.bf16 %v2582, %v2582
        %v2870 = vsel %vm1589, %v2867, 0
        %v2873 = vsel %vm1627, %v2868, 0
        %2875 = vmatpush.bf16.msra.mxu0 0
        %2876 = vmatpush.bf16.msra.mxu0 0
        %2877 = vmatpush.bf16.msra.mxu0 0
        %2878 = vmatpush.bf16.msra.mxu0 0
        %2879 = vmatpush.bf16.msra.mxu0 0
        %2880 = vmatpush.bf16.msra.mxu0 0
        %2881 = vmatpush.bf16.msra.mxu0 0
        %2882 = vmatpush.bf16.msra.mxu0 %v2873
        %2883 = vmatmul.bf16.gmra.mxu0 %v2870
        %v2884 = vpop.f32.mrf.mxu0
        %v2885 = vadd.f32 0.0, %v2884
        %v2886 = vpop.f32.mrf.mxu0
        %2887 = vdwg.mxu0
        %v2888 = vadd.f32 %v2806, %v2885
        %2889 = vrot.lane.b32.xlu0 %v2648, 104
        %v2890 = vpop.permute.xlu0 %2889
        %2891 = vrot.lane.b32.xlu0 %v2648, 72
        %v2892 = vpop.permute.xlu0 %2891
        %v2894 = vsel %vm1589, %v2890, 0
        %v2897 = vsel %vm1589, %v2892, 0
        %2899 = vmatpush.bf16.xpose.msra.mxu0 0
        %2900 = vmatpush.bf16.xpose.msra.mxu0 0
        %2901 = vmatpush.bf16.xpose.msra.mxu0 0
        %2902 = vmatpush.bf16.xpose.msra.mxu0 0
        %2903 = vmatpush.bf16.xpose.msra.mxu0 0
        %2904 = vmatpush.bf16.xpose.msra.mxu0 0
        %2905 = vmatpush.bf16.xpose.msra.mxu0 0
        %2906 = vmatpush.bf16.xpose.msra.mxu0 %v2897
        %2907 = vmatmul.bf16.gmra.mxu0 %v2894
        %v2908 = vpop.f32.mrf.mxu0
        %v2909 = vadd.f32 0.0, %v2908
        %v2910 = vpop.f32.mrf.mxu0
        %2911 = vdwg.mxu0
        %v2912 = vmul.f32 %v2909, 0.35355338
        %v2913 = vadd.f32 %v2912, %v2647
        %v2914 = vsel %vm2673, %v2913, -inf
        %2915 = vmax.xlane.f32.xlu0 %v2914
        %v2916 = vpop.xlane.xlu0 %2915
        %v2917 = vsub.f32 %v2913, %v2916
        %v2918 = vmul.f32 %v2917, 1.442695
        %v2919 = vpow.pop %v2918
        %v2920 = vsel %vm2673, %v2919, 0.0
        %2921 = vadd.xlane.f32.xlu0 %v2920
        %v2922 = vpop.xlane.xlu0 %2921
        %v2923 = vrcp.pop %v2922
        %v2924 = vmul.f32 %v2919, %v2923
        %v2925 = vpack.c.bf16 %v2924, %v2924
        %2926 = vrot.lane.b32.xlu0 %v2648, 40
        %v2927 = vpop.permute.xlu0 %2926
        %v2929 = vsel %vm2688, %v2925, 0
        %v2932 = vsel %vm2692, %v2927, 0
        %2934 = vmatpush.bf16.msra.mxu0 0
        %2935 = vmatpush.bf16.msra.mxu0 0
        %2936 = vmatpush.bf16.msra.mxu0 0
        %2937 = vmatpush.bf16.msra.mxu0 0
        %2938 = vmatpush.bf16.msra.mxu0 0
        %2939 = vmatpush.bf16.msra.mxu0 0
        %2940 = vmatpush.bf16.msra.mxu0 0
        %2941 = vmatpush.bf16.msra.mxu0 %v2932
        %2942 = vmatmul.bf16.gmra.mxu0 %v2929
        %v2943 = vpop.f32.mrf.mxu0
        %v2944 = vadd.f32 0.0, %v2943
        %v2945 = vpop.f32.mrf.mxu0
        %2946 = vdwg.mxu0
        %v2947 = vpack.c.bf16 %v2944, %v2944
        %v2948 = vpack.c.bf16 %v2583, %v2583
        %v2950 = vsel %vm1589, %v2947, 0
        %v2953 = vsel %vm1627, %v2948, 0
        %2955 = vmatpush.bf16.msra.mxu0 0
        %2956 = vmatpush.bf16.msra.mxu0 0
        %2957 = vmatpush.bf16.msra.mxu0 0
        %2958 = vmatpush.bf16.msra.mxu0 0
        %2959 = vmatpush.bf16.msra.mxu0 0
        %2960 = vmatpush.bf16.msra.mxu0 0
        %2961 = vmatpush.bf16.msra.mxu0 0
        %2962 = vmatpush.bf16.msra.mxu0 %v2953
        %2963 = vmatmul.bf16.gmra.mxu0 %v2950
        %v2964 = vpop.f32.mrf.mxu0
        %v2965 = vadd.f32 0.0, %v2964
        %v2966 = vpop.f32.mrf.mxu0
        %2967 = vdwg.mxu0
        %v2968 = vadd.f32 %v2888, %v2965
        %v2970 = vperm.slane %v2584, 0
        %v2972 = vadd.f32 %v2968, %v2970
        %v2973 = vadd.f32 %v2574, %v2972
        %vm2974 = vcmask 259072
        %v2975 = vsel %vm2974, %v2973, 0.0
        %2976 = vadd.xlane.f32.xlu0 %v2975
        %v2977 = vpop.xlane.xlu0 %2976
        %v2978 = vmul.f32 %v2977, %v1915
        %v2979 = vsub.f32 %v2973, %v2978
        %v2980 = vmul.f32 %v2979, %v2979
        %v2981 = vsel %vm2974, %v2980, 0.0
        %2982 = vadd.xlane.f32.xlu0 %v2981
        %v2983 = vpop.xlane.xlu0 %2982
        %v2984 = vmul.f32 %v2983, %v1915
        %v2985 = vadd.f32 %v2984, 1e-05
        %v2986 = vrsqrt.pop %v2985
        %v2987 = vmul.f32 %v2986, %v2985
        %v2988 = vmul.f32 %v2987, %v2986
        %v2989 = vmul.f32 0.5, %v2988
        %v2990 = vsub.f32 1.5, %v2989
        %v2991 = vmul.f32 %v2986, %v2990
        %vm2992 = vweird.f32 %v2985
        %vm2993 = vweird.f32 %v2986
        %vm2994 = vmor %vm2992, %vm2993
        %v2995 = vsel %vm2994, %v2986, %v2991
        %v2996 = vmul.f32 %v2979, %v2995
        %v2998 = vperm.slane %v2585, 0
        %v3000 = vmul.f32 %v2996, %v2998
        %v3002 = vperm.slane %v2586, 0
        %v3004 = vadd.f32 %v3000, %v3002
        %v3005 = vpack.c.bf16 %v3004, %v3004
        %v3006 = vpack.c.bf16 %v2588, %v2587
        %v3007 = vpack.c.bf16 %v2590, %v2589
        %v3009 = vperm.slane %v2591, 0
        %v3012 = vsel %vm1568, %v3005, 0
        %3014 = vmatpush.bf16.msra.mxu0 0
        %3015 = vmatpush.bf16.msra.mxu0 0
        %3016 = vmatpush.bf16.msra.mxu0 0
        %3017 = vmatpush.bf16.msra.mxu0 0
        %3018 = vmatpush.bf16.msra.mxu0 0
        %3019 = vmatpush.bf16.msra.mxu0 0
        %3020 = vmatpush.bf16.msra.mxu0 %v3007
        %3021 = vmatpush.bf16.msra.mxu0 %v3006
        %3022 = vmatmul.bf16.gmra.mxu0 %v3012
        %v3023 = vpop.f32.mrf.mxu0
        %v3024 = vadd.f32 %v3009, %v3023
        %v3025 = vpop.f32.mrf.mxu0
        %3026 = vdwg.mxu0
        %v3027 = vpack.c.bf16 %v2542, %v2542
        %v3028 = vpack.c.bf16 %v2593, %v2592
        %v3029 = vpack.c.bf16 %v2595, %v2594
        %v3031 = vperm.slane %v2596, 0
        %v3034 = vsel %vm1568, %v3027, 0
        %3036 = vmatpush.bf16.msra.mxu0 0
        %3037 = vmatpush.bf16.msra.mxu0 0
        %3038 = vmatpush.bf16.msra.mxu0 0
        %3039 = vmatpush.bf16.msra.mxu0 0
        %3040 = vmatpush.bf16.msra.mxu0 0
        %3041 = vmatpush.bf16.msra.mxu0 0
        %3042 = vmatpush.bf16.msra.mxu0 %v3029
        %3043 = vmatpush.bf16.msra.mxu0 %v3028
        %3044 = vmatmul.bf16.gmra.mxu0 %v3034
        %v3045 = vpop.f32.mrf.mxu0
        %v3046 = vadd.f32 %v3031, %v3045
        %v3047 = vpop.f32.mrf.mxu0
        %3048 = vdwg.mxu0
        %v3049 = vpack.c.bf16 %v3024, %v3024
        %v3050 = vpack.c.bf16 %v3046, %v3046
        %v3052 = vsel %vm1589, %v3049, 0
        %v3055 = vsel %vm1589, %v3050, 0
        %3057 = vmatpush.bf16.xpose.msra.mxu0 0
        %3058 = vmatpush.bf16.xpose.msra.mxu0 0
        %3059 = vmatpush.bf16.xpose.msra.mxu0 0
        %3060 = vmatpush.bf16.xpose.msra.mxu0 0
        %3061 = vmatpush.bf16.xpose.msra.mxu0 0
        %3062 = vmatpush.bf16.xpose.msra.mxu0 0
        %3063 = vmatpush.bf16.xpose.msra.mxu0 0
        %3064 = vmatpush.bf16.xpose.msra.mxu0 %v3055
        %3065 = vmatmul.bf16.gmra.mxu0 %v3052
        %v3066 = vpop.f32.mrf.mxu0
        %v3067 = vadd.f32 0.0, %v3066
        %v3068 = vpop.f32.mrf.mxu0
        %3069 = vdwg.mxu0
        %v3070 = vmul.f32 %v3067, 0.35355338
        %vm3071 = vcmask 62464
        %v3072 = vsel %vm3071, %v3070, -inf
        %3073 = vmax.xlane.f32.xlu0 %v3072
        %v3074 = vpop.xlane.xlu0 %3073
        %v3075 = vsub.f32 %v3070, %v3074
        %v3076 = vmul.f32 %v3075, 1.442695
        %v3077 = vpow.pop %v3076
        %v3078 = vsel %vm3071, %v3077, 0.0
        %3079 = vadd.xlane.f32.xlu0 %v3078
        %v3080 = vpop.xlane.xlu0 %3079
        %v3081 = vrcp.pop %v3080
        %v3082 = vmul.f32 %v3077, %v3081
        %v3083 = vpack.c.bf16 %v3082, %v3082
        %3085 = vrot.lane.b32.xlu0 %v3050, 96
        %v3086 = vpop.permute.xlu0 %3085
        %v3088 = vsel %vm1589, %v3083, 0
        %v3091 = vsel %vm1627, %v3086, 0
        %3093 = vmatpush.bf16.msra.mxu0 0
        %3094 = vmatpush.bf16.msra.mxu0 0
        %3095 = vmatpush.bf16.msra.mxu0 0
        %3096 = vmatpush.bf16.msra.mxu0 0
        %3097 = vmatpush.bf16.msra.mxu0 0
        %3098 = vmatpush.bf16.msra.mxu0 0
        %3099 = vmatpush.bf16.msra.mxu0 0
        %3100 = vmatpush.bf16.msra.mxu0 %v3091
        %3101 = vmatmul.bf16.gmra.mxu0 %v3088
        %v3102 = vpop.f32.mrf.mxu0
        %v3103 = vadd.f32 0.0, %v3102
        %v3104 = vpop.f32.mrf.mxu0
        %3105 = vdwg.mxu0
        %v3106 = vpack.c.bf16 %v3103, %v3103
        %v3107 = vpack.c.bf16 %v2597, %v2597
        %3109 = vrot.lane.b32.xlu0 %v3049, 120
        %v3110 = vpop.permute.xlu0 %3109
        %3111 = vrot.lane.b32.xlu0 %v3050, 120
        %v3112 = vpop.permute.xlu0 %3111
        %v3114 = vsel %vm1589, %v3110, 0
        %v3117 = vsel %vm1589, %v3112, 0
        %3119 = vmatpush.bf16.xpose.msra.mxu0 0
        %3120 = vmatpush.bf16.xpose.msra.mxu0 0
        %3121 = vmatpush.bf16.xpose.msra.mxu0 0
        %3122 = vmatpush.bf16.xpose.msra.mxu0 0
        %3123 = vmatpush.bf16.xpose.msra.mxu0 0
        %3124 = vmatpush.bf16.xpose.msra.mxu0 0
        %3125 = vmatpush.bf16.xpose.msra.mxu0 0
        %3126 = vmatpush.bf16.xpose.msra.mxu0 %v3117
        %3127 = vmatmul.bf16.gmra.mxu0 %v3114
        %v3128 = vpop.f32.mrf.mxu0
        %v3129 = vadd.f32 0.0, %v3128
        %v3130 = vpop.f32.mrf.mxu0
        %3131 = vdwg.mxu0
        %v3132 = vmul.f32 %v3129, 0.35355338
        %v3133 = vsel %vm3071, %v3132, -inf
        %3134 = vmax.xlane.f32.xlu0 %v3133
        %v3135 = vpop.xlane.xlu0 %3134
        %v3136 = vsub.f32 %v3132, %v3135
        %v3137 = vmul.f32 %v3136, 1.442695
        %v3138 = vpow.pop %v3137
        %v3139 = vsel %vm3071, %v3138, 0.0
        %3140 = vadd.xlane.f32.xlu0 %v3139
        %v3141 = vpop.xlane.xlu0 %3140
        %v3142 = vrcp.pop %v3141
        %v3143 = vmul.f32 %v3138, %v3142
        %v3144 = vpack.c.bf16 %v3143, %v3143
        %3145 = vrot.lane.b32.xlu0 %v3050, 88
        %v3146 = vpop.permute.xlu0 %3145
        %v3148 = vsel %vm1589, %v3144, 0
        %v3151 = vsel %vm1627, %v3146, 0
        %3153 = vmatpush.bf16.msra.mxu0 0
        %3154 = vmatpush.bf16.msra.mxu0 0
        %3155 = vmatpush.bf16.msra.mxu0 0
        %3156 = vmatpush.bf16.msra.mxu0 0
        %3157 = vmatpush.bf16.msra.mxu0 0
        %3158 = vmatpush.bf16.msra.mxu0 0
        %3159 = vmatpush.bf16.msra.mxu0 0
        %3160 = vmatpush.bf16.msra.mxu0 %v3151
        %3161 = vmatmul.bf16.gmra.mxu0 %v3148
        %v3162 = vpop.f32.mrf.mxu0
        %v3163 = vadd.f32 0.0, %v3162
        %v3164 = vpop.f32.mrf.mxu0
        %3165 = vdwg.mxu0
        %v3166 = vpack.c.bf16 %v3163, %v3163
        %v3167 = vpack.c.bf16 %v2598, %v2598
        %v3169 = vsel %vm1589, %v3166, 0
        %v3172 = vsel %vm1627, %v3167, 0
        %3174 = vmatpush.bf16.msra.mxu0 0
        %3175 = vmatpush.bf16.msra.mxu0 0
        %3176 = vmatpush.bf16.msra.mxu0 0
        %3177 = vmatpush.bf16.msra.mxu0 0
        %3178 = vmatpush.bf16.msra.mxu0 0
        %3179 = vmatpush.bf16.msra.mxu0 0
        %3180 = vmatpush.bf16.msra.mxu0 0
        %3181 = vmatpush.bf16.msra.mxu0 %v3172
        %3182 = vmatmul.bf16.gmra.mxu0 %v3169
        %v3183 = vpop.f32.mrf.mxu0
        %v3184 = vadd.f32 0.0, %v3183
        %v3185 = vpop.f32.mrf.mxu0
        %3186 = vdwg.mxu0
        %v3188 = vsel %vm1589, %v3106, 0
        %v3191 = vsel %vm1627, %v3107, 0
        %3193 = vmatpush.bf16.msra.mxu0 0
        %3194 = vmatpush.bf16.msra.mxu0 0
        %3195 = vmatpush.bf16.msra.mxu0 0
        %3196 = vmatpush.bf16.msra.mxu0 0
        %3197 = vmatpush.bf16.msra.mxu0 0
        %3198 = vmatpush.bf16.msra.mxu0 0
        %3199 = vmatpush.bf16.msra.mxu0 0
        %3200 = vmatpush.bf16.msra.mxu0 %v3191
        %3201 = vmatmul.bf16.gmra.mxu0 %v3188
        %v3202 = vpop.f32.mrf.mxu0
        %v3203 = vadd.f32 %v3184, %v3202
        %v3204 = vpop.f32.mrf.mxu0
        %3205 = vdwg.mxu0
        %3206 = vrot.lane.b32.xlu0 %v3049, 112
        %v3207 = vpop.permute.xlu0 %3206
        %3208 = vrot.lane.b32.xlu0 %v3050, 112
        %v3209 = vpop.permute.xlu0 %3208
        %v3211 = vsel %vm1589, %v3207, 0
        %v3214 = vsel %vm1589, %v3209, 0
        %3216 = vmatpush.bf16.xpose.msra.mxu0 0
        %3217 = vmatpush.bf16.xpose.msra.mxu0 0
        %3218 = vmatpush.bf16.xpose.msra.mxu0 0
        %3219 = vmatpush.bf16.xpose.msra.mxu0 0
        %3220 = vmatpush.bf16.xpose.msra.mxu0 0
        %3221 = vmatpush.bf16.xpose.msra.mxu0 0
        %3222 = vmatpush.bf16.xpose.msra.mxu0 0
        %3223 = vmatpush.bf16.xpose.msra.mxu0 %v3214
        %3224 = vmatmul.bf16.gmra.mxu0 %v3211
        %v3225 = vpop.f32.mrf.mxu0
        %v3226 = vadd.f32 0.0, %v3225
        %v3227 = vpop.f32.mrf.mxu0
        %3228 = vdwg.mxu0
        %v3229 = vmul.f32 %v3226, 0.35355338
        %v3230 = vsel %vm3071, %v3229, -inf
        %3231 = vmax.xlane.f32.xlu0 %v3230
        %v3232 = vpop.xlane.xlu0 %3231
        %v3233 = vsub.f32 %v3229, %v3232
        %v3234 = vmul.f32 %v3233, 1.442695
        %v3235 = vpow.pop %v3234
        %v3236 = vsel %vm3071, %v3235, 0.0
        %3237 = vadd.xlane.f32.xlu0 %v3236
        %v3238 = vpop.xlane.xlu0 %3237
        %v3239 = vrcp.pop %v3238
        %v3240 = vmul.f32 %v3235, %v3239
        %v3241 = vpack.c.bf16 %v3240, %v3240
        %3242 = vrot.lane.b32.xlu0 %v3050, 80
        %v3243 = vpop.permute.xlu0 %3242
        %v3245 = vsel %vm1589, %v3241, 0
        %v3248 = vsel %vm1627, %v3243, 0
        %3250 = vmatpush.bf16.msra.mxu0 0
        %3251 = vmatpush.bf16.msra.mxu0 0
        %3252 = vmatpush.bf16.msra.mxu0 0
        %3253 = vmatpush.bf16.msra.mxu0 0
        %3254 = vmatpush.bf16.msra.mxu0 0
        %3255 = vmatpush.bf16.msra.mxu0 0
        %3256 = vmatpush.bf16.msra.mxu0 0
        %3257 = vmatpush.bf16.msra.mxu0 %v3248
        %3258 = vmatmul.bf16.gmra.mxu0 %v3245
        %v3259 = vpop.f32.mrf.mxu0
        %v3260 = vadd.f32 0.0, %v3259
        %v3261 = vpop.f32.mrf.mxu0
        %3262 = vdwg.mxu0
        %v3263 = vpack.c.bf16 %v3260, %v3260
        %v3264 = vpack.c.bf16 %v2599, %v2599
        %v3266 = vsel %vm1589, %v3263, 0
        %v3269 = vsel %vm1627, %v3264, 0
        %3271 = vmatpush.bf16.msra.mxu0 0
        %3272 = vmatpush.bf16.msra.mxu0 0
        %3273 = vmatpush.bf16.msra.mxu0 0
        %3274 = vmatpush.bf16.msra.mxu0 0
        %3275 = vmatpush.bf16.msra.mxu0 0
        %3276 = vmatpush.bf16.msra.mxu0 0
        %3277 = vmatpush.bf16.msra.mxu0 0
        %3278 = vmatpush.bf16.msra.mxu0 %v3269
        %3279 = vmatmul.bf16.gmra.mxu0 %v3266
        %v3280 = vpop.f32.mrf.mxu0
        %v3281 = vadd.f32 0.0, %v3280
        %v3282 = vpop.f32.mrf.mxu0
        %3283 = vdwg.mxu0
        %v3284 = vadd.f32 %v3203, %v3281
        %3285 = vrot.lane.b32.xlu0 %v3049, 104
        %v3286 = vpop.permute.xlu0 %3285
        %3287 = vrot.lane.b32.xlu0 %v3050, 104
        %v3288 = vpop.permute.xlu0 %3287
        %v3290 = vsel %vm1589, %v3286, 0
        %v3293 = vsel %vm1589, %v3288, 0
        %3295 = vmatpush.bf16.xpose.msra.mxu0 0
        %3296 = vmatpush.bf16.xpose.msra.mxu0 0
        %3297 = vmatpush.bf16.xpose.msra.mxu0 0
        %3298 = vmatpush.bf16.xpose.msra.mxu0 0
        %3299 = vmatpush.bf16.xpose.msra.mxu0 0
        %3300 = vmatpush.bf16.xpose.msra.mxu0 0
        %3301 = vmatpush.bf16.xpose.msra.mxu0 0
        %3302 = vmatpush.bf16.xpose.msra.mxu0 %v3293
        %3303 = vmatmul.bf16.gmra.mxu0 %v3290
        %v3304 = vpop.f32.mrf.mxu0
        %v3305 = vadd.f32 0.0, %v3304
        %v3306 = vpop.f32.mrf.mxu0
        %3307 = vdwg.mxu0
        %v3308 = vmul.f32 %v3305, 0.35355338
        %v3309 = vsel %vm3071, %v3308, -inf
        %3310 = vmax.xlane.f32.xlu0 %v3309
        %v3311 = vpop.xlane.xlu0 %3310
        %v3312 = vsub.f32 %v3308, %v3311
        %v3313 = vmul.f32 %v3312, 1.442695
        %v3314 = vpow.pop %v3313
        %v3315 = vsel %vm3071, %v3314, 0.0
        %3316 = vadd.xlane.f32.xlu0 %v3315
        %v3317 = vpop.xlane.xlu0 %3316
        %v3318 = vrcp.pop %v3317
        %v3319 = vmul.f32 %v3314, %v3318
        %v3320 = vpack.c.bf16 %v3319, %v3319
        %3321 = vrot.lane.b32.xlu0 %v3050, 72
        %v3322 = vpop.permute.xlu0 %3321
        %v3324 = vsel %vm1589, %v3320, 0
        %v3327 = vsel %vm1627, %v3322, 0
        %3329 = vmatpush.bf16.msra.mxu0 0
        %3330 = vmatpush.bf16.msra.mxu0 0
        %3331 = vmatpush.bf16.msra.mxu0 0
        %3332 = vmatpush.bf16.msra.mxu0 0
        %3333 = vmatpush.bf16.msra.mxu0 0
        %3334 = vmatpush.bf16.msra.mxu0 0
        %3335 = vmatpush.bf16.msra.mxu0 0
        %3336 = vmatpush.bf16.msra.mxu0 %v3327
        %3337 = vmatmul.bf16.gmra.mxu0 %v3324
        %v3338 = vpop.f32.mrf.mxu0
        %v3339 = vadd.f32 0.0, %v3338
        %v3340 = vpop.f32.mrf.mxu0
        %3341 = vdwg.mxu0
        %v3342 = vpack.c.bf16 %v3339, %v3339
        %v3343 = vpack.c.bf16 %v2600, %v2600
        %v3345 = vsel %vm1589, %v3342, 0
        %v3348 = vsel %vm1627, %v3343, 0
        %3350 = vmatpush.bf16.msra.mxu0 0
        %3351 = vmatpush.bf16.msra.mxu0 0
        %3352 = vmatpush.bf16.msra.mxu0 0
        %3353 = vmatpush.bf16.msra.mxu0 0
        %3354 = vmatpush.bf16.msra.mxu0 0
        %3355 = vmatpush.bf16.msra.mxu0 0
        %3356 = vmatpush.bf16.msra.mxu0 0
        %3357 = vmatpush.bf16.msra.mxu0 %v3348
        %3358 = vmatmul.bf16.gmra.mxu0 %v3345
        %v3359 = vpop.f32.mrf.mxu0
        %v3360 = vadd.f32 0.0, %v3359
        %v3361 = vpop.f32.mrf.mxu0
        %3362 = vdwg.mxu0
        %v3363 = vadd.f32 %v3284, %v3360
        %v3365 = vperm.slane %v2601, 0
        %v3367 = vadd.f32 %v3363, %v3365
        %v3368 = vadd.f32 %v3004, %v3367
        %v3369 = vsel %vm2974, %v3368, 0.0
        %3370 = vadd.xlane.f32.xlu0 %v3369
        %v3371 = vpop.xlane.xlu0 %3370
        %v3372 = vmul.f32 %v3371, %v1915
        %v3373 = vsub.f32 %v3368, %v3372
        %v3374 = vmul.f32 %v3373, %v3373
        %v3375 = vsel %vm2974, %v3374, 0.0
        %3376 = vadd.xlane.f32.xlu0 %v3375
        %v3377 = vpop.xlane.xlu0 %3376
        %v3378 = vmul.f32 %v3377, %v1915
        %v3379 = vadd.f32 %v3378, 1e-05
        %v3380 = vrsqrt.pop %v3379
        %v3381 = vmul.f32 %v3380, %v3379
        %v3382 = vmul.f32 %v3381, %v3380
        %v3383 = vmul.f32 0.5, %v3382
        %v3384 = vsub.f32 1.5, %v3383
        %v3385 = vmul.f32 %v3380, %v3384
        %vm3386 = vweird.f32 %v3379
        %vm3387 = vweird.f32 %v3380
        %vm3388 = vmor %vm3386, %vm3387
        %v3389 = vsel %vm3388, %v3380, %v3385
        %v3390 = vmul.f32 %v3373, %v3389
        %v3392 = vperm.slane %v2602, 0
        %v3394 = vmul.f32 %v3390, %v3392
        %v3396 = vperm.slane %v2603, 0
        %v3398 = vadd.f32 %v3394, %v3396
        %v3399 = vpack.c.bf16 %v3398, %v3398
        %v3400 = vpack.c.bf16 %v2605, %v2604
        %v3401 = vpack.c.bf16 %v2607, %v2606
        %v3403 = vperm.slane %v2608, 0
        %v3406 = vsel %vm1568, %v3399, 0
        %3408 = vmatpush.bf16.msra.mxu0 0
        %3409 = vmatpush.bf16.msra.mxu0 0
        %3410 = vmatpush.bf16.msra.mxu0 0
        %3411 = vmatpush.bf16.msra.mxu0 0
        %3412 = vmatpush.bf16.msra.mxu0 0
        %3413 = vmatpush.bf16.msra.mxu0 0
        %3414 = vmatpush.bf16.msra.mxu0 %v3401
        %3415 = vmatpush.bf16.msra.mxu0 %v3400
        %3416 = vmatmul.bf16.gmra.mxu0 %v3406
        %v3417 = vpop.f32.mrf.mxu0
        %v3418 = vadd.f32 %v3403, %v3417
        %v3419 = vpop.f32.mrf.mxu0
        %3420 = vdwg.mxu0
        %v3421 = vmax.f32 %v3418, 0.0
        %v3422 = vpack.c.bf16 %v3421, %v3421
        %v3423 = vpack.c.bf16 %v2610, %v2609
        %v3424 = vpack.c.bf16 %v2612, %v2611
        %v3425 = vpack.c.bf16 %v2614, %v2613
        %v3426 = vpack.c.bf16 %v2616, %v2615
        %v3428 = vperm.slane %v2617, 0
        %v3431 = vsel %vm1974, %v3422, 0
        %3433 = vmatpush.bf16.msra.mxu0 0
        %3434 = vmatpush.bf16.msra.mxu0 0
        %3435 = vmatpush.bf16.msra.mxu0 0
        %3436 = vmatpush.bf16.msra.mxu0 0
        %3437 = vmatpush.bf16.msra.mxu0 %v3426
        %3438 = vmatpush.bf16.msra.mxu0 %v3425
        %3439 = vmatpush.bf16.msra.mxu0 %v3424
        %3440 = vmatpush.bf16.msra.mxu0 %v3423
        %3441 = vmatmul.bf16.gmra.mxu0 %v3431
        %v3442 = vpop.f32.mrf.mxu0
        %v3443 = vadd.f32 %v3428, %v3442
        %v3444 = vpop.f32.mrf.mxu0
        %3445 = vdwg.mxu0
        %v3446 = vadd.f32 %v3398, %v3443
        %v3447 = vsel %vm2974, %v3446, 0.0
        %3448 = vadd.xlane.f32.xlu0 %v3447
        %v3449 = vpop.xlane.xlu0 %3448
        %v3450 = vmul.f32 %v3449, %v1915
        %v3451 = vsub.f32 %v3446, %v3450
        %v3452 = vmul.f32 %v3451, %v3451
        %v3453 = vsel %vm2974, %v3452, 0.0
        %3454 = vadd.xlane.f32.xlu0 %v3453
        %v3455 = vpop.xlane.xlu0 %3454
        %v3456 = vmul.f32 %v3455, %v1915
        %v3457 = vadd.f32 %v3456, 1e-05
        %v3458 = vrsqrt.pop %v3457
        %v3459 = vmul.f32 %v3458, %v3457
        %v3460 = vmul.f32 %v3459, %v3458
        %v3461 = vmul.f32 0.5, %v3460
        %v3462 = vsub.f32 1.5, %v3461
        %v3463 = vmul.f32 %v3458, %v3462
        %vm3464 = vweird.f32 %v3457
        %vm3465 = vweird.f32 %v3458
        %vm3466 = vmor %vm3464, %vm3465
        %v3467 = vsel %vm3466, %v3458, %v3463
        %v3468 = vmul.f32 %v3451, %v3467
        %v3470 = vperm.slane %v2618, 0
        %v3472 = vmul.f32 %v3468, %v3470
        %v3474 = vperm.slane %v2619, 0
        %v3476 = vadd.f32 %v3472, %v3474
        %s3477 = scalar_lea.vmem %s45, 32
        %v3478 = vld [vmem:[%s3477] sm:$0xff]
        %v3479 = vld [vmem:[%s3477 + $0x8] sm:$0xff]
        %v3480 = vld [vmem:[%s3477 + $0x10] sm:$0xff]
        %v3481 = vld [vmem:[%s3477 + $0x18] sm:$0xff]
        %s3482 = scalar_lea.vmem %s47, 1
        %v3483 = vld [vmem:[%s3482] sm:$0x1]
        %s3484 = scalar_lea.vmem %s49, 32
        %v3485 = vld [vmem:[%s3484] sm:$0xff]
        %v3486 = vld [vmem:[%s3484 + $0x8] sm:$0xff]
        %v3487 = vld [vmem:[%s3484 + $0x10] sm:$0xff]
        %v3488 = vld [vmem:[%s3484 + $0x18] sm:$0xff]
        %s3489 = scalar_lea.vmem %s51, 1
        %v3490 = vld [vmem:[%s3489] sm:$0x1]
        %s3491 = scalar_lea.vmem %s53, 1
        %v3492 = vld [vmem:[%s3491] sm:$0x1]
        %s3493 = scalar_lea.vmem %s55, 1
        %v3494 = vld [vmem:[%s3493] sm:$0x1]
        %s3495 = scalar_lea.vmem %s57, 32
        %v3496 = vld [vmem:[%s3495] sm:$0xff]
        %v3497 = vld [vmem:[%s3495 + $0x8] sm:$0xff]
        %v3498 = vld [vmem:[%s3495 + $0x10] sm:$0xff]
        %v3499 = vld [vmem:[%s3495 + $0x18] sm:$0xff]
        %s3500 = scalar_lea.vmem %s59, 1
        %v3501 = vld [vmem:[%s3500] sm:$0x1]
        %s3502 = scalar_lea.vmem [#allocation4], 32
        %v3503 = vld [vmem:[%s3502] sm:$0xff]
        %v3504 = vld [vmem:[%s3502 + $0x8] sm:$0xff]
        %v3505 = vld [vmem:[%s3502 + $0x10] sm:$0xff]
        %v3506 = vld [vmem:[%s3502 + $0x18] sm:$0xff]
        %s3507 = scalar_lea.vmem %s63, 1
        %v3508 = vld [vmem:[%s3507] sm:$0x1]
        %s3509 = scalar_lea.vmem [#allocation6], 32
        %v3510 = vld [vmem:[%s3509] sm:$0xff]
        %v3511 = vld [vmem:[%s3509 + $0x8] sm:$0xff]
        %v3512 = vld [vmem:[%s3509 + $0x10] sm:$0xff]
        %v3513 = vld [vmem:[%s3509 + $0x18] sm:$0xff]
        %s3514 = scalar_lea.vmem %s67, 1
        %v3515 = vld [vmem:[%s3514] sm:$0x1]
        %s3516 = scalar_lea.vmem %s69, 1
        %v3517 = vld [vmem:[%s3516] sm:$0x1]
        %s3518 = scalar_lea.vmem %s71, 1
        %v3519 = vld [vmem:[%s3518] sm:$0x1]
        %s3520 = scalar_lea.vmem [#allocation7], 32
        %v3521 = vld [vmem:[%s3520] sm:$0xff]
        %v3522 = vld [vmem:[%s3520 + $0x8] sm:$0xff]
        %v3523 = vld [vmem:[%s3520 + $0x10] sm:$0xff]
        %v3524 = vld [vmem:[%s3520 + $0x18] sm:$0xff]
        %s3525 = scalar_lea.vmem [#allocation9], 1
        %v3526 = vld [vmem:[%s3525] sm:$0x1]
        %s3527 = scalar_lea.vmem %s77, 64
        %v3528 = vld [vmem:[%s3527] sm:$0xff]
        %v3529 = vld [vmem:[%s3527 + $0x8] sm:$0xff]
        %v3530 = vld [vmem:[%s3527 + $0x10] sm:$0xff]
        %v3531 = vld [vmem:[%s3527 + $0x18] sm:$0xff]
        %v3532 = vld [vmem:[%s3527 + $0x20] sm:$0xff]
        %v3533 = vld [vmem:[%s3527 + $0x28] sm:$0xff]
        %v3534 = vld [vmem:[%s3527 + $0x30] sm:$0xff]
        %v3535 = vld [vmem:[%s3527 + $0x38] sm:$0xff]
        %s3536 = scalar_lea.vmem %s79, 1
        %v3537 = vld [vmem:[%s3536] sm:$0x1]
        %s3538 = scalar_lea.vmem %s81, 1
        %v3539 = vld [vmem:[%s3538] sm:$0x1]
        %s3540 = scalar_lea.vmem %s83, 1
        %v3541 = vld [vmem:[%s3540] sm:$0x1]
        %v3542 = vpack.c.bf16 %v3476, %v3476
        %v3543 = vpack.c.bf16 %v3479, %v3478
        %v3544 = vpack.c.bf16 %v3481, %v3480
        %v3546 = vperm.slane %v3483, 0
        %v3549 = vsel %vm1568, %v3542, 0
        %3551 = vmatpush.bf16.msra.mxu0 0
        %3552 = vmatpush.bf16.msra.mxu0 0
        %3553 = vmatpush.bf16.msra.mxu0 0
        %3554 = vmatpush.bf16.msra.mxu0 0
        %3555 = vmatpush.bf16.msra.mxu0 0
        %3556 = vmatpush.bf16.msra.mxu0 0
        %3557 = vmatpush.bf16.msra.mxu0 %v3544
        %3558 = vmatpush.bf16.msra.mxu0 %v3543
        %3559 = vmatmul.bf16.gmra.mxu0 %v3549
        %v3560 = vpop.f32.mrf.mxu0
        %v3561 = vadd.f32 %v3546, %v3560
        %v3562 = vpop.f32.mrf.mxu0
        %3563 = vdwg.mxu0
        %v3564 = vpack.c.bf16 %v3561, %v3561
        %3566 = vrot.lane.b32.xlu0 %v3564, 96
        %v3567 = vpop.permute.xlu0 %3566
        %v3569 = vsel %vm1589, %v3564, 0
        %v3572 = vsel %vm1589, %v3567, 0
        %3574 = vmatpush.bf16.xpose.msra.mxu0 0
        %3575 = vmatpush.bf16.xpose.msra.mxu0 0
        %3576 = vmatpush.bf16.xpose.msra.mxu0 0
        %3577 = vmatpush.bf16.xpose.msra.mxu0 0
        %3578 = vmatpush.bf16.xpose.msra.mxu0 0
        %3579 = vmatpush.bf16.xpose.msra.mxu0 0
        %3580 = vmatpush.bf16.xpose.msra.mxu0 0
        %3581 = vmatpush.bf16.xpose.msra.mxu0 %v3572
        %3582 = vmatmul.bf16.gmra.mxu0 %v3569
        %v3583 = vpop.f32.mrf.mxu0
        %v3584 = vadd.f32 0.0, %v3583
        %v3585 = vpop.f32.mrf.mxu0
        %3586 = vdwg.mxu0
        %v3587 = vmul.f32 %v3584, 0.35355338
        %v3588 = vadd.f32 %v3587, %v2647
        %v3589 = vsel %vm2673, %v3588, -inf
        %3590 = vmax.xlane.f32.xlu0 %v3589
        %v3591 = vpop.xlane.xlu0 %3590
        %v3592 = vsub.f32 %v3588, %v3591
        %v3593 = vmul.f32 %v3592, 1.442695
        %v3594 = vpow.pop %v3593
        %v3595 = vsel %vm2673, %v3594, 0.0
        %3596 = vadd.xlane.f32.xlu0 %v3595
        %v3597 = vpop.xlane.xlu0 %3596
        %v3598 = vrcp.pop %v3597
        %v3599 = vmul.f32 %v3594, %v3598
        %v3600 = vpack.c.bf16 %v3599, %v3599
        %3601 = vrot.lane.b32.xlu0 %v3564, 64
        %v3602 = vpop.permute.xlu0 %3601
        %v3604 = vsel %vm2688, %v3600, 0
        %v3607 = vsel %vm2692, %v3602, 0
        %3609 = vmatpush.bf16.msra.mxu0 0
        %3610 = vmatpush.bf16.msra.mxu0 0
        %3611 = vmatpush.bf16.msra.mxu0 0
        %3612 = vmatpush.bf16.msra.mxu0 0
        %3613 = vmatpush.bf16.msra.mxu0 0
        %3614 = vmatpush.bf16.msra.mxu0 0
        %3615 = vmatpush.bf16.msra.mxu0 0
        %3616 = vmatpush.bf16.msra.mxu0 %v3607
        %3617 = vmatmul.bf16.gmra.mxu0 %v3604
        %v3618 = vpop.f32.mrf.mxu0
        %v3619 = vadd.f32 0.0, %v3618
        %v3620 = vpop.f32.mrf.mxu0
        %3621 = vdwg.mxu0
        %v3622 = vpack.c.bf16 %v3619, %v3619
        %v3623 = vpack.c.bf16 %v3485, %v3485
        %3624 = vrot.lane.b32.xlu0 %v3564, 120
        %v3625 = vpop.permute.xlu0 %3624
        %3626 = vrot.lane.b32.xlu0 %v3564, 88
        %v3627 = vpop.permute.xlu0 %3626
        %v3629 = vsel %vm1589, %v3625, 0
        %v3632 = vsel %vm1589, %v3627, 0
        %3634 = vmatpush.bf16.xpose.msra.mxu0 0
        %3635 = vmatpush.bf16.xpose.msra.mxu0 0
        %3636 = vmatpush.bf16.xpose.msra.mxu0 0
        %3637 = vmatpush.bf16.xpose.msra.mxu0 0
        %3638 = vmatpush.bf16.xpose.msra.mxu0 0
        %3639 = vmatpush.bf16.xpose.msra.mxu0 0
        %3640 = vmatpush.bf16.xpose.msra.mxu0 0
        %3641 = vmatpush.bf16.xpose.msra.mxu0 %v3632
        %3642 = vmatmul.bf16.gmra.mxu0 %v3629
        %v3643 = vpop.f32.mrf.mxu0
        %v3644 = vadd.f32 0.0, %v3643
        %v3645 = vpop.f32.mrf.mxu0
        %3646 = vdwg.mxu0
        %v3647 = vmul.f32 %v3644, 0.35355338
        %v3648 = vadd.f32 %v3647, %v2647
        %v3649 = vsel %vm2673, %v3648, -inf
        %3650 = vmax.xlane.f32.xlu0 %v3649
        %v3651 = vpop.xlane.xlu0 %3650
        %v3652 = vsub.f32 %v3648, %v3651
        %v3653 = vmul.f32 %v3652, 1.442695
        %v3654 = vpow.pop %v3653
        %v3655 = vsel %vm2673, %v3654, 0.0
        %3656 = vadd.xlane.f32.xlu0 %v3655
        %v3657 = vpop.xlane.xlu0 %3656
        %v3658 = vrcp.pop %v3657
        %v3659 = vmul.f32 %v3654, %v3658
        %v3660 = vpack.c.bf16 %v3659, %v3659
        %3661 = vrot.lane.b32.xlu0 %v3564, 56
        %v3662 = vpop.permute.xlu0 %3661
        %v3664 = vsel %vm2688, %v3660, 0
        %v3667 = vsel %vm2692, %v3662, 0
        %3669 = vmatpush.bf16.msra.mxu0 0
        %3670 = vmatpush.bf16.msra.mxu0 0
        %3671 = vmatpush.bf16.msra.mxu0 0
        %3672 = vmatpush.bf16.msra.mxu0 0
        %3673 = vmatpush.bf16.msra.mxu0 0
        %3674 = vmatpush.bf16.msra.mxu0 0
        %3675 = vmatpush.bf16.msra.mxu0 0
        %3676 = vmatpush.bf16.msra.mxu0 %v3667
        %3677 = vmatmul.bf16.gmra.mxu0 %v3664
        %v3678 = vpop.f32.mrf.mxu0
        %v3679 = vadd.f32 0.0, %v3678
        %v3680 = vpop.f32.mrf.mxu0
        %3681 = vdwg.mxu0
        %v3682 = vpack.c.bf16 %v3679, %v3679
        %v3683 = vpack.c.bf16 %v3486, %v3486
        %v3685 = vsel %vm1589, %v3682, 0
        %v3688 = vsel %vm1627, %v3683, 0
        %3690 = vmatpush.bf16.msra.mxu0 0
        %3691 = vmatpush.bf16.msra.mxu0 0
        %3692 = vmatpush.bf16.msra.mxu0 0
        %3693 = vmatpush.bf16.msra.mxu0 0
        %3694 = vmatpush.bf16.msra.mxu0 0
        %3695 = vmatpush.bf16.msra.mxu0 0
        %3696 = vmatpush.bf16.msra.mxu0 0
        %3697 = vmatpush.bf16.msra.mxu0 %v3688
        %3698 = vmatmul.bf16.gmra.mxu0 %v3685
        %v3699 = vpop.f32.mrf.mxu0
        %v3700 = vadd.f32 0.0, %v3699
        %v3701 = vpop.f32.mrf.mxu0
        %3702 = vdwg.mxu0
        %v3704 = vsel %vm1589, %v3622, 0
        %v3707 = vsel %vm1627, %v3623, 0
        %3709 = vmatpush.bf16.msra.mxu0 0
        %3710 = vmatpush.bf16.msra.mxu0 0
        %3711 = vmatpush.bf16.msra.mxu0 0
        %3712 = vmatpush.bf16.msra.mxu0 0
        %3713 = vmatpush.bf16.msra.mxu0 0
        %3714 = vmatpush.bf16.msra.mxu0 0
        %3715 = vmatpush.bf16.msra.mxu0 0
        %3716 = vmatpush.bf16.msra.mxu0 %v3707
        %3717 = vmatmul.bf16.gmra.mxu0 %v3704
        %v3718 = vpop.f32.mrf.mxu0
        %v3719 = vadd.f32 %v3700, %v3718
        %v3720 = vpop.f32.mrf.mxu0
        %3721 = vdwg.mxu0
        %3722 = vrot.lane.b32.xlu0 %v3564, 112
        %v3723 = vpop.permute.xlu0 %3722
        %3724 = vrot.lane.b32.xlu0 %v3564, 80
        %v3725 = vpop.permute.xlu0 %3724
        %v3727 = vsel %vm1589, %v3723, 0
        %v3730 = vsel %vm1589, %v3725, 0
        %3732 = vmatpush.bf16.xpose.msra.mxu0 0
        %3733 = vmatpush.bf16.xpose.msra.mxu0 0
        %3734 = vmatpush.bf16.xpose.msra.mxu0 0
        %3735 = vmatpush.bf16.xpose.msra.mxu0 0
        %3736 = vmatpush.bf16.xpose.msra.mxu0 0
        %3737 = vmatpush.bf16.xpose.msra.mxu0 0
        %3738 = vmatpush.bf16.xpose.msra.mxu0 0
        %3739 = vmatpush.bf16.xpose.msra.mxu0 %v3730
        %3740 = vmatmul.bf16.gmra.mxu0 %v3727
        %v3741 = vpop.f32.mrf.mxu0
        %v3742 = vadd.f32 0.0, %v3741
        %v3743 = vpop.f32.mrf.mxu0
        %3744 = vdwg.mxu0
        %v3745 = vmul.f32 %v3742, 0.35355338
        %v3746 = vadd.f32 %v3745, %v2647
        %v3747 = vsel %vm2673, %v3746, -inf
        %3748 = vmax.xlane.f32.xlu0 %v3747
        %v3749 = vpop.xlane.xlu0 %3748
        %v3750 = vsub.f32 %v3746, %v3749
        %v3751 = vmul.f32 %v3750, 1.442695
        %v3752 = vpow.pop %v3751
        %v3753 = vsel %vm2673, %v3752, 0.0
        %3754 = vadd.xlane.f32.xlu0 %v3753
        %v3755 = vpop.xlane.xlu0 %3754
        %v3756 = vrcp.pop %v3755
        %v3757 = vmul.f32 %v3752, %v3756
        %v3758 = vpack.c.bf16 %v3757, %v3757
        %3759 = vrot.lane.b32.xlu0 %v3564, 48
        %v3760 = vpop.permute.xlu0 %3759
        %v3762 = vsel %vm2688, %v3758, 0
        %v3765 = vsel %vm2692, %v3760, 0
        %3767 = vmatpush.bf16.msra.mxu0 0
        %3768 = vmatpush.bf16.msra.mxu0 0
        %3769 = vmatpush.bf16.msra.mxu0 0
        %3770 = vmatpush.bf16.msra.mxu0 0
        %3771 = vmatpush.bf16.msra.mxu0 0
        %3772 = vmatpush.bf16.msra.mxu0 0
        %3773 = vmatpush.bf16.msra.mxu0 0
        %3774 = vmatpush.bf16.msra.mxu0 %v3765
        %3775 = vmatmul.bf16.gmra.mxu0 %v3762
        %v3776 = vpop.f32.mrf.mxu0
        %v3777 = vadd.f32 0.0, %v3776
        %v3778 = vpop.f32.mrf.mxu0
        %3779 = vdwg.mxu0
        %v3780 = vpack.c.bf16 %v3777, %v3777
        %v3781 = vpack.c.bf16 %v3487, %v3487
        %v3783 = vsel %vm1589, %v3780, 0
        %v3786 = vsel %vm1627, %v3781, 0
        %3788 = vmatpush.bf16.msra.mxu0 0
        %3789 = vmatpush.bf16.msra.mxu0 0
        %3790 = vmatpush.bf16.msra.mxu0 0
        %3791 = vmatpush.bf16.msra.mxu0 0
        %3792 = vmatpush.bf16.msra.mxu0 0
        %3793 = vmatpush.bf16.msra.mxu0 0
        %3794 = vmatpush.bf16.msra.mxu0 0
        %3795 = vmatpush.bf16.msra.mxu0 %v3786
        %3796 = vmatmul.bf16.gmra.mxu0 %v3783
        %v3797 = vpop.f32.mrf.mxu0
        %v3798 = vadd.f32 0.0, %v3797
        %v3799 = vpop.f32.mrf.mxu0
        %3800 = vdwg.mxu0
        %v3801 = vadd.f32 %v3719, %v3798
        %3802 = vrot.lane.b32.xlu0 %v3564, 104
        %v3803 = vpop.permute.xlu0 %3802
        %3804 = vrot.lane.b32.xlu0 %v3564, 72
        %v3805 = vpop.permute.xlu0 %3804
        %v3807 = vsel %vm1589, %v3803, 0
        %v3810 = vsel %vm1589, %v3805, 0
        %3812 = vmatpush.bf16.xpose.msra.mxu0 0
        %3813 = vmatpush.bf16.xpose.msra.mxu0 0
        %3814 = vmatpush.bf16.xpose.msra.mxu0 0
        %3815 = vmatpush.bf16.xpose.msra.mxu0 0
        %3816 = vmatpush.bf16.xpose.msra.mxu0 0
        %3817 = vmatpush.bf16.xpose.msra.mxu0 0
        %3818 = vmatpush.bf16.xpose.msra.mxu0 0
        %3819 = vmatpush.bf16.xpose.msra.mxu0 %v3810
        %3820 = vmatmul.bf16.gmra.mxu0 %v3807
        %v3821 = vpop.f32.mrf.mxu0
        %v3822 = vadd.f32 0.0, %v3821
        %v3823 = vpop.f32.mrf.mxu0
        %3824 = vdwg.mxu0
        %v3825 = vmul.f32 %v3822, 0.35355338
        %v3826 = vadd.f32 %v3825, %v2647
        %v3827 = vsel %vm2673, %v3826, -inf
        %3828 = vmax.xlane.f32.xlu0 %v3827
        %v3829 = vpop.xlane.xlu0 %3828
        %v3830 = vsub.f32 %v3826, %v3829
        %v3831 = vmul.f32 %v3830, 1.442695
        %v3832 = vpow.pop %v3831
        %v3833 = vsel %vm2673, %v3832, 0.0
        %3834 = vadd.xlane.f32.xlu0 %v3833
        %v3835 = vpop.xlane.xlu0 %3834
        %v3836 = vrcp.pop %v3835
        %v3837 = vmul.f32 %v3832, %v3836
        %v3838 = vpack.c.bf16 %v3837, %v3837
        %3839 = vrot.lane.b32.xlu0 %v3564, 40
        %v3840 = vpop.permute.xlu0 %3839
        %v3842 = vsel %vm2688, %v3838, 0
        %v3845 = vsel %vm2692, %v3840, 0
        %3847 = vmatpush.bf16.msra.mxu0 0
        %3848 = vmatpush.bf16.msra.mxu0 0
        %3849 = vmatpush.bf16.msra.mxu0 0
        %3850 = vmatpush.bf16.msra.mxu0 0
        %3851 = vmatpush.bf16.msra.mxu0 0
        %3852 = vmatpush.bf16.msra.mxu0 0
        %3853 = vmatpush.bf16.msra.mxu0 0
        %3854 = vmatpush.bf16.msra.mxu0 %v3845
        %3855 = vmatmul.bf16.gmra.mxu0 %v3842
        %v3856 = vpop.f32.mrf.mxu0
        %v3857 = vadd.f32 0.0, %v3856
        %v3858 = vpop.f32.mrf.mxu0
        %3859 = vdwg.mxu0
        %v3860 = vpack.c.bf16 %v3857, %v3857
        %v3861 = vpack.c.bf16 %v3488, %v3488
        %v3863 = vsel %vm1589, %v3860, 0
        %v3866 = vsel %vm1627, %v3861, 0
        %3868 = vmatpush.bf16.msra.mxu0 0
        %3869 = vmatpush.bf16.msra.mxu0 0
        %3870 = vmatpush.bf16.msra.mxu0 0
        %3871 = vmatpush.bf16.msra.mxu0 0
        %3872 = vmatpush.bf16.msra.mxu0 0
        %3873 = vmatpush.bf16.msra.mxu0 0
        %3874 = vmatpush.bf16.msra.mxu0 0
        %3875 = vmatpush.bf16.msra.mxu0 %v3866
        %3876 = vmatmul.bf16.gmra.mxu0 %v3863
        %v3877 = vpop.f32.mrf.mxu0
        %v3878 = vadd.f32 0.0, %v3877
        %v3879 = vpop.f32.mrf.mxu0
        %3880 = vdwg.mxu0
        %v3881 = vadd.f32 %v3801, %v3878
        %v3883 = vperm.slane %v3490, 0
        %v3885 = vadd.f32 %v3881, %v3883
        %v3886 = vadd.f32 %v3476, %v3885
        %v3887 = vsel %vm2974, %v3886, 0.0
        %3888 = vadd.xlane.f32.xlu0 %v3887
        %v3889 = vpop.xlane.xlu0 %3888
        %v3890 = vmul.f32 %v3889, %v1915
        %v3891 = vsub.f32 %v3886, %v3890
        %v3892 = vmul.f32 %v3891, %v3891
        %v3893 = vsel %vm2974, %v3892, 0.0
        %3894 = vadd.xlane.f32.xlu0 %v3893
        %v3895 = vpop.xlane.xlu0 %3894
        %v3896 = vmul.f32 %v3895, %v1915
        %v3897 = vadd.f32 %v3896, 1e-05
        %v3898 = vrsqrt.pop %v3897
        %v3899 = vmul.f32 %v3898, %v3897
        %v3900 = vmul.f32 %v3899, %v3898
        %v3901 = vmul.f32 0.5, %v3900
        %v3902 = vsub.f32 1.5, %v3901
        %v3903 = vmul.f32 %v3898, %v3902
        %vm3904 = vweird.f32 %v3897
        %vm3905 = vweird.f32 %v3898
        %vm3906 = vmor %vm3904, %vm3905
        %v3907 = vsel %vm3906, %v3898, %v3903
        %v3908 = vmul.f32 %v3891, %v3907
        %v3910 = vperm.slane %v3492, 0
        %v3912 = vmul.f32 %v3908, %v3910
        %v3914 = vperm.slane %v3494, 0
        %v3916 = vadd.f32 %v3912, %v3914
        %v3917 = vpack.c.bf16 %v3916, %v3916
        %v3918 = vpack.c.bf16 %v3497, %v3496
        %v3919 = vpack.c.bf16 %v3499, %v3498
        %v3921 = vperm.slane %v3501, 0
        %v3924 = vsel %vm1568, %v3917, 0
        %3926 = vmatpush.bf16.msra.mxu0 0
        %3927 = vmatpush.bf16.msra.mxu0 0
        %3928 = vmatpush.bf16.msra.mxu0 0
        %3929 = vmatpush.bf16.msra.mxu0 0
        %3930 = vmatpush.bf16.msra.mxu0 0
        %3931 = vmatpush.bf16.msra.mxu0 0
        %3932 = vmatpush.bf16.msra.mxu0 %v3919
        %3933 = vmatpush.bf16.msra.mxu0 %v3918
        %3934 = vmatmul.bf16.gmra.mxu0 %v3924
        %v3935 = vpop.f32.mrf.mxu0
        %v3936 = vadd.f32 %v3921, %v3935
        %v3937 = vpop.f32.mrf.mxu0
        %3938 = vdwg.mxu0
        %v3939 = vpack.c.bf16 %v3504, %v3503
        %v3940 = vpack.c.bf16 %v3506, %v3505
        %v3942 = vperm.slane %v3508, 0
        %3944 = vmatpush.bf16.msra.mxu0 0
        %3945 = vmatpush.bf16.msra.mxu0 0
        %3946 = vmatpush.bf16.msra.mxu0 0
        %3947 = vmatpush.bf16.msra.mxu0 0
        %3948 = vmatpush.bf16.msra.mxu0 0
        %3949 = vmatpush.bf16.msra.mxu0 0
        %3950 = vmatpush.bf16.msra.mxu0 %v3940
        %3951 = vmatpush.bf16.msra.mxu0 %v3939
        %3952 = vmatmul.bf16.gmra.mxu0 %v3034
        %v3953 = vpop.f32.mrf.mxu0
        %v3954 = vadd.f32 %v3942, %v3953
        %v3955 = vpop.f32.mrf.mxu0
        %3956 = vdwg.mxu0
        %v3957 = vpack.c.bf16 %v3936, %v3936
        %v3958 = vpack.c.bf16 %v3954, %v3954
        %v3960 = vsel %vm1589, %v3957, 0
        %v3963 = vsel %vm1589, %v3958, 0
        %3965 = vmatpush.bf16.xpose.msra.mxu0 0
        %3966 = vmatpush.bf16.xpose.msra.mxu0 0
        %3967 = vmatpush.bf16.xpose.msra.mxu0 0
        %3968 = vmatpush.bf16.xpose.msra.mxu0 0
        %3969 = vmatpush.bf16.xpose.msra.mxu0 0
        %3970 = vmatpush.bf16.xpose.msra.mxu0 0
        %3971 = vmatpush.bf16.xpose.msra.mxu0 0
        %3972 = vmatpush.bf16.xpose.msra.mxu0 %v3963
        %3973 = vmatmul.bf16.gmra.mxu0 %v3960
        %v3974 = vpop.f32.mrf.mxu0
        %v3975 = vadd.f32 0.0, %v3974
        %v3976 = vpop.f32.mrf.mxu0
        %3977 = vdwg.mxu0
        %v3978 = vmul.f32 %v3975, 0.35355338
        %v3979 = vsel %vm3071, %v3978, -inf
        %3980 = vmax.xlane.f32.xlu0 %v3979
        %v3981 = vpop.xlane.xlu0 %3980
        %v3982 = vsub.f32 %v3978, %v3981
        %v3983 = vmul.f32 %v3982, 1.442695
        %v3984 = vpow.pop %v3983
        %v3985 = vsel %vm3071, %v3984, 0.0
        %3986 = vadd.xlane.f32.xlu0 %v3985
        %v3987 = vpop.xlane.xlu0 %3986
        %v3988 = vrcp.pop %v3987
        %v3989 = vmul.f32 %v3984, %v3988
        %v3990 = vpack.c.bf16 %v3989, %v3989
        %3992 = vrot.lane.b32.xlu0 %v3958, 96
        %v3993 = vpop.permute.xlu0 %3992
        %v3995 = vsel %vm1589, %v3990, 0
        %v3998 = vsel %vm1627, %v3993, 0
        %4000 = vmatpush.bf16.msra.mxu0 0
        %4001 = vmatpush.bf16.msra.mxu0 0
        %4002 = vmatpush.bf16.msra.mxu0 0
        %4003 = vmatpush.bf16.msra.mxu0 0
        %4004 = vmatpush.bf16.msra.mxu0 0
        %4005 = vmatpush.bf16.msra.mxu0 0
        %4006 = vmatpush.bf16.msra.mxu0 0
        %4007 = vmatpush.bf16.msra.mxu0 %v3998
        %4008 = vmatmul.bf16.gmra.mxu0 %v3995
        %v4009 = vpop.f32.mrf.mxu0
        %v4010 = vadd.f32 0.0, %v4009
        %v4011 = vpop.f32.mrf.mxu0
        %4012 = vdwg.mxu0
        %v4013 = vpack.c.bf16 %v4010, %v4010
        %v4014 = vpack.c.bf16 %v3510, %v3510
        %4016 = vrot.lane.b32.xlu0 %v3957, 120
        %v4017 = vpop.permute.xlu0 %4016
        %4018 = vrot.lane.b32.xlu0 %v3958, 120
        %v4019 = vpop.permute.xlu0 %4018
        %v4021 = vsel %vm1589, %v4017, 0
        %v4024 = vsel %vm1589, %v4019, 0
        %4026 = vmatpush.bf16.xpose.msra.mxu0 0
        %4027 = vmatpush.bf16.xpose.msra.mxu0 0
        %4028 = vmatpush.bf16.xpose.msra.mxu0 0
        %4029 = vmatpush.bf16.xpose.msra.mxu0 0
        %4030 = vmatpush.bf16.xpose.msra.mxu0 0
        %4031 = vmatpush.bf16.xpose.msra.mxu0 0
        %4032 = vmatpush.bf16.xpose.msra.mxu0 0
        %4033 = vmatpush.bf16.xpose.msra.mxu0 %v4024
        %4034 = vmatmul.bf16.gmra.mxu0 %v4021
        %v4035 = vpop.f32.mrf.mxu0
        %v4036 = vadd.f32 0.0, %v4035
        %v4037 = vpop.f32.mrf.mxu0
        %4038 = vdwg.mxu0
        %v4039 = vmul.f32 %v4036, 0.35355338
        %v4040 = vsel %vm3071, %v4039, -inf
        %4041 = vmax.xlane.f32.xlu0 %v4040
        %v4042 = vpop.xlane.xlu0 %4041
        %v4043 = vsub.f32 %v4039, %v4042
        %v4044 = vmul.f32 %v4043, 1.442695
        %v4045 = vpow.pop %v4044
        %v4046 = vsel %vm3071, %v4045, 0.0
        %4047 = vadd.xlane.f32.xlu0 %v4046
        %v4048 = vpop.xlane.xlu0 %4047
        %v4049 = vrcp.pop %v4048
        %v4050 = vmul.f32 %v4045, %v4049
        %v4051 = vpack.c.bf16 %v4050, %v4050
        %4052 = vrot.lane.b32.xlu0 %v3958, 88
        %v4053 = vpop.permute.xlu0 %4052
        %v4055 = vsel %vm1589, %v4051, 0
        %v4058 = vsel %vm1627, %v4053, 0
        %4060 = vmatpush.bf16.msra.mxu0 0
        %4061 = vmatpush.bf16.msra.mxu0 0
        %4062 = vmatpush.bf16.msra.mxu0 0
        %4063 = vmatpush.bf16.msra.mxu0 0
        %4064 = vmatpush.bf16.msra.mxu0 0
        %4065 = vmatpush.bf16.msra.mxu0 0
        %4066 = vmatpush.bf16.msra.mxu0 0
        %4067 = vmatpush.bf16.msra.mxu0 %v4058
        %4068 = vmatmul.bf16.gmra.mxu0 %v4055
        %v4069 = vpop.f32.mrf.mxu0
        %v4070 = vadd.f32 0.0, %v4069
        %v4071 = vpop.f32.mrf.mxu0
        %4072 = vdwg.mxu0
        %v4073 = vpack.c.bf16 %v4070, %v4070
        %v4074 = vpack.c.bf16 %v3511, %v3511
        %v4076 = vsel %vm1589, %v4073, 0
        %v4079 = vsel %vm1627, %v4074, 0
        %4081 = vmatpush.bf16.msra.mxu0 0
        %4082 = vmatpush.bf16.msra.mxu0 0
        %4083 = vmatpush.bf16.msra.mxu0 0
        %4084 = vmatpush.bf16.msra.mxu0 0
        %4085 = vmatpush.bf16.msra.mxu0 0
        %4086 = vmatpush.bf16.msra.mxu0 0
        %4087 = vmatpush.bf16.msra.mxu0 0
        %4088 = vmatpush.bf16.msra.mxu0 %v4079
        %4089 = vmatmul.bf16.gmra.mxu0 %v4076
        %v4090 = vpop.f32.mrf.mxu0
        %v4091 = vadd.f32 0.0, %v4090
        %v4092 = vpop.f32.mrf.mxu0
        %4093 = vdwg.mxu0
        %v4095 = vsel %vm1589, %v4013, 0
        %v4098 = vsel %vm1627, %v4014, 0
        %4100 = vmatpush.bf16.msra.mxu0 0
        %4101 = vmatpush.bf16.msra.mxu0 0
        %4102 = vmatpush.bf16.msra.mxu0 0
        %4103 = vmatpush.bf16.msra.mxu0 0
        %4104 = vmatpush.bf16.msra.mxu0 0
        %4105 = vmatpush.bf16.msra.mxu0 0
        %4106 = vmatpush.bf16.msra.mxu0 0
        %4107 = vmatpush.bf16.msra.mxu0 %v4098
        %4108 = vmatmul.bf16.gmra.mxu0 %v4095
        %v4109 = vpop.f32.mrf.mxu0
        %v4110 = vadd.f32 %v4091, %v4109
        %v4111 = vpop.f32.mrf.mxu0
        %4112 = vdwg.mxu0
        %4113 = vrot.lane.b32.xlu0 %v3957, 112
        %v4114 = vpop.permute.xlu0 %4113
        %4115 = vrot.lane.b32.xlu0 %v3958, 112
        %v4116 = vpop.permute.xlu0 %4115
        %v4118 = vsel %vm1589, %v4114, 0
        %v4121 = vsel %vm1589, %v4116, 0
        %4123 = vmatpush.bf16.xpose.msra.mxu0 0
        %4124 = vmatpush.bf16.xpose.msra.mxu0 0
        %4125 = vmatpush.bf16.xpose.msra.mxu0 0
        %4126 = vmatpush.bf16.xpose.msra.mxu0 0
        %4127 = vmatpush.bf16.xpose.msra.mxu0 0
        %4128 = vmatpush.bf16.xpose.msra.mxu0 0
        %4129 = vmatpush.bf16.xpose.msra.mxu0 0
        %4130 = vmatpush.bf16.xpose.msra.mxu0 %v4121
        %4131 = vmatmul.bf16.gmra.mxu0 %v4118
        %v4132 = vpop.f32.mrf.mxu0
        %v4133 = vadd.f32 0.0, %v4132
        %v4134 = vpop.f32.mrf.mxu0
        %4135 = vdwg.mxu0
        %v4136 = vmul.f32 %v4133, 0.35355338
        %v4137 = vsel %vm3071, %v4136, -inf
        %4138 = vmax.xlane.f32.xlu0 %v4137
        %v4139 = vpop.xlane.xlu0 %4138
        %v4140 = vsub.f32 %v4136, %v4139
        %v4141 = vmul.f32 %v4140, 1.442695
        %v4142 = vpow.pop %v4141
        %v4143 = vsel %vm3071, %v4142, 0.0
        %4144 = vadd.xlane.f32.xlu0 %v4143
        %v4145 = vpop.xlane.xlu0 %4144
        %v4146 = vrcp.pop %v4145
        %v4147 = vmul.f32 %v4142, %v4146
        %v4148 = vpack.c.bf16 %v4147, %v4147
        %4149 = vrot.lane.b32.xlu0 %v3958, 80
        %v4150 = vpop.permute.xlu0 %4149
        %v4152 = vsel %vm1589, %v4148, 0
        %v4155 = vsel %vm1627, %v4150, 0
        %4157 = vmatpush.bf16.msra.mxu0 0
        %4158 = vmatpush.bf16.msra.mxu0 0
        %4159 = vmatpush.bf16.msra.mxu0 0
        %4160 = vmatpush.bf16.msra.mxu0 0
        %4161 = vmatpush.bf16.msra.mxu0 0
        %4162 = vmatpush.bf16.msra.mxu0 0
        %4163 = vmatpush.bf16.msra.mxu0 0
        %4164 = vmatpush.bf16.msra.mxu0 %v4155
        %4165 = vmatmul.bf16.gmra.mxu0 %v4152
        %v4166 = vpop.f32.mrf.mxu0
        %v4167 = vadd.f32 0.0, %v4166
        %v4168 = vpop.f32.mrf.mxu0
        %4169 = vdwg.mxu0
        %v4170 = vpack.c.bf16 %v4167, %v4167
        %v4171 = vpack.c.bf16 %v3512, %v3512
        %v4173 = vsel %vm1589, %v4170, 0
        %v4176 = vsel %vm1627, %v4171, 0
        %4178 = vmatpush.bf16.msra.mxu0 0
        %4179 = vmatpush.bf16.msra.mxu0 0
        %4180 = vmatpush.bf16.msra.mxu0 0
        %4181 = vmatpush.bf16.msra.mxu0 0
        %4182 = vmatpush.bf16.msra.mxu0 0
        %4183 = vmatpush.bf16.msra.mxu0 0
        %4184 = vmatpush.bf16.msra.mxu0 0
        %4185 = vmatpush.bf16.msra.mxu0 %v4176
        %4186 = vmatmul.bf16.gmra.mxu0 %v4173
        %v4187 = vpop.f32.mrf.mxu0
        %v4188 = vadd.f32 0.0, %v4187
        %v4189 = vpop.f32.mrf.mxu0
        %4190 = vdwg.mxu0
        %v4191 = vadd.f32 %v4110, %v4188
        %4192 = vrot.lane.b32.xlu0 %v3957, 104
        %v4193 = vpop.permute.xlu0 %4192
        %4194 = vrot.lane.b32.xlu0 %v3958, 104
        %v4195 = vpop.permute.xlu0 %4194
        %v4197 = vsel %vm1589, %v4193, 0
        %v4200 = vsel %vm1589, %v4195, 0
        %4202 = vmatpush.bf16.xpose.msra.mxu0 0
        %4203 = vmatpush.bf16.xpose.msra.mxu0 0
        %4204 = vmatpush.bf16.xpose.msra.mxu0 0
        %4205 = vmatpush.bf16.xpose.msra.mxu0 0
        %4206 = vmatpush.bf16.xpose.msra.mxu0 0
        %4207 = vmatpush.bf16.xpose.msra.mxu0 0
        %4208 = vmatpush.bf16.xpose.msra.mxu0 0
        %4209 = vmatpush.bf16.xpose.msra.mxu0 %v4200
        %4210 = vmatmul.bf16.gmra.mxu0 %v4197
        %v4211 = vpop.f32.mrf.mxu0
        %v4212 = vadd.f32 0.0, %v4211
        %v4213 = vpop.f32.mrf.mxu0
        %4214 = vdwg.mxu0
        %v4215 = vmul.f32 %v4212, 0.35355338
        %v4216 = vsel %vm3071, %v4215, -inf
        %4217 = vmax.xlane.f32.xlu0 %v4216
        %v4218 = vpop.xlane.xlu0 %4217
        %v4219 = vsub.f32 %v4215, %v4218
        %v4220 = vmul.f32 %v4219, 1.442695
        %v4221 = vpow.pop %v4220
        %v4222 = vsel %vm3071, %v4221, 0.0
        %4223 = vadd.xlane.f32.xlu0 %v4222
        %v4224 = vpop.xlane.xlu0 %4223
        %v4225 = vrcp.pop %v4224
        %v4226 = vmul.f32 %v4221, %v4225
        %v4227 = vpack.c.bf16 %v4226, %v4226
        %4228 = vrot.lane.b32.xlu0 %v3958, 72
        %v4229 = vpop.permute.xlu0 %4228
        %v4231 = vsel %vm1589, %v4227, 0
        %v4234 = vsel %vm1627, %v4229, 0
        %4236 = vmatpush.bf16.msra.mxu0 0
        %4237 = vmatpush.bf16.msra.mxu0 0
        %4238 = vmatpush.bf16.msra.mxu0 0
        %4239 = vmatpush.bf16.msra.mxu0 0
        %4240 = vmatpush.bf16.msra.mxu0 0
        %4241 = vmatpush.bf16.msra.mxu0 0
        %4242 = vmatpush.bf16.msra.mxu0 0
        %4243 = vmatpush.bf16.msra.mxu0 %v4234
        %4244 = vmatmul.bf16.gmra.mxu0 %v4231
        %v4245 = vpop.f32.mrf.mxu0
        %v4246 = vadd.f32 0.0, %v4245
        %v4247 = vpop.f32.mrf.mxu0
        %4248 = vdwg.mxu0
        %v4249 = vpack.c.bf16 %v4246, %v4246
        %v4250 = vpack.c.bf16 %v3513, %v3513
        %v4252 = vsel %vm1589, %v4249, 0
        %v4255 = vsel %vm1627, %v4250, 0
        %4257 = vmatpush.bf16.msra.mxu0 0
        %4258 = vmatpush.bf16.msra.mxu0 0
        %4259 = vmatpush.bf16.msra.mxu0 0
        %4260 = vmatpush.bf16.msra.mxu0 0
        %4261 = vmatpush.bf16.msra.mxu0 0
        %4262 = vmatpush.bf16.msra.mxu0 0
        %4263 = vmatpush.bf16.msra.mxu0 0
        %4264 = vmatpush.bf16.msra.mxu0 %v4255
        %4265 = vmatmul.bf16.gmra.mxu0 %v4252
        %v4266 = vpop.f32.mrf.mxu0
        %v4267 = vadd.f32 0.0, %v4266
        %v4268 = vpop.f32.mrf.mxu0
        %4269 = vdwg.mxu0
        %v4270 = vadd.f32 %v4191, %v4267
        %v4272 = vperm.slane %v3515, 0
        %v4274 = vadd.f32 %v4270, %v4272
        %v4275 = vadd.f32 %v3916, %v4274
        %v4276 = vsel %vm2974, %v4275, 0.0
        %4277 = vadd.xlane.f32.xlu0 %v4276
        %v4278 = vpop.xlane.xlu0 %4277
        %v4279 = vmul.f32 %v4278, %v1915
        %v4280 = vsub.f32 %v4275, %v4279
        %v4281 = vmul.f32 %v4280, %v4280
        %v4282 = vsel %vm2974, %v4281, 0.0
        %4283 = vadd.xlane.f32.xlu0 %v4282
        %v4284 = vpop.xlane.xlu0 %4283
        %v4285 = vmul.f32 %v4284, %v1915
        %v4286 = vadd.f32 %v4285, 1e-05
        %v4287 = vrsqrt.pop %v4286
        %v4288 = vmul.f32 %v4287, %v4286
        %v4289 = vmul.f32 %v4288, %v4287
        %v4290 = vmul.f32 0.5, %v4289
        %v4291 = vsub.f32 1.5, %v4290
        %v4292 = vmul.f32 %v4287, %v4291
        %vm4293 = vweird.f32 %v4286
        %vm4294 = vweird.f32 %v4287
        %vm4295 = vmor %vm4293, %vm4294
        %v4296 = vsel %vm4295, %v4287, %v4292
        %v4297 = vmul.f32 %v4280, %v4296
        %v4299 = vperm.slane %v3517, 0
        %v4301 = vmul.f32 %v4297, %v4299
        %v4303 = vperm.slane %v3519, 0
        %v4305 = vadd.f32 %v4301, %v4303
        %v4306 = vpack.c.bf16 %v4305, %v4305
        %v4307 = vpack.c.bf16 %v3522, %v3521
        %v4308 = vpack.c.bf16 %v3524, %v3523
        %v4310 = vperm.slane %v3526, 0
        %v4313 = vsel %vm1568, %v4306, 0
        %4315 = vmatpush.bf16.msra.mxu0 0
        %4316 = vmatpush.bf16.msra.mxu0 0
        %4317 = vmatpush.bf16.msra.mxu0 0
        %4318 = vmatpush.bf16.msra.mxu0 0
        %4319 = vmatpush.bf16.msra.mxu0 0
        %4320 = vmatpush.bf16.msra.mxu0 0
        %4321 = vmatpush.bf16.msra.mxu0 %v4308
        %4322 = vmatpush.bf16.msra.mxu0 %v4307
        %4323 = vmatmul.bf16.gmra.mxu0 %v4313
        %v4324 = vpop.f32.mrf.mxu0
        %v4325 = vadd.f32 %v4310, %v4324
        %v4326 = vpop.f32.mrf.mxu0
        %4327 = vdwg.mxu0
        %v4328 = vmax.f32 %v4325, 0.0
        %v4329 = vpack.c.bf16 %v4328, %v4328
        %v4330 = vpack.c.bf16 %v3529, %v3528
        %v4331 = vpack.c.bf16 %v3531, %v3530
        %v4332 = vpack.c.bf16 %v3533, %v3532
        %v4333 = vpack.c.bf16 %v3535, %v3534
        %v4335 = vperm.slane %v3537, 0
        %v4338 = vsel %vm1974, %v4329, 0
        %4340 = vmatpush.bf16.msra.mxu0 0
        %4341 = vmatpush.bf16.msra.mxu0 0
        %4342 = vmatpush.bf16.msra.mxu0 0
        %4343 = vmatpush.bf16.msra.mxu0 0
        %4344 = vmatpush.bf16.msra.mxu0 %v4333
        %4345 = vmatpush.bf16.msra.mxu0 %v4332
        %4346 = vmatpush.bf16.msra.mxu0 %v4331
        %4347 = vmatpush.bf16.msra.mxu0 %v4330
        %4348 = vmatmul.bf16.gmra.mxu0 %v4338
        %v4349 = vpop.f32.mrf.mxu0
        %v4350 = vadd.f32 %v4335, %v4349
        %v4351 = vpop.f32.mrf.mxu0
        %4352 = vdwg.mxu0
        %v4353 = vadd.f32 %v4305, %v4350
        %v4354 = vsel %vm2974, %v4353, 0.0
        %4355 = vadd.xlane.f32.xlu0 %v4354
        %v4356 = vpop.xlane.xlu0 %4355
        %v4357 = vmul.f32 %v4356, %v1915
        %v4358 = vsub.f32 %v4353, %v4357
        %v4359 = vmul.f32 %v4358, %v4358
        %v4360 = vsel %vm2974, %v4359, 0.0
        %4361 = vadd.xlane.f32.xlu0 %v4360
        %v4362 = vpop.xlane.xlu0 %4361
        %v4363 = vmul.f32 %v4362, %v1915
        %v4364 = vadd.f32 %v4363, 1e-05
        %v4365 = vrsqrt.pop %v4364
        %v4366 = vmul.f32 %v4365, %v4364
        %v4367 = vmul.f32 %v4366, %v4365
        %v4368 = vmul.f32 0.5, %v4367
        %v4369 = vsub.f32 1.5, %v4368
        %v4370 = vmul.f32 %v4365, %v4369
        %vm4371 = vweird.f32 %v4364
        %vm4372 = vweird.f32 %v4365
        %vm4373 = vmor %vm4371, %vm4372
        %v4374 = vsel %vm4373, %v4365, %v4370
        %v4375 = vmul.f32 %v4358, %v4374
        %v4377 = vperm.slane %v3539, 0
        %v4379 = vmul.f32 %v4375, %v4377
        %v4381 = vperm.slane %v3541, 0
        %v4383 = vadd.f32 %v4379, %v4381
        %v4384 = vld [vmem:[#allocation10] sm:$0x1]
        %v4385 = vld [vmem:[#allocation12] sm:$0x1]
        %v4386 = vsel %vm2974, %v4383, 0.0
        %4387 = vadd.xlane.f32.xlu0 %v4386
        %v4388 = vpop.xlane.xlu0 %4387
        %v4389 = vmul.f32 %v4388, %v1915
        %v4390 = vsub.f32 %v4383, %v4389
        %v4391 = vmul.f32 %v4390, %v4390
        %v4392 = vsel %vm2974, %v4391, 0.0
        %4393 = vadd.xlane.f32.xlu0 %v4392
        %v4394 = vpop.xlane.xlu0 %4393
        %v4395 = vmul.f32 %v4394, %v1915
        %v4396 = vadd.f32 %v4395, 1e-05
        %v4397 = vrsqrt.pop %v4396
        %v4398 = vmul.f32 %v4397, %v4396
        %v4399 = vmul.f32 %v4398, %v4397
        %v4400 = vmul.f32 0.5, %v4399
        %v4401 = vsub.f32 1.5, %v4400
        %v4402 = vmul.f32 %v4397, %v4401
        %vm4403 = vweird.f32 %v4396
        %vm4404 = vweird.f32 %v4397
        %vm4405 = vmor %vm4403, %vm4404
        %v4406 = vsel %vm4405, %v4397, %v4402
        %v4407 = vmul.f32 %v4390, %v4406
        %v4409 = vperm.slane %v4384, 0
        %v4411 = vmul.f32 %v4407, %v4409
        %v4413 = vperm.slane %v4385, 0
        %v4415 = vadd.f32 %v4411, %v4413
        %v4416 = vld [vmem:[%s89] sm:$0xff]
        %v4417 = vld [vmem:[%s89 + $0x8] sm:$0xff]
        %v4418 = vld [vmem:[%s89 + $0x10] sm:$0xff]
        %v4419 = vld [vmem:[%s89 + $0x18] sm:$0xff]
        %v4420 = vld [vmem:[%s91] sm:$0x1]
        %v4421 = vpack.c.bf16 %v4415, %v4415
        %v4422 = vpack.c.bf16 %v4417, %v4416
        %v4423 = vpack.c.bf16 %v4419, %v4418
        %v4425 = vperm.slane %v4420, 0
        %v4428 = vsel %vm1568, %v4421, 0
        %4430 = vmatpush.bf16.msra.mxu0 0
        %4431 = vmatpush.bf16.msra.mxu0 0
        %4432 = vmatpush.bf16.msra.mxu0 0
        %4433 = vmatpush.bf16.msra.mxu0 0
        %4434 = vmatpush.bf16.msra.mxu0 0
        %4435 = vmatpush.bf16.msra.mxu0 0
        %4436 = vmatpush.bf16.msra.mxu0 %v4423
        %4437 = vmatpush.bf16.msra.mxu0 %v4422
        %4438 = vmatmul.bf16.gmra.mxu0 %v4428
        %v4439 = vpop.f32.mrf.mxu0
        %v4440 = vadd.f32 %v4425, %v4439
        %v4441 = vpop.f32.mrf.mxu0
        %4442 = vdwg.mxu0
        %vm4443 = vcmask 29696
        %4444 = vst.msk [vmem:[%s1500] sm:$0x3f] %vm4443, %v4440
        %p4445 = scmp.lt.s32.totalorder %s108, 1
        %s4446 = scalar_select %p4445, %s108, 1
        %s4447 = smul.addr %s4446, 8
        %s4448 = scalar_lea.vmem %s93, %s4447
        // Predicated region
        $region233: #{transformer_forward.1} parent=203 // pred_check
          %p4449 = pneg %p1102
        $region234: #{transformer_forward.1} parent=203 // pred_check_branch
          %4451 = sbr.rel (%p4449) target = $region236
        $region235: #{transformer_forward.1} parent=203 // pred_region
          _
        $region236: #{transformer_forward.1} parent=203 // pred_fallthru
          _
      $region204: #{transformer_forward.1} parent=5 // pred_fallthru
        _
      %p4452 = scmp.le.s32.totalorder 2, %s103
      // Predicated region
      $region237: #{transformer_forward.1} parent=5 // pred_check
        %p4453 = pneg %p4452
      $region238: #{transformer_forward.1} parent=5 // pred_check_branch
        %4455 = sbr.rel (%p4453) target = $region240
      $region239: #{transformer_forward.1} parent=5 // pred_region
        %s4456 = ssub.s32 %s103, 2
        // Predicated region
        $region241: #{transformer_forward.1} parent=239 // pred_check
          %p4457 = pneg %p1108
        $region242: #{transformer_forward.1} parent=239 // pred_check_branch
          %4459 = sbr.rel (%p4457) target = $region244
        $region243: #{transformer_forward.1} parent=239 // pred_region
          %p4460 = scmp.lt.s32.totalorder %s109, 1
          %s4461 = scalar_select %p4460, %s109, 1
          %s4462 = smul.addr %s4461, 8
          %s4463 = scalar_lea.vmem %s93, %s4462
        $region244: #{transformer_forward.1} parent=239 // pred_fallthru
          _
      $region240: #{transformer_forward.1} parent=5 // pred_fallthru
        _
    $region6: #{transformer_forward.1} parent=1 // loop_footer
      %s107 = sadd.s32 1, %s103
    $region7: #{transformer_forward.1} parent=1 // loop_footer_branch
      %102 = sbr.rel target = $region3
    $region8: #{transformer_forward.1} parent=1 // loop_exit
      _
    %4464 = vsyncpa [#allocation3], 1
    %s4465 = scalar_lea.sflag [#allocation3], 1
    %4466 = vsyncpa %s4465, 1
    %4467 = vsyncpa [#allocation5], 1
    %4468 = vsyncpa [#allocation8], 1
    %4469 = vsyncpa [#allocation11], 1

</llo_original>
